<compile_context>
chip_gen: v6e
topology: v6e:2x2x1
jax: 0.10.0
libtpu: 0.0.40
codegen_flags: <defaults>
</compile_context>

<pallas_src>
import functools
import numpy as np
import jax
import jax.numpy as jnp
from jax.experimental import pallas as pl
from jax.experimental.pallas import tpu as pltpu


# ----------------------------------------------------------------------------- Pallas kernels

def _in_conv_kernel(x_ref, w_ref, t_ref, o_ref, pad_ref, *, T):
    """Conv1d(Cin->H, k=3, pad=1) + folded BN + ReLU for one batch element."""
    Cin = x_ref.shape[1]
    pad_ref[:, 0:1] = jnp.zeros((Cin, 1), jnp.float32)
    pad_ref[:, T + 1:T + 2] = jnp.zeros((Cin, 1), jnp.float32)
    pad_ref[:, 1:T + 1] = x_ref[0]
    H = o_ref.shape[1]
    acc = jnp.zeros((H, T), jnp.float32)
    for k in range(3):                                   # static tap loop (in-kernel "im2col")
        wk = w_ref[k]                                    # (H, Cin)
        xk = pad_ref[:, k:k + T]                         # (Cin, T)
        if Cin == 1:
            acc = acc + wk * xk                          # (H,1)*(1,T) broadcast, skip K=1 MXU op
        else:
            acc = acc + jnp.dot(wk, xk, preferred_element_type=jnp.float32)
    o_ref[0] = jnp.maximum(acc + t_ref[...], 0.0)


def _encoder_kernel(*refs, S, K, Lout):
    """Fused encoder level: strided down-conv (+BN+ReLU) + full ResConBlock (growth 2, 2)."""
    ph_refs = refs[:S]                                   # S polyphase views of the input
    (wd_ref, td_ref, w1_ref, t1_ref, wdep_ref, tdep_ref,
     w2_ref, t2_ref, wr_ref, tr_ref, o_ref, pad_ref) = refs[S:]

    # Conv1d(C, C, K, stride=S) via polyphase: tap k reads phase (k % S) at offset (k // S).
    C = ph_refs[0].shape[1]
    down = jnp.zeros((C, Lout), jnp.float32)
    for k in range(K):
        off = k // S
        down = down + jnp.dot(wd_ref[k], ph_refs[k % S][0, :, off:off + Lout],
                              preferred_element_type=jnp.float32)
    down = jnp.maximum(down + td_ref[...], 0.0)

    # ResConBlock: pointwise -> depthwise(k=5,p=2) -> pointwise, + pointwise residual branch.
    p1 = jnp.maximum(jnp.dot(w1_ref[...], down, preferred_element_type=jnp.float32) + t1_ref[...], 0.0)
    Cm = p1.shape[0]
    pad_ref[:, 0:2] = jnp.zeros((Cm, 2), jnp.float32)
    pad_ref[:, Lout + 2:Lout + 4] = jnp.zeros((Cm, 2), jnp.float32)
    pad_ref[:, 2:Lout + 2] = p1
    Kd = wdep_ref.shape[0]
    acc = jnp.zeros((Cm, Lout), jnp.float32)
    for k in range(Kd):                                  # depthwise taps on the VMEM-resident tile
        acc = acc + wdep_ref[k] * pad_ref[:, k:k + Lout]
    dw = jnp.maximum(acc + tdep_ref[...], 0.0)
    p2 = jnp.maximum(jnp.dot(w2_ref[...], dw, preferred_element_type=jnp.float32) + t2_ref[...], 0.0)
    res = jnp.maximum(jnp.dot(wr_ref[...], down, preferred_element_type=jnp.float32) + tr_ref[...], 0.0)
    o_ref[0] = p2 + res                                  # residual add fused in the epilogue


def _decoder_kernel(*refs, has_linear, K_up, L):
    """Fused decoder level: [Linear+ReLU] + skip-add + ResConBlock(2, 1/2) +
       polyphase ConvTranspose1d(stride=2) + BN + ReLU (two output phases)."""
    x_ref, skip_ref = refs[0], refs[1]
    i = 2
    lin_ref = None
    if has_linear:
        lin_ref = refs[i]
        i += 1
    (w1_ref, t1_ref, wdep_ref, tdep_ref, w2_ref, t2_ref, wr_ref, tr_ref,
     up_ref, ut_ref, o_ref, pad_ref, ext_ref) = refs[i:]

    x = x_ref[0]                                         # (Cin, L)
    if has_linear:
        # Linear(hdim, hdim, bias=False) + ReLU over the channel dim (direct matmul, no im2col).
        x = jnp.maximum(jnp.dot(lin_ref[...], x, preferred_element_type=jnp.float32), 0.0)
    x = x + skip_ref[0]                                  # fused skip-add

    p1 = jnp.maximum(jnp.dot(w1_ref[...], x, preferred_element_type=jnp.float32) + t1_ref[...], 0.0)
    Cm = p1.shape[0]
    pad_ref[:, 0:2] = jnp.zeros((Cm, 2), jnp.float32)
    pad_ref[:, L + 2:L + 4] = jnp.zeros((Cm, 2), jnp.float32)
    pad_ref[:, 2:L + 2] = p1
    Kd = wdep_ref.shape[0]
    acc = jnp.zeros((Cm, L), jnp.float32)
    for k in range(Kd):
        acc = acc + wdep_ref[k] * pad_ref[:, k:k + L]
    dw = jnp.maximum(acc + tdep_ref[...], 0.0)
    p2 = jnp.maximum(jnp.dot(w2_ref[...], dw, preferred_element_type=jnp.float32) + t2_ref[...], 0.0)
    res = jnp.maximum(jnp.dot(wr_ref[...], x, preferred_element_type=jnp.float32) + tr_ref[...], 0.0)
    y = p2 + res                                         # (Co, L)

    # ConvTranspose1d(Co, Co, K_up, stride=2) + BN + ReLU via polyphase (no zero-stuffing).
    Co = y.shape[0]
    hph = K_up // 2
    P_len = L + hph - 1
    if hph > 1:
        ext_ref[:, 0:hph - 1] = jnp.zeros((Co, hph - 1), jnp.float32)
        ext_ref[:, L + hph - 1:L + 2 * hph - 2] = jnp.zeros((Co, hph - 1), jnp.float32)
    ext_ref[:, hph - 1:hph - 1 + L] = y
    for r in range(2):                                   # out[2q + r] = sum_j W_{r+2j}^T y[q - j]
        ph = jnp.zeros((Co, P_len), jnp.float32)
        for j in range(hph):
            off = hph - 1 - j
            ph = ph + jnp.dot(up_ref[r + 2 * j], ext_ref[:, off:off + P_len],
                              preferred_element_type=jnp.float32)
        o_ref[0, r] = jnp.maximum(ph + ut_ref[...], 0.0)


def _mask_out_kernel(x_ref, enc_ref, wt_ref, bt_ref, wg_ref, bg_ref, wm_ref, bm_ref,
                     wo_ref, bo_ref, o_ref, pad_ref, *, T):
    """MaskGate (tanh * sigmoid -> relu conv) * enc_out, then out_conv (k=3, pad=1) + bias."""
    xb = x_ref[0]                                        # (H, T)
    a = jnp.tanh(jnp.dot(wt_ref[...], xb, preferred_element_type=jnp.float32) + bt_ref[...])
    g = jax.nn.sigmoid(jnp.dot(wg_ref[...], xb, preferred_element_type=jnp.float32) + bg_ref[...])
    m = jnp.maximum(jnp.dot(wm_ref[...], a * g, preferred_element_type=jnp.float32) + bm_ref[...], 0.0)
    y = enc_ref[0] * m                                   # enc_out * mask
    Hc = y.shape[0]
    pad_ref[:, 0:1] = jnp.zeros((Hc, 1), jnp.float32)
    pad_ref[:, T + 1:T + 2] = jnp.zeros((Hc, 1), jnp.float32)
    pad_ref[:, 1:T + 1] = y
    Co = o_ref.shape[1]
    acc = jnp.zeros((Co, T), jnp.float32)
    for k in range(3):
        acc = acc + jnp.dot(wo_ref[k], pad_ref[:, k:k + T], preferred_element_type=jnp.float32)
    o_ref[0] = acc + bo_ref[...]


# ----------------------------------------------------------------------------- kernel wrappers

def in_conv_apply(x, p):
    B, Cin, T = x.shape
    H = p["w"].shape[1]                                  # w: (3, H, Cin)
    kern = functools.partial(_in_conv_kernel, T=T)
    return pl.pallas_call(
        kern,
        out_shape=jax.ShapeDtypeStruct((B, H, T), jnp.float32),
        grid=(B,),
        in_specs=[
            pl.BlockSpec((1, Cin, T), lambda b: (b, 0, 0)),
            pl.BlockSpec((3, H, Cin), lambda b: (0, 0, 0)),
            pl.BlockSpec((H, 1), lambda b: (0, 0)),
        ],
        out_specs=pl.BlockSpec((1, H, T), lambda b: (b, 0, 0)),
        scratch_shapes=[pltpu.VMEM((Cin, T + 2), jnp.float32)],
        compiler_params=pltpu.CompilerParams(dimension_semantics=("parallel",)),
    )(x, p["w"], p["t"])


def encoder_apply(x, p, K, S):
    """Fused encoder level. Host glue only splits x into its S polyphase views (no im2col)."""
    B, C, L = x.shape
    Lout = (L - K) // S + 1
    need = (K - 1) // S + Lout
    phases = []
    for r in range(S):
        ph = x[:, :, r::S]
        if ph.shape[-1] < need:
            ph = jnp.pad(ph, ((0, 0), (0, 0), (0, need - ph.shape[-1])))
        else:
            ph = ph[:, :, :need]
        phases.append(ph)
    Cm = p["w1"].shape[0]
    Co = p["w2"].shape[0]
    Kd = p["wdep"].shape[0]
    kern = functools.partial(_encoder_kernel, S=S, K=K, Lout=Lout)
    in_specs = [pl.BlockSpec((1, C, need), lambda b: (b, 0, 0)) for _ in range(S)]
    in_specs += [
        pl.BlockSpec((K, C, C), lambda b: (0, 0, 0)),
        pl.BlockSpec((C, 1), lambda b: (0, 0)),
        pl.BlockSpec((Cm, C), lambda b: (0, 0)),
        pl.BlockSpec((Cm, 1), lambda b: (0, 0)),
        pl.BlockSpec((Kd, Cm, 1), lambda b: (0, 0, 0)),
        pl.BlockSpec((Cm, 1), lambda b: (0, 0)),
        pl.BlockSpec((Co, Cm), lambda b: (0, 0)),
        pl.BlockSpec((Co, 1), lambda b: (0, 0)),
        pl.BlockSpec((Co, C), lambda b: (0, 0)),
        pl.BlockSpec((Co, 1), lambda b: (0, 0)),
    ]
    return pl.pallas_call(
        kern,
        out_shape=jax.ShapeDtypeStruct((B, Co, Lout), jnp.float32),
        grid=(B,),
        in_specs=in_specs,
        out_specs=pl.BlockSpec((1, Co, Lout), lambda b: (b, 0, 0)),
        scratch_shapes=[pltpu.VMEM((Cm, Lout + 4), jnp.float32)],
        compiler_params=pltpu.CompilerParams(dimension_semantics=("parallel",)),
    )(*phases, p["down_w"], p["down_t"], p["w1"], p["t1"], p["wdep"], p["tdep"],
      p["w2"], p["t2"], p["wr"], p["tr"])


def decoder_apply(x, skip, p, lin_w=None, K_up=4, S=2):
    """Fused decoder level. Only host glue afterwards is the 2-phase time interleave."""
    assert S == 2 and K_up % 2 == 0, "polyphase ConvTranspose path assumes stride=2, even kernel"
    B, Cin, L = x.shape
    skip = skip[..., :L]
    Cm = p["w1"].shape[0]
    Co = p["w2"].shape[0]
    Kd = p["wdep"].shape[0]
    hph = K_up // 2
    P_len = L + hph - 1
    kern = functools.partial(_decoder_kernel, has_linear=lin_w is not None, K_up=K_up, L=L)
    in_specs = [
        pl.BlockSpec((1, Cin, L), lambda b: (b, 0, 0)),
        pl.BlockSpec((1, Cin, L), lambda b: (b, 0, 0)),
    ]
    args = [x, skip]
    if lin_w is not None:
        in_specs.append(pl.BlockSpec((Cin, Cin), lambda b: (0, 0)))
        args.append(lin_w)
    in_specs += [
        pl.BlockSpec((Cm, Cin), lambda b: (0, 0)),
        pl.BlockSpec((Cm, 1), lambda b: (0, 0)),
        pl.BlockSpec((Kd, Cm, 1), lambda b: (0, 0, 0)),
        pl.BlockSpec((Cm, 1), lambda b: (0, 0)),
        pl.BlockSpec((Co, Cm), lambda b: (0, 0)),
        pl.BlockSpec((Co, 1), lambda b: (0, 0)),
        pl.BlockSpec((Co, Cin), lambda b: (0, 0)),
        pl.BlockSpec((Co, 1), lambda b: (0, 0)),
        pl.BlockSpec((K_up, Co, Co), lambda b: (0, 0, 0)),
        pl.BlockSpec((Co, 1), lambda b: (0, 0)),
    ]
    args += [p["w1"], p["t1"], p["wdep"], p["tdep"], p["w2"], p["t2"],
             p["wr"], p["tr"], p["up_w"], p["up_t"]]
    o = pl.pallas_call(
        kern,
        out_shape=jax.ShapeDtypeStruct((B, 2, Co, P_len), jnp.float32),
        grid=(B,),
        in_specs=in_specs,
        out_specs=pl.BlockSpec((1, 2, Co, P_len), lambda b: (b, 0, 0, 0)),
        scratch_shapes=[pltpu.VMEM((Cm, L + 4), jnp.float32),
                        pltpu.VMEM((Co, max(L + 2 * hph - 2, L)), jnp.float32)],
        compiler_params=pltpu.CompilerParams(dimension_semantics=("parallel",)),
    )(*args)
    # Interleave the 2 ConvTranspose output phases along time (tiny glue transpose + reshape).
    return jnp.transpose(o, (0, 2, 3, 1)).reshape(B, Co, 2 * P_len)


def mask_out_apply(x, enc_out, mg, oc):
    B, Hc, T = x.shape
    Co = oc["w"].shape[1]                                # out_conv weight: (3, Co, Hc)
    kern = functools.partial(_mask_out_kernel, T=T)
    return pl.pallas_call(
        kern,
        out_shape=jax.ShapeDtypeStruct((B, Co, T), jnp.float32),
        grid=(B,),
        in_specs=[
            pl.BlockSpec((1, Hc, T), lambda b: (b, 0, 0)),
            pl.BlockSpec((1, Hc, T), lambda b: (b, 0, 0)),
            pl.BlockSpec((Hc, Hc), lambda b: (0, 0)),
            pl.BlockSpec((Hc, 1), lambda b: (0, 0)),
            pl.BlockSpec((Hc, Hc), lambda b: (0, 0)),
            pl.BlockSpec((Hc, 1), lambda b: (0, 0)),
            pl.BlockSpec((Hc, Hc), lambda b: (0, 0)),
            pl.BlockSpec((Hc, 1), lambda b: (0, 0)),
            pl.BlockSpec((3, Co, Hc), lambda b: (0, 0, 0)),
            pl.BlockSpec((Co, 1), lambda b: (0, 0)),
        ],
        out_specs=pl.BlockSpec((1, Co, T), lambda b: (b, 0, 0)),
        scratch_shapes=[pltpu.VMEM((Hc, T + 2), jnp.float32)],
        compiler_params=pltpu.CompilerParams(dimension_semantics=("parallel",)),
    )(x, enc_out, mg["out_w"], mg["out_b"], mg["gate_w"], mg["gate_b"],
      mg["mask_w"], mg["mask_b"], oc["w"], oc["b"])


# ----------------------------------------------------------------------------- parameter init

class KeyGen:
    def __init__(self, seed):
        self.key = jax.random.PRNGKey(seed)

    def __call__(self):
        self.key, sub = jax.random.split(self.key)
        return sub


def init_conv(key, cout, cin, k):
    k1, k2 = jax.random.split(key)
    w = jax.random.normal(k1, (cout, cin, k), jnp.float32) / np.sqrt(cin * k)
    b = 0.01 * jax.random.normal(k2, (cout,), jnp.float32)
    return w, b


def init_bn(key, c):
    """Eval-mode BatchNorm1d with deterministic running stats, expressed as (scale, shift)."""
    k1, k2, k3, k4 = jax.random.split(key, 4)
    gamma = 1.0 + 0.1 * jax.random.normal(k1, (c,), jnp.float32)
    beta = 0.1 * jax.random.normal(k2, (c,), jnp.float32)
    mean = 0.05 * jax.random.normal(k3, (c,), jnp.float32)
    var = 1.0 + 0.1 * jax.random.uniform(k4, (c,), jnp.float32)
    scale = gamma / jnp.sqrt(var + 1e-5)
    shift = beta - mean * scale
    return scale, shift


def fold_conv_bn(w, b, scale, shift):
    """Fold eval-mode BN and the conv bias into the weight / an additive per-channel shift."""
    wf = w * scale.reshape((-1,) + (1,) * (w.ndim - 1))
    tf = (b * scale + shift).reshape(-1, 1)
    return wf, tf


def init_rcb(kg, cin, g1, g2):
    """ResConBlock params (see TODO(synk) note at top of file), BN/bias pre-folded."""
    c1 = int(cin * g1)
    c2 = int(cin * g2)
    w1, b1 = init_conv(kg(), c1, cin, 1)
    s1, t1 = init_bn(kg(), c1)
    w1f, t1f = fold_conv_bn(w1[:, :, 0], b1, s1, t1)
    wd, bd = init_conv(kg(), c1, 1, 5)                   # depthwise weight (c1, 1, 5)
    sd, td = init_bn(kg(), c1)
    wdf = (wd[:, 0, :] * sd[:, None])                    # (c1, 5)
    wdf = jnp.transpose(wdf, (1, 0)).reshape(5, c1, 1)   # tap-major for clean in-kernel indexing
    tdf = (bd * sd + td).reshape(-1, 1)
    w2, b2 = init_conv(kg(), c2, c1, 1)
    s2, t2 = init_bn(kg(), c2)
    w2f, t2f = fold_conv_bn(w2[:, :, 0], b2, s2, t2)
    wr, br = init_conv(kg(), c2, cin, 1)
    sr, tr = init_bn(kg(), c2)
    wrf, trf = fold_conv_bn(wr[:, :, 0], br, sr, tr)
    return dict(w1=w1f, t1=t1f, wdep=wdf, tdep=tdf, w2=w2f, t2=t2f, wr=wrf, tr=trf)


def init_params(kg, cfg):
    H, depth, growth, K = cfg["hidden"], cfg["depth"], cfg["growth"], cfg["kernel_size"]
    in_ch = cfg["in_channels"]
    out_ch = cfg["out_channels"]
    P = {}

    w, b = init_conv(kg(), H, in_ch, 3)
    s, t = init_bn(kg(), H)
    wf, tf = fold_conv_bn(w, b, s, t)
    P["in_conv"] = dict(w=jnp.transpose(wf, (2, 0, 1)), t=tf)        # (3, H, in_ch)

    w, b = init_conv(kg(), in_ch, H, 3)
    P["out_conv"] = dict(w=jnp.transpose(w, (2, 0, 1)), b=b.reshape(-1, 1))  # (3, in_ch, H)

    ic = in_ch * H
    oc = out_ch * growth
    encs, decs = [], []
    for layer in range(depth):
        # Encoder(ic, oc*H): down_conv(Conv1d(ic,ic,K,S)+BN+ReLU) then ResConBlock(ic, 2, 2)
        dw, db = init_conv(kg(), ic, ic, K)
        ds, dt = init_bn(kg(), ic)
        dwf, dtf = fold_conv_bn(dw, db, ds, dt)
        enc = dict(down_w=jnp.transpose(dwf, (2, 0, 1)), down_t=dtf)  # (K, ic, ic)
        enc.update(init_rcb(kg, ic, 2.0, 2.0))
        encs.append(enc)

        # Decoder(oc*H, ic): ResConBlock(oc*H, 2, 1/2) then ConvTranspose1d(ic, ic, K, S)+BN+ReLU
        uw, ub = init_conv(kg(), ic, ic, K)              # ConvTranspose weight (Cin, Cout, K)
        us, ut = init_bn(kg(), ic)
        up_w = jnp.transpose(uw, (2, 1, 0)) * us[None, :, None]       # (K, Cout, Cin), BN-scaled
        up_t = (ub * us + ut).reshape(-1, 1)
        dec = init_rcb(kg, oc * H, 2.0, 0.5)
        dec.update(up_w=up_w, up_t=up_t)
        decs.append(dec)

        ic = H * 2 ** (layer + 1)
        oc *= growth
    decs.reverse()
    P["encoders"] = encs
    P["decoders"] = decs

    hdim = H * growth ** depth
    P["linear_w"] = jax.random.normal(kg(), (hdim, hdim), jnp.float32) / np.sqrt(hdim)

    mg = {}
    for name in ("out", "gate", "mask"):
        w, b = init_conv(kg(), H, H, 1)
        mg[name + "_w"] = w[:, :, 0]
        mg[name + "_b"] = b.reshape(-1, 1)
    P["mask_gate"] = mg
    return P


# ----------------------------------------------------------------------------- model forward

def manner_block_forward(x, P, cfg):
    depth, K, S = cfg["depth"], cfg["kernel_size"], cfg["stride"]

    # in_conv: Conv1d(in_channels, hidden, 3, padding=1) + BN + ReLU   [1 fused kernel]
    x = in_conv_apply(x, P["in_conv"])
    enc_out = x
    skips = []
    for l in range(depth):
        # down_conv + ResConBlock fused into one kernel per encoder level
        x = encoder_apply(x, P["encoders"][l], K=K, S=S)
        # TODO(synk): MultiviewAttentionBlock (layer == depth-1) source not provided; omitted.
        skips.append(x)

    for l in range(depth):
        skip = skips.pop(-1)
        # Linear(hdim, hdim, bias=False)+ReLU (the reference permute/Linear/permute) is fused
        # into the first decoder kernel's prologue; skip-add / ResConBlock / ConvTranspose+BN+ReLU
        # are all fused in the same kernel.
        lin_w = P["linear_w"] if l == 0 else None
        x = decoder_apply(x, skip, P["decoders"][l], lin_w=lin_w, K_up=K, S=S)
        # TODO(synk): decoder MultiviewAttentionBlock (layer == depth-1) omitted (source not provided).

    # MaskGate * enc_out + out_conv fused into one kernel
    x = mask_out_apply(x, enc_out, P["mask_gate"], P["out_conv"])
    return x


# ----------------------------------------------------------------------------- main

if __name__ == "__main__":
    cfg = dict(in_channels=1, out_channels=1, hidden=16, depth=2,
               kernel_size=4, stride=2, growth=2, head=4, segment_len=8)
    B, T = 2, 62   # T chosen as a "valid length" so encoder/decoder lengths round-trip exactly

    kg = KeyGen(0)
    params = init_params(kg, cfg)
    x = jax.random.normal(jax.random.PRNGKey(0), (B, cfg["in_channels"], T), jnp.float32)

    fwd = jax.jit(functools.partial(manner_block_forward, cfg=cfg))
    out = fwd(x, params)
    out = jax.block_until_ready(out)

    assert out.shape == (B, cfg["in_channels"], T), out.shape
    assert bool(jnp.all(jnp.isfinite(out)))
    print("KERNEL_OK")
</pallas_src>

<mosaic_0001>
module attributes {stable_mosaic.version = 11 : i64} {
  func.func @_in_conv_kernel(%arg0: i32, %arg1: memref<1x1x62xf32, #tpu.memory_space<vmem>>, %arg2: memref<3x16x1xf32, #tpu.memory_space<vmem>>, %arg3: memref<16x1xf32, #tpu.memory_space<vmem>>, %arg4: memref<1x16x62xf32, #tpu.memory_space<vmem>>, %arg5: memref<1x64xf32, #tpu.memory_space<vmem>>) attributes {dimension_semantics = [#tpu.dimension_semantics<parallel>], iteration_bounds = array<i64: 2>, scalar_prefetch = 0 : i64, scratch_operands = 1 : i64, tpu.core_type = #tpu.core_type<tc>, window_params = [{transform_indices = @transform_0, window_bounds = array<i64: 1, 1, 62>}, {pipeline_mode = #tpu.pipeline_mode<synchronous>, transform_indices = @transform_1, window_bounds = array<i64: 3, 16, 1>}, {pipeline_mode = #tpu.pipeline_mode<synchronous>, transform_indices = @transform_2, window_bounds = array<i64: 16, 1>}, {transform_indices = @transform_3, window_bounds = array<i64: 1, 16, 62>}]} {
    %cst = arith.constant 0.000000e+00 : f32
    %0 = vector.broadcast %cst : f32 to vector<1x1xf32>
    %c0 = arith.constant 0 : index
    %c0_0 = arith.constant 0 : index
    %1 = vector.load %arg5[%c0, %c0_0] : memref<1x64xf32, #tpu.memory_space<vmem>>, vector<1x1xf32>
    tpu.vector_store %arg5[%c0, %c0_0], %0 {strides = array<i32>} : memref<1x64xf32, #tpu.memory_space<vmem>>, vector<1x1xf32>,
    %cst_1 = arith.constant 0.000000e+00 : f32
    %2 = vector.broadcast %cst_1 : f32 to vector<1x1xf32>
    %c0_2 = arith.constant 0 : index
    %c63 = arith.constant 63 : index
    %3 = vector.load %arg5[%c0_2, %c63] : memref<1x64xf32, #tpu.memory_space<vmem>>, vector<1x1xf32>
    tpu.vector_store %arg5[%c0_2, %c63], %2 {strides = array<i32>} : memref<1x64xf32, #tpu.memory_space<vmem>>, vector<1x1xf32>,
    %c0_3 = arith.constant 0 : index
    %c0_4 = arith.constant 0 : index
    %c0_5 = arith.constant 0 : index
    %4 = vector.load %arg1[%c0_3, %c0_4, %c0_5] : memref<1x1x62xf32, #tpu.memory_space<vmem>>, vector<1x1x62xf32>
    %5 = vector.shape_cast %4 : vector<1x1x62xf32> to vector<1x62xf32>
    %c0_6 = arith.constant 0 : index
    %c1 = arith.constant 1 : index
    %6 = vector.load %arg5[%c0_6, %c1] : memref<1x64xf32, #tpu.memory_space<vmem>>, vector<1x62xf32>
    tpu.vector_store %arg5[%c0_6, %c1], %5 {strides = array<i32>} : memref<1x64xf32, #tpu.memory_space<vmem>>, vector<1x62xf32>,
    %cst_7 = arith.constant 0.000000e+00 : f32
    %7 = vector.broadcast %cst_7 : f32 to vector<16x62xf32>
    %c0_8 = arith.constant 0 : index
    %c0_9 = arith.constant 0 : index
    %c0_10 = arith.constant 0 : index
    %8 = vector.load %arg2[%c0_8, %c0_9, %c0_10] : memref<3x16x1xf32, #tpu.memory_space<vmem>>, vector<1x16x1xf32>
    %9 = vector.shape_cast %8 : vector<1x16x1xf32> to vector<16x1xf32>
    %c0_11 = arith.constant 0 : index
    %c0_12 = arith.constant 0 : index
    %10 = vector.load %arg5[%c0_11, %c0_12] : memref<1x64xf32, #tpu.memory_space<vmem>>, vector<1x62xf32>
    %11 = vector.broadcast %9 : vector<16x1xf32> to vector<16x62xf32>
    %12 = vector.broadcast %10 : vector<1x62xf32> to vector<16x62xf32>
    %13 = arith.mulf %11, %12 : vector<16x62xf32>
    %14 = arith.addf %7, %13 : vector<16x62xf32>
    %c1_13 = arith.constant 1 : index
    %c0_14 = arith.constant 0 : index
    %c0_15 = arith.constant 0 : index
    %15 = vector.load %arg2[%c1_13, %c0_14, %c0_15] : memref<3x16x1xf32, #tpu.memory_space<vmem>>, vector<1x16x1xf32>
    %16 = vector.shape_cast %15 : vector<1x16x1xf32> to vector<16x1xf32>
    %c0_16 = arith.constant 0 : index
    %c1_17 = arith.constant 1 : index
    %17 = vector.load %arg5[%c0_16, %c1_17] : memref<1x64xf32, #tpu.memory_space<vmem>>, vector<1x62xf32>
    %18 = vector.broadcast %16 : vector<16x1xf32> to vector<16x62xf32>
    %19 = vector.broadcast %17 : vector<1x62xf32> to vector<16x62xf32>
    %20 = arith.mulf %18, %19 : vector<16x62xf32>
    %21 = arith.addf %14, %20 : vector<16x62xf32>
    %c2 = arith.constant 2 : index
    %c0_18 = arith.constant 0 : index
    %c0_19 = arith.constant 0 : index
    %22 = vector.load %arg2[%c2, %c0_18, %c0_19] : memref<3x16x1xf32, #tpu.memory_space<vmem>>, vector<1x16x1xf32>
    %23 = vector.shape_cast %22 : vector<1x16x1xf32> to vector<16x1xf32>
    %c0_20 = arith.constant 0 : index
    %c2_21 = arith.constant 2 : index
    %24 = vector.load %arg5[%c0_20, %c2_21] : memref<1x64xf32, #tpu.memory_space<vmem>>, vector<1x62xf32>
    %25 = vector.broadcast %23 : vector<16x1xf32> to vector<16x62xf32>
    %26 = vector.broadcast %24 : vector<1x62xf32> to vector<16x62xf32>
    %27 = arith.mulf %25, %26 : vector<16x62xf32>
    %28 = arith.addf %21, %27 : vector<16x62xf32>
    %c0_22 = arith.constant 0 : index
    %c0_23 = arith.constant 0 : index
    %29 = vector.load %arg3[%c0_22, %c0_23] : memref<16x1xf32, #tpu.memory_space<vmem>>, vector<16x1xf32>
    %30 = vector.broadcast %29 : vector<16x1xf32> to vector<16x62xf32>
    %31 = arith.addf %28, %30 : vector<16x62xf32>
    %cst_24 = arith.constant 0.000000e+00 : f32
    %32 = vector.broadcast %cst_24 : f32 to vector<16x62xf32>
    %33 = arith.maximumf %31, %32 : vector<16x62xf32>
    %c0_25 = arith.constant 0 : index
    %c0_26 = arith.constant 0 : index
    %c0_27 = arith.constant 0 : index
    %34 = vector.load %arg4[%c0_25, %c0_26, %c0_27] : memref<1x16x62xf32, #tpu.memory_space<vmem>>, vector<1x16x62xf32>
    %35 = vector.shape_cast %34 : vector<1x16x62xf32> to vector<16x62xf32>
    %36 = vector.shape_cast %33 : vector<16x62xf32> to vector<1x16x62xf32>
    tpu.vector_store %arg4[%c0_25, %c0_26, %c0_27], %36 {strides = array<i32>} : memref<1x16x62xf32, #tpu.memory_space<vmem>>, vector<1x16x62xf32>,
    return
  }
  func.func @transform_0(%arg0: i32) -> (i32, i32, i32) {
    %c0_i32 = arith.constant 0 : i32
    %c0_i32_0 = arith.constant 0 : i32
    %c0_i32_1 = arith.constant 0 : i32
    return %arg0, %c0_i32, %c0_i32_0 : i32, i32, i32
  }
  func.func @transform_1(%arg0: i32) -> (i32, i32, i32) {
    %c0_i32 = arith.constant 0 : i32
    %c0_i32_0 = arith.constant 0 : i32
    %c0_i32_1 = arith.constant 0 : i32
    %c0_i32_2 = arith.constant 0 : i32
    return %c0_i32, %c0_i32_0, %c0_i32_1 : i32, i32, i32
  }
  func.func @transform_2(%arg0: i32) -> (i32, i32) {
    %c0_i32 = arith.constant 0 : i32
    %c0_i32_0 = arith.constant 0 : i32
    %c0_i32_1 = arith.constant 0 : i32
    return %c0_i32, %c0_i32_0 : i32, i32
  }
  func.func @transform_3(%arg0: i32) -> (i32, i32, i32) {
    %c0_i32 = arith.constant 0 : i32
    %c0_i32_0 = arith.constant 0 : i32
    %c0_i32_1 = arith.constant 0 : i32
    return %arg0, %c0_i32, %c0_i32_0 : i32, i32, i32
  }
}

module attributes {stable_mosaic.version = 11 : i64} {
  func.func @_encoder_kernel(%arg0: i32, %arg1: memref<1x16x31xf32, #tpu.memory_space<vmem>>, %arg2: memref<1x16x31xf32, #tpu.memory_space<vmem>>, %arg3: memref<4x16x16xf32, #tpu.memory_space<vmem>>, %arg4: memref<16x1xf32, #tpu.memory_space<vmem>>, %arg5: memref<32x16xf32, #tpu.memory_space<vmem>>, %arg6: memref<32x1xf32, #tpu.memory_space<vmem>>, %arg7: memref<5x32x1xf32, #tpu.memory_space<vmem>>, %arg8: memref<32x1xf32, #tpu.memory_space<vmem>>, %arg9: memref<32x32xf32, #tpu.memory_space<vmem>>, %arg10: memref<32x1xf32, #tpu.memory_space<vmem>>, %arg11: memref<32x16xf32, #tpu.memory_space<vmem>>, %arg12: memref<32x1xf32, #tpu.memory_space<vmem>>, %arg13: memref<1x32x30xf32, #tpu.memory_space<vmem>>, %arg14: memref<32x34xf32, #tpu.memory_space<vmem>>) attributes {dimension_semantics = [#tpu.dimension_semantics<parallel>], iteration_bounds = array<i64: 2>, scalar_prefetch = 0 : i64, scratch_operands = 1 : i64, tpu.core_type = #tpu.core_type<tc>, window_params = [{transform_indices = @transform_0, window_bounds = array<i64: 1, 16, 31>}, {transform_indices = @transform_1, window_bounds = array<i64: 1, 16, 31>}, {pipeline_mode = #tpu.pipeline_mode<synchronous>, transform_indices = @transform_2, window_bounds = array<i64: 4, 16, 16>}, {pipeline_mode = #tpu.pipeline_mode<synchronous>, transform_indices = @transform_3, window_bounds = array<i64: 16, 1>}, {pipeline_mode = #tpu.pipeline_mode<synchronous>, transform_indices = @transform_4, window_bounds = array<i64: 32, 16>}, {pipeline_mode = #tpu.pipeline_mode<synchronous>, transform_indices = @transform_5, window_bounds = array<i64: 32, 1>}, {pipeline_mode = #tpu.pipeline_mode<synchronous>, transform_indices = @transform_6, window_bounds = array<i64: 5, 32, 1>}, {pipeline_mode = #tpu.pipeline_mode<synchronous>, transform_indices = @transform_7, window_bounds = array<i64: 32, 1>}, {pipeline_mode = #tpu.pipeline_mode<synchronous>, transform_indices = @transform_8, window_bounds = array<i64: 32, 32>}, {pipeline_mode = #tpu.pipeline_mode<synchronous>, transform_indices = @transform_9, window_bounds = array<i64: 32, 1>}, {pipeline_mode = #tpu.pipeline_mode<synchronous>, transform_indices = @transform_10, window_bounds = array<i64: 32, 16>}, {pipeline_mode = #tpu.pipeline_mode<synchronous>, transform_indices = @transform_11, window_bounds = array<i64: 32, 1>}, {transform_indices = @transform_12, window_bounds = array<i64: 1, 32, 30>}]} {
    %cst = arith.constant 0.000000e+00 : f32
    %0 = vector.broadcast %cst : f32 to vector<16x30xf32>
    %c0 = arith.constant 0 : index
    %c0_0 = arith.constant 0 : index
    %c0_1 = arith.constant 0 : index
    %1 = vector.load %arg3[%c0, %c0_0, %c0_1] : memref<4x16x16xf32, #tpu.memory_space<vmem>>, vector<1x16x16xf32>
    %2 = vector.shape_cast %1 : vector<1x16x16xf32> to vector<16x16xf32>
    %c0_2 = arith.constant 0 : index
    %c0_3 = arith.constant 0 : index
    %c0_4 = arith.constant 0 : index
    %3 = vector.load %arg1[%c0_2, %c0_3, %c0_4] : memref<1x16x31xf32, #tpu.memory_space<vmem>>, vector<1x16x30xf32>
    %4 = vector.shape_cast %3 : vector<1x16x30xf32> to vector<16x30xf32>
    %cst_5 = arith.constant dense<0.000000e+00> : vector<16x30xf32>
    %5 = tpu.matmul %2, %4, %cst_5 {dimension_numbers = #tpu.dot_dimension_numbers<[1], [0], [0], [1], [0, 0, 1, 1], [], []>} : vector<16x16xf32>, vector<16x30xf32>, vector<16x30xf32> -> vector<16x30xf32>
    %6 = arith.addf %0, %5 : vector<16x30xf32>
    %c1 = arith.constant 1 : index
    %c0_6 = arith.constant 0 : index
    %c0_7 = arith.constant 0 : index
    %7 = vector.load %arg3[%c1, %c0_6, %c0_7] : memref<4x16x16xf32, #tpu.memory_space<vmem>>, vector<1x16x16xf32>
    %8 = vector.shape_cast %7 : vector<1x16x16xf32> to vector<16x16xf32>
    %c0_8 = arith.constant 0 : index
    %c0_9 = arith.constant 0 : index
    %c0_10 = arith.constant 0 : index
    %9 = vector.load %arg2[%c0_8, %c0_9, %c0_10] : memref<1x16x31xf32, #tpu.memory_space<vmem>>, vector<1x16x30xf32>
    %10 = vector.shape_cast %9 : vector<1x16x30xf32> to vector<16x30xf32>
    %cst_11 = arith.constant dense<0.000000e+00> : vector<16x30xf32>
    %11 = tpu.matmul %8, %10, %cst_11 {dimension_numbers = #tpu.dot_dimension_numbers<[1], [0], [0], [1], [0, 0, 1, 1], [], []>} : vector<16x16xf32>, vector<16x30xf32>, vector<16x30xf32> -> vector<16x30xf32>
    %12 = arith.addf %6, %11 : vector<16x30xf32>
    %c2 = arith.constant 2 : index
    %c0_12 = arith.constant 0 : index
    %c0_13 = arith.constant 0 : index
    %13 = vector.load %arg3[%c2, %c0_12, %c0_13] : memref<4x16x16xf32, #tpu.memory_space<vmem>>, vector<1x16x16xf32>
    %14 = vector.shape_cast %13 : vector<1x16x16xf32> to vector<16x16xf32>
    %c0_14 = arith.constant 0 : index
    %c0_15 = arith.constant 0 : index
    %c1_16 = arith.constant 1 : index
    %15 = vector.load %arg1[%c0_14, %c0_15, %c1_16] : memref<1x16x31xf32, #tpu.memory_space<vmem>>, vector<1x16x30xf32>
    %16 = vector.shape_cast %15 : vector<1x16x30xf32> to vector<16x30xf32>
    %cst_17 = arith.constant dense<0.000000e+00> : vector<16x30xf32>
    %17 = tpu.matmul %14, %16, %cst_17 {dimension_numbers = #tpu.dot_dimension_numbers<[1], [0], [0], [1], [0, 0, 1, 1], [], []>} : vector<16x16xf32>, vector<16x30xf32>, vector<16x30xf32> -> vector<16x30xf32>
    %18 = arith.addf %12, %17 : vector<16x30xf32>
    %c3 = arith.constant 3 : index
    %c0_18 = arith.constant 0 : index
    %c0_19 = arith.constant 0 : index
    %19 = vector.load %arg3[%c3, %c0_18, %c0_19] : memref<4x16x16xf32, #tpu.memory_space<vmem>>, vector<1x16x16xf32>
    %20 = vector.shape_cast %19 : vector<1x16x16xf32> to vector<16x16xf32>
    %c0_20 = arith.constant 0 : index
    %c0_21 = arith.constant 0 : index
    %c1_22 = arith.constant 1 : index
    %21 = vector.load %arg2[%c0_20, %c0_21, %c1_22] : memref<1x16x31xf32, #tpu.memory_space<vmem>>, vector<1x16x30xf32>
    %22 = vector.shape_cast %21 : vector<1x16x30xf32> to vector<16x30xf32>
    %cst_23 = arith.constant dense<0.000000e+00> : vector<16x30xf32>
    %23 = tpu.matmul %20, %22, %cst_23 {dimension_numbers = #tpu.dot_dimension_numbers<[1], [0], [0], [1], [0, 0, 1, 1], [], []>} : vector<16x16xf32>, vector<16x30xf32>, vector<16x30xf32> -> vector<16x30xf32>
    %24 = arith.addf %18, %23 : vector<16x30xf32>
    %c0_24 = arith.constant 0 : index
    %c0_25 = arith.constant 0 : index
    %25 = vector.load %arg4[%c0_24, %c0_25] : memref<16x1xf32, #tpu.memory_space<vmem>>, vector<16x1xf32>
    %26 = vector.broadcast %25 : vector<16x1xf32> to vector<16x30xf32>
    %27 = arith.addf %24, %26 : vector<16x30xf32>
    %cst_26 = arith.constant 0.000000e+00 : f32
    %28 = vector.broadcast %cst_26 : f32 to vector<16x30xf32>
    %29 = arith.maximumf %27, %28 : vector<16x30xf32>
    %c0_27 = arith.constant 0 : index
    %c0_28 = arith.constant 0 : index
    %30 = vector.load %arg5[%c0_27, %c0_28] : memref<32x16xf32, #tpu.memory_space<vmem>>, vector<32x16xf32>
    %cst_29 = arith.constant dense<0.000000e+00> : vector<32x30xf32>
    %31 = tpu.matmul %30, %29, %cst_29 {dimension_numbers = #tpu.dot_dimension_numbers<[1], [0], [0], [1], [0, 0, 1, 1], [], []>} : vector<32x16xf32>, vector<16x30xf32>, vector<32x30xf32> -> vector<32x30xf32>
    %c0_30 = arith.constant 0 : index
    %c0_31 = arith.constant 0 : index
    %32 = vector.load %arg6[%c0_30, %c0_31] : memref<32x1xf32, #tpu.memory_space<vmem>>, vector<32x1xf32>
    %33 = vector.broadcast %32 : vector<32x1xf32> to vector<32x30xf32>
    %34 = arith.addf %31, %33 : vector<32x30xf32>
    %cst_32 = arith.constant 0.000000e+00 : f32
    %35 = vector.broadcast %cst_32 : f32 to vector<32x30xf32>
    %36 = arith.maximumf %34, %35 : vector<32x30xf32>
    %cst_33 = arith.constant 0.000000e+00 : f32
    %37 = vector.broadcast %cst_33 : f32 to vector<32x2xf32>
    %c0_34 = arith.constant 0 : index
    %c0_35 = arith.constant 0 : index
    %38 = vector.load %arg14[%c0_34, %c0_35] : memref<32x34xf32, #tpu.memory_space<vmem>>, vector<32x2xf32>
    tpu.vector_store %arg14[%c0_34, %c0_35], %37 {strides = array<i32>} : memref<32x34xf32, #tpu.memory_space<vmem>>, vector<32x2xf32>,
    %cst_36 = arith.constant 0.000000e+00 : f32
    %39 = vector.broadcast %cst_36 : f32 to vector<32x2xf32>
    %c0_37 = arith.constant 0 : index
    %c32 = arith.constant 32 : index
    %40 = vector.load %arg14[%c0_37, %c32] : memref<32x34xf32, #tpu.memory_space<vmem>>, vector<32x2xf32>
    tpu.vector_store %arg14[%c0_37, %c32], %39 {strides = array<i32>} : memref<32x34xf32, #tpu.memory_space<vmem>>, vector<32x2xf32>,
    %c0_38 = arith.constant 0 : index
    %c2_39 = arith.constant 2 : index
    %41 = vector.load %arg14[%c0_38, %c2_39] : memref<32x34xf32, #tpu.memory_space<vmem>>, vector<32x30xf32>
    tpu.vector_store %arg14[%c0_38, %c2_39], %36 {strides = array<i32>} : memref<32x34xf32, #tpu.memory_space<vmem>>, vector<32x30xf32>,
    %cst_40 = arith.constant 0.000000e+00 : f32
    %42 = vector.broadcast %cst_40 : f32 to vector<32x30xf32>
    %c0_41 = arith.constant 0 : index
    %c0_42 = arith.constant 0 : index
    %c0_43 = arith.constant 0 : index
    %43 = vector.load %arg7[%c0_41, %c0_42, %c0_43] : memref<5x32x1xf32, #tpu.memory_space<vmem>>, vector<1x32x1xf32>
    %44 = vector.shape_cast %43 : vector<1x32x1xf32> to vector<32x1xf32>
    %c0_44 = arith.constant 0 : index
    %c0_45 = arith.constant 0 : index
    %45 = vector.load %arg14[%c0_44, %c0_45] : memref<32x34xf32, #tpu.memory_space<vmem>>, vector<32x30xf32>
    %46 = vector.broadcast %44 : vector<32x1xf32> to vector<32x30xf32>
    %47 = arith.mulf %46, %45 : vector<32x30xf32>
    %48 = arith.addf %42, %47 : vector<32x30xf32>
    %c1_46 = arith.constant 1 : index
    %c0_47 = arith.constant 0 : index
    %c0_48 = arith.constant 0 : index
    %49 = vector.load %arg7[%c1_46, %c0_47, %c0_48] : memref<5x32x1xf32, #tpu.memory_space<vmem>>, vector<1x32x1xf32>
    %50 = vector.shape_cast %49 : vector<1x32x1xf32> to vector<32x1xf32>
    %c0_49 = arith.constant 0 : index
    %c1_50 = arith.constant 1 : index
    %51 = vector.load %arg14[%c0_49, %c1_50] : memref<32x34xf32, #tpu.memory_space<vmem>>, vector<32x30xf32>
    %52 = vector.broadcast %50 : vector<32x1xf32> to vector<32x30xf32>
    %53 = arith.mulf %52, %51 : vector<32x30xf32>
    %54 = arith.addf %48, %53 : vector<32x30xf32>
    %c2_51 = arith.constant 2 : index
    %c0_52 = arith.constant 0 : index
    %c0_53 = arith.constant 0 : index
    %55 = vector.load %arg7[%c2_51, %c0_52, %c0_53] : memref<5x32x1xf32, #tpu.memory_space<vmem>>, vector<1x32x1xf32>
    %56 = vector.shape_cast %55 : vector<1x32x1xf32> to vector<32x1xf32>
    %c0_54 = arith.constant 0 : index
    %c2_55 = arith.constant 2 : index
    %57 = vector.load %arg14[%c0_54, %c2_55] : memref<32x34xf32, #tpu.memory_space<vmem>>, vector<32x30xf32>
    %58 = vector.broadcast %56 : vector<32x1xf32> to vector<32x30xf32>
    %59 = arith.mulf %58, %57 : vector<32x30xf32>
    %60 = arith.addf %54, %59 : vector<32x30xf32>
    %c3_56 = arith.constant 3 : index
    %c0_57 = arith.constant 0 : index
    %c0_58 = arith.constant 0 : index
    %61 = vector.load %arg7[%c3_56, %c0_57, %c0_58] : memref<5x32x1xf32, #tpu.memory_space<vmem>>, vector<1x32x1xf32>
    %62 = vector.shape_cast %61 : vector<1x32x1xf32> to vector<32x1xf32>
    %c0_59 = arith.constant 0 : index
    %c3_60 = arith.constant 3 : index
    %63 = vector.load %arg14[%c0_59, %c3_60] : memref<32x34xf32, #tpu.memory_space<vmem>>, vector<32x30xf32>
    %64 = vector.broadcast %62 : vector<32x1xf32> to vector<32x30xf32>
    %65 = arith.mulf %64, %63 : vector<32x30xf32>
    %66 = arith.addf %60, %65 : vector<32x30xf32>
    %c4 = arith.constant 4 : index
    %c0_61 = arith.constant 0 : index
    %c0_62 = arith.constant 0 : index
    %67 = vector.load %arg7[%c4, %c0_61, %c0_62] : memref<5x32x1xf32, #tpu.memory_space<vmem>>, vector<1x32x1xf32>
    %68 = vector.shape_cast %67 : vector<1x32x1xf32> to vector<32x1xf32>
    %c0_63 = arith.constant 0 : index
    %c4_64 = arith.constant 4 : index
    %69 = vector.load %arg14[%c0_63, %c4_64] : memref<32x34xf32, #tpu.memory_space<vmem>>, vector<32x30xf32>
    %70 = vector.broadcast %68 : vector<32x1xf32> to vector<32x30xf32>
    %71 = arith.mulf %70, %69 : vector<32x30xf32>
    %72 = arith.addf %66, %71 : vector<32x30xf32>
    %c0_65 = arith.constant 0 : index
    %c0_66 = arith.constant 0 : index
    %73 = vector.load %arg8[%c0_65, %c0_66] : memref<32x1xf32, #tpu.memory_space<vmem>>, vector<32x1xf32>
    %74 = vector.broadcast %73 : vector<32x1xf32> to vector<32x30xf32>
    %75 = arith.addf %72, %74 : vector<32x30xf32>
    %cst_67 = arith.constant 0.000000e+00 : f32
    %76 = vector.broadcast %cst_67 : f32 to vector<32x30xf32>
    %77 = arith.maximumf %75, %76 : vector<32x30xf32>
    %c0_68 = arith.constant 0 : index
    %c0_69 = arith.constant 0 : index
    %78 = vector.load %arg9[%c0_68, %c0_69] : memref<32x32xf32, #tpu.memory_space<vmem>>, vector<32x32xf32>
    %cst_70 = arith.constant dense<0.000000e+00> : vector<32x30xf32>
    %79 = tpu.matmul %78, %77, %cst_70 {dimension_numbers = #tpu.dot_dimension_numbers<[1], [0], [0], [1], [0, 0, 1, 1], [], []>} : vector<32x32xf32>, vector<32x30xf32>, vector<32x30xf32> -> vector<32x30xf32>
    %c0_71 = arith.constant 0 : index
    %c0_72 = arith.constant 0 : index
    %80 = vector.load %arg10[%c0_71, %c0_72] : memref<32x1xf32, #tpu.memory_space<vmem>>, vector<32x1xf32>
    %81 = vector.broadcast %80 : vector<32x1xf32> to vector<32x30xf32>
    %82 = arith.addf %79, %81 : vector<32x30xf32>
    %cst_73 = arith.constant 0.000000e+00 : f32
    %83 = vector.broadcast %cst_73 : f32 to vector<32x30xf32>
    %84 = arith.maximumf %82, %83 : vector<32x30xf32>
    %c0_74 = arith.constant 0 : index
    %c0_75 = arith.constant 0 : index
    %85 = vector.load %arg11[%c0_74, %c0_75] : memref<32x16xf32, #tpu.memory_space<vmem>>, vector<32x16xf32>
    %cst_76 = arith.constant dense<0.000000e+00> : vector<32x30xf32>
    %86 = tpu.matmul %85, %29, %cst_76 {dimension_numbers = #tpu.dot_dimension_numbers<[1], [0], [0], [1], [0, 0, 1, 1], [], []>} : vector<32x16xf32>, vector<16x30xf32>, vector<32x30xf32> -> vector<32x30xf32>
    %c0_77 = arith.constant 0 : index
    %c0_78 = arith.constant 0 : index
    %87 = vector.load %arg12[%c0_77, %c0_78] : memref<32x1xf32, #tpu.memory_space<vmem>>, vector<32x1xf32>
    %88 = vector.broadcast %87 : vector<32x1xf32> to vector<32x30xf32>
    %89 = arith.addf %86, %88 : vector<32x30xf32>
    %cst_79 = arith.constant 0.000000e+00 : f32
    %90 = vector.broadcast %cst_79 : f32 to vector<32x30xf32>
    %91 = arith.maximumf %89, %90 : vector<32x30xf32>
    %92 = arith.addf %84, %91 : vector<32x30xf32>
    %c0_80 = arith.constant 0 : index
    %c0_81 = arith.constant 0 : index
    %c0_82 = arith.constant 0 : index
    %93 = vector.load %arg13[%c0_80, %c0_81, %c0_82] : memref<1x32x30xf32, #tpu.memory_space<vmem>>, vector<1x32x30xf32>
    %94 = vector.shape_cast %93 : vector<1x32x30xf32> to vector<32x30xf32>
    %95 = vector.shape_cast %92 : vector<32x30xf32> to vector<1x32x30xf32>
    tpu.vector_store %arg13[%c0_80, %c0_81, %c0_82], %95 {strides = array<i32>} : memref<1x32x30xf32, #tpu.memory_space<vmem>>, vector<1x32x30xf32>,
    return
  }
  func.func @transform_0(%arg0: i32) -> (i32, i32, i32) {
    %c0_i32 = arith.constant 0 : i32
    %c0_i32_0 = arith.constant 0 : i32
    %c0_i32_1 = arith.constant 0 : i32
    return %arg0, %c0_i32, %c0_i32_0 : i32, i32, i32
  }
  func.func @transform_1(%arg0: i32) -> (i32, i32, i32) {
    %c0_i32 = arith.constant 0 : i32
    %c0_i32_0 = arith.constant 0 : i32
    %c0_i32_1 = arith.constant 0 : i32
    return %arg0, %c0_i32, %c0_i32_0 : i32, i32, i32
  }
  func.func @transform_2(%arg0: i32) -> (i32, i32, i32) {
    %c0_i32 = arith.constant 0 : i32
    %c0_i32_0 = arith.constant 0 : i32
    %c0_i32_1 = arith.constant 0 : i32
    %c0_i32_2 = arith.constant 0 : i32
    return %c0_i32, %c0_i32_0, %c0_i32_1 : i32, i32, i32
  }
  func.func @transform_3(%arg0: i32) -> (i32, i32) {
    %c0_i32 = arith.constant 0 : i32
    %c0_i32_0 = arith.constant 0 : i32
    %c0_i32_1 = arith.constant 0 : i32
    return %c0_i32, %c0_i32_0 : i32, i32
  }
  func.func @transform_4(%arg0: i32) -> (i32, i32) {
    %c0_i32 = arith.constant 0 : i32
    %c0_i32_0 = arith.constant 0 : i32
    %c0_i32_1 = arith.constant 0 : i32
    return %c0_i32, %c0_i32_0 : i32, i32
  }
  func.func @transform_5(%arg0: i32) -> (i32, i32) {
    %c0_i32 = arith.constant 0 : i32
    %c0_i32_0 = arith.constant 0 : i32
    %c0_i32_1 = arith.constant 0 : i32
    return %c0_i32, %c0_i32_0 : i32, i32
  }
  func.func @transform_6(%arg0: i32) -> (i32, i32, i32) {
    %c0_i32 = arith.constant 0 : i32
    %c0_i32_0 = arith.constant 0 : i32
    %c0_i32_1 = arith.constant 0 : i32
    %c0_i32_2 = arith.constant 0 : i32
    return %c0_i32, %c0_i32_0, %c0_i32_1 : i32, i32, i32
  }
  func.func @transform_7(%arg0: i32) -> (i32, i32) {
    %c0_i32 = arith.constant 0 : i32
    %c0_i32_0 = arith.constant 0 : i32
    %c0_i32_1 = arith.constant 0 : i32
    return %c0_i32, %c0_i32_0 : i32, i32
  }
  func.func @transform_8(%arg0: i32) -> (i32, i32) {
    %c0_i32 = arith.constant 0 : i32
    %c0_i32_0 = arith.constant 0 : i32
    %c0_i32_1 = arith.constant 0 : i32
    return %c0_i32, %c0_i32_0 : i32, i32
  }
  func.func @transform_9(%arg0: i32) -> (i32, i32) {
    %c0_i32 = arith.constant 0 : i32
    %c0_i32_0 = arith.constant 0 : i32
    %c0_i32_1 = arith.constant 0 : i32
    return %c0_i32, %c0_i32_0 : i32, i32
  }
  func.func @transform_10(%arg0: i32) -> (i32, i32) {
    %c0_i32 = arith.constant 0 : i32
    %c0_i32_0 = arith.constant 0 : i32
    %c0_i32_1 = arith.constant 0 : i32
    return %c0_i32, %c0_i32_0 : i32, i32
  }
  func.func @transform_11(%arg0: i32) -> (i32, i32) {
    %c0_i32 = arith.constant 0 : i32
    %c0_i32_0 = arith.constant 0 : i32
    %c0_i32_1 = arith.constant 0 : i32
    return %c0_i32, %c0_i32_0 : i32, i32
  }
  func.func @transform_12(%arg0: i32) -> (i32, i32, i32) {
    %c0_i32 = arith.constant 0 : i32
    %c0_i32_0 = arith.constant 0 : i32
    %c0_i32_1 = arith.constant 0 : i32
    return %arg0, %c0_i32, %c0_i32_0 : i32, i32, i32
  }
}

module attributes {stable_mosaic.version = 11 : i64} {
  func.func @_encoder_kernel(%arg0: i32, %arg1: memref<1x32x15xf32, #tpu.memory_space<vmem>>, %arg2: memref<1x32x15xf32, #tpu.memory_space<vmem>>, %arg3: memref<4x32x32xf32, #tpu.memory_space<vmem>>, %arg4: memref<32x1xf32, #tpu.memory_space<vmem>>, %arg5: memref<64x32xf32, #tpu.memory_space<vmem>>, %arg6: memref<64x1xf32, #tpu.memory_space<vmem>>, %arg7: memref<5x64x1xf32, #tpu.memory_space<vmem>>, %arg8: memref<64x1xf32, #tpu.memory_space<vmem>>, %arg9: memref<64x64xf32, #tpu.memory_space<vmem>>, %arg10: memref<64x1xf32, #tpu.memory_space<vmem>>, %arg11: memref<64x32xf32, #tpu.memory_space<vmem>>, %arg12: memref<64x1xf32, #tpu.memory_space<vmem>>, %arg13: memref<1x64x14xf32, #tpu.memory_space<vmem>>, %arg14: memref<64x18xf32, #tpu.memory_space<vmem>>) attributes {dimension_semantics = [#tpu.dimension_semantics<parallel>], iteration_bounds = array<i64: 2>, scalar_prefetch = 0 : i64, scratch_operands = 1 : i64, tpu.core_type = #tpu.core_type<tc>, window_params = [{transform_indices = @transform_0, window_bounds = array<i64: 1, 32, 15>}, {transform_indices = @transform_1, window_bounds = array<i64: 1, 32, 15>}, {pipeline_mode = #tpu.pipeline_mode<synchronous>, transform_indices = @transform_2, window_bounds = array<i64: 4, 32, 32>}, {pipeline_mode = #tpu.pipeline_mode<synchronous>, transform_indices = @transform_3, window_bounds = array<i64: 32, 1>}, {pipeline_mode = #tpu.pipeline_mode<synchronous>, transform_indices = @transform_4, window_bounds = array<i64: 64, 32>}, {pipeline_mode = #tpu.pipeline_mode<synchronous>, transform_indices = @transform_5, window_bounds = array<i64: 64, 1>}, {pipeline_mode = #tpu.pipeline_mode<synchronous>, transform_indices = @transform_6, window_bounds = array<i64: 5, 64, 1>}, {pipeline_mode = #tpu.pipeline_mode<synchronous>, transform_indices = @transform_7, window_bounds = array<i64: 64, 1>}, {pipeline_mode = #tpu.pipeline_mode<synchronous>, transform_indices = @transform_8, window_bounds = array<i64: 64, 64>}, {pipeline_mode = #tpu.pipeline_mode<synchronous>, transform_indices = @transform_9, window_bounds = array<i64: 64, 1>}, {pipeline_mode = #tpu.pipeline_mode<synchronous>, transform_indices = @transform_10, window_bounds = array<i64: 64, 32>}, {pipeline_mode = #tpu.pipeline_mode<synchronous>, transform_indices = @transform_11, window_bounds = array<i64: 64, 1>}, {transform_indices = @transform_12, window_bounds = array<i64: 1, 64, 14>}]} {
    %cst = arith.constant 0.000000e+00 : f32
    %0 = vector.broadcast %cst : f32 to vector<32x14xf32>
    %c0 = arith.constant 0 : index
    %c0_0 = arith.constant 0 : index
    %c0_1 = arith.constant 0 : index
    %1 = vector.load %arg3[%c0, %c0_0, %c0_1] : memref<4x32x32xf32, #tpu.memory_space<vmem>>, vector<1x32x32xf32>
    %2 = vector.shape_cast %1 : vector<1x32x32xf32> to vector<32x32xf32>
    %c0_2 = arith.constant 0 : index
    %c0_3 = arith.constant 0 : index
    %c0_4 = arith.constant 0 : index
    %3 = vector.load %arg1[%c0_2, %c0_3, %c0_4] : memref<1x32x15xf32, #tpu.memory_space<vmem>>, vector<1x32x14xf32>
    %4 = vector.shape_cast %3 : vector<1x32x14xf32> to vector<32x14xf32>
    %cst_5 = arith.constant dense<0.000000e+00> : vector<32x14xf32>
    %5 = tpu.matmul %2, %4, %cst_5 {dimension_numbers = #tpu.dot_dimension_numbers<[1], [0], [0], [1], [0, 0, 1, 1], [], []>} : vector<32x32xf32>, vector<32x14xf32>, vector<32x14xf32> -> vector<32x14xf32>
    %6 = arith.addf %0, %5 : vector<32x14xf32>
    %c1 = arith.constant 1 : index
    %c0_6 = arith.constant 0 : index
    %c0_7 = arith.constant 0 : index
    %7 = vector.load %arg3[%c1, %c0_6, %c0_7] : memref<4x32x32xf32, #tpu.memory_space<vmem>>, vector<1x32x32xf32>
    %8 = vector.shape_cast %7 : vector<1x32x32xf32> to vector<32x32xf32>
    %c0_8 = arith.constant 0 : index
    %c0_9 = arith.constant 0 : index
    %c0_10 = arith.constant 0 : index
    %9 = vector.load %arg2[%c0_8, %c0_9, %c0_10] : memref<1x32x15xf32, #tpu.memory_space<vmem>>, vector<1x32x14xf32>
    %10 = vector.shape_cast %9 : vector<1x32x14xf32> to vector<32x14xf32>
    %cst_11 = arith.constant dense<0.000000e+00> : vector<32x14xf32>
    %11 = tpu.matmul %8, %10, %cst_11 {dimension_numbers = #tpu.dot_dimension_numbers<[1], [0], [0], [1], [0, 0, 1, 1], [], []>} : vector<32x32xf32>, vector<32x14xf32>, vector<32x14xf32> -> vector<32x14xf32>
    %12 = arith.addf %6, %11 : vector<32x14xf32>
    %c2 = arith.constant 2 : index
    %c0_12 = arith.constant 0 : index
    %c0_13 = arith.constant 0 : index
    %13 = vector.load %arg3[%c2, %c0_12, %c0_13] : memref<4x32x32xf32, #tpu.memory_space<vmem>>, vector<1x32x32xf32>
    %14 = vector.shape_cast %13 : vector<1x32x32xf32> to vector<32x32xf32>
    %c0_14 = arith.constant 0 : index
    %c0_15 = arith.constant 0 : index
    %c1_16 = arith.constant 1 : index
    %15 = vector.load %arg1[%c0_14, %c0_15, %c1_16] : memref<1x32x15xf32, #tpu.memory_space<vmem>>, vector<1x32x14xf32>
    %16 = vector.shape_cast %15 : vector<1x32x14xf32> to vector<32x14xf32>
    %cst_17 = arith.constant dense<0.000000e+00> : vector<32x14xf32>
    %17 = tpu.matmul %14, %16, %cst_17 {dimension_numbers = #tpu.dot_dimension_numbers<[1], [0], [0], [1], [0, 0, 1, 1], [], []>} : vector<32x32xf32>, vector<32x14xf32>, vector<32x14xf32> -> vector<32x14xf32>
    %18 = arith.addf %12, %17 : vector<32x14xf32>
    %c3 = arith.constant 3 : index
    %c0_18 = arith.constant 0 : index
    %c0_19 = arith.constant 0 : index
    %19 = vector.load %arg3[%c3, %c0_18, %c0_19] : memref<4x32x32xf32, #tpu.memory_space<vmem>>, vector<1x32x32xf32>
    %20 = vector.shape_cast %19 : vector<1x32x32xf32> to vector<32x32xf32>
    %c0_20 = arith.constant 0 : index
    %c0_21 = arith.constant 0 : index
    %c1_22 = arith.constant 1 : index
    %21 = vector.load %arg2[%c0_20, %c0_21, %c1_22] : memref<1x32x15xf32, #tpu.memory_space<vmem>>, vector<1x32x14xf32>
    %22 = vector.shape_cast %21 : vector<1x32x14xf32> to vector<32x14xf32>
    %cst_23 = arith.constant dense<0.000000e+00> : vector<32x14xf32>
    %23 = tpu.matmul %20, %22, %cst_23 {dimension_numbers = #tpu.dot_dimension_numbers<[1], [0], [0], [1], [0, 0, 1, 1], [], []>} : vector<32x32xf32>, vector<32x14xf32>, vector<32x14xf32> -> vector<32x14xf32>
    %24 = arith.addf %18, %23 : vector<32x14xf32>
    %c0_24 = arith.constant 0 : index
    %c0_25 = arith.constant 0 : index
    %25 = vector.load %arg4[%c0_24, %c0_25] : memref<32x1xf32, #tpu.memory_space<vmem>>, vector<32x1xf32>
    %26 = vector.broadcast %25 : vector<32x1xf32> to vector<32x14xf32>
    %27 = arith.addf %24, %26 : vector<32x14xf32>
    %cst_26 = arith.constant 0.000000e+00 : f32
    %28 = vector.broadcast %cst_26 : f32 to vector<32x14xf32>
    %29 = arith.maximumf %27, %28 : vector<32x14xf32>
    %c0_27 = arith.constant 0 : index
    %c0_28 = arith.constant 0 : index
    %30 = vector.load %arg5[%c0_27, %c0_28] : memref<64x32xf32, #tpu.memory_space<vmem>>, vector<64x32xf32>
    %cst_29 = arith.constant dense<0.000000e+00> : vector<64x14xf32>
    %31 = tpu.matmul %30, %29, %cst_29 {dimension_numbers = #tpu.dot_dimension_numbers<[1], [0], [0], [1], [0, 0, 1, 1], [], []>} : vector<64x32xf32>, vector<32x14xf32>, vector<64x14xf32> -> vector<64x14xf32>
    %c0_30 = arith.constant 0 : index
    %c0_31 = arith.constant 0 : index
    %32 = vector.load %arg6[%c0_30, %c0_31] : memref<64x1xf32, #tpu.memory_space<vmem>>, vector<64x1xf32>
    %33 = vector.broadcast %32 : vector<64x1xf32> to vector<64x14xf32>
    %34 = arith.addf %31, %33 : vector<64x14xf32>
    %cst_32 = arith.constant 0.000000e+00 : f32
    %35 = vector.broadcast %cst_32 : f32 to vector<64x14xf32>
    %36 = arith.maximumf %34, %35 : vector<64x14xf32>
    %cst_33 = arith.constant 0.000000e+00 : f32
    %37 = vector.broadcast %cst_33 : f32 to vector<64x2xf32>
    %c0_34 = arith.constant 0 : index
    %c0_35 = arith.constant 0 : index
    %38 = vector.load %arg14[%c0_34, %c0_35] : memref<64x18xf32, #tpu.memory_space<vmem>>, vector<64x2xf32>
    tpu.vector_store %arg14[%c0_34, %c0_35], %37 {strides = array<i32>} : memref<64x18xf32, #tpu.memory_space<vmem>>, vector<64x2xf32>,
    %cst_36 = arith.constant 0.000000e+00 : f32
    %39 = vector.broadcast %cst_36 : f32 to vector<64x2xf32>
    %c0_37 = arith.constant 0 : index
    %c16 = arith.constant 16 : index
    %40 = vector.load %arg14[%c0_37, %c16] : memref<64x18xf32, #tpu.memory_space<vmem>>, vector<64x2xf32>
    tpu.vector_store %arg14[%c0_37, %c16], %39 {strides = array<i32>} : memref<64x18xf32, #tpu.memory_space<vmem>>, vector<64x2xf32>,
    %c0_38 = arith.constant 0 : index
    %c2_39 = arith.constant 2 : index
    %41 = vector.load %arg14[%c0_38, %c2_39] : memref<64x18xf32, #tpu.memory_space<vmem>>, vector<64x14xf32>
    tpu.vector_store %arg14[%c0_38, %c2_39], %36 {strides = array<i32>} : memref<64x18xf32, #tpu.memory_space<vmem>>, vector<64x14xf32>,
    %cst_40 = arith.constant 0.000000e+00 : f32
    %42 = vector.broadcast %cst_40 : f32 to vector<64x14xf32>
    %c0_41 = arith.constant 0 : index
    %c0_42 = arith.constant 0 : index
    %c0_43 = arith.constant 0 : index
    %43 = vector.load %arg7[%c0_41, %c0_42, %c0_43] : memref<5x64x1xf32, #tpu.memory_space<vmem>>, vector<1x64x1xf32>
    %44 = vector.shape_cast %43 : vector<1x64x1xf32> to vector<64x1xf32>
    %c0_44 = arith.constant 0 : index
    %c0_45 = arith.constant 0 : index
    %45 = vector.load %arg14[%c0_44, %c0_45] : memref<64x18xf32, #tpu.memory_space<vmem>>, vector<64x14xf32>
    %46 = vector.broadcast %44 : vector<64x1xf32> to vector<64x14xf32>
    %47 = arith.mulf %46, %45 : vector<64x14xf32>
    %48 = arith.addf %42, %47 : vector<64x14xf32>
    %c1_46 = arith.constant 1 : index
    %c0_47 = arith.constant 0 : index
    %c0_48 = arith.constant 0 : index
    %49 = vector.load %arg7[%c1_46, %c0_47, %c0_48] : memref<5x64x1xf32, #tpu.memory_space<vmem>>, vector<1x64x1xf32>
    %50 = vector.shape_cast %49 : vector<1x64x1xf32> to vector<64x1xf32>
    %c0_49 = arith.constant 0 : index
    %c1_50 = arith.constant 1 : index
    %51 = vector.load %arg14[%c0_49, %c1_50] : memref<64x18xf32, #tpu.memory_space<vmem>>, vector<64x14xf32>
    %52 = vector.broadcast %50 : vector<64x1xf32> to vector<64x14xf32>
    %53 = arith.mulf %52, %51 : vector<64x14xf32>
    %54 = arith.addf %48, %53 : vector<64x14xf32>
    %c2_51 = arith.constant 2 : index
    %c0_52 = arith.constant 0 : index
    %c0_53 = arith.constant 0 : index
    %55 = vector.load %arg7[%c2_51, %c0_52, %c0_53] : memref<5x64x1xf32, #tpu.memory_space<vmem>>, vector<1x64x1xf32>
    %56 = vector.shape_cast %55 : vector<1x64x1xf32> to vector<64x1xf32>
    %c0_54 = arith.constant 0 : index
    %c2_55 = arith.constant 2 : index
    %57 = vector.load %arg14[%c0_54, %c2_55] : memref<64x18xf32, #tpu.memory_space<vmem>>, vector<64x14xf32>
    %58 = vector.broadcast %56 : vector<64x1xf32> to vector<64x14xf32>
    %59 = arith.mulf %58, %57 : vector<64x14xf32>
    %60 = arith.addf %54, %59 : vector<64x14xf32>
    %c3_56 = arith.constant 3 : index
    %c0_57 = arith.constant 0 : index
    %c0_58 = arith.constant 0 : index
    %61 = vector.load %arg7[%c3_56, %c0_57, %c0_58] : memref<5x64x1xf32, #tpu.memory_space<vmem>>, vector<1x64x1xf32>
    %62 = vector.shape_cast %61 : vector<1x64x1xf32> to vector<64x1xf32>
    %c0_59 = arith.constant 0 : index
    %c3_60 = arith.constant 3 : index
    %63 = vector.load %arg14[%c0_59, %c3_60] : memref<64x18xf32, #tpu.memory_space<vmem>>, vector<64x14xf32>
    %64 = vector.broadcast %62 : vector<64x1xf32> to vector<64x14xf32>
    %65 = arith.mulf %64, %63 : vector<64x14xf32>
    %66 = arith.addf %60, %65 : vector<64x14xf32>
    %c4 = arith.constant 4 : index
    %c0_61 = arith.constant 0 : index
    %c0_62 = arith.constant 0 : index
    %67 = vector.load %arg7[%c4, %c0_61, %c0_62] : memref<5x64x1xf32, #tpu.memory_space<vmem>>, vector<1x64x1xf32>
    %68 = vector.shape_cast %67 : vector<1x64x1xf32> to vector<64x1xf32>
    %c0_63 = arith.constant 0 : index
    %c4_64 = arith.constant 4 : index
    %69 = vector.load %arg14[%c0_63, %c4_64] : memref<64x18xf32, #tpu.memory_space<vmem>>, vector<64x14xf32>
    %70 = vector.broadcast %68 : vector<64x1xf32> to vector<64x14xf32>
    %71 = arith.mulf %70, %69 : vector<64x14xf32>
    %72 = arith.addf %66, %71 : vector<64x14xf32>
    %c0_65 = arith.constant 0 : index
    %c0_66 = arith.constant 0 : index
    %73 = vector.load %arg8[%c0_65, %c0_66] : memref<64x1xf32, #tpu.memory_space<vmem>>, vector<64x1xf32>
    %74 = vector.broadcast %73 : vector<64x1xf32> to vector<64x14xf32>
    %75 = arith.addf %72, %74 : vector<64x14xf32>
    %cst_67 = arith.constant 0.000000e+00 : f32
    %76 = vector.broadcast %cst_67 : f32 to vector<64x14xf32>
    %77 = arith.maximumf %75, %76 : vector<64x14xf32>
    %c0_68 = arith.constant 0 : index
    %c0_69 = arith.constant 0 : index
    %78 = vector.load %arg9[%c0_68, %c0_69] : memref<64x64xf32, #tpu.memory_space<vmem>>, vector<64x64xf32>
    %cst_70 = arith.constant dense<0.000000e+00> : vector<64x14xf32>
    %79 = tpu.matmul %78, %77, %cst_70 {dimension_numbers = #tpu.dot_dimension_numbers<[1], [0], [0], [1], [0, 0, 1, 1], [], []>} : vector<64x64xf32>, vector<64x14xf32>, vector<64x14xf32> -> vector<64x14xf32>
    %c0_71 = arith.constant 0 : index
    %c0_72 = arith.constant 0 : index
    %80 = vector.load %arg10[%c0_71, %c0_72] : memref<64x1xf32, #tpu.memory_space<vmem>>, vector<64x1xf32>
    %81 = vector.broadcast %80 : vector<64x1xf32> to vector<64x14xf32>
    %82 = arith.addf %79, %81 : vector<64x14xf32>
    %cst_73 = arith.constant 0.000000e+00 : f32
    %83 = vector.broadcast %cst_73 : f32 to vector<64x14xf32>
    %84 = arith.maximumf %82, %83 : vector<64x14xf32>
    %c0_74 = arith.constant 0 : index
    %c0_75 = arith.constant 0 : index
    %85 = vector.load %arg11[%c0_74, %c0_75] : memref<64x32xf32, #tpu.memory_space<vmem>>, vector<64x32xf32>
    %cst_76 = arith.constant dense<0.000000e+00> : vector<64x14xf32>
    %86 = tpu.matmul %85, %29, %cst_76 {dimension_numbers = #tpu.dot_dimension_numbers<[1], [0], [0], [1], [0, 0, 1, 1], [], []>} : vector<64x32xf32>, vector<32x14xf32>, vector<64x14xf32> -> vector<64x14xf32>
    %c0_77 = arith.constant 0 : index
    %c0_78 = arith.constant 0 : index
    %87 = vector.load %arg12[%c0_77, %c0_78] : memref<64x1xf32, #tpu.memory_space<vmem>>, vector<64x1xf32>
    %88 = vector.broadcast %87 : vector<64x1xf32> to vector<64x14xf32>
    %89 = arith.addf %86, %88 : vector<64x14xf32>
    %cst_79 = arith.constant 0.000000e+00 : f32
    %90 = vector.broadcast %cst_79 : f32 to vector<64x14xf32>
    %91 = arith.maximumf %89, %90 : vector<64x14xf32>
    %92 = arith.addf %84, %91 : vector<64x14xf32>
    %c0_80 = arith.constant 0 : index
    %c0_81 = arith.constant 0 : index
    %c0_82 = arith.constant 0 : index
    %93 = vector.load %arg13[%c0_80, %c0_81, %c0_82] : memref<1x64x14xf32, #tpu.memory_space<vmem>>, vector<1x64x14xf32>
    %94 = vector.shape_cast %93 : vector<1x64x14xf32> to vector<64x14xf32>
    %95 = vector.shape_cast %92 : vector<64x14xf32> to vector<1x64x14xf32>
    tpu.vector_store %arg13[%c0_80, %c0_81, %c0_82], %95 {strides = array<i32>} : memref<1x64x14xf32, #tpu.memory_space<vmem>>, vector<1x64x14xf32>,
    return
  }
  func.func @transform_0(%arg0: i32) -> (i32, i32, i32) {
    %c0_i32 = arith.constant 0 : i32
    %c0_i32_0 = arith.constant 0 : i32
    %c0_i32_1 = arith.constant 0 : i32
    return %arg0, %c0_i32, %c0_i32_0 : i32, i32, i32
  }
  func.func @transform_1(%arg0: i32) -> (i32, i32, i32) {
    %c0_i32 = arith.constant 0 : i32
    %c0_i32_0 = arith.constant 0 : i32
    %c0_i32_1 = arith.constant 0 : i32
    return %arg0, %c0_i32, %c0_i32_0 : i32, i32, i32
  }
  func.func @transform_2(%arg0: i32) -> (i32, i32, i32) {
    %c0_i32 = arith.constant 0 : i32
    %c0_i32_0 = arith.constant 0 : i32
    %c0_i32_1 = arith.constant 0 : i32
    %c0_i32_2 = arith.constant 0 : i32
    return %c0_i32, %c0_i32_0, %c0_i32_1 : i32, i32, i32
  }
  func.func @transform_3(%arg0: i32) -> (i32, i32) {
    %c0_i32 = arith.constant 0 : i32
    %c0_i32_0 = arith.constant 0 : i32
    %c0_i32_1 = arith.constant 0 : i32
    return %c0_i32, %c0_i32_0 : i32, i32
  }
  func.func @transform_4(%arg0: i32) -> (i32, i32) {
    %c0_i32 = arith.constant 0 : i32
    %c0_i32_0 = arith.constant 0 : i32
    %c0_i32_1 = arith.constant 0 : i32
    return %c0_i32, %c0_i32_0 : i32, i32
  }
  func.func @transform_5(%arg0: i32) -> (i32, i32) {
    %c0_i32 = arith.constant 0 : i32
    %c0_i32_0 = arith.constant 0 : i32
    %c0_i32_1 = arith.constant 0 : i32
    return %c0_i32, %c0_i32_0 : i32, i32
  }
  func.func @transform_6(%arg0: i32) -> (i32, i32, i32) {
    %c0_i32 = arith.constant 0 : i32
    %c0_i32_0 = arith.constant 0 : i32
    %c0_i32_1 = arith.constant 0 : i32
    %c0_i32_2 = arith.constant 0 : i32
    return %c0_i32, %c0_i32_0, %c0_i32_1 : i32, i32, i32
  }
  func.func @transform_7(%arg0: i32) -> (i32, i32) {
    %c0_i32 = arith.constant 0 : i32
    %c0_i32_0 = arith.constant 0 : i32
    %c0_i32_1 = arith.constant 0 : i32
    return %c0_i32, %c0_i32_0 : i32, i32
  }
  func.func @transform_8(%arg0: i32) -> (i32, i32) {
    %c0_i32 = arith.constant 0 : i32
    %c0_i32_0 = arith.constant 0 : i32
    %c0_i32_1 = arith.constant 0 : i32
    return %c0_i32, %c0_i32_0 : i32, i32
  }
  func.func @transform_9(%arg0: i32) -> (i32, i32) {
    %c0_i32 = arith.constant 0 : i32
    %c0_i32_0 = arith.constant 0 : i32
    %c0_i32_1 = arith.constant 0 : i32
    return %c0_i32, %c0_i32_0 : i32, i32
  }
  func.func @transform_10(%arg0: i32) -> (i32, i32) {
    %c0_i32 = arith.constant 0 : i32
    %c0_i32_0 = arith.constant 0 : i32
    %c0_i32_1 = arith.constant 0 : i32
    return %c0_i32, %c0_i32_0 : i32, i32
  }
  func.func @transform_11(%arg0: i32) -> (i32, i32) {
    %c0_i32 = arith.constant 0 : i32
    %c0_i32_0 = arith.constant 0 : i32
    %c0_i32_1 = arith.constant 0 : i32
    return %c0_i32, %c0_i32_0 : i32, i32
  }
  func.func @transform_12(%arg0: i32) -> (i32, i32, i32) {
    %c0_i32 = arith.constant 0 : i32
    %c0_i32_0 = arith.constant 0 : i32
    %c0_i32_1 = arith.constant 0 : i32
    return %arg0, %c0_i32, %c0_i32_0 : i32, i32, i32
  }
}

module attributes {stable_mosaic.version = 11 : i64} {
  func.func @_decoder_kernel(%arg0: i32, %arg1: memref<1x64x14xf32, #tpu.memory_space<vmem>>, %arg2: memref<1x64x14xf32, #tpu.memory_space<vmem>>, %arg3: memref<64x64xf32, #tpu.memory_space<vmem>>, %arg4: memref<128x64xf32, #tpu.memory_space<vmem>>, %arg5: memref<128x1xf32, #tpu.memory_space<vmem>>, %arg6: memref<5x128x1xf32, #tpu.memory_space<vmem>>, %arg7: memref<128x1xf32, #tpu.memory_space<vmem>>, %arg8: memref<32x128xf32, #tpu.memory_space<vmem>>, %arg9: memref<32x1xf32, #tpu.memory_space<vmem>>, %arg10: memref<32x64xf32, #tpu.memory_space<vmem>>, %arg11: memref<32x1xf32, #tpu.memory_space<vmem>>, %arg12: memref<4x32x32xf32, #tpu.memory_space<vmem>>, %arg13: memref<32x1xf32, #tpu.memory_space<vmem>>, %arg14: memref<1x2x32x15xf32, #tpu.memory_space<vmem>>, %arg15: memref<128x18xf32, #tpu.memory_space<vmem>>, %arg16: memref<32x16xf32, #tpu.memory_space<vmem>>) attributes {dimension_semantics = [#tpu.dimension_semantics<parallel>], iteration_bounds = array<i64: 2>, scalar_prefetch = 0 : i64, scratch_operands = 2 : i64, tpu.core_type = #tpu.core_type<tc>, window_params = [{transform_indices = @transform_0, window_bounds = array<i64: 1, 64, 14>}, {transform_indices = @transform_1, window_bounds = array<i64: 1, 64, 14>}, {pipeline_mode = #tpu.pipeline_mode<synchronous>, transform_indices = @transform_2, window_bounds = array<i64: 64, 64>}, {pipeline_mode = #tpu.pipeline_mode<synchronous>, transform_indices = @transform_3, window_bounds = array<i64: 128, 64>}, {pipeline_mode = #tpu.pipeline_mode<synchronous>, transform_indices = @transform_4, window_bounds = array<i64: 128, 1>}, {pipeline_mode = #tpu.pipeline_mode<synchronous>, transform_indices = @transform_5, window_bounds = array<i64: 5, 128, 1>}, {pipeline_mode = #tpu.pipeline_mode<synchronous>, transform_indices = @transform_6, window_bounds = array<i64: 128, 1>}, {pipeline_mode = #tpu.pipeline_mode<synchronous>, transform_indices = @transform_7, window_bounds = array<i64: 32, 128>}, {pipeline_mode = #tpu.pipeline_mode<synchronous>, transform_indices = @transform_8, window_bounds = array<i64: 32, 1>}, {pipeline_mode = #tpu.pipeline_mode<synchronous>, transform_indices = @transform_9, window_bounds = array<i64: 32, 64>}, {pipeline_mode = #tpu.pipeline_mode<synchronous>, transform_indices = @transform_10, window_bounds = array<i64: 32, 1>}, {pipeline_mode = #tpu.pipeline_mode<synchronous>, transform_indices = @transform_11, window_bounds = array<i64: 4, 32, 32>}, {pipeline_mode = #tpu.pipeline_mode<synchronous>, transform_indices = @transform_12, window_bounds = array<i64: 32, 1>}, {transform_indices = @transform_13, window_bounds = array<i64: 1, 2, 32, 15>}]} {
    %c0 = arith.constant 0 : index
    %c0_0 = arith.constant 0 : index
    %c0_1 = arith.constant 0 : index
    %0 = vector.load %arg1[%c0, %c0_0, %c0_1] : memref<1x64x14xf32, #tpu.memory_space<vmem>>, vector<1x64x14xf32>
    %1 = vector.shape_cast %0 : vector<1x64x14xf32> to vector<64x14xf32>
    %c0_2 = arith.constant 0 : index
    %c0_3 = arith.constant 0 : index
    %2 = vector.load %arg3[%c0_2, %c0_3] : memref<64x64xf32, #tpu.memory_space<vmem>>, vector<64x64xf32>
    %cst = arith.constant dense<0.000000e+00> : vector<64x14xf32>
    %3 = tpu.matmul %2, %1, %cst {dimension_numbers = #tpu.dot_dimension_numbers<[1], [0], [0], [1], [0, 0, 1, 1], [], []>} : vector<64x64xf32>, vector<64x14xf32>, vector<64x14xf32> -> vector<64x14xf32>
    %cst_4 = arith.constant 0.000000e+00 : f32
    %4 = vector.broadcast %cst_4 : f32 to vector<64x14xf32>
    %5 = arith.maximumf %3, %4 : vector<64x14xf32>
    %c0_5 = arith.constant 0 : index
    %c0_6 = arith.constant 0 : index
    %c0_7 = arith.constant 0 : index
    %6 = vector.load %arg2[%c0_5, %c0_6, %c0_7] : memref<1x64x14xf32, #tpu.memory_space<vmem>>, vector<1x64x14xf32>
    %7 = vector.shape_cast %6 : vector<1x64x14xf32> to vector<64x14xf32>
    %8 = arith.addf %5, %7 : vector<64x14xf32>
    %c0_8 = arith.constant 0 : index
    %c0_9 = arith.constant 0 : index
    %9 = vector.load %arg4[%c0_8, %c0_9] : memref<128x64xf32, #tpu.memory_space<vmem>>, vector<128x64xf32>
    %cst_10 = arith.constant dense<0.000000e+00> : vector<128x14xf32>
    %10 = tpu.matmul %9, %8, %cst_10 {dimension_numbers = #tpu.dot_dimension_numbers<[1], [0], [0], [1], [0, 0, 1, 1], [], []>} : vector<128x64xf32>, vector<64x14xf32>, vector<128x14xf32> -> vector<128x14xf32>
    %c0_11 = arith.constant 0 : index
    %c0_12 = arith.constant 0 : index
    %11 = vector.load %arg5[%c0_11, %c0_12] : memref<128x1xf32, #tpu.memory_space<vmem>>, vector<128x1xf32>
    %12 = vector.broadcast %11 : vector<128x1xf32> to vector<128x14xf32>
    %13 = arith.addf %10, %12 : vector<128x14xf32>
    %cst_13 = arith.constant 0.000000e+00 : f32
    %14 = vector.broadcast %cst_13 : f32 to vector<128x14xf32>
    %15 = arith.maximumf %13, %14 : vector<128x14xf32>
    %cst_14 = arith.constant 0.000000e+00 : f32
    %16 = vector.broadcast %cst_14 : f32 to vector<128x2xf32>
    %c0_15 = arith.constant 0 : index
    %c0_16 = arith.constant 0 : index
    %17 = vector.load %arg15[%c0_15, %c0_16] : memref<128x18xf32, #tpu.memory_space<vmem>>, vector<128x2xf32>
    tpu.vector_store %arg15[%c0_15, %c0_16], %16 {strides = array<i32>} : memref<128x18xf32, #tpu.memory_space<vmem>>, vector<128x2xf32>,
    %cst_17 = arith.constant 0.000000e+00 : f32
    %18 = vector.broadcast %cst_17 : f32 to vector<128x2xf32>
    %c0_18 = arith.constant 0 : index
    %c16 = arith.constant 16 : index
    %19 = vector.load %arg15[%c0_18, %c16] : memref<128x18xf32, #tpu.memory_space<vmem>>, vector<128x2xf32>
    tpu.vector_store %arg15[%c0_18, %c16], %18 {strides = array<i32>} : memref<128x18xf32, #tpu.memory_space<vmem>>, vector<128x2xf32>,
    %c0_19 = arith.constant 0 : index
    %c2 = arith.constant 2 : index
    %20 = vector.load %arg15[%c0_19, %c2] : memref<128x18xf32, #tpu.memory_space<vmem>>, vector<128x14xf32>
    tpu.vector_store %arg15[%c0_19, %c2], %15 {strides = array<i32>} : memref<128x18xf32, #tpu.memory_space<vmem>>, vector<128x14xf32>,
    %cst_20 = arith.constant 0.000000e+00 : f32
    %21 = vector.broadcast %cst_20 : f32 to vector<128x14xf32>
    %c0_21 = arith.constant 0 : index
    %c0_22 = arith.constant 0 : index
    %c0_23 = arith.constant 0 : index
    %22 = vector.load %arg6[%c0_21, %c0_22, %c0_23] : memref<5x128x1xf32, #tpu.memory_space<vmem>>, vector<1x128x1xf32>
    %23 = vector.shape_cast %22 : vector<1x128x1xf32> to vector<128x1xf32>
    %c0_24 = arith.constant 0 : index
    %c0_25 = arith.constant 0 : index
    %24 = vector.load %arg15[%c0_24, %c0_25] : memref<128x18xf32, #tpu.memory_space<vmem>>, vector<128x14xf32>
    %25 = vector.broadcast %23 : vector<128x1xf32> to vector<128x14xf32>
    %26 = arith.mulf %25, %24 : vector<128x14xf32>
    %27 = arith.addf %21, %26 : vector<128x14xf32>
    %c1 = arith.constant 1 : index
    %c0_26 = arith.constant 0 : index
    %c0_27 = arith.constant 0 : index
    %28 = vector.load %arg6[%c1, %c0_26, %c0_27] : memref<5x128x1xf32, #tpu.memory_space<vmem>>, vector<1x128x1xf32>
    %29 = vector.shape_cast %28 : vector<1x128x1xf32> to vector<128x1xf32>
    %c0_28 = arith.constant 0 : index
    %c1_29 = arith.constant 1 : index
    %30 = vector.load %arg15[%c0_28, %c1_29] : memref<128x18xf32, #tpu.memory_space<vmem>>, vector<128x14xf32>
    %31 = vector.broadcast %29 : vector<128x1xf32> to vector<128x14xf32>
    %32 = arith.mulf %31, %30 : vector<128x14xf32>
    %33 = arith.addf %27, %32 : vector<128x14xf32>
    %c2_30 = arith.constant 2 : index
    %c0_31 = arith.constant 0 : index
    %c0_32 = arith.constant 0 : index
    %34 = vector.load %arg6[%c2_30, %c0_31, %c0_32] : memref<5x128x1xf32, #tpu.memory_space<vmem>>, vector<1x128x1xf32>
    %35 = vector.shape_cast %34 : vector<1x128x1xf32> to vector<128x1xf32>
    %c0_33 = arith.constant 0 : index
    %c2_34 = arith.constant 2 : index
    %36 = vector.load %arg15[%c0_33, %c2_34] : memref<128x18xf32, #tpu.memory_space<vmem>>, vector<128x14xf32>
    %37 = vector.broadcast %35 : vector<128x1xf32> to vector<128x14xf32>
    %38 = arith.mulf %37, %36 : vector<128x14xf32>
    %39 = arith.addf %33, %38 : vector<128x14xf32>
    %c3 = arith.constant 3 : index
    %c0_35 = arith.constant 0 : index
    %c0_36 = arith.constant 0 : index
    %40 = vector.load %arg6[%c3, %c0_35, %c0_36] : memref<5x128x1xf32, #tpu.memory_space<vmem>>, vector<1x128x1xf32>
    %41 = vector.shape_cast %40 : vector<1x128x1xf32> to vector<128x1xf32>
    %c0_37 = arith.constant 0 : index
    %c3_38 = arith.constant 3 : index
    %42 = vector.load %arg15[%c0_37, %c3_38] : memref<128x18xf32, #tpu.memory_space<vmem>>, vector<128x14xf32>
    %43 = vector.broadcast %41 : vector<128x1xf32> to vector<128x14xf32>
    %44 = arith.mulf %43, %42 : vector<128x14xf32>
    %45 = arith.addf %39, %44 : vector<128x14xf32>
    %c4 = arith.constant 4 : index
    %c0_39 = arith.constant 0 : index
    %c0_40 = arith.constant 0 : index
    %46 = vector.load %arg6[%c4, %c0_39, %c0_40] : memref<5x128x1xf32, #tpu.memory_space<vmem>>, vector<1x128x1xf32>
    %47 = vector.shape_cast %46 : vector<1x128x1xf32> to vector<128x1xf32>
    %c0_41 = arith.constant 0 : index
    %c4_42 = arith.constant 4 : index
    %48 = vector.load %arg15[%c0_41, %c4_42] : memref<128x18xf32, #tpu.memory_space<vmem>>, vector<128x14xf32>
    %49 = vector.broadcast %47 : vector<128x1xf32> to vector<128x14xf32>
    %50 = arith.mulf %49, %48 : vector<128x14xf32>
    %51 = arith.addf %45, %50 : vector<128x14xf32>
    %c0_43 = arith.constant 0 : index
    %c0_44 = arith.constant 0 : index
    %52 = vector.load %arg7[%c0_43, %c0_44] : memref<128x1xf32, #tpu.memory_space<vmem>>, vector<128x1xf32>
    %53 = vector.broadcast %52 : vector<128x1xf32> to vector<128x14xf32>
    %54 = arith.addf %51, %53 : vector<128x14xf32>
    %cst_45 = arith.constant 0.000000e+00 : f32
    %55 = vector.broadcast %cst_45 : f32 to vector<128x14xf32>
    %56 = arith.maximumf %54, %55 : vector<128x14xf32>
    %c0_46 = arith.constant 0 : index
    %c0_47 = arith.constant 0 : index
    %57 = vector.load %arg8[%c0_46, %c0_47] : memref<32x128xf32, #tpu.memory_space<vmem>>, vector<32x128xf32>
    %cst_48 = arith.constant dense<0.000000e+00> : vector<32x14xf32>
    %58 = tpu.matmul %57, %56, %cst_48 {dimension_numbers = #tpu.dot_dimension_numbers<[1], [0], [0], [1], [0, 0, 1, 1], [], []>} : vector<32x128xf32>, vector<128x14xf32>, vector<32x14xf32> -> vector<32x14xf32>
    %c0_49 = arith.constant 0 : index
    %c0_50 = arith.constant 0 : index
    %59 = vector.load %arg9[%c0_49, %c0_50] : memref<32x1xf32, #tpu.memory_space<vmem>>, vector<32x1xf32>
    %60 = vector.broadcast %59 : vector<32x1xf32> to vector<32x14xf32>
    %61 = arith.addf %58, %60 : vector<32x14xf32>
    %cst_51 = arith.constant 0.000000e+00 : f32
    %62 = vector.broadcast %cst_51 : f32 to vector<32x14xf32>
    %63 = arith.maximumf %61, %62 : vector<32x14xf32>
    %c0_52 = arith.constant 0 : index
    %c0_53 = arith.constant 0 : index
    %64 = vector.load %arg10[%c0_52, %c0_53] : memref<32x64xf32, #tpu.memory_space<vmem>>, vector<32x64xf32>
    %cst_54 = arith.constant dense<0.000000e+00> : vector<32x14xf32>
    %65 = tpu.matmul %64, %8, %cst_54 {dimension_numbers = #tpu.dot_dimension_numbers<[1], [0], [0], [1], [0, 0, 1, 1], [], []>} : vector<32x64xf32>, vector<64x14xf32>, vector<32x14xf32> -> vector<32x14xf32>
    %c0_55 = arith.constant 0 : index
    %c0_56 = arith.constant 0 : index
    %66 = vector.load %arg11[%c0_55, %c0_56] : memref<32x1xf32, #tpu.memory_space<vmem>>, vector<32x1xf32>
    %67 = vector.broadcast %66 : vector<32x1xf32> to vector<32x14xf32>
    %68 = arith.addf %65, %67 : vector<32x14xf32>
    %cst_57 = arith.constant 0.000000e+00 : f32
    %69 = vector.broadcast %cst_57 : f32 to vector<32x14xf32>
    %70 = arith.maximumf %68, %69 : vector<32x14xf32>
    %71 = arith.addf %63, %70 : vector<32x14xf32>
    %cst_58 = arith.constant 0.000000e+00 : f32
    %72 = vector.broadcast %cst_58 : f32 to vector<32x1xf32>
    %c0_59 = arith.constant 0 : index
    %c0_60 = arith.constant 0 : index
    %73 = vector.load %arg16[%c0_59, %c0_60] : memref<32x16xf32, #tpu.memory_space<vmem>>, vector<32x1xf32>
    tpu.vector_store %arg16[%c0_59, %c0_60], %72 {strides = array<i32>} : memref<32x16xf32, #tpu.memory_space<vmem>>, vector<32x1xf32>,
    %cst_61 = arith.constant 0.000000e+00 : f32
    %74 = vector.broadcast %cst_61 : f32 to vector<32x1xf32>
    %c0_62 = arith.constant 0 : index
    %c15 = arith.constant 15 : index
    %75 = vector.load %arg16[%c0_62, %c15] : memref<32x16xf32, #tpu.memory_space<vmem>>, vector<32x1xf32>
    tpu.vector_store %arg16[%c0_62, %c15], %74 {strides = array<i32>} : memref<32x16xf32, #tpu.memory_space<vmem>>, vector<32x1xf32>,
    %c0_63 = arith.constant 0 : index
    %c1_64 = arith.constant 1 : index
    %76 = vector.load %arg16[%c0_63, %c1_64] : memref<32x16xf32, #tpu.memory_space<vmem>>, vector<32x14xf32>
    tpu.vector_store %arg16[%c0_63, %c1_64], %71 {strides = array<i32>} : memref<32x16xf32, #tpu.memory_space<vmem>>, vector<32x14xf32>,
    %cst_65 = arith.constant 0.000000e+00 : f32
    %77 = vector.broadcast %cst_65 : f32 to vector<32x15xf32>
    %c0_66 = arith.constant 0 : index
    %c0_67 = arith.constant 0 : index
    %c0_68 = arith.constant 0 : index
    %78 = vector.load %arg12[%c0_66, %c0_67, %c0_68] : memref<4x32x32xf32, #tpu.memory_space<vmem>>, vector<1x32x32xf32>
    %79 = vector.shape_cast %78 : vector<1x32x32xf32> to vector<32x32xf32>
    %c0_69 = arith.constant 0 : index
    %c1_70 = arith.constant 1 : index
    %80 = vector.load %arg16[%c0_69, %c1_70] : memref<32x16xf32, #tpu.memory_space<vmem>>, vector<32x15xf32>
    %cst_71 = arith.constant dense<0.000000e+00> : vector<32x15xf32>
    %81 = tpu.matmul %79, %80, %cst_71 {dimension_numbers = #tpu.dot_dimension_numbers<[1], [0], [0], [1], [0, 0, 1, 1], [], []>} : vector<32x32xf32>, vector<32x15xf32>, vector<32x15xf32> -> vector<32x15xf32>
    %82 = arith.addf %77, %81 : vector<32x15xf32>
    %c2_72 = arith.constant 2 : index
    %c0_73 = arith.constant 0 : index
    %c0_74 = arith.constant 0 : index
    %83 = vector.load %arg12[%c2_72, %c0_73, %c0_74] : memref<4x32x32xf32, #tpu.memory_space<vmem>>, vector<1x32x32xf32>
    %84 = vector.shape_cast %83 : vector<1x32x32xf32> to vector<32x32xf32>
    %c0_75 = arith.constant 0 : index
    %c0_76 = arith.constant 0 : index
    %85 = vector.load %arg16[%c0_75, %c0_76] : memref<32x16xf32, #tpu.memory_space<vmem>>, vector<32x15xf32>
    %cst_77 = arith.constant dense<0.000000e+00> : vector<32x15xf32>
    %86 = tpu.matmul %84, %85, %cst_77 {dimension_numbers = #tpu.dot_dimension_numbers<[1], [0], [0], [1], [0, 0, 1, 1], [], []>} : vector<32x32xf32>, vector<32x15xf32>, vector<32x15xf32> -> vector<32x15xf32>
    %87 = arith.addf %82, %86 : vector<32x15xf32>
    %c0_78 = arith.constant 0 : index
    %c0_79 = arith.constant 0 : index
    %88 = vector.load %arg13[%c0_78, %c0_79] : memref<32x1xf32, #tpu.memory_space<vmem>>, vector<32x1xf32>
    %89 = vector.broadcast %88 : vector<32x1xf32> to vector<32x15xf32>
    %90 = arith.addf %87, %89 : vector<32x15xf32>
    %cst_80 = arith.constant 0.000000e+00 : f32
    %91 = vector.broadcast %cst_80 : f32 to vector<32x15xf32>
    %92 = arith.maximumf %90, %91 : vector<32x15xf32>
    %c0_81 = arith.constant 0 : index
    %c0_82 = arith.constant 0 : index
    %c0_83 = arith.constant 0 : index
    %c0_84 = arith.constant 0 : index
    %93 = vector.load %arg14[%c0_81, %c0_82, %c0_83, %c0_84] : memref<1x2x32x15xf32, #tpu.memory_space<vmem>>, vector<1x1x32x15xf32>
    %94 = vector.shape_cast %93 : vector<1x1x32x15xf32> to vector<32x15xf32>
    %95 = vector.shape_cast %92 : vector<32x15xf32> to vector<1x1x32x15xf32>
    tpu.vector_store %arg14[%c0_81, %c0_82, %c0_83, %c0_84], %95 {strides = array<i32>} : memref<1x2x32x15xf32, #tpu.memory_space<vmem>>, vector<1x1x32x15xf32>,
    %cst_85 = arith.constant 0.000000e+00 : f32
    %96 = vector.broadcast %cst_85 : f32 to vector<32x15xf32>
    %c1_86 = arith.constant 1 : index
    %c0_87 = arith.constant 0 : index
    %c0_88 = arith.constant 0 : index
    %97 = vector.load %arg12[%c1_86, %c0_87, %c0_88] : memref<4x32x32xf32, #tpu.memory_space<vmem>>, vector<1x32x32xf32>
    %98 = vector.shape_cast %97 : vector<1x32x32xf32> to vector<32x32xf32>
    %c0_89 = arith.constant 0 : index
    %c1_90 = arith.constant 1 : index
    %99 = vector.load %arg16[%c0_89, %c1_90] : memref<32x16xf32, #tpu.memory_space<vmem>>, vector<32x15xf32>
    %cst_91 = arith.constant dense<0.000000e+00> : vector<32x15xf32>
    %100 = tpu.matmul %98, %99, %cst_91 {dimension_numbers = #tpu.dot_dimension_numbers<[1], [0], [0], [1], [0, 0, 1, 1], [], []>} : vector<32x32xf32>, vector<32x15xf32>, vector<32x15xf32> -> vector<32x15xf32>
    %101 = arith.addf %96, %100 : vector<32x15xf32>
    %c3_92 = arith.constant 3 : index
    %c0_93 = arith.constant 0 : index
    %c0_94 = arith.constant 0 : index
    %102 = vector.load %arg12[%c3_92, %c0_93, %c0_94] : memref<4x32x32xf32, #tpu.memory_space<vmem>>, vector<1x32x32xf32>
    %103 = vector.shape_cast %102 : vector<1x32x32xf32> to vector<32x32xf32>
    %c0_95 = arith.constant 0 : index
    %c0_96 = arith.constant 0 : index
    %104 = vector.load %arg16[%c0_95, %c0_96] : memref<32x16xf32, #tpu.memory_space<vmem>>, vector<32x15xf32>
    %cst_97 = arith.constant dense<0.000000e+00> : vector<32x15xf32>
    %105 = tpu.matmul %103, %104, %cst_97 {dimension_numbers = #tpu.dot_dimension_numbers<[1], [0], [0], [1], [0, 0, 1, 1], [], []>} : vector<32x32xf32>, vector<32x15xf32>, vector<32x15xf32> -> vector<32x15xf32>
    %106 = arith.addf %101, %105 : vector<32x15xf32>
    %c0_98 = arith.constant 0 : index
    %c0_99 = arith.constant 0 : index
    %107 = vector.load %arg13[%c0_98, %c0_99] : memref<32x1xf32, #tpu.memory_space<vmem>>, vector<32x1xf32>
    %108 = vector.broadcast %107 : vector<32x1xf32> to vector<32x15xf32>
    %109 = arith.addf %106, %108 : vector<32x15xf32>
    %cst_100 = arith.constant 0.000000e+00 : f32
    %110 = vector.broadcast %cst_100 : f32 to vector<32x15xf32>
    %111 = arith.maximumf %109, %110 : vector<32x15xf32>
    %c0_101 = arith.constant 0 : index
    %c1_102 = arith.constant 1 : index
    %c0_103 = arith.constant 0 : index
    %c0_104 = arith.constant 0 : index
    %112 = vector.load %arg14[%c0_101, %c1_102, %c0_103, %c0_104] : memref<1x2x32x15xf32, #tpu.memory_space<vmem>>, vector<1x1x32x15xf32>
    %113 = vector.shape_cast %112 : vector<1x1x32x15xf32> to vector<32x15xf32>
    %114 = vector.shape_cast %111 : vector<32x15xf32> to vector<1x1x32x15xf32>
    tpu.vector_store %arg14[%c0_101, %c1_102, %c0_103, %c0_104], %114 {strides = array<i32>} : memref<1x2x32x15xf32, #tpu.memory_space<vmem>>, vector<1x1x32x15xf32>,
    return
  }
  func.func @transform_0(%arg0: i32) -> (i32, i32, i32) {
    %c0_i32 = arith.constant 0 : i32
    %c0_i32_0 = arith.constant 0 : i32
    %c0_i32_1 = arith.constant 0 : i32
    return %arg0, %c0_i32, %c0_i32_0 : i32, i32, i32
  }
  func.func @transform_1(%arg0: i32) -> (i32, i32, i32) {
    %c0_i32 = arith.constant 0 : i32
    %c0_i32_0 = arith.constant 0 : i32
    %c0_i32_1 = arith.constant 0 : i32
    return %arg0, %c0_i32, %c0_i32_0 : i32, i32, i32
  }
  func.func @transform_2(%arg0: i32) -> (i32, i32) {
    %c0_i32 = arith.constant 0 : i32
    %c0_i32_0 = arith.constant 0 : i32
    %c0_i32_1 = arith.constant 0 : i32
    return %c0_i32, %c0_i32_0 : i32, i32
  }
  func.func @transform_3(%arg0: i32) -> (i32, i32) {
    %c0_i32 = arith.constant 0 : i32
    %c0_i32_0 = arith.constant 0 : i32
    %c0_i32_1 = arith.constant 0 : i32
    return %c0_i32, %c0_i32_0 : i32, i32
  }
  func.func @transform_4(%arg0: i32) -> (i32, i32) {
    %c0_i32 = arith.constant 0 : i32
    %c0_i32_0 = arith.constant 0 : i32
    %c0_i32_1 = arith.constant 0 : i32
    return %c0_i32, %c0_i32_0 : i32, i32
  }
  func.func @transform_5(%arg0: i32) -> (i32, i32, i32) {
    %c0_i32 = arith.constant 0 : i32
    %c0_i32_0 = arith.constant 0 : i32
    %c0_i32_1 = arith.constant 0 : i32
    %c0_i32_2 = arith.constant 0 : i32
    return %c0_i32, %c0_i32_0, %c0_i32_1 : i32, i32, i32
  }
  func.func @transform_6(%arg0: i32) -> (i32, i32) {
    %c0_i32 = arith.constant 0 : i32
    %c0_i32_0 = arith.constant 0 : i32
    %c0_i32_1 = arith.constant 0 : i32
    return %c0_i32, %c0_i32_0 : i32, i32
  }
  func.func @transform_7(%arg0: i32) -> (i32, i32) {
    %c0_i32 = arith.constant 0 : i32
    %c0_i32_0 = arith.constant 0 : i32
    %c0_i32_1 = arith.constant 0 : i32
    return %c0_i32, %c0_i32_0 : i32, i32
  }
  func.func @transform_8(%arg0: i32) -> (i32, i32) {
    %c0_i32 = arith.constant 0 : i32
    %c0_i32_0 = arith.constant 0 : i32
    %c0_i32_1 = arith.constant 0 : i32
    return %c0_i32, %c0_i32_0 : i32, i32
  }
  func.func @transform_9(%arg0: i32) -> (i32, i32) {
    %c0_i32 = arith.constant 0 : i32
    %c0_i32_0 = arith.constant 0 : i32
    %c0_i32_1 = arith.constant 0 : i32
    return %c0_i32, %c0_i32_0 : i32, i32
  }
  func.func @transform_10(%arg0: i32) -> (i32, i32) {
    %c0_i32 = arith.constant 0 : i32
    %c0_i32_0 = arith.constant 0 : i32
    %c0_i32_1 = arith.constant 0 : i32
    return %c0_i32, %c0_i32_0 : i32, i32
  }
  func.func @transform_11(%arg0: i32) -> (i32, i32, i32) {
    %c0_i32 = arith.constant 0 : i32
    %c0_i32_0 = arith.constant 0 : i32
    %c0_i32_1 = arith.constant 0 : i32
    %c0_i32_2 = arith.constant 0 : i32
    return %c0_i32, %c0_i32_0, %c0_i32_1 : i32, i32, i32
  }
  func.func @transform_12(%arg0: i32) -> (i32, i32) {
    %c0_i32 = arith.constant 0 : i32
    %c0_i32_0 = arith.constant 0 : i32
    %c0_i32_1 = arith.constant 0 : i32
    return %c0_i32, %c0_i32_0 : i32, i32
  }
  func.func @transform_13(%arg0: i32) -> (i32, i32, i32, i32) {
    %c0_i32 = arith.constant 0 : i32
    %c0_i32_0 = arith.constant 0 : i32
    %c0_i32_1 = arith.constant 0 : i32
    %c0_i32_2 = arith.constant 0 : i32
    return %arg0, %c0_i32, %c0_i32_0, %c0_i32_1 : i32, i32, i32, i32
  }
}

module attributes {stable_mosaic.version = 11 : i64} {
  func.func @_decoder_kernel(%arg0: i32, %arg1: memref<1x32x30xf32, #tpu.memory_space<vmem>>, %arg2: memref<1x32x30xf32, #tpu.memory_space<vmem>>, %arg3: memref<64x32xf32, #tpu.memory_space<vmem>>, %arg4: memref<64x1xf32, #tpu.memory_space<vmem>>, %arg5: memref<5x64x1xf32, #tpu.memory_space<vmem>>, %arg6: memref<64x1xf32, #tpu.memory_space<vmem>>, %arg7: memref<16x64xf32, #tpu.memory_space<vmem>>, %arg8: memref<16x1xf32, #tpu.memory_space<vmem>>, %arg9: memref<16x32xf32, #tpu.memory_space<vmem>>, %arg10: memref<16x1xf32, #tpu.memory_space<vmem>>, %arg11: memref<4x16x16xf32, #tpu.memory_space<vmem>>, %arg12: memref<16x1xf32, #tpu.memory_space<vmem>>, %arg13: memref<1x2x16x31xf32, #tpu.memory_space<vmem>>, %arg14: memref<64x34xf32, #tpu.memory_space<vmem>>, %arg15: memref<16x32xf32, #tpu.memory_space<vmem>>) attributes {dimension_semantics = [#tpu.dimension_semantics<parallel>], iteration_bounds = array<i64: 2>, scalar_prefetch = 0 : i64, scratch_operands = 2 : i64, tpu.core_type = #tpu.core_type<tc>, window_params = [{transform_indices = @transform_0, window_bounds = array<i64: 1, 32, 30>}, {transform_indices = @transform_1, window_bounds = array<i64: 1, 32, 30>}, {pipeline_mode = #tpu.pipeline_mode<synchronous>, transform_indices = @transform_2, window_bounds = array<i64: 64, 32>}, {pipeline_mode = #tpu.pipeline_mode<synchronous>, transform_indices = @transform_3, window_bounds = array<i64: 64, 1>}, {pipeline_mode = #tpu.pipeline_mode<synchronous>, transform_indices = @transform_4, window_bounds = array<i64: 5, 64, 1>}, {pipeline_mode = #tpu.pipeline_mode<synchronous>, transform_indices = @transform_5, window_bounds = array<i64: 64, 1>}, {pipeline_mode = #tpu.pipeline_mode<synchronous>, transform_indices = @transform_6, window_bounds = array<i64: 16, 64>}, {pipeline_mode = #tpu.pipeline_mode<synchronous>, transform_indices = @transform_7, window_bounds = array<i64: 16, 1>}, {pipeline_mode = #tpu.pipeline_mode<synchronous>, transform_indices = @transform_8, window_bounds = array<i64: 16, 32>}, {pipeline_mode = #tpu.pipeline_mode<synchronous>, transform_indices = @transform_9, window_bounds = array<i64: 16, 1>}, {pipeline_mode = #tpu.pipeline_mode<synchronous>, transform_indices = @transform_10, window_bounds = array<i64: 4, 16, 16>}, {pipeline_mode = #tpu.pipeline_mode<synchronous>, transform_indices = @transform_11, window_bounds = array<i64: 16, 1>}, {transform_indices = @transform_12, window_bounds = array<i64: 1, 2, 16, 31>}]} {
    %c0 = arith.constant 0 : index
    %c0_0 = arith.constant 0 : index
    %c0_1 = arith.constant 0 : index
    %0 = vector.load %arg1[%c0, %c0_0, %c0_1] : memref<1x32x30xf32, #tpu.memory_space<vmem>>, vector<1x32x30xf32>
    %1 = vector.shape_cast %0 : vector<1x32x30xf32> to vector<32x30xf32>
    %c0_2 = arith.constant 0 : index
    %c0_3 = arith.constant 0 : index
    %c0_4 = arith.constant 0 : index
    %2 = vector.load %arg2[%c0_2, %c0_3, %c0_4] : memref<1x32x30xf32, #tpu.memory_space<vmem>>, vector<1x32x30xf32>
    %3 = vector.shape_cast %2 : vector<1x32x30xf32> to vector<32x30xf32>
    %4 = arith.addf %1, %3 : vector<32x30xf32>
    %c0_5 = arith.constant 0 : index
    %c0_6 = arith.constant 0 : index
    %5 = vector.load %arg3[%c0_5, %c0_6] : memref<64x32xf32, #tpu.memory_space<vmem>>, vector<64x32xf32>
    %cst = arith.constant dense<0.000000e+00> : vector<64x30xf32>
    %6 = tpu.matmul %5, %4, %cst {dimension_numbers = #tpu.dot_dimension_numbers<[1], [0], [0], [1], [0, 0, 1, 1], [], []>} : vector<64x32xf32>, vector<32x30xf32>, vector<64x30xf32> -> vector<64x30xf32>
    %c0_7 = arith.constant 0 : index
    %c0_8 = arith.constant 0 : index
    %7 = vector.load %arg4[%c0_7, %c0_8] : memref<64x1xf32, #tpu.memory_space<vmem>>, vector<64x1xf32>
    %8 = vector.broadcast %7 : vector<64x1xf32> to vector<64x30xf32>
    %9 = arith.addf %6, %8 : vector<64x30xf32>
    %cst_9 = arith.constant 0.000000e+00 : f32
    %10 = vector.broadcast %cst_9 : f32 to vector<64x30xf32>
    %11 = arith.maximumf %9, %10 : vector<64x30xf32>
    %cst_10 = arith.constant 0.000000e+00 : f32
    %12 = vector.broadcast %cst_10 : f32 to vector<64x2xf32>
    %c0_11 = arith.constant 0 : index
    %c0_12 = arith.constant 0 : index
    %13 = vector.load %arg14[%c0_11, %c0_12] : memref<64x34xf32, #tpu.memory_space<vmem>>, vector<64x2xf32>
    tpu.vector_store %arg14[%c0_11, %c0_12], %12 {strides = array<i32>} : memref<64x34xf32, #tpu.memory_space<vmem>>, vector<64x2xf32>,
    %cst_13 = arith.constant 0.000000e+00 : f32
    %14 = vector.broadcast %cst_13 : f32 to vector<64x2xf32>
    %c0_14 = arith.constant 0 : index
    %c32 = arith.constant 32 : index
    %15 = vector.load %arg14[%c0_14, %c32] : memref<64x34xf32, #tpu.memory_space<vmem>>, vector<64x2xf32>
    tpu.vector_store %arg14[%c0_14, %c32], %14 {strides = array<i32>} : memref<64x34xf32, #tpu.memory_space<vmem>>, vector<64x2xf32>,
    %c0_15 = arith.constant 0 : index
    %c2 = arith.constant 2 : index
    %16 = vector.load %arg14[%c0_15, %c2] : memref<64x34xf32, #tpu.memory_space<vmem>>, vector<64x30xf32>
    tpu.vector_store %arg14[%c0_15, %c2], %11 {strides = array<i32>} : memref<64x34xf32, #tpu.memory_space<vmem>>, vector<64x30xf32>,
    %cst_16 = arith.constant 0.000000e+00 : f32
    %17 = vector.broadcast %cst_16 : f32 to vector<64x30xf32>
    %c0_17 = arith.constant 0 : index
    %c0_18 = arith.constant 0 : index
    %c0_19 = arith.constant 0 : index
    %18 = vector.load %arg5[%c0_17, %c0_18, %c0_19] : memref<5x64x1xf32, #tpu.memory_space<vmem>>, vector<1x64x1xf32>
    %19 = vector.shape_cast %18 : vector<1x64x1xf32> to vector<64x1xf32>
    %c0_20 = arith.constant 0 : index
    %c0_21 = arith.constant 0 : index
    %20 = vector.load %arg14[%c0_20, %c0_21] : memref<64x34xf32, #tpu.memory_space<vmem>>, vector<64x30xf32>
    %21 = vector.broadcast %19 : vector<64x1xf32> to vector<64x30xf32>
    %22 = arith.mulf %21, %20 : vector<64x30xf32>
    %23 = arith.addf %17, %22 : vector<64x30xf32>
    %c1 = arith.constant 1 : index
    %c0_22 = arith.constant 0 : index
    %c0_23 = arith.constant 0 : index
    %24 = vector.load %arg5[%c1, %c0_22, %c0_23] : memref<5x64x1xf32, #tpu.memory_space<vmem>>, vector<1x64x1xf32>
    %25 = vector.shape_cast %24 : vector<1x64x1xf32> to vector<64x1xf32>
    %c0_24 = arith.constant 0 : index
    %c1_25 = arith.constant 1 : index
    %26 = vector.load %arg14[%c0_24, %c1_25] : memref<64x34xf32, #tpu.memory_space<vmem>>, vector<64x30xf32>
    %27 = vector.broadcast %25 : vector<64x1xf32> to vector<64x30xf32>
    %28 = arith.mulf %27, %26 : vector<64x30xf32>
    %29 = arith.addf %23, %28 : vector<64x30xf32>
    %c2_26 = arith.constant 2 : index
    %c0_27 = arith.constant 0 : index
    %c0_28 = arith.constant 0 : index
    %30 = vector.load %arg5[%c2_26, %c0_27, %c0_28] : memref<5x64x1xf32, #tpu.memory_space<vmem>>, vector<1x64x1xf32>
    %31 = vector.shape_cast %30 : vector<1x64x1xf32> to vector<64x1xf32>
    %c0_29 = arith.constant 0 : index
    %c2_30 = arith.constant 2 : index
    %32 = vector.load %arg14[%c0_29, %c2_30] : memref<64x34xf32, #tpu.memory_space<vmem>>, vector<64x30xf32>
    %33 = vector.broadcast %31 : vector<64x1xf32> to vector<64x30xf32>
    %34 = arith.mulf %33, %32 : vector<64x30xf32>
    %35 = arith.addf %29, %34 : vector<64x30xf32>
    %c3 = arith.constant 3 : index
    %c0_31 = arith.constant 0 : index
    %c0_32 = arith.constant 0 : index
    %36 = vector.load %arg5[%c3, %c0_31, %c0_32] : memref<5x64x1xf32, #tpu.memory_space<vmem>>, vector<1x64x1xf32>
    %37 = vector.shape_cast %36 : vector<1x64x1xf32> to vector<64x1xf32>
    %c0_33 = arith.constant 0 : index
    %c3_34 = arith.constant 3 : index
    %38 = vector.load %arg14[%c0_33, %c3_34] : memref<64x34xf32, #tpu.memory_space<vmem>>, vector<64x30xf32>
    %39 = vector.broadcast %37 : vector<64x1xf32> to vector<64x30xf32>
    %40 = arith.mulf %39, %38 : vector<64x30xf32>
    %41 = arith.addf %35, %40 : vector<64x30xf32>
    %c4 = arith.constant 4 : index
    %c0_35 = arith.constant 0 : index
    %c0_36 = arith.constant 0 : index
    %42 = vector.load %arg5[%c4, %c0_35, %c0_36] : memref<5x64x1xf32, #tpu.memory_space<vmem>>, vector<1x64x1xf32>
    %43 = vector.shape_cast %42 : vector<1x64x1xf32> to vector<64x1xf32>
    %c0_37 = arith.constant 0 : index
    %c4_38 = arith.constant 4 : index
    %44 = vector.load %arg14[%c0_37, %c4_38] : memref<64x34xf32, #tpu.memory_space<vmem>>, vector<64x30xf32>
    %45 = vector.broadcast %43 : vector<64x1xf32> to vector<64x30xf32>
    %46 = arith.mulf %45, %44 : vector<64x30xf32>
    %47 = arith.addf %41, %46 : vector<64x30xf32>
    %c0_39 = arith.constant 0 : index
    %c0_40 = arith.constant 0 : index
    %48 = vector.load %arg6[%c0_39, %c0_40] : memref<64x1xf32, #tpu.memory_space<vmem>>, vector<64x1xf32>
    %49 = vector.broadcast %48 : vector<64x1xf32> to vector<64x30xf32>
    %50 = arith.addf %47, %49 : vector<64x30xf32>
    %cst_41 = arith.constant 0.000000e+00 : f32
    %51 = vector.broadcast %cst_41 : f32 to vector<64x30xf32>
    %52 = arith.maximumf %50, %51 : vector<64x30xf32>
    %c0_42 = arith.constant 0 : index
    %c0_43 = arith.constant 0 : index
    %53 = vector.load %arg7[%c0_42, %c0_43] : memref<16x64xf32, #tpu.memory_space<vmem>>, vector<16x64xf32>
    %cst_44 = arith.constant dense<0.000000e+00> : vector<16x30xf32>
    %54 = tpu.matmul %53, %52, %cst_44 {dimension_numbers = #tpu.dot_dimension_numbers<[1], [0], [0], [1], [0, 0, 1, 1], [], []>} : vector<16x64xf32>, vector<64x30xf32>, vector<16x30xf32> -> vector<16x30xf32>
    %c0_45 = arith.constant 0 : index
    %c0_46 = arith.constant 0 : index
    %55 = vector.load %arg8[%c0_45, %c0_46] : memref<16x1xf32, #tpu.memory_space<vmem>>, vector<16x1xf32>
    %56 = vector.broadcast %55 : vector<16x1xf32> to vector<16x30xf32>
    %57 = arith.addf %54, %56 : vector<16x30xf32>
    %cst_47 = arith.constant 0.000000e+00 : f32
    %58 = vector.broadcast %cst_47 : f32 to vector<16x30xf32>
    %59 = arith.maximumf %57, %58 : vector<16x30xf32>
    %c0_48 = arith.constant 0 : index
    %c0_49 = arith.constant 0 : index
    %60 = vector.load %arg9[%c0_48, %c0_49] : memref<16x32xf32, #tpu.memory_space<vmem>>, vector<16x32xf32>
    %cst_50 = arith.constant dense<0.000000e+00> : vector<16x30xf32>
    %61 = tpu.matmul %60, %4, %cst_50 {dimension_numbers = #tpu.dot_dimension_numbers<[1], [0], [0], [1], [0, 0, 1, 1], [], []>} : vector<16x32xf32>, vector<32x30xf32>, vector<16x30xf32> -> vector<16x30xf32>
    %c0_51 = arith.constant 0 : index
    %c0_52 = arith.constant 0 : index
    %62 = vector.load %arg10[%c0_51, %c0_52] : memref<16x1xf32, #tpu.memory_space<vmem>>, vector<16x1xf32>
    %63 = vector.broadcast %62 : vector<16x1xf32> to vector<16x30xf32>
    %64 = arith.addf %61, %63 : vector<16x30xf32>
    %cst_53 = arith.constant 0.000000e+00 : f32
    %65 = vector.broadcast %cst_53 : f32 to vector<16x30xf32>
    %66 = arith.maximumf %64, %65 : vector<16x30xf32>
    %67 = arith.addf %59, %66 : vector<16x30xf32>
    %cst_54 = arith.constant 0.000000e+00 : f32
    %68 = vector.broadcast %cst_54 : f32 to vector<16x1xf32>
    %c0_55 = arith.constant 0 : index
    %c0_56 = arith.constant 0 : index
    %69 = vector.load %arg15[%c0_55, %c0_56] : memref<16x32xf32, #tpu.memory_space<vmem>>, vector<16x1xf32>
    tpu.vector_store %arg15[%c0_55, %c0_56], %68 {strides = array<i32>} : memref<16x32xf32, #tpu.memory_space<vmem>>, vector<16x1xf32>,
    %cst_57 = arith.constant 0.000000e+00 : f32
    %70 = vector.broadcast %cst_57 : f32 to vector<16x1xf32>
    %c0_58 = arith.constant 0 : index
    %c31 = arith.constant 31 : index
    %71 = vector.load %arg15[%c0_58, %c31] : memref<16x32xf32, #tpu.memory_space<vmem>>, vector<16x1xf32>
    tpu.vector_store %arg15[%c0_58, %c31], %70 {strides = array<i32>} : memref<16x32xf32, #tpu.memory_space<vmem>>, vector<16x1xf32>,
    %c0_59 = arith.constant 0 : index
    %c1_60 = arith.constant 1 : index
    %72 = vector.load %arg15[%c0_59, %c1_60] : memref<16x32xf32, #tpu.memory_space<vmem>>, vector<16x30xf32>
    tpu.vector_store %arg15[%c0_59, %c1_60], %67 {strides = array<i32>} : memref<16x32xf32, #tpu.memory_space<vmem>>, vector<16x30xf32>,
    %cst_61 = arith.constant 0.000000e+00 : f32
    %73 = vector.broadcast %cst_61 : f32 to vector<16x31xf32>
    %c0_62 = arith.constant 0 : index
    %c0_63 = arith.constant 0 : index
    %c0_64 = arith.constant 0 : index
    %74 = vector.load %arg11[%c0_62, %c0_63, %c0_64] : memref<4x16x16xf32, #tpu.memory_space<vmem>>, vector<1x16x16xf32>
    %75 = vector.shape_cast %74 : vector<1x16x16xf32> to vector<16x16xf32>
    %c0_65 = arith.constant 0 : index
    %c1_66 = arith.constant 1 : index
    %76 = vector.load %arg15[%c0_65, %c1_66] : memref<16x32xf32, #tpu.memory_space<vmem>>, vector<16x31xf32>
    %cst_67 = arith.constant dense<0.000000e+00> : vector<16x31xf32>
    %77 = tpu.matmul %75, %76, %cst_67 {dimension_numbers = #tpu.dot_dimension_numbers<[1], [0], [0], [1], [0, 0, 1, 1], [], []>} : vector<16x16xf32>, vector<16x31xf32>, vector<16x31xf32> -> vector<16x31xf32>
    %78 = arith.addf %73, %77 : vector<16x31xf32>
    %c2_68 = arith.constant 2 : index
    %c0_69 = arith.constant 0 : index
    %c0_70 = arith.constant 0 : index
    %79 = vector.load %arg11[%c2_68, %c0_69, %c0_70] : memref<4x16x16xf32, #tpu.memory_space<vmem>>, vector<1x16x16xf32>
    %80 = vector.shape_cast %79 : vector<1x16x16xf32> to vector<16x16xf32>
    %c0_71 = arith.constant 0 : index
    %c0_72 = arith.constant 0 : index
    %81 = vector.load %arg15[%c0_71, %c0_72] : memref<16x32xf32, #tpu.memory_space<vmem>>, vector<16x31xf32>
    %cst_73 = arith.constant dense<0.000000e+00> : vector<16x31xf32>
    %82 = tpu.matmul %80, %81, %cst_73 {dimension_numbers = #tpu.dot_dimension_numbers<[1], [0], [0], [1], [0, 0, 1, 1], [], []>} : vector<16x16xf32>, vector<16x31xf32>, vector<16x31xf32> -> vector<16x31xf32>
    %83 = arith.addf %78, %82 : vector<16x31xf32>
    %c0_74 = arith.constant 0 : index
    %c0_75 = arith.constant 0 : index
    %84 = vector.load %arg12[%c0_74, %c0_75] : memref<16x1xf32, #tpu.memory_space<vmem>>, vector<16x1xf32>
    %85 = vector.broadcast %84 : vector<16x1xf32> to vector<16x31xf32>
    %86 = arith.addf %83, %85 : vector<16x31xf32>
    %cst_76 = arith.constant 0.000000e+00 : f32
    %87 = vector.broadcast %cst_76 : f32 to vector<16x31xf32>
    %88 = arith.maximumf %86, %87 : vector<16x31xf32>
    %c0_77 = arith.constant 0 : index
    %c0_78 = arith.constant 0 : index
    %c0_79 = arith.constant 0 : index
    %c0_80 = arith.constant 0 : index
    %89 = vector.load %arg13[%c0_77, %c0_78, %c0_79, %c0_80] : memref<1x2x16x31xf32, #tpu.memory_space<vmem>>, vector<1x1x16x31xf32>
    %90 = vector.shape_cast %89 : vector<1x1x16x31xf32> to vector<16x31xf32>
    %91 = vector.shape_cast %88 : vector<16x31xf32> to vector<1x1x16x31xf32>
    tpu.vector_store %arg13[%c0_77, %c0_78, %c0_79, %c0_80], %91 {strides = array<i32>} : memref<1x2x16x31xf32, #tpu.memory_space<vmem>>, vector<1x1x16x31xf32>,
    %cst_81 = arith.constant 0.000000e+00 : f32
    %92 = vector.broadcast %cst_81 : f32 to vector<16x31xf32>
    %c1_82 = arith.constant 1 : index
    %c0_83 = arith.constant 0 : index
    %c0_84 = arith.constant 0 : index
    %93 = vector.load %arg11[%c1_82, %c0_83, %c0_84] : memref<4x16x16xf32, #tpu.memory_space<vmem>>, vector<1x16x16xf32>
    %94 = vector.shape_cast %93 : vector<1x16x16xf32> to vector<16x16xf32>
    %c0_85 = arith.constant 0 : index
    %c1_86 = arith.constant 1 : index
    %95 = vector.load %arg15[%c0_85, %c1_86] : memref<16x32xf32, #tpu.memory_space<vmem>>, vector<16x31xf32>
    %cst_87 = arith.constant dense<0.000000e+00> : vector<16x31xf32>
    %96 = tpu.matmul %94, %95, %cst_87 {dimension_numbers = #tpu.dot_dimension_numbers<[1], [0], [0], [1], [0, 0, 1, 1], [], []>} : vector<16x16xf32>, vector<16x31xf32>, vector<16x31xf32> -> vector<16x31xf32>
    %97 = arith.addf %92, %96 : vector<16x31xf32>
    %c3_88 = arith.constant 3 : index
    %c0_89 = arith.constant 0 : index
    %c0_90 = arith.constant 0 : index
    %98 = vector.load %arg11[%c3_88, %c0_89, %c0_90] : memref<4x16x16xf32, #tpu.memory_space<vmem>>, vector<1x16x16xf32>
    %99 = vector.shape_cast %98 : vector<1x16x16xf32> to vector<16x16xf32>
    %c0_91 = arith.constant 0 : index
    %c0_92 = arith.constant 0 : index
    %100 = vector.load %arg15[%c0_91, %c0_92] : memref<16x32xf32, #tpu.memory_space<vmem>>, vector<16x31xf32>
    %cst_93 = arith.constant dense<0.000000e+00> : vector<16x31xf32>
    %101 = tpu.matmul %99, %100, %cst_93 {dimension_numbers = #tpu.dot_dimension_numbers<[1], [0], [0], [1], [0, 0, 1, 1], [], []>} : vector<16x16xf32>, vector<16x31xf32>, vector<16x31xf32> -> vector<16x31xf32>
    %102 = arith.addf %97, %101 : vector<16x31xf32>
    %c0_94 = arith.constant 0 : index
    %c0_95 = arith.constant 0 : index
    %103 = vector.load %arg12[%c0_94, %c0_95] : memref<16x1xf32, #tpu.memory_space<vmem>>, vector<16x1xf32>
    %104 = vector.broadcast %103 : vector<16x1xf32> to vector<16x31xf32>
    %105 = arith.addf %102, %104 : vector<16x31xf32>
    %cst_96 = arith.constant 0.000000e+00 : f32
    %106 = vector.broadcast %cst_96 : f32 to vector<16x31xf32>
    %107 = arith.maximumf %105, %106 : vector<16x31xf32>
    %c0_97 = arith.constant 0 : index
    %c1_98 = arith.constant 1 : index
    %c0_99 = arith.constant 0 : index
    %c0_100 = arith.constant 0 : index
    %108 = vector.load %arg13[%c0_97, %c1_98, %c0_99, %c0_100] : memref<1x2x16x31xf32, #tpu.memory_space<vmem>>, vector<1x1x16x31xf32>
    %109 = vector.shape_cast %108 : vector<1x1x16x31xf32> to vector<16x31xf32>
    %110 = vector.shape_cast %107 : vector<16x31xf32> to vector<1x1x16x31xf32>
    tpu.vector_store %arg13[%c0_97, %c1_98, %c0_99, %c0_100], %110 {strides = array<i32>} : memref<1x2x16x31xf32, #tpu.memory_space<vmem>>, vector<1x1x16x31xf32>,
    return
  }
  func.func @transform_0(%arg0: i32) -> (i32, i32, i32) {
    %c0_i32 = arith.constant 0 : i32
    %c0_i32_0 = arith.constant 0 : i32
    %c0_i32_1 = arith.constant 0 : i32
    return %arg0, %c0_i32, %c0_i32_0 : i32, i32, i32
  }
  func.func @transform_1(%arg0: i32) -> (i32, i32, i32) {
    %c0_i32 = arith.constant 0 : i32
    %c0_i32_0 = arith.constant 0 : i32
    %c0_i32_1 = arith.constant 0 : i32
    return %arg0, %c0_i32, %c0_i32_0 : i32, i32, i32
  }
  func.func @transform_2(%arg0: i32) -> (i32, i32) {
    %c0_i32 = arith.constant 0 : i32
    %c0_i32_0 = arith.constant 0 : i32
    %c0_i32_1 = arith.constant 0 : i32
    return %c0_i32, %c0_i32_0 : i32, i32
  }
  func.func @transform_3(%arg0: i32) -> (i32, i32) {
    %c0_i32 = arith.constant 0 : i32
    %c0_i32_0 = arith.constant 0 : i32
    %c0_i32_1 = arith.constant 0 : i32
    return %c0_i32, %c0_i32_0 : i32, i32
  }
  func.func @transform_4(%arg0: i32) -> (i32, i32, i32) {
    %c0_i32 = arith.constant 0 : i32
    %c0_i32_0 = arith.constant 0 : i32
    %c0_i32_1 = arith.constant 0 : i32
    %c0_i32_2 = arith.constant 0 : i32
    return %c0_i32, %c0_i32_0, %c0_i32_1 : i32, i32, i32
  }
  func.func @transform_5(%arg0: i32) -> (i32, i32) {
    %c0_i32 = arith.constant 0 : i32
    %c0_i32_0 = arith.constant 0 : i32
    %c0_i32_1 = arith.constant 0 : i32
    return %c0_i32, %c0_i32_0 : i32, i32
  }
  func.func @transform_6(%arg0: i32) -> (i32, i32) {
    %c0_i32 = arith.constant 0 : i32
    %c0_i32_0 = arith.constant 0 : i32
    %c0_i32_1 = arith.constant 0 : i32
    return %c0_i32, %c0_i32_0 : i32, i32
  }
  func.func @transform_7(%arg0: i32) -> (i32, i32) {
    %c0_i32 = arith.constant 0 : i32
    %c0_i32_0 = arith.constant 0 : i32
    %c0_i32_1 = arith.constant 0 : i32
    return %c0_i32, %c0_i32_0 : i32, i32
  }
  func.func @transform_8(%arg0: i32) -> (i32, i32) {
    %c0_i32 = arith.constant 0 : i32
    %c0_i32_0 = arith.constant 0 : i32
    %c0_i32_1 = arith.constant 0 : i32
    return %c0_i32, %c0_i32_0 : i32, i32
  }
  func.func @transform_9(%arg0: i32) -> (i32, i32) {
    %c0_i32 = arith.constant 0 : i32
    %c0_i32_0 = arith.constant 0 : i32
    %c0_i32_1 = arith.constant 0 : i32
    return %c0_i32, %c0_i32_0 : i32, i32
  }
  func.func @transform_10(%arg0: i32) -> (i32, i32, i32) {
    %c0_i32 = arith.constant 0 : i32
    %c0_i32_0 = arith.constant 0 : i32
    %c0_i32_1 = arith.constant 0 : i32
    %c0_i32_2 = arith.constant 0 : i32
    return %c0_i32, %c0_i32_0, %c0_i32_1 : i32, i32, i32
  }
  func.func @transform_11(%arg0: i32) -> (i32, i32) {
    %c0_i32 = arith.constant 0 : i32
    %c0_i32_0 = arith.constant 0 : i32
    %c0_i32_1 = arith.constant 0 : i32
    return %c0_i32, %c0_i32_0 : i32, i32
  }
  func.func @transform_12(%arg0: i32) -> (i32, i32, i32, i32) {
    %c0_i32 = arith.constant 0 : i32
    %c0_i32_0 = arith.constant 0 : i32
    %c0_i32_1 = arith.constant 0 : i32
    %c0_i32_2 = arith.constant 0 : i32
    return %arg0, %c0_i32, %c0_i32_0, %c0_i32_1 : i32, i32, i32, i32
  }
}

module attributes {stable_mosaic.version = 11 : i64} {
  func.func @_mask_out_kernel(%arg0: i32, %arg1: memref<1x16x62xf32, #tpu.memory_space<vmem>>, %arg2: memref<1x16x62xf32, #tpu.memory_space<vmem>>, %arg3: memref<16x16xf32, #tpu.memory_space<vmem>>, %arg4: memref<16x1xf32, #tpu.memory_space<vmem>>, %arg5: memref<16x16xf32, #tpu.memory_space<vmem>>, %arg6: memref<16x1xf32, #tpu.memory_space<vmem>>, %arg7: memref<16x16xf32, #tpu.memory_space<vmem>>, %arg8: memref<16x1xf32, #tpu.memory_space<vmem>>, %arg9: memref<3x1x16xf32, #tpu.memory_space<vmem>>, %arg10: memref<1x1xf32, #tpu.memory_space<vmem>>, %arg11: memref<1x1x62xf32, #tpu.memory_space<vmem>>, %arg12: memref<16x64xf32, #tpu.memory_space<vmem>>) attributes {dimension_semantics = [#tpu.dimension_semantics<parallel>], iteration_bounds = array<i64: 2>, scalar_prefetch = 0 : i64, scratch_operands = 1 : i64, tpu.core_type = #tpu.core_type<tc>, window_params = [{transform_indices = @transform_0, window_bounds = array<i64: 1, 16, 62>}, {transform_indices = @transform_1, window_bounds = array<i64: 1, 16, 62>}, {pipeline_mode = #tpu.pipeline_mode<synchronous>, transform_indices = @transform_2, window_bounds = array<i64: 16, 16>}, {pipeline_mode = #tpu.pipeline_mode<synchronous>, transform_indices = @transform_3, window_bounds = array<i64: 16, 1>}, {pipeline_mode = #tpu.pipeline_mode<synchronous>, transform_indices = @transform_4, window_bounds = array<i64: 16, 16>}, {pipeline_mode = #tpu.pipeline_mode<synchronous>, transform_indices = @transform_5, window_bounds = array<i64: 16, 1>}, {pipeline_mode = #tpu.pipeline_mode<synchronous>, transform_indices = @transform_6, window_bounds = array<i64: 16, 16>}, {pipeline_mode = #tpu.pipeline_mode<synchronous>, transform_indices = @transform_7, window_bounds = array<i64: 16, 1>}, {pipeline_mode = #tpu.pipeline_mode<synchronous>, transform_indices = @transform_8, window_bounds = array<i64: 3, 1, 16>}, {pipeline_mode = #tpu.pipeline_mode<synchronous>, transform_indices = @transform_9, window_bounds = array<i64: 1, 1>}, {transform_indices = @transform_10, window_bounds = array<i64: 1, 1, 62>}]} {
    %c0 = arith.constant 0 : index
    %c0_0 = arith.constant 0 : index
    %c0_1 = arith.constant 0 : index
    %0 = vector.load %arg1[%c0, %c0_0, %c0_1] : memref<1x16x62xf32, #tpu.memory_space<vmem>>, vector<1x16x62xf32>
    %1 = vector.shape_cast %0 : vector<1x16x62xf32> to vector<16x62xf32>
    %c0_2 = arith.constant 0 : index
    %c0_3 = arith.constant 0 : index
    %2 = vector.load %arg3[%c0_2, %c0_3] : memref<16x16xf32, #tpu.memory_space<vmem>>, vector<16x16xf32>
    %cst = arith.constant dense<0.000000e+00> : vector<16x62xf32>
    %3 = tpu.matmul %2, %1, %cst {dimension_numbers = #tpu.dot_dimension_numbers<[1], [0], [0], [1], [0, 0, 1, 1], [], []>} : vector<16x16xf32>, vector<16x62xf32>, vector<16x62xf32> -> vector<16x62xf32>
    %c0_4 = arith.constant 0 : index
    %c0_5 = arith.constant 0 : index
    %4 = vector.load %arg4[%c0_4, %c0_5] : memref<16x1xf32, #tpu.memory_space<vmem>>, vector<16x1xf32>
    %5 = vector.broadcast %4 : vector<16x1xf32> to vector<16x62xf32>
    %6 = arith.addf %3, %5 : vector<16x62xf32>
    %7 = math.tanh %6 : vector<16x62xf32>
    %c0_6 = arith.constant 0 : index
    %c0_7 = arith.constant 0 : index
    %8 = vector.load %arg5[%c0_6, %c0_7] : memref<16x16xf32, #tpu.memory_space<vmem>>, vector<16x16xf32>
    %cst_8 = arith.constant dense<0.000000e+00> : vector<16x62xf32>
    %9 = tpu.matmul %8, %1, %cst_8 {dimension_numbers = #tpu.dot_dimension_numbers<[1], [0], [0], [1], [0, 0, 1, 1], [], []>} : vector<16x16xf32>, vector<16x62xf32>, vector<16x62xf32> -> vector<16x62xf32>
    %c0_9 = arith.constant 0 : index
    %c0_10 = arith.constant 0 : index
    %10 = vector.load %arg6[%c0_9, %c0_10] : memref<16x1xf32, #tpu.memory_space<vmem>>, vector<16x1xf32>
    %11 = vector.broadcast %10 : vector<16x1xf32> to vector<16x62xf32>
    %12 = arith.addf %9, %11 : vector<16x62xf32>
    %13 = arith.negf %12 : vector<16x62xf32>
    %14 = math.exp %13 : vector<16x62xf32>
    %cst_11 = arith.constant 1.000000e+00 : f32
    %15 = vector.broadcast %cst_11 : f32 to vector<16x62xf32>
    %16 = arith.addf %15, %14 : vector<16x62xf32>
    %17 = arith.divf %15, %16 : vector<16x62xf32>
    %c0_12 = arith.constant 0 : index
    %c0_13 = arith.constant 0 : index
    %18 = vector.load %arg7[%c0_12, %c0_13] : memref<16x16xf32, #tpu.memory_space<vmem>>, vector<16x16xf32>
    %19 = arith.mulf %7, %17 : vector<16x62xf32>
    %cst_14 = arith.constant dense<0.000000e+00> : vector<16x62xf32>
    %20 = tpu.matmul %18, %19, %cst_14 {dimension_numbers = #tpu.dot_dimension_numbers<[1], [0], [0], [1], [0, 0, 1, 1], [], []>} : vector<16x16xf32>, vector<16x62xf32>, vector<16x62xf32> -> vector<16x62xf32>
    %c0_15 = arith.constant 0 : index
    %c0_16 = arith.constant 0 : index
    %21 = vector.load %arg8[%c0_15, %c0_16] : memref<16x1xf32, #tpu.memory_space<vmem>>, vector<16x1xf32>
    %22 = vector.broadcast %21 : vector<16x1xf32> to vector<16x62xf32>
    %23 = arith.addf %20, %22 : vector<16x62xf32>
    %cst_17 = arith.constant 0.000000e+00 : f32
    %24 = vector.broadcast %cst_17 : f32 to vector<16x62xf32>
    %25 = arith.maximumf %23, %24 : vector<16x62xf32>
    %c0_18 = arith.constant 0 : index
    %c0_19 = arith.constant 0 : index
    %c0_20 = arith.constant 0 : index
    %26 = vector.load %arg2[%c0_18, %c0_19, %c0_20] : memref<1x16x62xf32, #tpu.memory_space<vmem>>, vector<1x16x62xf32>
    %27 = vector.shape_cast %26 : vector<1x16x62xf32> to vector<16x62xf32>
    %28 = arith.mulf %27, %25 : vector<16x62xf32>
    %cst_21 = arith.constant 0.000000e+00 : f32
    %29 = vector.broadcast %cst_21 : f32 to vector<16x1xf32>
    %c0_22 = arith.constant 0 : index
    %c0_23 = arith.constant 0 : index
    %30 = vector.load %arg12[%c0_22, %c0_23] : memref<16x64xf32, #tpu.memory_space<vmem>>, vector<16x1xf32>
    tpu.vector_store %arg12[%c0_22, %c0_23], %29 {strides = array<i32>} : memref<16x64xf32, #tpu.memory_space<vmem>>, vector<16x1xf32>,
    %cst_24 = arith.constant 0.000000e+00 : f32
    %31 = vector.broadcast %cst_24 : f32 to vector<16x1xf32>
    %c0_25 = arith.constant 0 : index
    %c63 = arith.constant 63 : index
    %32 = vector.load %arg12[%c0_25, %c63] : memref<16x64xf32, #tpu.memory_space<vmem>>, vector<16x1xf32>
    tpu.vector_store %arg12[%c0_25, %c63], %31 {strides = array<i32>} : memref<16x64xf32, #tpu.memory_space<vmem>>, vector<16x1xf32>,
    %c0_26 = arith.constant 0 : index
    %c1 = arith.constant 1 : index
    %33 = vector.load %arg12[%c0_26, %c1] : memref<16x64xf32, #tpu.memory_space<vmem>>, vector<16x62xf32>
    tpu.vector_store %arg12[%c0_26, %c1], %28 {strides = array<i32>} : memref<16x64xf32, #tpu.memory_space<vmem>>, vector<16x62xf32>,
    %cst_27 = arith.constant 0.000000e+00 : f32
    %34 = vector.broadcast %cst_27 : f32 to vector<1x62xf32>
    %c0_28 = arith.constant 0 : index
    %c0_29 = arith.constant 0 : index
    %c0_30 = arith.constant 0 : index
    %35 = vector.load %arg9[%c0_28, %c0_29, %c0_30] : memref<3x1x16xf32, #tpu.memory_space<vmem>>, vector<1x1x16xf32>
    %36 = vector.shape_cast %35 : vector<1x1x16xf32> to vector<1x16xf32>
    %c0_31 = arith.constant 0 : index
    %c0_32 = arith.constant 0 : index
    %37 = vector.load %arg12[%c0_31, %c0_32] : memref<16x64xf32, #tpu.memory_space<vmem>>, vector<16x62xf32>
    %cst_33 = arith.constant dense<0.000000e+00> : vector<1x62xf32>
    %38 = tpu.matmul %36, %37, %cst_33 {dimension_numbers = #tpu.dot_dimension_numbers<[1], [0], [0], [1], [0, 0, 1, 1], [], []>} : vector<1x16xf32>, vector<16x62xf32>, vector<1x62xf32> -> vector<1x62xf32>
    %39 = arith.addf %34, %38 : vector<1x62xf32>
    %c1_34 = arith.constant 1 : index
    %c0_35 = arith.constant 0 : index
    %c0_36 = arith.constant 0 : index
    %40 = vector.load %arg9[%c1_34, %c0_35, %c0_36] : memref<3x1x16xf32, #tpu.memory_space<vmem>>, vector<1x1x16xf32>
    %41 = vector.shape_cast %40 : vector<1x1x16xf32> to vector<1x16xf32>
    %c0_37 = arith.constant 0 : index
    %c1_38 = arith.constant 1 : index
    %42 = vector.load %arg12[%c0_37, %c1_38] : memref<16x64xf32, #tpu.memory_space<vmem>>, vector<16x62xf32>
    %cst_39 = arith.constant dense<0.000000e+00> : vector<1x62xf32>
    %43 = tpu.matmul %41, %42, %cst_39 {dimension_numbers = #tpu.dot_dimension_numbers<[1], [0], [0], [1], [0, 0, 1, 1], [], []>} : vector<1x16xf32>, vector<16x62xf32>, vector<1x62xf32> -> vector<1x62xf32>
    %44 = arith.addf %39, %43 : vector<1x62xf32>
    %c2 = arith.constant 2 : index
    %c0_40 = arith.constant 0 : index
    %c0_41 = arith.constant 0 : index
    %45 = vector.load %arg9[%c2, %c0_40, %c0_41] : memref<3x1x16xf32, #tpu.memory_space<vmem>>, vector<1x1x16xf32>
    %46 = vector.shape_cast %45 : vector<1x1x16xf32> to vector<1x16xf32>
    %c0_42 = arith.constant 0 : index
    %c2_43 = arith.constant 2 : index
    %47 = vector.load %arg12[%c0_42, %c2_43] : memref<16x64xf32, #tpu.memory_space<vmem>>, vector<16x62xf32>
    %cst_44 = arith.constant dense<0.000000e+00> : vector<1x62xf32>
    %48 = tpu.matmul %46, %47, %cst_44 {dimension_numbers = #tpu.dot_dimension_numbers<[1], [0], [0], [1], [0, 0, 1, 1], [], []>} : vector<1x16xf32>, vector<16x62xf32>, vector<1x62xf32> -> vector<1x62xf32>
    %49 = arith.addf %44, %48 : vector<1x62xf32>
    %c0_45 = arith.constant 0 : index
    %c0_46 = arith.constant 0 : index
    %50 = vector.load %arg10[%c0_45, %c0_46] : memref<1x1xf32, #tpu.memory_space<vmem>>, vector<1x1xf32>
    %51 = vector.broadcast %50 : vector<1x1xf32> to vector<1x62xf32>
    %52 = arith.addf %49, %51 : vector<1x62xf32>
    %c0_47 = arith.constant 0 : index
    %c0_48 = arith.constant 0 : index
    %c0_49 = arith.constant 0 : index
    %53 = vector.load %arg11[%c0_47, %c0_48, %c0_49] : memref<1x1x62xf32, #tpu.memory_space<vmem>>, vector<1x1x62xf32>
    %54 = vector.shape_cast %53 : vector<1x1x62xf32> to vector<1x62xf32>
    %55 = vector.shape_cast %52 : vector<1x62xf32> to vector<1x1x62xf32>
    tpu.vector_store %arg11[%c0_47, %c0_48, %c0_49], %55 {strides = array<i32>} : memref<1x1x62xf32, #tpu.memory_space<vmem>>, vector<1x1x62xf32>,
    return
  }
  func.func @transform_0(%arg0: i32) -> (i32, i32, i32) {
    %c0_i32 = arith.constant 0 : i32
    %c0_i32_0 = arith.constant 0 : i32
    %c0_i32_1 = arith.constant 0 : i32
    return %arg0, %c0_i32, %c0_i32_0 : i32, i32, i32
  }
  func.func @transform_1(%arg0: i32) -> (i32, i32, i32) {
    %c0_i32 = arith.constant 0 : i32
    %c0_i32_0 = arith.constant 0 : i32
    %c0_i32_1 = arith.constant 0 : i32
    return %arg0, %c0_i32, %c0_i32_0 : i32, i32, i32
  }
  func.func @transform_2(%arg0: i32) -> (i32, i32) {
    %c0_i32 = arith.constant 0 : i32
    %c0_i32_0 = arith.constant 0 : i32
    %c0_i32_1 = arith.constant 0 : i32
    return %c0_i32, %c0_i32_0 : i32, i32
  }
  func.func @transform_3(%arg0: i32) -> (i32, i32) {
    %c0_i32 = arith.constant 0 : i32
    %c0_i32_0 = arith.constant 0 : i32
    %c0_i32_1 = arith.constant 0 : i32
    return %c0_i32, %c0_i32_0 : i32, i32
  }
  func.func @transform_4(%arg0: i32) -> (i32, i32) {
    %c0_i32 = arith.constant 0 : i32
    %c0_i32_0 = arith.constant 0 : i32
    %c0_i32_1 = arith.constant 0 : i32
    return %c0_i32, %c0_i32_0 : i32, i32
  }
  func.func @transform_5(%arg0: i32) -> (i32, i32) {
    %c0_i32 = arith.constant 0 : i32
    %c0_i32_0 = arith.constant 0 : i32
    %c0_i32_1 = arith.constant 0 : i32
    return %c0_i32, %c0_i32_0 : i32, i32
  }
  func.func @transform_6(%arg0: i32) -> (i32, i32) {
    %c0_i32 = arith.constant 0 : i32
    %c0_i32_0 = arith.constant 0 : i32
    %c0_i32_1 = arith.constant 0 : i32
    return %c0_i32, %c0_i32_0 : i32, i32
  }
  func.func @transform_7(%arg0: i32) -> (i32, i32) {
    %c0_i32 = arith.constant 0 : i32
    %c0_i32_0 = arith.constant 0 : i32
    %c0_i32_1 = arith.constant 0 : i32
    return %c0_i32, %c0_i32_0 : i32, i32
  }
  func.func @transform_8(%arg0: i32) -> (i32, i32, i32) {
    %c0_i32 = arith.constant 0 : i32
    %c0_i32_0 = arith.constant 0 : i32
    %c0_i32_1 = arith.constant 0 : i32
    %c0_i32_2 = arith.constant 0 : i32
    return %c0_i32, %c0_i32_0, %c0_i32_1 : i32, i32, i32
  }
  func.func @transform_9(%arg0: i32) -> (i32, i32) {
    %c0_i32 = arith.constant 0 : i32
    %c0_i32_0 = arith.constant 0 : i32
    %c0_i32_1 = arith.constant 0 : i32
    return %c0_i32, %c0_i32_0 : i32, i32
  }
  func.func @transform_10(%arg0: i32) -> (i32, i32, i32) {
    %c0_i32 = arith.constant 0 : i32
    %c0_i32_0 = arith.constant 0 : i32
    %c0_i32_1 = arith.constant 0 : i32
    return %arg0, %c0_i32, %c0_i32_0 : i32, i32, i32
  }
}

</mosaic_0001>

<llo_original>
// kernel: manner_block_forward.6
$region0: #{manner_block_forward.6}
  #allocation0 [shape = 'u32[]', space=smem, size = 0x4, offset = 0x4, fixed_abs, tag = 'smem constant byte address 0x4 - core index']
  #allocation1 [shape = 'u32[144,128]{1,0:T(1,128)}', space=vmem, size = 0x12000, scoped, tag = 'internal scratch']
  #allocation2 [shape = 'f32[1,64]{1,0:T(1,128)}', space=vmem, size = 0x200, scoped, tag = 'scratch operand']
  %s0 = inlined_call_operand.vmem [shape: f32[2,1,62], index: 0, kind: input, shape index: {}]
  %s1 = inlined_call_operand.vmem [shape: f32[3,16,1], index: 1, kind: input, shape index: {}]
  %s2 = inlined_call_operand.vmem [shape: f32[16,1], index: 2, kind: input, shape index: {}]
  %s3 = inlined_call_operand.vmem [shape: f32[2,16,62], index: 3, kind: output, shape index: {}]
  %s4 = sld [smem:[#allocation0]]
  $region45: #{manner_block_forward.6} parent=0
    _
  %s6 = ssub.s32 1, %s4
  %s7 = scalar_select 0, %s6, %s4
  loop: start=0, step=1, limit=4
  $region2: #{manner_block_forward.6} parent=0 // loop_pre_header
    _
  $region3: #{manner_block_forward.6} parent=0 // loop_header
    %s9 = sphi 0, %s13
    %p10 = scmp.ge.s32.totalorder %s9, 4
    %s19 = sphi 0, %s21
    %s22 = sphi 0, %s19
    %s23 = sphi 0, %s22
    %s39 = sphi 0, %s23
    %s43 = sphi 0, %s43
    %s45 = sphi 0, %s43
    %s46 = sphi 0, %s45
    %s60 = sphi 0, %s46
    %s64 = sphi 0, %s64
    %s66 = sphi 0, %s64
    %s67 = sphi 0, %s66
    %s81 = sphi 0, %s67
    %s87 = sphi 0, %s89
    %s90 = sphi 0, %s87
    %s91 = sphi 0, %s90
    %s107 = sphi 0, %s91
  $region4: #{manner_block_forward.6} parent=0 // loop_header_branch
    %12 = sbr.rel (%p10) target = $region8
  $region5: #{manner_block_forward.6} parent=0 // loop_body
    %s14 = ssub.s32 %s9, 1
    %s15 = ssub.s32 %s9, 2
    %s16 = sadd.s32 %s9, 1
    %s17 = ssub.s32 %s9, %s16
    %p18 = scmp.eq.s32.totalorder %s17, 0
    %s20 = sadd.s32 %s19, 1
    %s21 = scalar_select %p18, %s19, %s20
    %p24 = pneg %p18
    %p25 = scmp.eq.s32.totalorder %s9, 1
    %p26 = por %p24, %p25
    %p27 = scmp.ne.s32.totalorder %s19, %s22
    %p28 = scmp.eq.s32.totalorder %s9, 0
    %p29 = por %p27, %p28
    %p30 = scmp.ne.s32.totalorder %s19, %s22
    %p31 = scmp.eq.s32.totalorder %s14, 1
    %p32 = por %p30, %p31
    %p33 = scmp.ne.s32.totalorder %s22, %s23
    %p34 = scmp.eq.s32.totalorder %s14, 0
    %p35 = por %p33, %p34
    %p36 = scmp.ne.s32.totalorder %s22, %s23
    %p37 = scmp.eq.s32.totalorder %s15, 1
    %p38 = por %p36, %p37
    %p40 = scmp.ne.s32.totalorder %s23, %s39
    %p41 = scmp.eq.s32.totalorder %s15, 0
    %p42 = por %p40, %p41
    %s44 = sadd.s32 %s43, 1
    %p47 = scmp.eq.s32.totalorder %s9, 1
    %p48 = scmp.ne.s32.totalorder %s43, %s45
    %p49 = scmp.eq.s32.totalorder %s9, 0
    %p50 = por %p48, %p49
    %p51 = scmp.ne.s32.totalorder %s43, %s45
    %p52 = scmp.eq.s32.totalorder %s14, 1
    %p53 = por %p51, %p52
    %p54 = scmp.ne.s32.totalorder %s45, %s46
    %p55 = scmp.eq.s32.totalorder %s14, 0
    %p56 = por %p54, %p55
    %p57 = scmp.ne.s32.totalorder %s45, %s46
    %p58 = scmp.eq.s32.totalorder %s15, 1
    %p59 = por %p57, %p58
    %p61 = scmp.ne.s32.totalorder %s46, %s60
    %p62 = scmp.eq.s32.totalorder %s15, 0
    %p63 = por %p61, %p62
    %s65 = sadd.s32 %s64, 1
    %p68 = scmp.eq.s32.totalorder %s9, 1
    %p69 = scmp.ne.s32.totalorder %s64, %s66
    %p70 = scmp.eq.s32.totalorder %s9, 0
    %p71 = por %p69, %p70
    %p72 = scmp.ne.s32.totalorder %s64, %s66
    %p73 = scmp.eq.s32.totalorder %s14, 1
    %p74 = por %p72, %p73
    %p75 = scmp.ne.s32.totalorder %s66, %s67
    %p76 = scmp.eq.s32.totalorder %s14, 0
    %p77 = por %p75, %p76
    %p78 = scmp.ne.s32.totalorder %s66, %s67
    %p79 = scmp.eq.s32.totalorder %s15, 1
    %p80 = por %p78, %p79
    %p82 = scmp.ne.s32.totalorder %s67, %s81
    %p83 = scmp.eq.s32.totalorder %s15, 0
    %p84 = por %p82, %p83
    %s85 = ssub.s32 %s9, %s16
    %p86 = scmp.eq.s32.totalorder %s85, 0
    %s88 = sadd.s32 %s87, 1
    %s89 = scalar_select %p86, %s87, %s88
    %p92 = pneg %p86
    %p93 = scmp.eq.s32.totalorder %s9, 1
    %p94 = por %p92, %p93
    %p95 = scmp.ne.s32.totalorder %s87, %s90
    %p96 = scmp.eq.s32.totalorder %s9, 0
    %p97 = por %p95, %p96
    %p98 = scmp.ne.s32.totalorder %s87, %s90
    %p99 = scmp.eq.s32.totalorder %s14, 1
    %p100 = por %p98, %p99
    %p101 = scmp.ne.s32.totalorder %s90, %s91
    %p102 = scmp.eq.s32.totalorder %s14, 0
    %p103 = por %p101, %p102
    %p104 = scmp.ne.s32.totalorder %s90, %s91
    %p105 = scmp.eq.s32.totalorder %s15, 1
    %p106 = por %p104, %p105
    %p108 = scmp.ne.s32.totalorder %s91, %s107
    %p109 = scmp.eq.s32.totalorder %s15, 0
    %p110 = por %p108, %p109
    %p111 = scmp.le.s32.totalorder 1, %s9
    %p112 = scmp.lt.s32.totalorder %s9, 3
    %p113 = pnand %p111, %p112
    %p114 = pneg %p113
    // Predicated region
    $region9: #{manner_block_forward.6} parent=5 // pred_check
      _
    $region10: #{manner_block_forward.6} parent=5 // pred_check_branch
      %116 = sbr.rel (%p113) target = $region12
    $region11: #{manner_block_forward.6} parent=5 // pred_region
      %s117 = ssub.s32 %s9, 1
      // Predicated region
      $region13: #{manner_block_forward.6} parent=11 // pred_check
        %p118 = pneg %p56
      $region14: #{manner_block_forward.6} parent=11 // pred_check_branch
        %120 = sbr.rel (%p118) target = $region16
      $region15: #{manner_block_forward.6} parent=11 // pred_region
        _
      $region16: #{manner_block_forward.6} parent=11 // pred_fallthru
        _
      // Predicated region
      $region17: #{manner_block_forward.6} parent=11 // pred_check
        %p121 = pneg %p77
      $region18: #{manner_block_forward.6} parent=11 // pred_check_branch
        %123 = sbr.rel (%p121) target = $region20
      $region19: #{manner_block_forward.6} parent=11 // pred_region
        _
      $region20: #{manner_block_forward.6} parent=11 // pred_fallthru
        _
    $region12: #{manner_block_forward.6} parent=5 // pred_fallthru
      _
    %p124 = scmp.lt.s32.totalorder %s9, 2
    // Predicated region
    $region21: #{manner_block_forward.6} parent=5 // pred_check
      %p125 = pneg %p124
    $region22: #{manner_block_forward.6} parent=5 // pred_check_branch
      %127 = sbr.rel (%p125) target = $region24
    $region23: #{manner_block_forward.6} parent=5 // pred_region
      // Predicated region
      $region25: #{manner_block_forward.6} parent=23 // pred_check
        %p128 = pneg %p29
      $region26: #{manner_block_forward.6} parent=23 // pred_check_branch
        %130 = sbr.rel (%p128) target = $region28
      $region27: #{manner_block_forward.6} parent=23 // pred_region
        %p131 = scmp.lt.s32.totalorder %s9, 1
        %s132 = scalar_select %p131, %s9, 1
        %s133 = scalar_lea.vmem %s0, %s132
      $region28: #{manner_block_forward.6} parent=23 // pred_fallthru
        _
    $region24: #{manner_block_forward.6} parent=5 // pred_fallthru
      _
    %p134 = scmp.le.s32.totalorder 1, %s9
    %p135 = scmp.lt.s32.totalorder %s9, 3
    %p136 = pnand %p134, %p135
    %p137 = pneg %p136
    // Predicated region
    $region29: #{manner_block_forward.6} parent=5 // pred_check
      _
    $region30: #{manner_block_forward.6} parent=5 // pred_check_branch
      %139 = sbr.rel (%p136) target = $region32
    $region31: #{manner_block_forward.6} parent=5 // pred_region
      %s140 = ssub.s32 %s9, 1
      %p141 = scmp.lt.s32.totalorder %s14, 1
      %s142 = scalar_select %p141, %s14, 1
      %s143 = scalar_lea.vmem %s0, %s142
      %p144 = pneg %p35
      %p145 = pneg %p32
      %p146 = pneg %p56
      %p147 = pneg %p53
      %p148 = pneg %p77
      %p149 = pneg %p74
      %p150 = pneg %p103
      %p151 = pneg %p100
      %p152 = scmp.lt.s32.totalorder %s14, 1
      %s153 = scalar_select %p152, %s14, 1
      %s154 = smul.addr %s153, 2
      %s155 = smul.addr %s154, 8
      %s156 = scalar_lea.vmem %s3, %s155
      %p157 = scmp.lt.s32.totalorder %s14, 1
      %s158 = scalar_select %p157, %s14, 1
      %s159 = scalar_lea.vmem %s0, %s158
      %p160 = scmp.lt.s32.totalorder %s14, 1
      %s161 = scalar_select %p160, %s14, 1
      %s162 = smul.addr %s161, 2
      %s163 = smul.addr %s162, 8
      %s164 = scalar_lea.vmem %s3, %s163
      %vm165 = vcmask 0
      %166 = vst.msk [vmem:[#allocation2] sm:$0x1] %vm165, 0.0
      %vm167 = vcmask 516600
      %168 = vst.msk [vmem:[#allocation2] sm:$0x1] %vm167, 0.0
      %v169 = vld [vmem:[%s159] sm:$0x1]
      %v171 = vlaneseq
      %v172 = vshrl.u32 %v171, 7
      %v173 = vsub.s32 0, %v172
      %v174 = vrot.slane %v169, %v173
      %175 = vrot.lane.b32.xlu0 %v174, 1
      %v176 = vpop.permute.xlu0 %175
      %vm178 = vcmask 507912
      %179 = vst.msk [vmem:[#allocation2] sm:$0x1] %vm178, %v176
      %v180 = vld [vmem:[%s1] sm:$0xff]
      %v181 = vld [vmem:[%s1 + $0x8] sm:$0xff]
      %v182 = vld [vmem:[#allocation2] sm:$0x1]
      %184 = vset.pattern.permute.xlu0 0
      %185 = vperm.xlu0 %184, %v180
      %v186 = vpop.permute.xlu0 %185
      %189 = vset.pattern.permute.xlu0 0
      %190 = vperm.xlu0 %189, %v181
      %v191 = vpop.permute.xlu0 %190
      %v194 = vlaneseq
      %v195 = vshrl.u32 %v194, 7
      %v196 = vsub.s32 0, %v195
      %v197 = vrot.slane %v182, %v196
      %v199 = vmul.f32 %v186, %v197
      %v200 = vmul.f32 %v191, %v197
      %v201 = vadd.f32 %v199, 0.0
      %v202 = vadd.f32 %v200, 0.0
      %s203 = scalar_lea.vmem %s1, 16
      %v204 = vld [vmem:[%s203] sm:$0xff]
      %v205 = vld [vmem:[%s203 + $0x8] sm:$0xff]
      %207 = vset.pattern.permute.xlu0 0
      %208 = vperm.xlu0 %207, %v204
      %v209 = vpop.permute.xlu0 %208
      %212 = vset.pattern.permute.xlu0 0
      %213 = vperm.xlu0 %212, %v205
      %v214 = vpop.permute.xlu0 %213
      %v216 = vmul.f32 %v209, %v197
      %v217 = vmul.f32 %v214, %v197
      %220 = vrot.lane.b32.xlu0 %v216, 127
      %v221 = vpop.permute.xlu0 %220
      %222 = vrot.lane.b32.xlu0 %v217, 127
      %v223 = vpop.permute.xlu0 %222
      %v226 = vadd.f32 %v201, %v221
      %v227 = vadd.f32 %v202, %v223
      %s228 = scalar_lea.vmem %s1, 32
      %v229 = vld [vmem:[%s228] sm:$0xff]
      %v230 = vld [vmem:[%s228 + $0x8] sm:$0xff]
      %232 = vset.pattern.permute.xlu0 0
      %233 = vperm.xlu0 %232, %v229
      %v234 = vpop.permute.xlu0 %233
      %237 = vset.pattern.permute.xlu0 0
      %238 = vperm.xlu0 %237, %v230
      %v239 = vpop.permute.xlu0 %238
      %v241 = vmul.f32 %v234, %v197
      %v242 = vmul.f32 %v239, %v197
      %245 = vrot.lane.b32.xlu0 %v241, 126
      %v246 = vpop.permute.xlu0 %245
      %247 = vrot.lane.b32.xlu0 %v242, 126
      %v248 = vpop.permute.xlu0 %247
      %v251 = vadd.f32 %v226, %v246
      %v252 = vadd.f32 %v227, %v248
      %v253 = vld [vmem:[%s2] sm:$0xff]
      %v254 = vld [vmem:[%s2 + $0x8] sm:$0xff]
      %256 = vset.pattern.permute.xlu0 0
      %257 = vperm.xlu0 %256, %v253
      %v258 = vpop.permute.xlu0 %257
      %261 = vset.pattern.permute.xlu0 0
      %262 = vperm.xlu0 %261, %v254
      %v263 = vpop.permute.xlu0 %262
      %v265 = vadd.f32 %v251, %v258
      %v266 = vadd.f32 %v252, %v263
      %v267 = vmax.f32 %v265, 0.0
      %v268 = vmax.f32 %v266, 0.0
      %vm269 = vcmask 506880
      %270 = vst.msk [vmem:[%s164] sm:$0xff] %vm269, %v267
      %271 = vst.msk [vmem:[%s164 + $0x8] sm:$0xff] %vm269, %v268
      %p272 = scmp.lt.s32.totalorder %s14, 1
      %s273 = scalar_select %p272, %s14, 1
      %s274 = smul.addr %s273, 2
      %s275 = smul.addr %s274, 8
      %s276 = scalar_lea.vmem %s3, %s275
      // Predicated region
      $region33: #{manner_block_forward.6} parent=31 // pred_check
        %p277 = pneg %p100
      $region34: #{manner_block_forward.6} parent=31 // pred_check_branch
        %279 = sbr.rel (%p277) target = $region36
      $region35: #{manner_block_forward.6} parent=31 // pred_region
        _
      $region36: #{manner_block_forward.6} parent=31 // pred_fallthru
        _
    $region32: #{manner_block_forward.6} parent=5 // pred_fallthru
      _
    %p280 = scmp.le.s32.totalorder 2, %s9
    // Predicated region
    $region37: #{manner_block_forward.6} parent=5 // pred_check
      %p281 = pneg %p280
    $region38: #{manner_block_forward.6} parent=5 // pred_check_branch
      %283 = sbr.rel (%p281) target = $region40
    $region39: #{manner_block_forward.6} parent=5 // pred_region
      %s284 = ssub.s32 %s9, 2
      // Predicated region
      $region41: #{manner_block_forward.6} parent=39 // pred_check
        %p285 = pneg %p106
      $region42: #{manner_block_forward.6} parent=39 // pred_check_branch
        %287 = sbr.rel (%p285) target = $region44
      $region43: #{manner_block_forward.6} parent=39 // pred_region
        %p288 = scmp.lt.s32.totalorder %s15, 1
        %s289 = scalar_select %p288, %s15, 1
        %s290 = smul.addr %s289, 2
        %s291 = smul.addr %s290, 8
        %s292 = scalar_lea.vmem %s3, %s291
      $region44: #{manner_block_forward.6} parent=39 // pred_fallthru
        _
    $region40: #{manner_block_forward.6} parent=5 // pred_fallthru
      _
  $region6: #{manner_block_forward.6} parent=0 // loop_footer
    %s13 = sadd.s32 1, %s9
  $region7: #{manner_block_forward.6} parent=0 // loop_footer_branch
    %8 = sbr.rel target = $region3
  $region8: #{manner_block_forward.6} parent=0 // loop_exit
    _

// kernel: manner_block_forward.7
$region0: #{manner_block_forward.7}
  #allocation0 [shape = 'u32[]', space=smem, size = 0x4, offset = 0x4, fixed_abs, tag = 'smem constant byte address 0x4 - core index']
  #allocation1 [shape = 'u32[144,128]{1,0:T(1,128)}', space=vmem, size = 0x12000, scoped, tag = 'internal scratch']
  #allocation2 [shape = 'f32[32,34]{1,0:T(8,128)}', space=vmem, size = 0x4000, scoped, tag = 'scratch operand']
  %s0 = inlined_call_operand.vmem [shape: f32[2,16,31], index: 0, kind: input, shape index: {}]
  %s1 = inlined_call_operand.vmem [shape: f32[2,16,31], index: 1, kind: input, shape index: {}]
  %s2 = inlined_call_operand.vmem [shape: f32[4,16,16], index: 2, kind: input, shape index: {}]
  %s3 = inlined_call_operand.vmem [shape: f32[16,1], index: 3, kind: input, shape index: {}]
  %s4 = inlined_call_operand.vmem [shape: f32[32,16], index: 4, kind: input, shape index: {}]
  %s5 = inlined_call_operand.vmem [shape: f32[32,1], index: 5, kind: input, shape index: {}]
  %s6 = inlined_call_operand.vmem [shape: f32[5,32,1], index: 6, kind: input, shape index: {}]
  %s7 = inlined_call_operand.vmem [shape: f32[32,1], index: 7, kind: input, shape index: {}]
  %s8 = inlined_call_operand.vmem [shape: f32[32,32], index: 8, kind: input, shape index: {}]
  %s9 = inlined_call_operand.vmem [shape: f32[32,1], index: 9, kind: input, shape index: {}]
  %s10 = inlined_call_operand.vmem [shape: f32[32,16], index: 10, kind: input, shape index: {}]
  %s11 = inlined_call_operand.vmem [shape: f32[32,1], index: 11, kind: input, shape index: {}]
  %s12 = inlined_call_operand.vmem [shape: f32[2,32,30], index: 12, kind: output, shape index: {}]
  %s13 = sld [smem:[#allocation0]]
  $region81: #{manner_block_forward.7} parent=0
    _
  %s15 = ssub.s32 1, %s13
  %s16 = scalar_select 0, %s15, %s13
  loop: start=0, step=1, limit=4
  $region2: #{manner_block_forward.7} parent=0 // loop_pre_header
    _
  $region3: #{manner_block_forward.7} parent=0 // loop_header
    %s18 = sphi 0, %s22
    %p19 = scmp.ge.s32.totalorder %s18, 4
    %s28 = sphi 0, %s30
    %s31 = sphi 0, %s28
    %s32 = sphi 0, %s31
    %s48 = sphi 0, %s32
    %s54 = sphi 0, %s56
    %s57 = sphi 0, %s54
    %s58 = sphi 0, %s57
    %s74 = sphi 0, %s58
    %s78 = sphi 0, %s78
    %s80 = sphi 0, %s78
    %s81 = sphi 0, %s80
    %s95 = sphi 0, %s81
    %s99 = sphi 0, %s99
    %s101 = sphi 0, %s99
    %s102 = sphi 0, %s101
    %s116 = sphi 0, %s102
    %s120 = sphi 0, %s120
    %s122 = sphi 0, %s120
    %s123 = sphi 0, %s122
    %s137 = sphi 0, %s123
    %s141 = sphi 0, %s141
    %s143 = sphi 0, %s141
    %s144 = sphi 0, %s143
    %s158 = sphi 0, %s144
    %s162 = sphi 0, %s162
    %s164 = sphi 0, %s162
    %s165 = sphi 0, %s164
    %s179 = sphi 0, %s165
    %s183 = sphi 0, %s183
    %s185 = sphi 0, %s183
    %s186 = sphi 0, %s185
    %s200 = sphi 0, %s186
    %s204 = sphi 0, %s204
    %s206 = sphi 0, %s204
    %s207 = sphi 0, %s206
    %s221 = sphi 0, %s207
    %s225 = sphi 0, %s225
    %s227 = sphi 0, %s225
    %s228 = sphi 0, %s227
    %s242 = sphi 0, %s228
    %s246 = sphi 0, %s246
    %s248 = sphi 0, %s246
    %s249 = sphi 0, %s248
    %s263 = sphi 0, %s249
    %s267 = sphi 0, %s267
    %s269 = sphi 0, %s267
    %s270 = sphi 0, %s269
    %s284 = sphi 0, %s270
    %s290 = sphi 0, %s292
    %s293 = sphi 0, %s290
    %s294 = sphi 0, %s293
    %s310 = sphi 0, %s294
  $region4: #{manner_block_forward.7} parent=0 // loop_header_branch
    %21 = sbr.rel (%p19) target = $region8
  $region5: #{manner_block_forward.7} parent=0 // loop_body
    %s23 = ssub.s32 %s18, 1
    %s24 = ssub.s32 %s18, 2
    %s25 = sadd.s32 %s18, 1
    %s26 = ssub.s32 %s18, %s25
    %p27 = scmp.eq.s32.totalorder %s26, 0
    %s29 = sadd.s32 %s28, 1
    %s30 = scalar_select %p27, %s28, %s29
    %p33 = pneg %p27
    %p34 = scmp.eq.s32.totalorder %s18, 1
    %p35 = por %p33, %p34
    %p36 = scmp.ne.s32.totalorder %s28, %s31
    %p37 = scmp.eq.s32.totalorder %s18, 0
    %p38 = por %p36, %p37
    %p39 = scmp.ne.s32.totalorder %s28, %s31
    %p40 = scmp.eq.s32.totalorder %s23, 1
    %p41 = por %p39, %p40
    %p42 = scmp.ne.s32.totalorder %s31, %s32
    %p43 = scmp.eq.s32.totalorder %s23, 0
    %p44 = por %p42, %p43
    %p45 = scmp.ne.s32.totalorder %s31, %s32
    %p46 = scmp.eq.s32.totalorder %s24, 1
    %p47 = por %p45, %p46
    %p49 = scmp.ne.s32.totalorder %s32, %s48
    %p50 = scmp.eq.s32.totalorder %s24, 0
    %p51 = por %p49, %p50
    %s52 = ssub.s32 %s18, %s25
    %p53 = scmp.eq.s32.totalorder %s52, 0
    %s55 = sadd.s32 %s54, 1
    %s56 = scalar_select %p53, %s54, %s55
    %p59 = pneg %p53
    %p60 = scmp.eq.s32.totalorder %s18, 1
    %p61 = por %p59, %p60
    %p62 = scmp.ne.s32.totalorder %s54, %s57
    %p63 = scmp.eq.s32.totalorder %s18, 0
    %p64 = por %p62, %p63
    %p65 = scmp.ne.s32.totalorder %s54, %s57
    %p66 = scmp.eq.s32.totalorder %s23, 1
    %p67 = por %p65, %p66
    %p68 = scmp.ne.s32.totalorder %s57, %s58
    %p69 = scmp.eq.s32.totalorder %s23, 0
    %p70 = por %p68, %p69
    %p71 = scmp.ne.s32.totalorder %s57, %s58
    %p72 = scmp.eq.s32.totalorder %s24, 1
    %p73 = por %p71, %p72
    %p75 = scmp.ne.s32.totalorder %s58, %s74
    %p76 = scmp.eq.s32.totalorder %s24, 0
    %p77 = por %p75, %p76
    %s79 = sadd.s32 %s78, 1
    %p82 = scmp.eq.s32.totalorder %s18, 1
    %p83 = scmp.ne.s32.totalorder %s78, %s80
    %p84 = scmp.eq.s32.totalorder %s18, 0
    %p85 = por %p83, %p84
    %p86 = scmp.ne.s32.totalorder %s78, %s80
    %p87 = scmp.eq.s32.totalorder %s23, 1
    %p88 = por %p86, %p87
    %p89 = scmp.ne.s32.totalorder %s80, %s81
    %p90 = scmp.eq.s32.totalorder %s23, 0
    %p91 = por %p89, %p90
    %p92 = scmp.ne.s32.totalorder %s80, %s81
    %p93 = scmp.eq.s32.totalorder %s24, 1
    %p94 = por %p92, %p93
    %p96 = scmp.ne.s32.totalorder %s81, %s95
    %p97 = scmp.eq.s32.totalorder %s24, 0
    %p98 = por %p96, %p97
    %s100 = sadd.s32 %s99, 1
    %p103 = scmp.eq.s32.totalorder %s18, 1
    %p104 = scmp.ne.s32.totalorder %s99, %s101
    %p105 = scmp.eq.s32.totalorder %s18, 0
    %p106 = por %p104, %p105
    %p107 = scmp.ne.s32.totalorder %s99, %s101
    %p108 = scmp.eq.s32.totalorder %s23, 1
    %p109 = por %p107, %p108
    %p110 = scmp.ne.s32.totalorder %s101, %s102
    %p111 = scmp.eq.s32.totalorder %s23, 0
    %p112 = por %p110, %p111
    %p113 = scmp.ne.s32.totalorder %s101, %s102
    %p114 = scmp.eq.s32.totalorder %s24, 1
    %p115 = por %p113, %p114
    %p117 = scmp.ne.s32.totalorder %s102, %s116
    %p118 = scmp.eq.s32.totalorder %s24, 0
    %p119 = por %p117, %p118
    %s121 = sadd.s32 %s120, 1
    %p124 = scmp.eq.s32.totalorder %s18, 1
    %p125 = scmp.ne.s32.totalorder %s120, %s122
    %p126 = scmp.eq.s32.totalorder %s18, 0
    %p127 = por %p125, %p126
    %p128 = scmp.ne.s32.totalorder %s120, %s122
    %p129 = scmp.eq.s32.totalorder %s23, 1
    %p130 = por %p128, %p129
    %p131 = scmp.ne.s32.totalorder %s122, %s123
    %p132 = scmp.eq.s32.totalorder %s23, 0
    %p133 = por %p131, %p132
    %p134 = scmp.ne.s32.totalorder %s122, %s123
    %p135 = scmp.eq.s32.totalorder %s24, 1
    %p136 = por %p134, %p135
    %p138 = scmp.ne.s32.totalorder %s123, %s137
    %p139 = scmp.eq.s32.totalorder %s24, 0
    %p140 = por %p138, %p139
    %s142 = sadd.s32 %s141, 1
    %p145 = scmp.eq.s32.totalorder %s18, 1
    %p146 = scmp.ne.s32.totalorder %s141, %s143
    %p147 = scmp.eq.s32.totalorder %s18, 0
    %p148 = por %p146, %p147
    %p149 = scmp.ne.s32.totalorder %s141, %s143
    %p150 = scmp.eq.s32.totalorder %s23, 1
    %p151 = por %p149, %p150
    %p152 = scmp.ne.s32.totalorder %s143, %s144
    %p153 = scmp.eq.s32.totalorder %s23, 0
    %p154 = por %p152, %p153
    %p155 = scmp.ne.s32.totalorder %s143, %s144
    %p156 = scmp.eq.s32.totalorder %s24, 1
    %p157 = por %p155, %p156
    %p159 = scmp.ne.s32.totalorder %s144, %s158
    %p160 = scmp.eq.s32.totalorder %s24, 0
    %p161 = por %p159, %p160
    %s163 = sadd.s32 %s162, 1
    %p166 = scmp.eq.s32.totalorder %s18, 1
    %p167 = scmp.ne.s32.totalorder %s162, %s164
    %p168 = scmp.eq.s32.totalorder %s18, 0
    %p169 = por %p167, %p168
    %p170 = scmp.ne.s32.totalorder %s162, %s164
    %p171 = scmp.eq.s32.totalorder %s23, 1
    %p172 = por %p170, %p171
    %p173 = scmp.ne.s32.totalorder %s164, %s165
    %p174 = scmp.eq.s32.totalorder %s23, 0
    %p175 = por %p173, %p174
    %p176 = scmp.ne.s32.totalorder %s164, %s165
    %p177 = scmp.eq.s32.totalorder %s24, 1
    %p178 = por %p176, %p177
    %p180 = scmp.ne.s32.totalorder %s165, %s179
    %p181 = scmp.eq.s32.totalorder %s24, 0
    %p182 = por %p180, %p181
    %s184 = sadd.s32 %s183, 1
    %p187 = scmp.eq.s32.totalorder %s18, 1
    %p188 = scmp.ne.s32.totalorder %s183, %s185
    %p189 = scmp.eq.s32.totalorder %s18, 0
    %p190 = por %p188, %p189
    %p191 = scmp.ne.s32.totalorder %s183, %s185
    %p192 = scmp.eq.s32.totalorder %s23, 1
    %p193 = por %p191, %p192
    %p194 = scmp.ne.s32.totalorder %s185, %s186
    %p195 = scmp.eq.s32.totalorder %s23, 0
    %p196 = por %p194, %p195
    %p197 = scmp.ne.s32.totalorder %s185, %s186
    %p198 = scmp.eq.s32.totalorder %s24, 1
    %p199 = por %p197, %p198
    %p201 = scmp.ne.s32.totalorder %s186, %s200
    %p202 = scmp.eq.s32.totalorder %s24, 0
    %p203 = por %p201, %p202
    %s205 = sadd.s32 %s204, 1
    %p208 = scmp.eq.s32.totalorder %s18, 1
    %p209 = scmp.ne.s32.totalorder %s204, %s206
    %p210 = scmp.eq.s32.totalorder %s18, 0
    %p211 = por %p209, %p210
    %p212 = scmp.ne.s32.totalorder %s204, %s206
    %p213 = scmp.eq.s32.totalorder %s23, 1
    %p214 = por %p212, %p213
    %p215 = scmp.ne.s32.totalorder %s206, %s207
    %p216 = scmp.eq.s32.totalorder %s23, 0
    %p217 = por %p215, %p216
    %p218 = scmp.ne.s32.totalorder %s206, %s207
    %p219 = scmp.eq.s32.totalorder %s24, 1
    %p220 = por %p218, %p219
    %p222 = scmp.ne.s32.totalorder %s207, %s221
    %p223 = scmp.eq.s32.totalorder %s24, 0
    %p224 = por %p222, %p223
    %s226 = sadd.s32 %s225, 1
    %p229 = scmp.eq.s32.totalorder %s18, 1
    %p230 = scmp.ne.s32.totalorder %s225, %s227
    %p231 = scmp.eq.s32.totalorder %s18, 0
    %p232 = por %p230, %p231
    %p233 = scmp.ne.s32.totalorder %s225, %s227
    %p234 = scmp.eq.s32.totalorder %s23, 1
    %p235 = por %p233, %p234
    %p236 = scmp.ne.s32.totalorder %s227, %s228
    %p237 = scmp.eq.s32.totalorder %s23, 0
    %p238 = por %p236, %p237
    %p239 = scmp.ne.s32.totalorder %s227, %s228
    %p240 = scmp.eq.s32.totalorder %s24, 1
    %p241 = por %p239, %p240
    %p243 = scmp.ne.s32.totalorder %s228, %s242
    %p244 = scmp.eq.s32.totalorder %s24, 0
    %p245 = por %p243, %p244
    %s247 = sadd.s32 %s246, 1
    %p250 = scmp.eq.s32.totalorder %s18, 1
    %p251 = scmp.ne.s32.totalorder %s246, %s248
    %p252 = scmp.eq.s32.totalorder %s18, 0
    %p253 = por %p251, %p252
    %p254 = scmp.ne.s32.totalorder %s246, %s248
    %p255 = scmp.eq.s32.totalorder %s23, 1
    %p256 = por %p254, %p255
    %p257 = scmp.ne.s32.totalorder %s248, %s249
    %p258 = scmp.eq.s32.totalorder %s23, 0
    %p259 = por %p257, %p258
    %p260 = scmp.ne.s32.totalorder %s248, %s249
    %p261 = scmp.eq.s32.totalorder %s24, 1
    %p262 = por %p260, %p261
    %p264 = scmp.ne.s32.totalorder %s249, %s263
    %p265 = scmp.eq.s32.totalorder %s24, 0
    %p266 = por %p264, %p265
    %s268 = sadd.s32 %s267, 1
    %p271 = scmp.eq.s32.totalorder %s18, 1
    %p272 = scmp.ne.s32.totalorder %s267, %s269
    %p273 = scmp.eq.s32.totalorder %s18, 0
    %p274 = por %p272, %p273
    %p275 = scmp.ne.s32.totalorder %s267, %s269
    %p276 = scmp.eq.s32.totalorder %s23, 1
    %p277 = por %p275, %p276
    %p278 = scmp.ne.s32.totalorder %s269, %s270
    %p279 = scmp.eq.s32.totalorder %s23, 0
    %p280 = por %p278, %p279
    %p281 = scmp.ne.s32.totalorder %s269, %s270
    %p282 = scmp.eq.s32.totalorder %s24, 1
    %p283 = por %p281, %p282
    %p285 = scmp.ne.s32.totalorder %s270, %s284
    %p286 = scmp.eq.s32.totalorder %s24, 0
    %p287 = por %p285, %p286
    %s288 = ssub.s32 %s18, %s25
    %p289 = scmp.eq.s32.totalorder %s288, 0
    %s291 = sadd.s32 %s290, 1
    %s292 = scalar_select %p289, %s290, %s291
    %p295 = pneg %p289
    %p296 = scmp.eq.s32.totalorder %s18, 1
    %p297 = por %p295, %p296
    %p298 = scmp.ne.s32.totalorder %s290, %s293
    %p299 = scmp.eq.s32.totalorder %s18, 0
    %p300 = por %p298, %p299
    %p301 = scmp.ne.s32.totalorder %s290, %s293
    %p302 = scmp.eq.s32.totalorder %s23, 1
    %p303 = por %p301, %p302
    %p304 = scmp.ne.s32.totalorder %s293, %s294
    %p305 = scmp.eq.s32.totalorder %s23, 0
    %p306 = por %p304, %p305
    %p307 = scmp.ne.s32.totalorder %s293, %s294
    %p308 = scmp.eq.s32.totalorder %s24, 1
    %p309 = por %p307, %p308
    %p311 = scmp.ne.s32.totalorder %s294, %s310
    %p312 = scmp.eq.s32.totalorder %s24, 0
    %p313 = por %p311, %p312
    %p314 = scmp.le.s32.totalorder 1, %s18
    %p315 = scmp.lt.s32.totalorder %s18, 3
    %p316 = pnand %p314, %p315
    %p317 = pneg %p316
    // Predicated region
    $region9: #{manner_block_forward.7} parent=5 // pred_check
      _
    $region10: #{manner_block_forward.7} parent=5 // pred_check_branch
      %319 = sbr.rel (%p316) target = $region12
    $region11: #{manner_block_forward.7} parent=5 // pred_region
      %s320 = ssub.s32 %s18, 1
      // Predicated region
      $region13: #{manner_block_forward.7} parent=11 // pred_check
        %p321 = pneg %p91
      $region14: #{manner_block_forward.7} parent=11 // pred_check_branch
        %323 = sbr.rel (%p321) target = $region16
      $region15: #{manner_block_forward.7} parent=11 // pred_region
        _
      $region16: #{manner_block_forward.7} parent=11 // pred_fallthru
        _
      // Predicated region
      $region17: #{manner_block_forward.7} parent=11 // pred_check
        %p324 = pneg %p112
      $region18: #{manner_block_forward.7} parent=11 // pred_check_branch
        %326 = sbr.rel (%p324) target = $region20
      $region19: #{manner_block_forward.7} parent=11 // pred_region
        _
      $region20: #{manner_block_forward.7} parent=11 // pred_fallthru
        _
      // Predicated region
      $region21: #{manner_block_forward.7} parent=11 // pred_check
        %p327 = pneg %p133
      $region22: #{manner_block_forward.7} parent=11 // pred_check_branch
        %329 = sbr.rel (%p327) target = $region24
      $region23: #{manner_block_forward.7} parent=11 // pred_region
        _
      $region24: #{manner_block_forward.7} parent=11 // pred_fallthru
        _
      // Predicated region
      $region25: #{manner_block_forward.7} parent=11 // pred_check
        %p330 = pneg %p154
      $region26: #{manner_block_forward.7} parent=11 // pred_check_branch
        %332 = sbr.rel (%p330) target = $region28
      $region27: #{manner_block_forward.7} parent=11 // pred_region
        _
      $region28: #{manner_block_forward.7} parent=11 // pred_fallthru
        _
      // Predicated region
      $region29: #{manner_block_forward.7} parent=11 // pred_check
        %p333 = pneg %p175
      $region30: #{manner_block_forward.7} parent=11 // pred_check_branch
        %335 = sbr.rel (%p333) target = $region32
      $region31: #{manner_block_forward.7} parent=11 // pred_region
        _
      $region32: #{manner_block_forward.7} parent=11 // pred_fallthru
        _
      // Predicated region
      $region33: #{manner_block_forward.7} parent=11 // pred_check
        %p336 = pneg %p196
      $region34: #{manner_block_forward.7} parent=11 // pred_check_branch
        %338 = sbr.rel (%p336) target = $region36
      $region35: #{manner_block_forward.7} parent=11 // pred_region
        _
      $region36: #{manner_block_forward.7} parent=11 // pred_fallthru
        _
      // Predicated region
      $region37: #{manner_block_forward.7} parent=11 // pred_check
        %p339 = pneg %p217
      $region38: #{manner_block_forward.7} parent=11 // pred_check_branch
        %341 = sbr.rel (%p339) target = $region40
      $region39: #{manner_block_forward.7} parent=11 // pred_region
        _
      $region40: #{manner_block_forward.7} parent=11 // pred_fallthru
        _
      // Predicated region
      $region41: #{manner_block_forward.7} parent=11 // pred_check
        %p342 = pneg %p238
      $region42: #{manner_block_forward.7} parent=11 // pred_check_branch
        %344 = sbr.rel (%p342) target = $region44
      $region43: #{manner_block_forward.7} parent=11 // pred_region
        _
      $region44: #{manner_block_forward.7} parent=11 // pred_fallthru
        _
      // Predicated region
      $region45: #{manner_block_forward.7} parent=11 // pred_check
        %p345 = pneg %p259
      $region46: #{manner_block_forward.7} parent=11 // pred_check_branch
        %347 = sbr.rel (%p345) target = $region48
      $region47: #{manner_block_forward.7} parent=11 // pred_region
        _
      $region48: #{manner_block_forward.7} parent=11 // pred_fallthru
        _
      // Predicated region
      $region49: #{manner_block_forward.7} parent=11 // pred_check
        %p348 = pneg %p280
      $region50: #{manner_block_forward.7} parent=11 // pred_check_branch
        %350 = sbr.rel (%p348) target = $region52
      $region51: #{manner_block_forward.7} parent=11 // pred_region
        _
      $region52: #{manner_block_forward.7} parent=11 // pred_fallthru
        _
    $region12: #{manner_block_forward.7} parent=5 // pred_fallthru
      _
    %p351 = scmp.lt.s32.totalorder %s18, 2
    // Predicated region
    $region53: #{manner_block_forward.7} parent=5 // pred_check
      %p352 = pneg %p351
    $region54: #{manner_block_forward.7} parent=5 // pred_check_branch
      %354 = sbr.rel (%p352) target = $region56
    $region55: #{manner_block_forward.7} parent=5 // pred_region
      // Predicated region
      $region57: #{manner_block_forward.7} parent=55 // pred_check
        %p355 = pneg %p38
      $region58: #{manner_block_forward.7} parent=55 // pred_check_branch
        %357 = sbr.rel (%p355) target = $region60
      $region59: #{manner_block_forward.7} parent=55 // pred_region
        %p358 = scmp.lt.s32.totalorder %s18, 1
        %s359 = scalar_select %p358, %s18, 1
        %s360 = smul.addr %s359, 2
        %s361 = smul.addr %s360, 8
        %s362 = scalar_lea.vmem %s0, %s361
      $region60: #{manner_block_forward.7} parent=55 // pred_fallthru
        _
      // Predicated region
      $region61: #{manner_block_forward.7} parent=55 // pred_check
        %p363 = pneg %p64
      $region62: #{manner_block_forward.7} parent=55 // pred_check_branch
        %365 = sbr.rel (%p363) target = $region64
      $region63: #{manner_block_forward.7} parent=55 // pred_region
        %p366 = scmp.lt.s32.totalorder %s18, 1
        %s367 = scalar_select %p366, %s18, 1
        %s368 = smul.addr %s367, 2
        %s369 = smul.addr %s368, 8
        %s370 = scalar_lea.vmem %s1, %s369
      $region64: #{manner_block_forward.7} parent=55 // pred_fallthru
        _
    $region56: #{manner_block_forward.7} parent=5 // pred_fallthru
      _
    %p371 = scmp.le.s32.totalorder 1, %s18
    %p372 = scmp.lt.s32.totalorder %s18, 3
    %p373 = pnand %p371, %p372
    %p374 = pneg %p373
    // Predicated region
    $region65: #{manner_block_forward.7} parent=5 // pred_check
      _
    $region66: #{manner_block_forward.7} parent=5 // pred_check_branch
      %376 = sbr.rel (%p373) target = $region68
    $region67: #{manner_block_forward.7} parent=5 // pred_region
      %s377 = ssub.s32 %s18, 1
      %p378 = scmp.lt.s32.totalorder %s23, 1
      %s379 = scalar_select %p378, %s23, 1
      %s380 = smul.addr %s379, 2
      %s381 = smul.addr %s380, 8
      %s382 = scalar_lea.vmem %s0, %s381
      %p383 = pneg %p44
      %p384 = pneg %p41
      %p385 = scmp.lt.s32.totalorder %s23, 1
      %s386 = scalar_select %p385, %s23, 1
      %s387 = smul.addr %s386, 2
      %s388 = smul.addr %s387, 8
      %s389 = scalar_lea.vmem %s1, %s388
      %p390 = pneg %p70
      %p391 = pneg %p67
      %p392 = pneg %p91
      %p393 = pneg %p88
      %p394 = pneg %p112
      %p395 = pneg %p109
      %p396 = pneg %p133
      %p397 = pneg %p130
      %p398 = pneg %p154
      %p399 = pneg %p151
      %p400 = pneg %p175
      %p401 = pneg %p172
      %p402 = pneg %p196
      %p403 = pneg %p193
      %p404 = pneg %p217
      %p405 = pneg %p214
      %p406 = pneg %p238
      %p407 = pneg %p235
      %p408 = pneg %p259
      %p409 = pneg %p256
      %p410 = pneg %p280
      %p411 = pneg %p277
      %p412 = pneg %p306
      %p413 = pneg %p303
      %p414 = scmp.lt.s32.totalorder %s23, 1
      %s415 = scalar_select %p414, %s23, 1
      %s416 = smul.addr %s415, 4
      %s417 = smul.addr %s416, 8
      %s418 = scalar_lea.vmem %s12, %s417
      %p419 = scmp.lt.s32.totalorder %s23, 1
      %s420 = scalar_select %p419, %s23, 1
      %s421 = smul.addr %s420, 2
      %s422 = smul.addr %s421, 8
      %s423 = scalar_lea.vmem %s0, %s422
      %p424 = scmp.lt.s32.totalorder %s23, 1
      %s425 = scalar_select %p424, %s23, 1
      %s426 = smul.addr %s425, 2
      %s427 = smul.addr %s426, 8
      %s428 = scalar_lea.vmem %s1, %s427
      %p429 = scmp.lt.s32.totalorder %s23, 1
      %s430 = scalar_select %p429, %s23, 1
      %s431 = smul.addr %s430, 4
      %s432 = smul.addr %s431, 8
      %s433 = scalar_lea.vmem %s12, %s432
      %v434 = vld [vmem:[%s2] sm:$0xff]
      %v435 = vld [vmem:[%s2 + $0x8] sm:$0xff]
      %v436 = vld [vmem:[%s423] sm:$0xff]
      %v437 = vld [vmem:[%s423 + $0x8] sm:$0xff]
      %s438 = scalar_lea.vmem %s2, 16
      %v439 = vld [vmem:[%s438] sm:$0xff]
      %v440 = vld [vmem:[%s438 + $0x8] sm:$0xff]
      %v441 = vld [vmem:[%s428] sm:$0xff]
      %v442 = vld [vmem:[%s428 + $0x8] sm:$0xff]
      %vm443 = vcmask 130048
      %v445 = vsel %vm443, %v439, 0
      %v448 = vsel %vm443, %v440, 0
      %450 = vmatprep.subr.mxu0 0.0
      %451 = vmatpush1.msra.mxu0 0.0
      %452 = vmatprep.subr.mxu0 0.0
      %453 = vmatpush1.msra.mxu0 0.0
      %454 = vmatprep.subr.mxu0 0.0
      %455 = vmatpush1.msra.mxu0 0.0
      %456 = vmatprep.subr.mxu0 0.0
      %457 = vmatpush1.msra.mxu0 0.0
      %458 = vmatprep.subr.mxu0 0.0
      %459 = vmatpush1.msra.mxu0 0.0
      %460 = vmatprep.subr.mxu0 0.0
      %461 = vmatpush1.msra.mxu0 0.0
      %462 = vmatprep.subr.mxu0 0.0
      %463 = vmatpush1.msra.mxu0 0.0
      %464 = vmatprep.subr.mxu0 0.0
      %465 = vmatpush1.msra.mxu0 0.0
      %466 = vmatprep.subr.mxu0 0.0
      %467 = vmatpush1.msra.mxu0 0.0
      %468 = vmatprep.subr.mxu0 0.0
      %469 = vmatpush1.msra.mxu0 0.0
      %470 = vmatprep.subr.mxu0 0.0
      %471 = vmatpush1.msra.mxu0 0.0
      %472 = vmatprep.subr.mxu0 0.0
      %473 = vmatpush1.msra.mxu0 0.0
      %474 = vmatprep.subr.mxu0 0.0
      %475 = vmatpush1.msra.mxu0 0.0
      %476 = vmatprep.subr.mxu0 0.0
      %477 = vmatpush1.msra.mxu0 0.0
      %478 = vmatprep.subr.mxu0 0.0
      %479 = vmatpush1.msra.mxu0 %v442
      %480 = vmatprep.subr.mxu0 0.0
      %481 = vmatpush1.msra.mxu0 %v441
      %482 = vmatprep.subr.mxu0 0.0
      %483 = vmatpush2.msra.mxu0 0.0
      %484 = vmatprep.subr.mxu0 0.0
      %485 = vmatpush2.msra.mxu0 0.0
      %486 = vmatprep.subr.mxu0 0.0
      %487 = vmatpush2.msra.mxu0 0.0
      %488 = vmatprep.subr.mxu0 0.0
      %489 = vmatpush2.msra.mxu0 0.0
      %490 = vmatprep.subr.mxu0 0.0
      %491 = vmatpush2.msra.mxu0 0.0
      %492 = vmatprep.subr.mxu0 0.0
      %493 = vmatpush2.msra.mxu0 0.0
      %494 = vmatprep.subr.mxu0 0.0
      %495 = vmatpush2.msra.mxu0 0.0
      %496 = vmatprep.subr.mxu0 0.0
      %497 = vmatpush2.msra.mxu0 0.0
      %498 = vmatprep.subr.mxu0 0.0
      %499 = vmatpush2.msra.mxu0 0.0
      %500 = vmatprep.subr.mxu0 0.0
      %501 = vmatpush2.msra.mxu0 0.0
      %502 = vmatprep.subr.mxu0 0.0
      %503 = vmatpush2.msra.mxu0 0.0
      %504 = vmatprep.subr.mxu0 0.0
      %505 = vmatpush2.msra.mxu0 0.0
      %506 = vmatprep.subr.mxu0 0.0
      %507 = vmatpush2.msra.mxu0 0.0
      %508 = vmatprep.subr.mxu0 0.0
      %509 = vmatpush2.msra.mxu0 0.0
      %510 = vmatprep.subr.mxu0 0.0
      %511 = vmatpush2.msra.mxu0 0.0
      %512 = vmatprep.subr.mxu0 0.0
      %513 = vmatpush2.msra.mxu0 0.0
      %514 = vmatprep.mubr.f32.mxu0 0.0
      %515 = vmatmul.mubr.f32.gmra.mxu0 %v445
      %v516 = vpop.f32.mrf.mxu0
      %v517 = vadd.f32 0.0, %v516
      %v518 = vpop.f32.mrf.mxu0
      %519 = vmatprep.mubr.f32.mxu0 0.0
      %520 = vmatmul.mubr.f32.gmra.mxu0 %v448
      %v521 = vpop.f32.mrf.mxu0
      %v522 = vadd.f32 0.0, %v521
      %v523 = vpop.f32.mrf.mxu0
      %524 = vdwg.mxu0
      %v526 = vsel %vm443, %v434, 0
      %v529 = vsel %vm443, %v435, 0
      %531 = vmatprep.subr.mxu0 0.0
      %532 = vmatpush1.msra.mxu0 0.0
      %533 = vmatprep.subr.mxu0 0.0
      %534 = vmatpush1.msra.mxu0 0.0
      %535 = vmatprep.subr.mxu0 0.0
      %536 = vmatpush1.msra.mxu0 0.0
      %537 = vmatprep.subr.mxu0 0.0
      %538 = vmatpush1.msra.mxu0 0.0
      %539 = vmatprep.subr.mxu0 0.0
      %540 = vmatpush1.msra.mxu0 0.0
      %541 = vmatprep.subr.mxu0 0.0
      %542 = vmatpush1.msra.mxu0 0.0
      %543 = vmatprep.subr.mxu0 0.0
      %544 = vmatpush1.msra.mxu0 0.0
      %545 = vmatprep.subr.mxu0 0.0
      %546 = vmatpush1.msra.mxu0 0.0
      %547 = vmatprep.subr.mxu0 0.0
      %548 = vmatpush1.msra.mxu0 0.0
      %549 = vmatprep.subr.mxu0 0.0
      %550 = vmatpush1.msra.mxu0 0.0
      %551 = vmatprep.subr.mxu0 0.0
      %552 = vmatpush1.msra.mxu0 0.0
      %553 = vmatprep.subr.mxu0 0.0
      %554 = vmatpush1.msra.mxu0 0.0
      %555 = vmatprep.subr.mxu0 0.0
      %556 = vmatpush1.msra.mxu0 0.0
      %557 = vmatprep.subr.mxu0 0.0
      %558 = vmatpush1.msra.mxu0 0.0
      %559 = vmatprep.subr.mxu0 0.0
      %560 = vmatpush1.msra.mxu0 %v437
      %561 = vmatprep.subr.mxu0 0.0
      %562 = vmatpush1.msra.mxu0 %v436
      %563 = vmatprep.subr.mxu0 0.0
      %564 = vmatpush2.msra.mxu0 0.0
      %565 = vmatprep.subr.mxu0 0.0
      %566 = vmatpush2.msra.mxu0 0.0
      %567 = vmatprep.subr.mxu0 0.0
      %568 = vmatpush2.msra.mxu0 0.0
      %569 = vmatprep.subr.mxu0 0.0
      %570 = vmatpush2.msra.mxu0 0.0
      %571 = vmatprep.subr.mxu0 0.0
      %572 = vmatpush2.msra.mxu0 0.0
      %573 = vmatprep.subr.mxu0 0.0
      %574 = vmatpush2.msra.mxu0 0.0
      %575 = vmatprep.subr.mxu0 0.0
      %576 = vmatpush2.msra.mxu0 0.0
      %577 = vmatprep.subr.mxu0 0.0
      %578 = vmatpush2.msra.mxu0 0.0
      %579 = vmatprep.subr.mxu0 0.0
      %580 = vmatpush2.msra.mxu0 0.0
      %581 = vmatprep.subr.mxu0 0.0
      %582 = vmatpush2.msra.mxu0 0.0
      %583 = vmatprep.subr.mxu0 0.0
      %584 = vmatpush2.msra.mxu0 0.0
      %585 = vmatprep.subr.mxu0 0.0
      %586 = vmatpush2.msra.mxu0 0.0
      %587 = vmatprep.subr.mxu0 0.0
      %588 = vmatpush2.msra.mxu0 0.0
      %589 = vmatprep.subr.mxu0 0.0
      %590 = vmatpush2.msra.mxu0 0.0
      %591 = vmatprep.subr.mxu0 0.0
      %592 = vmatpush2.msra.mxu0 0.0
      %593 = vmatprep.subr.mxu0 0.0
      %594 = vmatpush2.msra.mxu0 0.0
      %595 = vmatprep.mubr.f32.mxu0 0.0
      %596 = vmatmul.mubr.f32.gmra.mxu0 %v526
      %v597 = vpop.f32.mrf.mxu0
      %v598 = vadd.f32 %v517, %v597
      %v599 = vpop.f32.mrf.mxu0
      %600 = vmatprep.mubr.f32.mxu0 0.0
      %601 = vmatmul.mubr.f32.gmra.mxu0 %v529
      %v602 = vpop.f32.mrf.mxu0
      %v603 = vadd.f32 %v522, %v602
      %v604 = vpop.f32.mrf.mxu0
      %605 = vdwg.mxu0
      %s606 = scalar_lea.vmem %s2, 32
      %v607 = vld [vmem:[%s606] sm:$0xff]
      %v608 = vld [vmem:[%s606 + $0x8] sm:$0xff]
      %611 = vrot.lane.b32.xlu0 %v436, 127
      %v612 = vpop.permute.xlu0 %611
      %613 = vrot.lane.b32.xlu0 %v437, 127
      %v614 = vpop.permute.xlu0 %613
      %v618 = vsel %vm443, %v607, 0
      %v621 = vsel %vm443, %v608, 0
      %623 = vmatprep.subr.mxu0 0.0
      %624 = vmatpush1.msra.mxu0 0.0
      %625 = vmatprep.subr.mxu0 0.0
      %626 = vmatpush1.msra.mxu0 0.0
      %627 = vmatprep.subr.mxu0 0.0
      %628 = vmatpush1.msra.mxu0 0.0
      %629 = vmatprep.subr.mxu0 0.0
      %630 = vmatpush1.msra.mxu0 0.0
      %631 = vmatprep.subr.mxu0 0.0
      %632 = vmatpush1.msra.mxu0 0.0
      %633 = vmatprep.subr.mxu0 0.0
      %634 = vmatpush1.msra.mxu0 0.0
      %635 = vmatprep.subr.mxu0 0.0
      %636 = vmatpush1.msra.mxu0 0.0
      %637 = vmatprep.subr.mxu0 0.0
      %638 = vmatpush1.msra.mxu0 0.0
      %639 = vmatprep.subr.mxu0 0.0
      %640 = vmatpush1.msra.mxu0 0.0
      %641 = vmatprep.subr.mxu0 0.0
      %642 = vmatpush1.msra.mxu0 0.0
      %643 = vmatprep.subr.mxu0 0.0
      %644 = vmatpush1.msra.mxu0 0.0
      %645 = vmatprep.subr.mxu0 0.0
      %646 = vmatpush1.msra.mxu0 0.0
      %647 = vmatprep.subr.mxu0 0.0
      %648 = vmatpush1.msra.mxu0 0.0
      %649 = vmatprep.subr.mxu0 0.0
      %650 = vmatpush1.msra.mxu0 0.0
      %651 = vmatprep.subr.mxu0 0.0
      %652 = vmatpush1.msra.mxu0 %v614
      %653 = vmatprep.subr.mxu0 0.0
      %654 = vmatpush1.msra.mxu0 %v612
      %655 = vmatprep.subr.mxu0 0.0
      %656 = vmatpush2.msra.mxu0 0.0
      %657 = vmatprep.subr.mxu0 0.0
      %658 = vmatpush2.msra.mxu0 0.0
      %659 = vmatprep.subr.mxu0 0.0
      %660 = vmatpush2.msra.mxu0 0.0
      %661 = vmatprep.subr.mxu0 0.0
      %662 = vmatpush2.msra.mxu0 0.0
      %663 = vmatprep.subr.mxu0 0.0
      %664 = vmatpush2.msra.mxu0 0.0
      %665 = vmatprep.subr.mxu0 0.0
      %666 = vmatpush2.msra.mxu0 0.0
      %667 = vmatprep.subr.mxu0 0.0
      %668 = vmatpush2.msra.mxu0 0.0
      %669 = vmatprep.subr.mxu0 0.0
      %670 = vmatpush2.msra.mxu0 0.0
      %671 = vmatprep.subr.mxu0 0.0
      %672 = vmatpush2.msra.mxu0 0.0
      %673 = vmatprep.subr.mxu0 0.0
      %674 = vmatpush2.msra.mxu0 0.0
      %675 = vmatprep.subr.mxu0 0.0
      %676 = vmatpush2.msra.mxu0 0.0
      %677 = vmatprep.subr.mxu0 0.0
      %678 = vmatpush2.msra.mxu0 0.0
      %679 = vmatprep.subr.mxu0 0.0
      %680 = vmatpush2.msra.mxu0 0.0
      %681 = vmatprep.subr.mxu0 0.0
      %682 = vmatpush2.msra.mxu0 0.0
      %683 = vmatprep.subr.mxu0 0.0
      %684 = vmatpush2.msra.mxu0 0.0
      %685 = vmatprep.subr.mxu0 0.0
      %686 = vmatpush2.msra.mxu0 0.0
      %687 = vmatprep.mubr.f32.mxu0 0.0
      %688 = vmatmul.mubr.f32.gmra.mxu0 %v618
      %v689 = vpop.f32.mrf.mxu0
      %v690 = vadd.f32 0.0, %v689
      %v691 = vpop.f32.mrf.mxu0
      %692 = vmatprep.mubr.f32.mxu0 0.0
      %693 = vmatmul.mubr.f32.gmra.mxu0 %v621
      %v694 = vpop.f32.mrf.mxu0
      %v695 = vadd.f32 0.0, %v694
      %v696 = vpop.f32.mrf.mxu0
      %697 = vdwg.mxu0
      %v698 = vadd.f32 %v598, %v690
      %v699 = vadd.f32 %v603, %v695
      %s700 = scalar_lea.vmem %s2, 48
      %v701 = vld [vmem:[%s700] sm:$0xff]
      %v702 = vld [vmem:[%s700 + $0x8] sm:$0xff]
      %705 = vrot.lane.b32.xlu0 %v441, 127
      %v706 = vpop.permute.xlu0 %705
      %707 = vrot.lane.b32.xlu0 %v442, 127
      %v708 = vpop.permute.xlu0 %707
      %v712 = vsel %vm443, %v701, 0
      %v715 = vsel %vm443, %v702, 0
      %717 = vmatprep.subr.mxu0 0.0
      %718 = vmatpush1.msra.mxu0 0.0
      %719 = vmatprep.subr.mxu0 0.0
      %720 = vmatpush1.msra.mxu0 0.0
      %721 = vmatprep.subr.mxu0 0.0
      %722 = vmatpush1.msra.mxu0 0.0
      %723 = vmatprep.subr.mxu0 0.0
      %724 = vmatpush1.msra.mxu0 0.0
      %725 = vmatprep.subr.mxu0 0.0
      %726 = vmatpush1.msra.mxu0 0.0
      %727 = vmatprep.subr.mxu0 0.0
      %728 = vmatpush1.msra.mxu0 0.0
      %729 = vmatprep.subr.mxu0 0.0
      %730 = vmatpush1.msra.mxu0 0.0
      %731 = vmatprep.subr.mxu0 0.0
      %732 = vmatpush1.msra.mxu0 0.0
      %733 = vmatprep.subr.mxu0 0.0
      %734 = vmatpush1.msra.mxu0 0.0
      %735 = vmatprep.subr.mxu0 0.0
      %736 = vmatpush1.msra.mxu0 0.0
      %737 = vmatprep.subr.mxu0 0.0
      %738 = vmatpush1.msra.mxu0 0.0
      %739 = vmatprep.subr.mxu0 0.0
      %740 = vmatpush1.msra.mxu0 0.0
      %741 = vmatprep.subr.mxu0 0.0
      %742 = vmatpush1.msra.mxu0 0.0
      %743 = vmatprep.subr.mxu0 0.0
      %744 = vmatpush1.msra.mxu0 0.0
      %745 = vmatprep.subr.mxu0 0.0
      %746 = vmatpush1.msra.mxu0 %v708
      %747 = vmatprep.subr.mxu0 0.0
      %748 = vmatpush1.msra.mxu0 %v706
      %749 = vmatprep.subr.mxu0 0.0
      %750 = vmatpush2.msra.mxu0 0.0
      %751 = vmatprep.subr.mxu0 0.0
      %752 = vmatpush2.msra.mxu0 0.0
      %753 = vmatprep.subr.mxu0 0.0
      %754 = vmatpush2.msra.mxu0 0.0
      %755 = vmatprep.subr.mxu0 0.0
      %756 = vmatpush2.msra.mxu0 0.0
      %757 = vmatprep.subr.mxu0 0.0
      %758 = vmatpush2.msra.mxu0 0.0
      %759 = vmatprep.subr.mxu0 0.0
      %760 = vmatpush2.msra.mxu0 0.0
      %761 = vmatprep.subr.mxu0 0.0
      %762 = vmatpush2.msra.mxu0 0.0
      %763 = vmatprep.subr.mxu0 0.0
      %764 = vmatpush2.msra.mxu0 0.0
      %765 = vmatprep.subr.mxu0 0.0
      %766 = vmatpush2.msra.mxu0 0.0
      %767 = vmatprep.subr.mxu0 0.0
      %768 = vmatpush2.msra.mxu0 0.0
      %769 = vmatprep.subr.mxu0 0.0
      %770 = vmatpush2.msra.mxu0 0.0
      %771 = vmatprep.subr.mxu0 0.0
      %772 = vmatpush2.msra.mxu0 0.0
      %773 = vmatprep.subr.mxu0 0.0
      %774 = vmatpush2.msra.mxu0 0.0
      %775 = vmatprep.subr.mxu0 0.0
      %776 = vmatpush2.msra.mxu0 0.0
      %777 = vmatprep.subr.mxu0 0.0
      %778 = vmatpush2.msra.mxu0 0.0
      %779 = vmatprep.subr.mxu0 0.0
      %780 = vmatpush2.msra.mxu0 0.0
      %781 = vmatprep.mubr.f32.mxu0 0.0
      %782 = vmatmul.mubr.f32.gmra.mxu0 %v712
      %v783 = vpop.f32.mrf.mxu0
      %v784 = vadd.f32 0.0, %v783
      %v785 = vpop.f32.mrf.mxu0
      %786 = vmatprep.mubr.f32.mxu0 0.0
      %787 = vmatmul.mubr.f32.gmra.mxu0 %v715
      %v788 = vpop.f32.mrf.mxu0
      %v789 = vadd.f32 0.0, %v788
      %v790 = vpop.f32.mrf.mxu0
      %791 = vdwg.mxu0
      %v792 = vadd.f32 %v698, %v784
      %v793 = vadd.f32 %v699, %v789
      %v794 = vld [vmem:[%s3] sm:$0xff]
      %v795 = vld [vmem:[%s3 + $0x8] sm:$0xff]
      %797 = vset.pattern.permute.xlu0 0
      %798 = vperm.xlu0 %797, %v794
      %v799 = vpop.permute.xlu0 %798
      %802 = vset.pattern.permute.xlu0 0
      %803 = vperm.xlu0 %802, %v795
      %v804 = vpop.permute.xlu0 %803
      %v806 = vadd.f32 %v792, %v799
      %v807 = vadd.f32 %v793, %v804
      %v808 = vmax.f32 %v806, 0.0
      %v809 = vmax.f32 %v807, 0.0
      %v810 = vld [vmem:[%s4] sm:$0xff]
      %v811 = vld [vmem:[%s4 + $0x8] sm:$0xff]
      %v812 = vld [vmem:[%s4 + $0x10] sm:$0xff]
      %v813 = vld [vmem:[%s4 + $0x18] sm:$0xff]
      %v814 = vld [vmem:[%s5] sm:$0xff]
      %v815 = vld [vmem:[%s5 + $0x8] sm:$0xff]
      %v816 = vld [vmem:[%s5 + $0x10] sm:$0xff]
      %v817 = vld [vmem:[%s5 + $0x18] sm:$0xff]
      %819 = vset.pattern.permute.xlu0 0
      %820 = vperm.xlu0 %819, %v814
      %v821 = vpop.permute.xlu0 %820
      %824 = vset.pattern.permute.xlu0 0
      %825 = vperm.xlu0 %824, %v815
      %v826 = vpop.permute.xlu0 %825
      %829 = vset.pattern.permute.xlu0 0
      %830 = vperm.xlu0 %829, %v816
      %v831 = vpop.permute.xlu0 %830
      %834 = vset.pattern.permute.xlu0 0
      %835 = vperm.xlu0 %834, %v817
      %v836 = vpop.permute.xlu0 %835
      %v839 = vsel %vm443, %v810, 0
      %v842 = vsel %vm443, %v811, 0
      %v845 = vsel %vm443, %v812, 0
      %v848 = vsel %vm443, %v813, 0
      %850 = vmatprep.subr.mxu0 0.0
      %851 = vmatpush1.msra.mxu0 0.0
      %852 = vmatprep.subr.mxu0 0.0
      %853 = vmatpush1.msra.mxu0 0.0
      %854 = vmatprep.subr.mxu0 0.0
      %855 = vmatpush1.msra.mxu0 0.0
      %856 = vmatprep.subr.mxu0 0.0
      %857 = vmatpush1.msra.mxu0 0.0
      %858 = vmatprep.subr.mxu0 0.0
      %859 = vmatpush1.msra.mxu0 0.0
      %860 = vmatprep.subr.mxu0 0.0
      %861 = vmatpush1.msra.mxu0 0.0
      %862 = vmatprep.subr.mxu0 0.0
      %863 = vmatpush1.msra.mxu0 0.0
      %864 = vmatprep.subr.mxu0 0.0
      %865 = vmatpush1.msra.mxu0 0.0
      %866 = vmatprep.subr.mxu0 0.0
      %867 = vmatpush1.msra.mxu0 0.0
      %868 = vmatprep.subr.mxu0 0.0
      %869 = vmatpush1.msra.mxu0 0.0
      %870 = vmatprep.subr.mxu0 0.0
      %871 = vmatpush1.msra.mxu0 0.0
      %872 = vmatprep.subr.mxu0 0.0
      %873 = vmatpush1.msra.mxu0 0.0
      %874 = vmatprep.subr.mxu0 0.0
      %875 = vmatpush1.msra.mxu0 0.0
      %876 = vmatprep.subr.mxu0 0.0
      %877 = vmatpush1.msra.mxu0 0.0
      %878 = vmatprep.subr.mxu0 0.0
      %879 = vmatpush1.msra.mxu0 %v809
      %880 = vmatprep.subr.mxu0 0.0
      %881 = vmatpush1.msra.mxu0 %v808
      %882 = vmatprep.subr.mxu0 0.0
      %883 = vmatpush2.msra.mxu0 0.0
      %884 = vmatprep.subr.mxu0 0.0
      %885 = vmatpush2.msra.mxu0 0.0
      %886 = vmatprep.subr.mxu0 0.0
      %887 = vmatpush2.msra.mxu0 0.0
      %888 = vmatprep.subr.mxu0 0.0
      %889 = vmatpush2.msra.mxu0 0.0
      %890 = vmatprep.subr.mxu0 0.0
      %891 = vmatpush2.msra.mxu0 0.0
      %892 = vmatprep.subr.mxu0 0.0
      %893 = vmatpush2.msra.mxu0 0.0
      %894 = vmatprep.subr.mxu0 0.0
      %895 = vmatpush2.msra.mxu0 0.0
      %896 = vmatprep.subr.mxu0 0.0
      %897 = vmatpush2.msra.mxu0 0.0
      %898 = vmatprep.subr.mxu0 0.0
      %899 = vmatpush2.msra.mxu0 0.0
      %900 = vmatprep.subr.mxu0 0.0
      %901 = vmatpush2.msra.mxu0 0.0
      %902 = vmatprep.subr.mxu0 0.0
      %903 = vmatpush2.msra.mxu0 0.0
      %904 = vmatprep.subr.mxu0 0.0
      %905 = vmatpush2.msra.mxu0 0.0
      %906 = vmatprep.subr.mxu0 0.0
      %907 = vmatpush2.msra.mxu0 0.0
      %908 = vmatprep.subr.mxu0 0.0
      %909 = vmatpush2.msra.mxu0 0.0
      %910 = vmatprep.subr.mxu0 0.0
      %911 = vmatpush2.msra.mxu0 0.0
      %912 = vmatprep.subr.mxu0 0.0
      %913 = vmatpush2.msra.mxu0 0.0
      %914 = vmatprep.mubr.f32.mxu0 0.0
      %915 = vmatmul.mubr.f32.gmra.mxu0 %v839
      %v916 = vpop.f32.mrf.mxu0
      %v917 = vadd.f32 %v821, %v916
      %v918 = vpop.f32.mrf.mxu0
      %919 = vmatprep.mubr.f32.mxu0 0.0
      %920 = vmatmul.mubr.f32.gmra.mxu0 %v842
      %v921 = vpop.f32.mrf.mxu0
      %v922 = vadd.f32 %v826, %v921
      %v923 = vpop.f32.mrf.mxu0
      %924 = vmatprep.mubr.f32.mxu0 0.0
      %925 = vmatmul.mubr.f32.gmra.mxu0 %v845
      %v926 = vpop.f32.mrf.mxu0
      %v927 = vadd.f32 %v831, %v926
      %v928 = vpop.f32.mrf.mxu0
      %929 = vmatprep.mubr.f32.mxu0 0.0
      %930 = vmatmul.mubr.f32.gmra.mxu0 %v848
      %v931 = vpop.f32.mrf.mxu0
      %v932 = vadd.f32 %v836, %v931
      %v933 = vpop.f32.mrf.mxu0
      %934 = vdwg.mxu0
      %v935 = vmax.f32 %v917, 0.0
      %v936 = vmax.f32 %v922, 0.0
      %v937 = vmax.f32 %v927, 0.0
      %v938 = vmax.f32 %v932, 0.0
      %vm939 = vcmask 15360
      %940 = vst.msk [vmem:[#allocation2] sm:$0xff] %vm939, 0.0
      %941 = vst.msk [vmem:[#allocation2 + $0x8] sm:$0xff] %vm939, 0.0
      %942 = vst.msk [vmem:[#allocation2 + $0x10] sm:$0xff] %vm939, 0.0
      %943 = vst.msk [vmem:[#allocation2 + $0x18] sm:$0xff] %vm939, 0.0
      %vm944 = vcmask 277760
      %945 = vst.msk [vmem:[#allocation2] sm:$0xff] %vm944, 0.0
      %946 = vst.msk [vmem:[#allocation2 + $0x8] sm:$0xff] %vm944, 0.0
      %947 = vst.msk [vmem:[#allocation2 + $0x10] sm:$0xff] %vm944, 0.0
      %948 = vst.msk [vmem:[#allocation2 + $0x18] sm:$0xff] %vm944, 0.0
      %953 = vrot.lane.b32.xlu0 %v935, 2
      %v954 = vpop.permute.xlu0 %953
      %955 = vrot.lane.b32.xlu0 %v936, 2
      %v956 = vpop.permute.xlu0 %955
      %957 = vrot.lane.b32.xlu0 %v937, 2
      %v958 = vpop.permute.xlu0 %957
      %959 = vrot.lane.b32.xlu0 %v938, 2
      %v960 = vpop.permute.xlu0 %959
      %vm965 = vcmask 261136
      %966 = vst.msk [vmem:[#allocation2] sm:$0xff] %vm965, %v954
      %967 = vst.msk [vmem:[#allocation2 + $0x8] sm:$0xff] %vm965, %v956
      %968 = vst.msk [vmem:[#allocation2 + $0x10] sm:$0xff] %vm965, %v958
      %969 = vst.msk [vmem:[#allocation2 + $0x18] sm:$0xff] %vm965, %v960
      %v970 = vld [vmem:[%s6] sm:$0xff]
      %v971 = vld [vmem:[%s6 + $0x8] sm:$0xff]
      %v972 = vld [vmem:[%s6 + $0x10] sm:$0xff]
      %v973 = vld [vmem:[%s6 + $0x18] sm:$0xff]
      %v974 = vld [vmem:[#allocation2] sm:$0xff]
      %v975 = vld [vmem:[#allocation2 + $0x8] sm:$0xff]
      %v976 = vld [vmem:[#allocation2 + $0x10] sm:$0xff]
      %v977 = vld [vmem:[#allocation2 + $0x18] sm:$0xff]
      %979 = vset.pattern.permute.xlu0 0
      %980 = vperm.xlu0 %979, %v970
      %v981 = vpop.permute.xlu0 %980
      %984 = vset.pattern.permute.xlu0 0
      %985 = vperm.xlu0 %984, %v971
      %v986 = vpop.permute.xlu0 %985
      %989 = vset.pattern.permute.xlu0 0
      %990 = vperm.xlu0 %989, %v972
      %v991 = vpop.permute.xlu0 %990
      %994 = vset.pattern.permute.xlu0 0
      %995 = vperm.xlu0 %994, %v973
      %v996 = vpop.permute.xlu0 %995
      %v998 = vmul.f32 %v981, %v974
      %v999 = vmul.f32 %v986, %v975
      %v1000 = vmul.f32 %v991, %v976
      %v1001 = vmul.f32 %v996, %v977
      %v1002 = vadd.f32 %v998, 0.0
      %v1003 = vadd.f32 %v999, 0.0
      %v1004 = vadd.f32 %v1000, 0.0
      %v1005 = vadd.f32 %v1001, 0.0
      %s1006 = scalar_lea.vmem %s6, 32
      %v1007 = vld [vmem:[%s1006] sm:$0xff]
      %v1008 = vld [vmem:[%s1006 + $0x8] sm:$0xff]
      %v1009 = vld [vmem:[%s1006 + $0x10] sm:$0xff]
      %v1010 = vld [vmem:[%s1006 + $0x18] sm:$0xff]
      %1012 = vset.pattern.permute.xlu0 0
      %1013 = vperm.xlu0 %1012, %v1007
      %v1014 = vpop.permute.xlu0 %1013
      %1017 = vset.pattern.permute.xlu0 0
      %1018 = vperm.xlu0 %1017, %v1008
      %v1019 = vpop.permute.xlu0 %1018
      %1022 = vset.pattern.permute.xlu0 0
      %1023 = vperm.xlu0 %1022, %v1009
      %v1024 = vpop.permute.xlu0 %1023
      %1027 = vset.pattern.permute.xlu0 0
      %1028 = vperm.xlu0 %1027, %v1010
      %v1029 = vpop.permute.xlu0 %1028
      %v1031 = vmul.f32 %v1014, %v974
      %v1032 = vmul.f32 %v1019, %v975
      %v1033 = vmul.f32 %v1024, %v976
      %v1034 = vmul.f32 %v1029, %v977
      %1039 = vrot.lane.b32.xlu0 %v1031, 127
      %v1040 = vpop.permute.xlu0 %1039
      %1041 = vrot.lane.b32.xlu0 %v1032, 127
      %v1042 = vpop.permute.xlu0 %1041
      %1043 = vrot.lane.b32.xlu0 %v1033, 127
      %v1044 = vpop.permute.xlu0 %1043
      %1045 = vrot.lane.b32.xlu0 %v1034, 127
      %v1046 = vpop.permute.xlu0 %1045
      %v1051 = vadd.f32 %v1002, %v1040
      %v1052 = vadd.f32 %v1003, %v1042
      %v1053 = vadd.f32 %v1004, %v1044
      %v1054 = vadd.f32 %v1005, %v1046
      %s1055 = scalar_lea.vmem %s6, 64
      %v1056 = vld [vmem:[%s1055] sm:$0xff]
      %v1057 = vld [vmem:[%s1055 + $0x8] sm:$0xff]
      %v1058 = vld [vmem:[%s1055 + $0x10] sm:$0xff]
      %v1059 = vld [vmem:[%s1055 + $0x18] sm:$0xff]
      %1061 = vset.pattern.permute.xlu0 0
      %1062 = vperm.xlu0 %1061, %v1056
      %v1063 = vpop.permute.xlu0 %1062
      %1066 = vset.pattern.permute.xlu0 0
      %1067 = vperm.xlu0 %1066, %v1057
      %v1068 = vpop.permute.xlu0 %1067
      %1071 = vset.pattern.permute.xlu0 0
      %1072 = vperm.xlu0 %1071, %v1058
      %v1073 = vpop.permute.xlu0 %1072
      %1076 = vset.pattern.permute.xlu0 0
      %1077 = vperm.xlu0 %1076, %v1059
      %v1078 = vpop.permute.xlu0 %1077
      %v1080 = vmul.f32 %v1063, %v974
      %v1081 = vmul.f32 %v1068, %v975
      %v1082 = vmul.f32 %v1073, %v976
      %v1083 = vmul.f32 %v1078, %v977
      %1088 = vrot.lane.b32.xlu0 %v1080, 126
      %v1089 = vpop.permute.xlu0 %1088
      %1090 = vrot.lane.b32.xlu0 %v1081, 126
      %v1091 = vpop.permute.xlu0 %1090
      %1092 = vrot.lane.b32.xlu0 %v1082, 126
      %v1093 = vpop.permute.xlu0 %1092
      %1094 = vrot.lane.b32.xlu0 %v1083, 126
      %v1095 = vpop.permute.xlu0 %1094
      %v1100 = vadd.f32 %v1051, %v1089
      %v1101 = vadd.f32 %v1052, %v1091
      %v1102 = vadd.f32 %v1053, %v1093
      %v1103 = vadd.f32 %v1054, %v1095
      %s1104 = scalar_lea.vmem %s6, 96
      %v1105 = vld [vmem:[%s1104] sm:$0xff]
      %v1106 = vld [vmem:[%s1104 + $0x8] sm:$0xff]
      %v1107 = vld [vmem:[%s1104 + $0x10] sm:$0xff]
      %v1108 = vld [vmem:[%s1104 + $0x18] sm:$0xff]
      %1110 = vset.pattern.permute.xlu0 0
      %1111 = vperm.xlu0 %1110, %v1105
      %v1112 = vpop.permute.xlu0 %1111
      %1115 = vset.pattern.permute.xlu0 0
      %1116 = vperm.xlu0 %1115, %v1106
      %v1117 = vpop.permute.xlu0 %1116
      %1120 = vset.pattern.permute.xlu0 0
      %1121 = vperm.xlu0 %1120, %v1107
      %v1122 = vpop.permute.xlu0 %1121
      %1125 = vset.pattern.permute.xlu0 0
      %1126 = vperm.xlu0 %1125, %v1108
      %v1127 = vpop.permute.xlu0 %1126
      %v1129 = vmul.f32 %v1112, %v974
      %v1130 = vmul.f32 %v1117, %v975
      %v1131 = vmul.f32 %v1122, %v976
      %v1132 = vmul.f32 %v1127, %v977
      %1137 = vrot.lane.b32.xlu0 %v1129, 125
      %v1138 = vpop.permute.xlu0 %1137
      %1139 = vrot.lane.b32.xlu0 %v1130, 125
      %v1140 = vpop.permute.xlu0 %1139
      %1141 = vrot.lane.b32.xlu0 %v1131, 125
      %v1142 = vpop.permute.xlu0 %1141
      %1143 = vrot.lane.b32.xlu0 %v1132, 125
      %v1144 = vpop.permute.xlu0 %1143
      %v1149 = vadd.f32 %v1100, %v1138
      %v1150 = vadd.f32 %v1101, %v1140
      %v1151 = vadd.f32 %v1102, %v1142
      %v1152 = vadd.f32 %v1103, %v1144
      %s1153 = scalar_lea.vmem %s6, 128
      %v1154 = vld [vmem:[%s1153] sm:$0xff]
      %v1155 = vld [vmem:[%s1153 + $0x8] sm:$0xff]
      %v1156 = vld [vmem:[%s1153 + $0x10] sm:$0xff]
      %v1157 = vld [vmem:[%s1153 + $0x18] sm:$0xff]
      %1159 = vset.pattern.permute.xlu0 0
      %1160 = vperm.xlu0 %1159, %v1154
      %v1161 = vpop.permute.xlu0 %1160
      %1164 = vset.pattern.permute.xlu0 0
      %1165 = vperm.xlu0 %1164, %v1155
      %v1166 = vpop.permute.xlu0 %1165
      %1169 = vset.pattern.permute.xlu0 0
      %1170 = vperm.xlu0 %1169, %v1156
      %v1171 = vpop.permute.xlu0 %1170
      %1174 = vset.pattern.permute.xlu0 0
      %1175 = vperm.xlu0 %1174, %v1157
      %v1176 = vpop.permute.xlu0 %1175
      %v1178 = vmul.f32 %v1161, %v974
      %v1179 = vmul.f32 %v1166, %v975
      %v1180 = vmul.f32 %v1171, %v976
      %v1181 = vmul.f32 %v1176, %v977
      %1186 = vrot.lane.b32.xlu0 %v1178, 124
      %v1187 = vpop.permute.xlu0 %1186
      %1188 = vrot.lane.b32.xlu0 %v1179, 124
      %v1189 = vpop.permute.xlu0 %1188
      %1190 = vrot.lane.b32.xlu0 %v1180, 124
      %v1191 = vpop.permute.xlu0 %1190
      %1192 = vrot.lane.b32.xlu0 %v1181, 124
      %v1193 = vpop.permute.xlu0 %1192
      %v1198 = vadd.f32 %v1149, %v1187
      %v1199 = vadd.f32 %v1150, %v1189
      %v1200 = vadd.f32 %v1151, %v1191
      %v1201 = vadd.f32 %v1152, %v1193
      %v1202 = vld [vmem:[%s7] sm:$0xff]
      %v1203 = vld [vmem:[%s7 + $0x8] sm:$0xff]
      %v1204 = vld [vmem:[%s7 + $0x10] sm:$0xff]
      %v1205 = vld [vmem:[%s7 + $0x18] sm:$0xff]
      %1207 = vset.pattern.permute.xlu0 0
      %1208 = vperm.xlu0 %1207, %v1202
      %v1209 = vpop.permute.xlu0 %1208
      %1212 = vset.pattern.permute.xlu0 0
      %1213 = vperm.xlu0 %1212, %v1203
      %v1214 = vpop.permute.xlu0 %1213
      %1217 = vset.pattern.permute.xlu0 0
      %1218 = vperm.xlu0 %1217, %v1204
      %v1219 = vpop.permute.xlu0 %1218
      %1222 = vset.pattern.permute.xlu0 0
      %1223 = vperm.xlu0 %1222, %v1205
      %v1224 = vpop.permute.xlu0 %1223
      %v1226 = vadd.f32 %v1198, %v1209
      %v1227 = vadd.f32 %v1199, %v1214
      %v1228 = vadd.f32 %v1200, %v1219
      %v1229 = vadd.f32 %v1201, %v1224
      %v1230 = vmax.f32 %v1226, 0.0
      %v1231 = vmax.f32 %v1227, 0.0
      %v1232 = vmax.f32 %v1228, 0.0
      %v1233 = vmax.f32 %v1229, 0.0
      %v1234 = vld [vmem:[%s8] sm:$0xff]
      %v1235 = vld [vmem:[%s8 + $0x8] sm:$0xff]
      %v1236 = vld [vmem:[%s8 + $0x10] sm:$0xff]
      %v1237 = vld [vmem:[%s8 + $0x18] sm:$0xff]
      %v1238 = vld [vmem:[%s9] sm:$0xff]
      %v1239 = vld [vmem:[%s9 + $0x8] sm:$0xff]
      %v1240 = vld [vmem:[%s9 + $0x10] sm:$0xff]
      %v1241 = vld [vmem:[%s9 + $0x18] sm:$0xff]
      %1243 = vset.pattern.permute.xlu0 0
      %1244 = vperm.xlu0 %1243, %v1238
      %v1245 = vpop.permute.xlu0 %1244
      %1248 = vset.pattern.permute.xlu0 0
      %1249 = vperm.xlu0 %1248, %v1239
      %v1250 = vpop.permute.xlu0 %1249
      %1253 = vset.pattern.permute.xlu0 0
      %1254 = vperm.xlu0 %1253, %v1240
      %v1255 = vpop.permute.xlu0 %1254
      %1258 = vset.pattern.permute.xlu0 0
      %1259 = vperm.xlu0 %1258, %v1241
      %v1260 = vpop.permute.xlu0 %1259
      %vm1262 = vcmask 261120
      %v1264 = vsel %vm1262, %v1234, 0
      %v1267 = vsel %vm1262, %v1235, 0
      %v1270 = vsel %vm1262, %v1236, 0
      %v1273 = vsel %vm1262, %v1237, 0
      %1275 = vmatprep.subr.mxu0 0.0
      %1276 = vmatpush1.msra.mxu0 0.0
      %1277 = vmatprep.subr.mxu0 0.0
      %1278 = vmatpush1.msra.mxu0 0.0
      %1279 = vmatprep.subr.mxu0 0.0
      %1280 = vmatpush1.msra.mxu0 0.0
      %1281 = vmatprep.subr.mxu0 0.0
      %1282 = vmatpush1.msra.mxu0 0.0
      %1283 = vmatprep.subr.mxu0 0.0
      %1284 = vmatpush1.msra.mxu0 0.0
      %1285 = vmatprep.subr.mxu0 0.0
      %1286 = vmatpush1.msra.mxu0 0.0
      %1287 = vmatprep.subr.mxu0 0.0
      %1288 = vmatpush1.msra.mxu0 0.0
      %1289 = vmatprep.subr.mxu0 0.0
      %1290 = vmatpush1.msra.mxu0 0.0
      %1291 = vmatprep.subr.mxu0 0.0
      %1292 = vmatpush1.msra.mxu0 0.0
      %1293 = vmatprep.subr.mxu0 0.0
      %1294 = vmatpush1.msra.mxu0 0.0
      %1295 = vmatprep.subr.mxu0 0.0
      %1296 = vmatpush1.msra.mxu0 0.0
      %1297 = vmatprep.subr.mxu0 0.0
      %1298 = vmatpush1.msra.mxu0 0.0
      %1299 = vmatprep.subr.mxu0 0.0
      %1300 = vmatpush1.msra.mxu0 %v1233
      %1301 = vmatprep.subr.mxu0 0.0
      %1302 = vmatpush1.msra.mxu0 %v1232
      %1303 = vmatprep.subr.mxu0 0.0
      %1304 = vmatpush1.msra.mxu0 %v1231
      %1305 = vmatprep.subr.mxu0 0.0
      %1306 = vmatpush1.msra.mxu0 %v1230
      %1307 = vmatprep.subr.mxu0 0.0
      %1308 = vmatpush2.msra.mxu0 0.0
      %1309 = vmatprep.subr.mxu0 0.0
      %1310 = vmatpush2.msra.mxu0 0.0
      %1311 = vmatprep.subr.mxu0 0.0
      %1312 = vmatpush2.msra.mxu0 0.0
      %1313 = vmatprep.subr.mxu0 0.0
      %1314 = vmatpush2.msra.mxu0 0.0
      %1315 = vmatprep.subr.mxu0 0.0
      %1316 = vmatpush2.msra.mxu0 0.0
      %1317 = vmatprep.subr.mxu0 0.0
      %1318 = vmatpush2.msra.mxu0 0.0
      %1319 = vmatprep.subr.mxu0 0.0
      %1320 = vmatpush2.msra.mxu0 0.0
      %1321 = vmatprep.subr.mxu0 0.0
      %1322 = vmatpush2.msra.mxu0 0.0
      %1323 = vmatprep.subr.mxu0 0.0
      %1324 = vmatpush2.msra.mxu0 0.0
      %1325 = vmatprep.subr.mxu0 0.0
      %1326 = vmatpush2.msra.mxu0 0.0
      %1327 = vmatprep.subr.mxu0 0.0
      %1328 = vmatpush2.msra.mxu0 0.0
      %1329 = vmatprep.subr.mxu0 0.0
      %1330 = vmatpush2.msra.mxu0 0.0
      %1331 = vmatprep.subr.mxu0 0.0
      %1332 = vmatpush2.msra.mxu0 0.0
      %1333 = vmatprep.subr.mxu0 0.0
      %1334 = vmatpush2.msra.mxu0 0.0
      %1335 = vmatprep.subr.mxu0 0.0
      %1336 = vmatpush2.msra.mxu0 0.0
      %1337 = vmatprep.subr.mxu0 0.0
      %1338 = vmatpush2.msra.mxu0 0.0
      %1339 = vmatprep.mubr.f32.mxu0 0.0
      %1340 = vmatmul.mubr.f32.gmra.mxu0 %v1264
      %v1341 = vpop.f32.mrf.mxu0
      %v1342 = vadd.f32 %v1245, %v1341
      %v1343 = vpop.f32.mrf.mxu0
      %1344 = vmatprep.mubr.f32.mxu0 0.0
      %1345 = vmatmul.mubr.f32.gmra.mxu0 %v1267
      %v1346 = vpop.f32.mrf.mxu0
      %v1347 = vadd.f32 %v1250, %v1346
      %v1348 = vpop.f32.mrf.mxu0
      %1349 = vmatprep.mubr.f32.mxu0 0.0
      %1350 = vmatmul.mubr.f32.gmra.mxu0 %v1270
      %v1351 = vpop.f32.mrf.mxu0
      %v1352 = vadd.f32 %v1255, %v1351
      %v1353 = vpop.f32.mrf.mxu0
      %1354 = vmatprep.mubr.f32.mxu0 0.0
      %1355 = vmatmul.mubr.f32.gmra.mxu0 %v1273
      %v1356 = vpop.f32.mrf.mxu0
      %v1357 = vadd.f32 %v1260, %v1356
      %v1358 = vpop.f32.mrf.mxu0
      %1359 = vdwg.mxu0
      %v1360 = vmax.f32 %v1342, 0.0
      %v1361 = vmax.f32 %v1347, 0.0
      %v1362 = vmax.f32 %v1352, 0.0
      %v1363 = vmax.f32 %v1357, 0.0
      %v1364 = vld [vmem:[%s10] sm:$0xff]
      %v1365 = vld [vmem:[%s10 + $0x8] sm:$0xff]
      %v1366 = vld [vmem:[%s10 + $0x10] sm:$0xff]
      %v1367 = vld [vmem:[%s10 + $0x18] sm:$0xff]
      %v1368 = vld [vmem:[%s11] sm:$0xff]
      %v1369 = vld [vmem:[%s11 + $0x8] sm:$0xff]
      %v1370 = vld [vmem:[%s11 + $0x10] sm:$0xff]
      %v1371 = vld [vmem:[%s11 + $0x18] sm:$0xff]
      %1373 = vset.pattern.permute.xlu0 0
      %1374 = vperm.xlu0 %1373, %v1368
      %v1375 = vpop.permute.xlu0 %1374
      %1378 = vset.pattern.permute.xlu0 0
      %1379 = vperm.xlu0 %1378, %v1369
      %v1380 = vpop.permute.xlu0 %1379
      %1383 = vset.pattern.permute.xlu0 0
      %1384 = vperm.xlu0 %1383, %v1370
      %v1385 = vpop.permute.xlu0 %1384
      %1388 = vset.pattern.permute.xlu0 0
      %1389 = vperm.xlu0 %1388, %v1371
      %v1390 = vpop.permute.xlu0 %1389
      %v1393 = vsel %vm443, %v1364, 0
      %v1396 = vsel %vm443, %v1365, 0
      %v1399 = vsel %vm443, %v1366, 0
      %v1402 = vsel %vm443, %v1367, 0
      %1404 = vmatprep.subr.mxu0 0.0
      %1405 = vmatpush1.msra.mxu0 0.0
      %1406 = vmatprep.subr.mxu0 0.0
      %1407 = vmatpush1.msra.mxu0 0.0
      %1408 = vmatprep.subr.mxu0 0.0
      %1409 = vmatpush1.msra.mxu0 0.0
      %1410 = vmatprep.subr.mxu0 0.0
      %1411 = vmatpush1.msra.mxu0 0.0
      %1412 = vmatprep.subr.mxu0 0.0
      %1413 = vmatpush1.msra.mxu0 0.0
      %1414 = vmatprep.subr.mxu0 0.0
      %1415 = vmatpush1.msra.mxu0 0.0
      %1416 = vmatprep.subr.mxu0 0.0
      %1417 = vmatpush1.msra.mxu0 0.0
      %1418 = vmatprep.subr.mxu0 0.0
      %1419 = vmatpush1.msra.mxu0 0.0
      %1420 = vmatprep.subr.mxu0 0.0
      %1421 = vmatpush1.msra.mxu0 0.0
      %1422 = vmatprep.subr.mxu0 0.0
      %1423 = vmatpush1.msra.mxu0 0.0
      %1424 = vmatprep.subr.mxu0 0.0
      %1425 = vmatpush1.msra.mxu0 0.0
      %1426 = vmatprep.subr.mxu0 0.0
      %1427 = vmatpush1.msra.mxu0 0.0
      %1428 = vmatprep.subr.mxu0 0.0
      %1429 = vmatpush1.msra.mxu0 0.0
      %1430 = vmatprep.subr.mxu0 0.0
      %1431 = vmatpush1.msra.mxu0 0.0
      %1432 = vmatprep.subr.mxu0 0.0
      %1433 = vmatpush1.msra.mxu0 %v809
      %1434 = vmatprep.subr.mxu0 0.0
      %1435 = vmatpush1.msra.mxu0 %v808
      %1436 = vmatprep.subr.mxu0 0.0
      %1437 = vmatpush2.msra.mxu0 0.0
      %1438 = vmatprep.subr.mxu0 0.0
      %1439 = vmatpush2.msra.mxu0 0.0
      %1440 = vmatprep.subr.mxu0 0.0
      %1441 = vmatpush2.msra.mxu0 0.0
      %1442 = vmatprep.subr.mxu0 0.0
      %1443 = vmatpush2.msra.mxu0 0.0
      %1444 = vmatprep.subr.mxu0 0.0
      %1445 = vmatpush2.msra.mxu0 0.0
      %1446 = vmatprep.subr.mxu0 0.0
      %1447 = vmatpush2.msra.mxu0 0.0
      %1448 = vmatprep.subr.mxu0 0.0
      %1449 = vmatpush2.msra.mxu0 0.0
      %1450 = vmatprep.subr.mxu0 0.0
      %1451 = vmatpush2.msra.mxu0 0.0
      %1452 = vmatprep.subr.mxu0 0.0
      %1453 = vmatpush2.msra.mxu0 0.0
      %1454 = vmatprep.subr.mxu0 0.0
      %1455 = vmatpush2.msra.mxu0 0.0
      %1456 = vmatprep.subr.mxu0 0.0
      %1457 = vmatpush2.msra.mxu0 0.0
      %1458 = vmatprep.subr.mxu0 0.0
      %1459 = vmatpush2.msra.mxu0 0.0
      %1460 = vmatprep.subr.mxu0 0.0
      %1461 = vmatpush2.msra.mxu0 0.0
      %1462 = vmatprep.subr.mxu0 0.0
      %1463 = vmatpush2.msra.mxu0 0.0
      %1464 = vmatprep.subr.mxu0 0.0
      %1465 = vmatpush2.msra.mxu0 0.0
      %1466 = vmatprep.subr.mxu0 0.0
      %1467 = vmatpush2.msra.mxu0 0.0
      %1468 = vmatprep.mubr.f32.mxu0 0.0
      %1469 = vmatmul.mubr.f32.gmra.mxu0 %v1393
      %v1470 = vpop.f32.mrf.mxu0
      %v1471 = vadd.f32 %v1375, %v1470
      %v1472 = vpop.f32.mrf.mxu0
      %1473 = vmatprep.mubr.f32.mxu0 0.0
      %1474 = vmatmul.mubr.f32.gmra.mxu0 %v1396
      %v1475 = vpop.f32.mrf.mxu0
      %v1476 = vadd.f32 %v1380, %v1475
      %v1477 = vpop.f32.mrf.mxu0
      %1478 = vmatprep.mubr.f32.mxu0 0.0
      %1479 = vmatmul.mubr.f32.gmra.mxu0 %v1399
      %v1480 = vpop.f32.mrf.mxu0
      %v1481 = vadd.f32 %v1385, %v1480
      %v1482 = vpop.f32.mrf.mxu0
      %1483 = vmatprep.mubr.f32.mxu0 0.0
      %1484 = vmatmul.mubr.f32.gmra.mxu0 %v1402
      %v1485 = vpop.f32.mrf.mxu0
      %v1486 = vadd.f32 %v1390, %v1485
      %v1487 = vpop.f32.mrf.mxu0
      %1488 = vdwg.mxu0
      %v1489 = vmax.f32 %v1471, 0.0
      %v1490 = vmax.f32 %v1476, 0.0
      %v1491 = vmax.f32 %v1481, 0.0
      %v1492 = vmax.f32 %v1486, 0.0
      %v1493 = vadd.f32 %v1360, %v1489
      %v1494 = vadd.f32 %v1361, %v1490
      %v1495 = vadd.f32 %v1362, %v1491
      %v1496 = vadd.f32 %v1363, %v1492
      %vm1497 = vcmask 244736
      %1498 = vst.msk [vmem:[%s433] sm:$0xff] %vm1497, %v1493
      %1499 = vst.msk [vmem:[%s433 + $0x8] sm:$0xff] %vm1497, %v1494
      %1500 = vst.msk [vmem:[%s433 + $0x10] sm:$0xff] %vm1497, %v1495
      %1501 = vst.msk [vmem:[%s433 + $0x18] sm:$0xff] %vm1497, %v1496
      %p1502 = scmp.lt.s32.totalorder %s23, 1
      %s1503 = scalar_select %p1502, %s23, 1
      %s1504 = smul.addr %s1503, 4
      %s1505 = smul.addr %s1504, 8
      %s1506 = scalar_lea.vmem %s12, %s1505
      // Predicated region
      $region69: #{manner_block_forward.7} parent=67 // pred_check
        %p1507 = pneg %p303
      $region70: #{manner_block_forward.7} parent=67 // pred_check_branch
        %1509 = sbr.rel (%p1507) target = $region72
      $region71: #{manner_block_forward.7} parent=67 // pred_region
        _
      $region72: #{manner_block_forward.7} parent=67 // pred_fallthru
        _
    $region68: #{manner_block_forward.7} parent=5 // pred_fallthru
      _
    %p1510 = scmp.le.s32.totalorder 2, %s18
    // Predicated region
    $region73: #{manner_block_forward.7} parent=5 // pred_check
      %p1511 = pneg %p1510
    $region74: #{manner_block_forward.7} parent=5 // pred_check_branch
      %1513 = sbr.rel (%p1511) target = $region76
    $region75: #{manner_block_forward.7} parent=5 // pred_region
      %s1514 = ssub.s32 %s18, 2
      // Predicated region
      $region77: #{manner_block_forward.7} parent=75 // pred_check
        %p1515 = pneg %p309
      $region78: #{manner_block_forward.7} parent=75 // pred_check_branch
        %1517 = sbr.rel (%p1515) target = $region80
      $region79: #{manner_block_forward.7} parent=75 // pred_region
        %p1518 = scmp.lt.s32.totalorder %s24, 1
        %s1519 = scalar_select %p1518, %s24, 1
        %s1520 = smul.addr %s1519, 4
        %s1521 = smul.addr %s1520, 8
        %s1522 = scalar_lea.vmem %s12, %s1521
      $region80: #{manner_block_forward.7} parent=75 // pred_fallthru
        _
    $region76: #{manner_block_forward.7} parent=5 // pred_fallthru
      _
  $region6: #{manner_block_forward.7} parent=0 // loop_footer
    %s22 = sadd.s32 1, %s18
  $region7: #{manner_block_forward.7} parent=0 // loop_footer_branch
    %17 = sbr.rel target = $region3
  $region8: #{manner_block_forward.7} parent=0 // loop_exit
    _

// kernel: manner_block_forward.8
$region0: #{manner_block_forward.8}
  #allocation0 [shape = 'u32[]', space=smem, size = 0x4, offset = 0x4, fixed_abs, tag = 'smem constant byte address 0x4 - core index']
  #allocation1 [shape = 'u32[144,128]{1,0:T(1,128)}', space=vmem, size = 0x12000, scoped, tag = 'internal scratch']
  #allocation2 [shape = 'f32[64,18]{1,0:T(8,128)}', space=vmem, size = 0x8000, scoped, tag = 'scratch operand']
  %s0 = inlined_call_operand.vmem [shape: f32[2,32,15], index: 0, kind: input, shape index: {}]
  %s1 = inlined_call_operand.vmem [shape: f32[2,32,15], index: 1, kind: input, shape index: {}]
  %s2 = inlined_call_operand.vmem [shape: f32[4,32,32], index: 2, kind: input, shape index: {}]
  %s3 = inlined_call_operand.vmem [shape: f32[32,1], index: 3, kind: input, shape index: {}]
  %s4 = inlined_call_operand.vmem [shape: f32[64,32], index: 4, kind: input, shape index: {}]
  %s5 = inlined_call_operand.vmem [shape: f32[64,1], index: 5, kind: input, shape index: {}]
  %s6 = inlined_call_operand.vmem [shape: f32[5,64,1], index: 6, kind: input, shape index: {}]
  %s7 = inlined_call_operand.vmem [shape: f32[64,1], index: 7, kind: input, shape index: {}]
  %s8 = inlined_call_operand.vmem [shape: f32[64,64], index: 8, kind: input, shape index: {}]
  %s9 = inlined_call_operand.vmem [shape: f32[64,1], index: 9, kind: input, shape index: {}]
  %s10 = inlined_call_operand.vmem [shape: f32[64,32], index: 10, kind: input, shape index: {}]
  %s11 = inlined_call_operand.vmem [shape: f32[64,1], index: 11, kind: input, shape index: {}]
  %s12 = inlined_call_operand.vmem [shape: f32[2,64,14], index: 12, kind: output, shape index: {}]
  %s13 = sld [smem:[#allocation0]]
  $region81: #{manner_block_forward.8} parent=0
    _
  %s15 = ssub.s32 1, %s13
  %s16 = scalar_select 0, %s15, %s13
  loop: start=0, step=1, limit=4
  $region2: #{manner_block_forward.8} parent=0 // loop_pre_header
    _
  $region3: #{manner_block_forward.8} parent=0 // loop_header
    %s18 = sphi 0, %s22
    %p19 = scmp.ge.s32.totalorder %s18, 4
    %s28 = sphi 0, %s30
    %s31 = sphi 0, %s28
    %s32 = sphi 0, %s31
    %s48 = sphi 0, %s32
    %s54 = sphi 0, %s56
    %s57 = sphi 0, %s54
    %s58 = sphi 0, %s57
    %s74 = sphi 0, %s58
    %s78 = sphi 0, %s78
    %s80 = sphi 0, %s78
    %s81 = sphi 0, %s80
    %s95 = sphi 0, %s81
    %s99 = sphi 0, %s99
    %s101 = sphi 0, %s99
    %s102 = sphi 0, %s101
    %s116 = sphi 0, %s102
    %s120 = sphi 0, %s120
    %s122 = sphi 0, %s120
    %s123 = sphi 0, %s122
    %s137 = sphi 0, %s123
    %s141 = sphi 0, %s141
    %s143 = sphi 0, %s141
    %s144 = sphi 0, %s143
    %s158 = sphi 0, %s144
    %s162 = sphi 0, %s162
    %s164 = sphi 0, %s162
    %s165 = sphi 0, %s164
    %s179 = sphi 0, %s165
    %s183 = sphi 0, %s183
    %s185 = sphi 0, %s183
    %s186 = sphi 0, %s185
    %s200 = sphi 0, %s186
    %s204 = sphi 0, %s204
    %s206 = sphi 0, %s204
    %s207 = sphi 0, %s206
    %s221 = sphi 0, %s207
    %s225 = sphi 0, %s225
    %s227 = sphi 0, %s225
    %s228 = sphi 0, %s227
    %s242 = sphi 0, %s228
    %s246 = sphi 0, %s246
    %s248 = sphi 0, %s246
    %s249 = sphi 0, %s248
    %s263 = sphi 0, %s249
    %s267 = sphi 0, %s267
    %s269 = sphi 0, %s267
    %s270 = sphi 0, %s269
    %s284 = sphi 0, %s270
    %s290 = sphi 0, %s292
    %s293 = sphi 0, %s290
    %s294 = sphi 0, %s293
    %s310 = sphi 0, %s294
  $region4: #{manner_block_forward.8} parent=0 // loop_header_branch
    %21 = sbr.rel (%p19) target = $region8
  $region5: #{manner_block_forward.8} parent=0 // loop_body
    %s23 = ssub.s32 %s18, 1
    %s24 = ssub.s32 %s18, 2
    %s25 = sadd.s32 %s18, 1
    %s26 = ssub.s32 %s18, %s25
    %p27 = scmp.eq.s32.totalorder %s26, 0
    %s29 = sadd.s32 %s28, 1
    %s30 = scalar_select %p27, %s28, %s29
    %p33 = pneg %p27
    %p34 = scmp.eq.s32.totalorder %s18, 1
    %p35 = por %p33, %p34
    %p36 = scmp.ne.s32.totalorder %s28, %s31
    %p37 = scmp.eq.s32.totalorder %s18, 0
    %p38 = por %p36, %p37
    %p39 = scmp.ne.s32.totalorder %s28, %s31
    %p40 = scmp.eq.s32.totalorder %s23, 1
    %p41 = por %p39, %p40
    %p42 = scmp.ne.s32.totalorder %s31, %s32
    %p43 = scmp.eq.s32.totalorder %s23, 0
    %p44 = por %p42, %p43
    %p45 = scmp.ne.s32.totalorder %s31, %s32
    %p46 = scmp.eq.s32.totalorder %s24, 1
    %p47 = por %p45, %p46
    %p49 = scmp.ne.s32.totalorder %s32, %s48
    %p50 = scmp.eq.s32.totalorder %s24, 0
    %p51 = por %p49, %p50
    %s52 = ssub.s32 %s18, %s25
    %p53 = scmp.eq.s32.totalorder %s52, 0
    %s55 = sadd.s32 %s54, 1
    %s56 = scalar_select %p53, %s54, %s55
    %p59 = pneg %p53
    %p60 = scmp.eq.s32.totalorder %s18, 1
    %p61 = por %p59, %p60
    %p62 = scmp.ne.s32.totalorder %s54, %s57
    %p63 = scmp.eq.s32.totalorder %s18, 0
    %p64 = por %p62, %p63
    %p65 = scmp.ne.s32.totalorder %s54, %s57
    %p66 = scmp.eq.s32.totalorder %s23, 1
    %p67 = por %p65, %p66
    %p68 = scmp.ne.s32.totalorder %s57, %s58
    %p69 = scmp.eq.s32.totalorder %s23, 0
    %p70 = por %p68, %p69
    %p71 = scmp.ne.s32.totalorder %s57, %s58
    %p72 = scmp.eq.s32.totalorder %s24, 1
    %p73 = por %p71, %p72
    %p75 = scmp.ne.s32.totalorder %s58, %s74
    %p76 = scmp.eq.s32.totalorder %s24, 0
    %p77 = por %p75, %p76
    %s79 = sadd.s32 %s78, 1
    %p82 = scmp.eq.s32.totalorder %s18, 1
    %p83 = scmp.ne.s32.totalorder %s78, %s80
    %p84 = scmp.eq.s32.totalorder %s18, 0
    %p85 = por %p83, %p84
    %p86 = scmp.ne.s32.totalorder %s78, %s80
    %p87 = scmp.eq.s32.totalorder %s23, 1
    %p88 = por %p86, %p87
    %p89 = scmp.ne.s32.totalorder %s80, %s81
    %p90 = scmp.eq.s32.totalorder %s23, 0
    %p91 = por %p89, %p90
    %p92 = scmp.ne.s32.totalorder %s80, %s81
    %p93 = scmp.eq.s32.totalorder %s24, 1
    %p94 = por %p92, %p93
    %p96 = scmp.ne.s32.totalorder %s81, %s95
    %p97 = scmp.eq.s32.totalorder %s24, 0
    %p98 = por %p96, %p97
    %s100 = sadd.s32 %s99, 1
    %p103 = scmp.eq.s32.totalorder %s18, 1
    %p104 = scmp.ne.s32.totalorder %s99, %s101
    %p105 = scmp.eq.s32.totalorder %s18, 0
    %p106 = por %p104, %p105
    %p107 = scmp.ne.s32.totalorder %s99, %s101
    %p108 = scmp.eq.s32.totalorder %s23, 1
    %p109 = por %p107, %p108
    %p110 = scmp.ne.s32.totalorder %s101, %s102
    %p111 = scmp.eq.s32.totalorder %s23, 0
    %p112 = por %p110, %p111
    %p113 = scmp.ne.s32.totalorder %s101, %s102
    %p114 = scmp.eq.s32.totalorder %s24, 1
    %p115 = por %p113, %p114
    %p117 = scmp.ne.s32.totalorder %s102, %s116
    %p118 = scmp.eq.s32.totalorder %s24, 0
    %p119 = por %p117, %p118
    %s121 = sadd.s32 %s120, 1
    %p124 = scmp.eq.s32.totalorder %s18, 1
    %p125 = scmp.ne.s32.totalorder %s120, %s122
    %p126 = scmp.eq.s32.totalorder %s18, 0
    %p127 = por %p125, %p126
    %p128 = scmp.ne.s32.totalorder %s120, %s122
    %p129 = scmp.eq.s32.totalorder %s23, 1
    %p130 = por %p128, %p129
    %p131 = scmp.ne.s32.totalorder %s122, %s123
    %p132 = scmp.eq.s32.totalorder %s23, 0
    %p133 = por %p131, %p132
    %p134 = scmp.ne.s32.totalorder %s122, %s123
    %p135 = scmp.eq.s32.totalorder %s24, 1
    %p136 = por %p134, %p135
    %p138 = scmp.ne.s32.totalorder %s123, %s137
    %p139 = scmp.eq.s32.totalorder %s24, 0
    %p140 = por %p138, %p139
    %s142 = sadd.s32 %s141, 1
    %p145 = scmp.eq.s32.totalorder %s18, 1
    %p146 = scmp.ne.s32.totalorder %s141, %s143
    %p147 = scmp.eq.s32.totalorder %s18, 0
    %p148 = por %p146, %p147
    %p149 = scmp.ne.s32.totalorder %s141, %s143
    %p150 = scmp.eq.s32.totalorder %s23, 1
    %p151 = por %p149, %p150
    %p152 = scmp.ne.s32.totalorder %s143, %s144
    %p153 = scmp.eq.s32.totalorder %s23, 0
    %p154 = por %p152, %p153
    %p155 = scmp.ne.s32.totalorder %s143, %s144
    %p156 = scmp.eq.s32.totalorder %s24, 1
    %p157 = por %p155, %p156
    %p159 = scmp.ne.s32.totalorder %s144, %s158
    %p160 = scmp.eq.s32.totalorder %s24, 0
    %p161 = por %p159, %p160
    %s163 = sadd.s32 %s162, 1
    %p166 = scmp.eq.s32.totalorder %s18, 1
    %p167 = scmp.ne.s32.totalorder %s162, %s164
    %p168 = scmp.eq.s32.totalorder %s18, 0
    %p169 = por %p167, %p168
    %p170 = scmp.ne.s32.totalorder %s162, %s164
    %p171 = scmp.eq.s32.totalorder %s23, 1
    %p172 = por %p170, %p171
    %p173 = scmp.ne.s32.totalorder %s164, %s165
    %p174 = scmp.eq.s32.totalorder %s23, 0
    %p175 = por %p173, %p174
    %p176 = scmp.ne.s32.totalorder %s164, %s165
    %p177 = scmp.eq.s32.totalorder %s24, 1
    %p178 = por %p176, %p177
    %p180 = scmp.ne.s32.totalorder %s165, %s179
    %p181 = scmp.eq.s32.totalorder %s24, 0
    %p182 = por %p180, %p181
    %s184 = sadd.s32 %s183, 1
    %p187 = scmp.eq.s32.totalorder %s18, 1
    %p188 = scmp.ne.s32.totalorder %s183, %s185
    %p189 = scmp.eq.s32.totalorder %s18, 0
    %p190 = por %p188, %p189
    %p191 = scmp.ne.s32.totalorder %s183, %s185
    %p192 = scmp.eq.s32.totalorder %s23, 1
    %p193 = por %p191, %p192
    %p194 = scmp.ne.s32.totalorder %s185, %s186
    %p195 = scmp.eq.s32.totalorder %s23, 0
    %p196 = por %p194, %p195
    %p197 = scmp.ne.s32.totalorder %s185, %s186
    %p198 = scmp.eq.s32.totalorder %s24, 1
    %p199 = por %p197, %p198
    %p201 = scmp.ne.s32.totalorder %s186, %s200
    %p202 = scmp.eq.s32.totalorder %s24, 0
    %p203 = por %p201, %p202
    %s205 = sadd.s32 %s204, 1
    %p208 = scmp.eq.s32.totalorder %s18, 1
    %p209 = scmp.ne.s32.totalorder %s204, %s206
    %p210 = scmp.eq.s32.totalorder %s18, 0
    %p211 = por %p209, %p210
    %p212 = scmp.ne.s32.totalorder %s204, %s206
    %p213 = scmp.eq.s32.totalorder %s23, 1
    %p214 = por %p212, %p213
    %p215 = scmp.ne.s32.totalorder %s206, %s207
    %p216 = scmp.eq.s32.totalorder %s23, 0
    %p217 = por %p215, %p216
    %p218 = scmp.ne.s32.totalorder %s206, %s207
    %p219 = scmp.eq.s32.totalorder %s24, 1
    %p220 = por %p218, %p219
    %p222 = scmp.ne.s32.totalorder %s207, %s221
    %p223 = scmp.eq.s32.totalorder %s24, 0
    %p224 = por %p222, %p223
    %s226 = sadd.s32 %s225, 1
    %p229 = scmp.eq.s32.totalorder %s18, 1
    %p230 = scmp.ne.s32.totalorder %s225, %s227
    %p231 = scmp.eq.s32.totalorder %s18, 0
    %p232 = por %p230, %p231
    %p233 = scmp.ne.s32.totalorder %s225, %s227
    %p234 = scmp.eq.s32.totalorder %s23, 1
    %p235 = por %p233, %p234
    %p236 = scmp.ne.s32.totalorder %s227, %s228
    %p237 = scmp.eq.s32.totalorder %s23, 0
    %p238 = por %p236, %p237
    %p239 = scmp.ne.s32.totalorder %s227, %s228
    %p240 = scmp.eq.s32.totalorder %s24, 1
    %p241 = por %p239, %p240
    %p243 = scmp.ne.s32.totalorder %s228, %s242
    %p244 = scmp.eq.s32.totalorder %s24, 0
    %p245 = por %p243, %p244
    %s247 = sadd.s32 %s246, 1
    %p250 = scmp.eq.s32.totalorder %s18, 1
    %p251 = scmp.ne.s32.totalorder %s246, %s248
    %p252 = scmp.eq.s32.totalorder %s18, 0
    %p253 = por %p251, %p252
    %p254 = scmp.ne.s32.totalorder %s246, %s248
    %p255 = scmp.eq.s32.totalorder %s23, 1
    %p256 = por %p254, %p255
    %p257 = scmp.ne.s32.totalorder %s248, %s249
    %p258 = scmp.eq.s32.totalorder %s23, 0
    %p259 = por %p257, %p258
    %p260 = scmp.ne.s32.totalorder %s248, %s249
    %p261 = scmp.eq.s32.totalorder %s24, 1
    %p262 = por %p260, %p261
    %p264 = scmp.ne.s32.totalorder %s249, %s263
    %p265 = scmp.eq.s32.totalorder %s24, 0
    %p266 = por %p264, %p265
    %s268 = sadd.s32 %s267, 1
    %p271 = scmp.eq.s32.totalorder %s18, 1
    %p272 = scmp.ne.s32.totalorder %s267, %s269
    %p273 = scmp.eq.s32.totalorder %s18, 0
    %p274 = por %p272, %p273
    %p275 = scmp.ne.s32.totalorder %s267, %s269
    %p276 = scmp.eq.s32.totalorder %s23, 1
    %p277 = por %p275, %p276
    %p278 = scmp.ne.s32.totalorder %s269, %s270
    %p279 = scmp.eq.s32.totalorder %s23, 0
    %p280 = por %p278, %p279
    %p281 = scmp.ne.s32.totalorder %s269, %s270
    %p282 = scmp.eq.s32.totalorder %s24, 1
    %p283 = por %p281, %p282
    %p285 = scmp.ne.s32.totalorder %s270, %s284
    %p286 = scmp.eq.s32.totalorder %s24, 0
    %p287 = por %p285, %p286
    %s288 = ssub.s32 %s18, %s25
    %p289 = scmp.eq.s32.totalorder %s288, 0
    %s291 = sadd.s32 %s290, 1
    %s292 = scalar_select %p289, %s290, %s291
    %p295 = pneg %p289
    %p296 = scmp.eq.s32.totalorder %s18, 1
    %p297 = por %p295, %p296
    %p298 = scmp.ne.s32.totalorder %s290, %s293
    %p299 = scmp.eq.s32.totalorder %s18, 0
    %p300 = por %p298, %p299
    %p301 = scmp.ne.s32.totalorder %s290, %s293
    %p302 = scmp.eq.s32.totalorder %s23, 1
    %p303 = por %p301, %p302
    %p304 = scmp.ne.s32.totalorder %s293, %s294
    %p305 = scmp.eq.s32.totalorder %s23, 0
    %p306 = por %p304, %p305
    %p307 = scmp.ne.s32.totalorder %s293, %s294
    %p308 = scmp.eq.s32.totalorder %s24, 1
    %p309 = por %p307, %p308
    %p311 = scmp.ne.s32.totalorder %s294, %s310
    %p312 = scmp.eq.s32.totalorder %s24, 0
    %p313 = por %p311, %p312
    %p314 = scmp.le.s32.totalorder 1, %s18
    %p315 = scmp.lt.s32.totalorder %s18, 3
    %p316 = pnand %p314, %p315
    %p317 = pneg %p316
    // Predicated region
    $region9: #{manner_block_forward.8} parent=5 // pred_check
      _
    $region10: #{manner_block_forward.8} parent=5 // pred_check_branch
      %319 = sbr.rel (%p316) target = $region12
    $region11: #{manner_block_forward.8} parent=5 // pred_region
      %s320 = ssub.s32 %s18, 1
      // Predicated region
      $region13: #{manner_block_forward.8} parent=11 // pred_check
        %p321 = pneg %p91
      $region14: #{manner_block_forward.8} parent=11 // pred_check_branch
        %323 = sbr.rel (%p321) target = $region16
      $region15: #{manner_block_forward.8} parent=11 // pred_region
        _
      $region16: #{manner_block_forward.8} parent=11 // pred_fallthru
        _
      // Predicated region
      $region17: #{manner_block_forward.8} parent=11 // pred_check
        %p324 = pneg %p112
      $region18: #{manner_block_forward.8} parent=11 // pred_check_branch
        %326 = sbr.rel (%p324) target = $region20
      $region19: #{manner_block_forward.8} parent=11 // pred_region
        _
      $region20: #{manner_block_forward.8} parent=11 // pred_fallthru
        _
      // Predicated region
      $region21: #{manner_block_forward.8} parent=11 // pred_check
        %p327 = pneg %p133
      $region22: #{manner_block_forward.8} parent=11 // pred_check_branch
        %329 = sbr.rel (%p327) target = $region24
      $region23: #{manner_block_forward.8} parent=11 // pred_region
        _
      $region24: #{manner_block_forward.8} parent=11 // pred_fallthru
        _
      // Predicated region
      $region25: #{manner_block_forward.8} parent=11 // pred_check
        %p330 = pneg %p154
      $region26: #{manner_block_forward.8} parent=11 // pred_check_branch
        %332 = sbr.rel (%p330) target = $region28
      $region27: #{manner_block_forward.8} parent=11 // pred_region
        _
      $region28: #{manner_block_forward.8} parent=11 // pred_fallthru
        _
      // Predicated region
      $region29: #{manner_block_forward.8} parent=11 // pred_check
        %p333 = pneg %p175
      $region30: #{manner_block_forward.8} parent=11 // pred_check_branch
        %335 = sbr.rel (%p333) target = $region32
      $region31: #{manner_block_forward.8} parent=11 // pred_region
        _
      $region32: #{manner_block_forward.8} parent=11 // pred_fallthru
        _
      // Predicated region
      $region33: #{manner_block_forward.8} parent=11 // pred_check
        %p336 = pneg %p196
      $region34: #{manner_block_forward.8} parent=11 // pred_check_branch
        %338 = sbr.rel (%p336) target = $region36
      $region35: #{manner_block_forward.8} parent=11 // pred_region
        _
      $region36: #{manner_block_forward.8} parent=11 // pred_fallthru
        _
      // Predicated region
      $region37: #{manner_block_forward.8} parent=11 // pred_check
        %p339 = pneg %p217
      $region38: #{manner_block_forward.8} parent=11 // pred_check_branch
        %341 = sbr.rel (%p339) target = $region40
      $region39: #{manner_block_forward.8} parent=11 // pred_region
        _
      $region40: #{manner_block_forward.8} parent=11 // pred_fallthru
        _
      // Predicated region
      $region41: #{manner_block_forward.8} parent=11 // pred_check
        %p342 = pneg %p238
      $region42: #{manner_block_forward.8} parent=11 // pred_check_branch
        %344 = sbr.rel (%p342) target = $region44
      $region43: #{manner_block_forward.8} parent=11 // pred_region
        _
      $region44: #{manner_block_forward.8} parent=11 // pred_fallthru
        _
      // Predicated region
      $region45: #{manner_block_forward.8} parent=11 // pred_check
        %p345 = pneg %p259
      $region46: #{manner_block_forward.8} parent=11 // pred_check_branch
        %347 = sbr.rel (%p345) target = $region48
      $region47: #{manner_block_forward.8} parent=11 // pred_region
        _
      $region48: #{manner_block_forward.8} parent=11 // pred_fallthru
        _
      // Predicated region
      $region49: #{manner_block_forward.8} parent=11 // pred_check
        %p348 = pneg %p280
      $region50: #{manner_block_forward.8} parent=11 // pred_check_branch
        %350 = sbr.rel (%p348) target = $region52
      $region51: #{manner_block_forward.8} parent=11 // pred_region
        _
      $region52: #{manner_block_forward.8} parent=11 // pred_fallthru
        _
    $region12: #{manner_block_forward.8} parent=5 // pred_fallthru
      _
    %p351 = scmp.lt.s32.totalorder %s18, 2
    // Predicated region
    $region53: #{manner_block_forward.8} parent=5 // pred_check
      %p352 = pneg %p351
    $region54: #{manner_block_forward.8} parent=5 // pred_check_branch
      %354 = sbr.rel (%p352) target = $region56
    $region55: #{manner_block_forward.8} parent=5 // pred_region
      // Predicated region
      $region57: #{manner_block_forward.8} parent=55 // pred_check
        %p355 = pneg %p38
      $region58: #{manner_block_forward.8} parent=55 // pred_check_branch
        %357 = sbr.rel (%p355) target = $region60
      $region59: #{manner_block_forward.8} parent=55 // pred_region
        %p358 = scmp.lt.s32.totalorder %s18, 1
        %s359 = scalar_select %p358, %s18, 1
        %s360 = smul.addr %s359, 4
        %s361 = smul.addr %s360, 8
        %s362 = scalar_lea.vmem %s0, %s361
      $region60: #{manner_block_forward.8} parent=55 // pred_fallthru
        _
      // Predicated region
      $region61: #{manner_block_forward.8} parent=55 // pred_check
        %p363 = pneg %p64
      $region62: #{manner_block_forward.8} parent=55 // pred_check_branch
        %365 = sbr.rel (%p363) target = $region64
      $region63: #{manner_block_forward.8} parent=55 // pred_region
        %p366 = scmp.lt.s32.totalorder %s18, 1
        %s367 = scalar_select %p366, %s18, 1
        %s368 = smul.addr %s367, 4
        %s369 = smul.addr %s368, 8
        %s370 = scalar_lea.vmem %s1, %s369
      $region64: #{manner_block_forward.8} parent=55 // pred_fallthru
        _
    $region56: #{manner_block_forward.8} parent=5 // pred_fallthru
      _
    %p371 = scmp.le.s32.totalorder 1, %s18
    %p372 = scmp.lt.s32.totalorder %s18, 3
    %p373 = pnand %p371, %p372
    %p374 = pneg %p373
    // Predicated region
    $region65: #{manner_block_forward.8} parent=5 // pred_check
      _
    $region66: #{manner_block_forward.8} parent=5 // pred_check_branch
      %376 = sbr.rel (%p373) target = $region68
    $region67: #{manner_block_forward.8} parent=5 // pred_region
      %s377 = ssub.s32 %s18, 1
      %p378 = scmp.lt.s32.totalorder %s23, 1
      %s379 = scalar_select %p378, %s23, 1
      %s380 = smul.addr %s379, 4
      %s381 = smul.addr %s380, 8
      %s382 = scalar_lea.vmem %s0, %s381
      %p383 = pneg %p44
      %p384 = pneg %p41
      %p385 = scmp.lt.s32.totalorder %s23, 1
      %s386 = scalar_select %p385, %s23, 1
      %s387 = smul.addr %s386, 4
      %s388 = smul.addr %s387, 8
      %s389 = scalar_lea.vmem %s1, %s388
      %p390 = pneg %p70
      %p391 = pneg %p67
      %p392 = pneg %p91
      %p393 = pneg %p88
      %p394 = pneg %p112
      %p395 = pneg %p109
      %p396 = pneg %p133
      %p397 = pneg %p130
      %p398 = pneg %p154
      %p399 = pneg %p151
      %p400 = pneg %p175
      %p401 = pneg %p172
      %p402 = pneg %p196
      %p403 = pneg %p193
      %p404 = pneg %p217
      %p405 = pneg %p214
      %p406 = pneg %p238
      %p407 = pneg %p235
      %p408 = pneg %p259
      %p409 = pneg %p256
      %p410 = pneg %p280
      %p411 = pneg %p277
      %p412 = pneg %p306
      %p413 = pneg %p303
      %p414 = scmp.lt.s32.totalorder %s23, 1
      %s415 = scalar_select %p414, %s23, 1
      %s416 = smul.addr %s415, 8
      %s417 = smul.addr %s416, 8
      %s418 = scalar_lea.vmem %s12, %s417
      %p419 = scmp.lt.s32.totalorder %s23, 1
      %s420 = scalar_select %p419, %s23, 1
      %s421 = smul.addr %s420, 4
      %s422 = smul.addr %s421, 8
      %s423 = scalar_lea.vmem %s0, %s422
      %p424 = scmp.lt.s32.totalorder %s23, 1
      %s425 = scalar_select %p424, %s23, 1
      %s426 = smul.addr %s425, 4
      %s427 = smul.addr %s426, 8
      %s428 = scalar_lea.vmem %s1, %s427
      %p429 = scmp.lt.s32.totalorder %s23, 1
      %s430 = scalar_select %p429, %s23, 1
      %s431 = smul.addr %s430, 8
      %s432 = smul.addr %s431, 8
      %s433 = scalar_lea.vmem %s12, %s432
      %v434 = vld [vmem:[%s2] sm:$0xff]
      %v435 = vld [vmem:[%s2 + $0x8] sm:$0xff]
      %v436 = vld [vmem:[%s2 + $0x10] sm:$0xff]
      %v437 = vld [vmem:[%s2 + $0x18] sm:$0xff]
      %v438 = vld [vmem:[%s423] sm:$0xff]
      %v439 = vld [vmem:[%s423 + $0x8] sm:$0xff]
      %v440 = vld [vmem:[%s423 + $0x10] sm:$0xff]
      %v441 = vld [vmem:[%s423 + $0x18] sm:$0xff]
      %s442 = scalar_lea.vmem %s2, 32
      %v443 = vld [vmem:[%s442] sm:$0xff]
      %v444 = vld [vmem:[%s442 + $0x8] sm:$0xff]
      %v445 = vld [vmem:[%s442 + $0x10] sm:$0xff]
      %v446 = vld [vmem:[%s442 + $0x18] sm:$0xff]
      %v447 = vld [vmem:[%s428] sm:$0xff]
      %v448 = vld [vmem:[%s428 + $0x8] sm:$0xff]
      %v449 = vld [vmem:[%s428 + $0x10] sm:$0xff]
      %v450 = vld [vmem:[%s428 + $0x18] sm:$0xff]
      %vm451 = vcmask 261120
      %v453 = vsel %vm451, %v443, 0
      %v456 = vsel %vm451, %v444, 0
      %v459 = vsel %vm451, %v445, 0
      %v462 = vsel %vm451, %v446, 0
      %464 = vmatprep.subr.mxu0 0.0
      %465 = vmatpush1.msra.mxu0 0.0
      %466 = vmatprep.subr.mxu0 0.0
      %467 = vmatpush1.msra.mxu0 0.0
      %468 = vmatprep.subr.mxu0 0.0
      %469 = vmatpush1.msra.mxu0 0.0
      %470 = vmatprep.subr.mxu0 0.0
      %471 = vmatpush1.msra.mxu0 0.0
      %472 = vmatprep.subr.mxu0 0.0
      %473 = vmatpush1.msra.mxu0 0.0
      %474 = vmatprep.subr.mxu0 0.0
      %475 = vmatpush1.msra.mxu0 0.0
      %476 = vmatprep.subr.mxu0 0.0
      %477 = vmatpush1.msra.mxu0 0.0
      %478 = vmatprep.subr.mxu0 0.0
      %479 = vmatpush1.msra.mxu0 0.0
      %480 = vmatprep.subr.mxu0 0.0
      %481 = vmatpush1.msra.mxu0 0.0
      %482 = vmatprep.subr.mxu0 0.0
      %483 = vmatpush1.msra.mxu0 0.0
      %484 = vmatprep.subr.mxu0 0.0
      %485 = vmatpush1.msra.mxu0 0.0
      %486 = vmatprep.subr.mxu0 0.0
      %487 = vmatpush1.msra.mxu0 0.0
      %488 = vmatprep.subr.mxu0 0.0
      %489 = vmatpush1.msra.mxu0 %v450
      %490 = vmatprep.subr.mxu0 0.0
      %491 = vmatpush1.msra.mxu0 %v449
      %492 = vmatprep.subr.mxu0 0.0
      %493 = vmatpush1.msra.mxu0 %v448
      %494 = vmatprep.subr.mxu0 0.0
      %495 = vmatpush1.msra.mxu0 %v447
      %496 = vmatprep.subr.mxu0 0.0
      %497 = vmatpush2.msra.mxu0 0.0
      %498 = vmatprep.subr.mxu0 0.0
      %499 = vmatpush2.msra.mxu0 0.0
      %500 = vmatprep.subr.mxu0 0.0
      %501 = vmatpush2.msra.mxu0 0.0
      %502 = vmatprep.subr.mxu0 0.0
      %503 = vmatpush2.msra.mxu0 0.0
      %504 = vmatprep.subr.mxu0 0.0
      %505 = vmatpush2.msra.mxu0 0.0
      %506 = vmatprep.subr.mxu0 0.0
      %507 = vmatpush2.msra.mxu0 0.0
      %508 = vmatprep.subr.mxu0 0.0
      %509 = vmatpush2.msra.mxu0 0.0
      %510 = vmatprep.subr.mxu0 0.0
      %511 = vmatpush2.msra.mxu0 0.0
      %512 = vmatprep.subr.mxu0 0.0
      %513 = vmatpush2.msra.mxu0 0.0
      %514 = vmatprep.subr.mxu0 0.0
      %515 = vmatpush2.msra.mxu0 0.0
      %516 = vmatprep.subr.mxu0 0.0
      %517 = vmatpush2.msra.mxu0 0.0
      %518 = vmatprep.subr.mxu0 0.0
      %519 = vmatpush2.msra.mxu0 0.0
      %520 = vmatprep.subr.mxu0 0.0
      %521 = vmatpush2.msra.mxu0 0.0
      %522 = vmatprep.subr.mxu0 0.0
      %523 = vmatpush2.msra.mxu0 0.0
      %524 = vmatprep.subr.mxu0 0.0
      %525 = vmatpush2.msra.mxu0 0.0
      %526 = vmatprep.subr.mxu0 0.0
      %527 = vmatpush2.msra.mxu0 0.0
      %528 = vmatprep.mubr.f32.mxu0 0.0
      %529 = vmatmul.mubr.f32.gmra.mxu0 %v453
      %v530 = vpop.f32.mrf.mxu0
      %v531 = vadd.f32 0.0, %v530
      %v532 = vpop.f32.mrf.mxu0
      %533 = vmatprep.mubr.f32.mxu0 0.0
      %534 = vmatmul.mubr.f32.gmra.mxu0 %v456
      %v535 = vpop.f32.mrf.mxu0
      %v536 = vadd.f32 0.0, %v535
      %v537 = vpop.f32.mrf.mxu0
      %538 = vmatprep.mubr.f32.mxu0 0.0
      %539 = vmatmul.mubr.f32.gmra.mxu0 %v459
      %v540 = vpop.f32.mrf.mxu0
      %v541 = vadd.f32 0.0, %v540
      %v542 = vpop.f32.mrf.mxu0
      %543 = vmatprep.mubr.f32.mxu0 0.0
      %544 = vmatmul.mubr.f32.gmra.mxu0 %v462
      %v545 = vpop.f32.mrf.mxu0
      %v546 = vadd.f32 0.0, %v545
      %v547 = vpop.f32.mrf.mxu0
      %548 = vdwg.mxu0
      %v550 = vsel %vm451, %v434, 0
      %v553 = vsel %vm451, %v435, 0
      %v556 = vsel %vm451, %v436, 0
      %v559 = vsel %vm451, %v437, 0
      %561 = vmatprep.subr.mxu0 0.0
      %562 = vmatpush1.msra.mxu0 0.0
      %563 = vmatprep.subr.mxu0 0.0
      %564 = vmatpush1.msra.mxu0 0.0
      %565 = vmatprep.subr.mxu0 0.0
      %566 = vmatpush1.msra.mxu0 0.0
      %567 = vmatprep.subr.mxu0 0.0
      %568 = vmatpush1.msra.mxu0 0.0
      %569 = vmatprep.subr.mxu0 0.0
      %570 = vmatpush1.msra.mxu0 0.0
      %571 = vmatprep.subr.mxu0 0.0
      %572 = vmatpush1.msra.mxu0 0.0
      %573 = vmatprep.subr.mxu0 0.0
      %574 = vmatpush1.msra.mxu0 0.0
      %575 = vmatprep.subr.mxu0 0.0
      %576 = vmatpush1.msra.mxu0 0.0
      %577 = vmatprep.subr.mxu0 0.0
      %578 = vmatpush1.msra.mxu0 0.0
      %579 = vmatprep.subr.mxu0 0.0
      %580 = vmatpush1.msra.mxu0 0.0
      %581 = vmatprep.subr.mxu0 0.0
      %582 = vmatpush1.msra.mxu0 0.0
      %583 = vmatprep.subr.mxu0 0.0
      %584 = vmatpush1.msra.mxu0 0.0
      %585 = vmatprep.subr.mxu0 0.0
      %586 = vmatpush1.msra.mxu0 %v441
      %587 = vmatprep.subr.mxu0 0.0
      %588 = vmatpush1.msra.mxu0 %v440
      %589 = vmatprep.subr.mxu0 0.0
      %590 = vmatpush1.msra.mxu0 %v439
      %591 = vmatprep.subr.mxu0 0.0
      %592 = vmatpush1.msra.mxu0 %v438
      %593 = vmatprep.subr.mxu0 0.0
      %594 = vmatpush2.msra.mxu0 0.0
      %595 = vmatprep.subr.mxu0 0.0
      %596 = vmatpush2.msra.mxu0 0.0
      %597 = vmatprep.subr.mxu0 0.0
      %598 = vmatpush2.msra.mxu0 0.0
      %599 = vmatprep.subr.mxu0 0.0
      %600 = vmatpush2.msra.mxu0 0.0
      %601 = vmatprep.subr.mxu0 0.0
      %602 = vmatpush2.msra.mxu0 0.0
      %603 = vmatprep.subr.mxu0 0.0
      %604 = vmatpush2.msra.mxu0 0.0
      %605 = vmatprep.subr.mxu0 0.0
      %606 = vmatpush2.msra.mxu0 0.0
      %607 = vmatprep.subr.mxu0 0.0
      %608 = vmatpush2.msra.mxu0 0.0
      %609 = vmatprep.subr.mxu0 0.0
      %610 = vmatpush2.msra.mxu0 0.0
      %611 = vmatprep.subr.mxu0 0.0
      %612 = vmatpush2.msra.mxu0 0.0
      %613 = vmatprep.subr.mxu0 0.0
      %614 = vmatpush2.msra.mxu0 0.0
      %615 = vmatprep.subr.mxu0 0.0
      %616 = vmatpush2.msra.mxu0 0.0
      %617 = vmatprep.subr.mxu0 0.0
      %618 = vmatpush2.msra.mxu0 0.0
      %619 = vmatprep.subr.mxu0 0.0
      %620 = vmatpush2.msra.mxu0 0.0
      %621 = vmatprep.subr.mxu0 0.0
      %622 = vmatpush2.msra.mxu0 0.0
      %623 = vmatprep.subr.mxu0 0.0
      %624 = vmatpush2.msra.mxu0 0.0
      %625 = vmatprep.mubr.f32.mxu0 0.0
      %626 = vmatmul.mubr.f32.gmra.mxu0 %v550
      %v627 = vpop.f32.mrf.mxu0
      %v628 = vadd.f32 %v531, %v627
      %v629 = vpop.f32.mrf.mxu0
      %630 = vmatprep.mubr.f32.mxu0 0.0
      %631 = vmatmul.mubr.f32.gmra.mxu0 %v553
      %v632 = vpop.f32.mrf.mxu0
      %v633 = vadd.f32 %v536, %v632
      %v634 = vpop.f32.mrf.mxu0
      %635 = vmatprep.mubr.f32.mxu0 0.0
      %636 = vmatmul.mubr.f32.gmra.mxu0 %v556
      %v637 = vpop.f32.mrf.mxu0
      %v638 = vadd.f32 %v541, %v637
      %v639 = vpop.f32.mrf.mxu0
      %640 = vmatprep.mubr.f32.mxu0 0.0
      %641 = vmatmul.mubr.f32.gmra.mxu0 %v559
      %v642 = vpop.f32.mrf.mxu0
      %v643 = vadd.f32 %v546, %v642
      %v644 = vpop.f32.mrf.mxu0
      %645 = vdwg.mxu0
      %s646 = scalar_lea.vmem %s2, 64
      %v647 = vld [vmem:[%s646] sm:$0xff]
      %v648 = vld [vmem:[%s646 + $0x8] sm:$0xff]
      %v649 = vld [vmem:[%s646 + $0x10] sm:$0xff]
      %v650 = vld [vmem:[%s646 + $0x18] sm:$0xff]
      %655 = vrot.lane.b32.xlu0 %v438, 127
      %v656 = vpop.permute.xlu0 %655
      %657 = vrot.lane.b32.xlu0 %v439, 127
      %v658 = vpop.permute.xlu0 %657
      %659 = vrot.lane.b32.xlu0 %v440, 127
      %v660 = vpop.permute.xlu0 %659
      %661 = vrot.lane.b32.xlu0 %v441, 127
      %v662 = vpop.permute.xlu0 %661
      %v668 = vsel %vm451, %v647, 0
      %v671 = vsel %vm451, %v648, 0
      %v674 = vsel %vm451, %v649, 0
      %v677 = vsel %vm451, %v650, 0
      %679 = vmatprep.subr.mxu0 0.0
      %680 = vmatpush1.msra.mxu0 0.0
      %681 = vmatprep.subr.mxu0 0.0
      %682 = vmatpush1.msra.mxu0 0.0
      %683 = vmatprep.subr.mxu0 0.0
      %684 = vmatpush1.msra.mxu0 0.0
      %685 = vmatprep.subr.mxu0 0.0
      %686 = vmatpush1.msra.mxu0 0.0
      %687 = vmatprep.subr.mxu0 0.0
      %688 = vmatpush1.msra.mxu0 0.0
      %689 = vmatprep.subr.mxu0 0.0
      %690 = vmatpush1.msra.mxu0 0.0
      %691 = vmatprep.subr.mxu0 0.0
      %692 = vmatpush1.msra.mxu0 0.0
      %693 = vmatprep.subr.mxu0 0.0
      %694 = vmatpush1.msra.mxu0 0.0
      %695 = vmatprep.subr.mxu0 0.0
      %696 = vmatpush1.msra.mxu0 0.0
      %697 = vmatprep.subr.mxu0 0.0
      %698 = vmatpush1.msra.mxu0 0.0
      %699 = vmatprep.subr.mxu0 0.0
      %700 = vmatpush1.msra.mxu0 0.0
      %701 = vmatprep.subr.mxu0 0.0
      %702 = vmatpush1.msra.mxu0 0.0
      %703 = vmatprep.subr.mxu0 0.0
      %704 = vmatpush1.msra.mxu0 %v662
      %705 = vmatprep.subr.mxu0 0.0
      %706 = vmatpush1.msra.mxu0 %v660
      %707 = vmatprep.subr.mxu0 0.0
      %708 = vmatpush1.msra.mxu0 %v658
      %709 = vmatprep.subr.mxu0 0.0
      %710 = vmatpush1.msra.mxu0 %v656
      %711 = vmatprep.subr.mxu0 0.0
      %712 = vmatpush2.msra.mxu0 0.0
      %713 = vmatprep.subr.mxu0 0.0
      %714 = vmatpush2.msra.mxu0 0.0
      %715 = vmatprep.subr.mxu0 0.0
      %716 = vmatpush2.msra.mxu0 0.0
      %717 = vmatprep.subr.mxu0 0.0
      %718 = vmatpush2.msra.mxu0 0.0
      %719 = vmatprep.subr.mxu0 0.0
      %720 = vmatpush2.msra.mxu0 0.0
      %721 = vmatprep.subr.mxu0 0.0
      %722 = vmatpush2.msra.mxu0 0.0
      %723 = vmatprep.subr.mxu0 0.0
      %724 = vmatpush2.msra.mxu0 0.0
      %725 = vmatprep.subr.mxu0 0.0
      %726 = vmatpush2.msra.mxu0 0.0
      %727 = vmatprep.subr.mxu0 0.0
      %728 = vmatpush2.msra.mxu0 0.0
      %729 = vmatprep.subr.mxu0 0.0
      %730 = vmatpush2.msra.mxu0 0.0
      %731 = vmatprep.subr.mxu0 0.0
      %732 = vmatpush2.msra.mxu0 0.0
      %733 = vmatprep.subr.mxu0 0.0
      %734 = vmatpush2.msra.mxu0 0.0
      %735 = vmatprep.subr.mxu0 0.0
      %736 = vmatpush2.msra.mxu0 0.0
      %737 = vmatprep.subr.mxu0 0.0
      %738 = vmatpush2.msra.mxu0 0.0
      %739 = vmatprep.subr.mxu0 0.0
      %740 = vmatpush2.msra.mxu0 0.0
      %741 = vmatprep.subr.mxu0 0.0
      %742 = vmatpush2.msra.mxu0 0.0
      %743 = vmatprep.mubr.f32.mxu0 0.0
      %744 = vmatmul.mubr.f32.gmra.mxu0 %v668
      %v745 = vpop.f32.mrf.mxu0
      %v746 = vadd.f32 0.0, %v745
      %v747 = vpop.f32.mrf.mxu0
      %748 = vmatprep.mubr.f32.mxu0 0.0
      %749 = vmatmul.mubr.f32.gmra.mxu0 %v671
      %v750 = vpop.f32.mrf.mxu0
      %v751 = vadd.f32 0.0, %v750
      %v752 = vpop.f32.mrf.mxu0
      %753 = vmatprep.mubr.f32.mxu0 0.0
      %754 = vmatmul.mubr.f32.gmra.mxu0 %v674
      %v755 = vpop.f32.mrf.mxu0
      %v756 = vadd.f32 0.0, %v755
      %v757 = vpop.f32.mrf.mxu0
      %758 = vmatprep.mubr.f32.mxu0 0.0
      %759 = vmatmul.mubr.f32.gmra.mxu0 %v677
      %v760 = vpop.f32.mrf.mxu0
      %v761 = vadd.f32 0.0, %v760
      %v762 = vpop.f32.mrf.mxu0
      %763 = vdwg.mxu0
      %v764 = vadd.f32 %v628, %v746
      %v765 = vadd.f32 %v633, %v751
      %v766 = vadd.f32 %v638, %v756
      %v767 = vadd.f32 %v643, %v761
      %s768 = scalar_lea.vmem %s2, 96
      %v769 = vld [vmem:[%s768] sm:$0xff]
      %v770 = vld [vmem:[%s768 + $0x8] sm:$0xff]
      %v771 = vld [vmem:[%s768 + $0x10] sm:$0xff]
      %v772 = vld [vmem:[%s768 + $0x18] sm:$0xff]
      %777 = vrot.lane.b32.xlu0 %v447, 127
      %v778 = vpop.permute.xlu0 %777
      %779 = vrot.lane.b32.xlu0 %v448, 127
      %v780 = vpop.permute.xlu0 %779
      %781 = vrot.lane.b32.xlu0 %v449, 127
      %v782 = vpop.permute.xlu0 %781
      %783 = vrot.lane.b32.xlu0 %v450, 127
      %v784 = vpop.permute.xlu0 %783
      %v790 = vsel %vm451, %v769, 0
      %v793 = vsel %vm451, %v770, 0
      %v796 = vsel %vm451, %v771, 0
      %v799 = vsel %vm451, %v772, 0
      %801 = vmatprep.subr.mxu0 0.0
      %802 = vmatpush1.msra.mxu0 0.0
      %803 = vmatprep.subr.mxu0 0.0
      %804 = vmatpush1.msra.mxu0 0.0
      %805 = vmatprep.subr.mxu0 0.0
      %806 = vmatpush1.msra.mxu0 0.0
      %807 = vmatprep.subr.mxu0 0.0
      %808 = vmatpush1.msra.mxu0 0.0
      %809 = vmatprep.subr.mxu0 0.0
      %810 = vmatpush1.msra.mxu0 0.0
      %811 = vmatprep.subr.mxu0 0.0
      %812 = vmatpush1.msra.mxu0 0.0
      %813 = vmatprep.subr.mxu0 0.0
      %814 = vmatpush1.msra.mxu0 0.0
      %815 = vmatprep.subr.mxu0 0.0
      %816 = vmatpush1.msra.mxu0 0.0
      %817 = vmatprep.subr.mxu0 0.0
      %818 = vmatpush1.msra.mxu0 0.0
      %819 = vmatprep.subr.mxu0 0.0
      %820 = vmatpush1.msra.mxu0 0.0
      %821 = vmatprep.subr.mxu0 0.0
      %822 = vmatpush1.msra.mxu0 0.0
      %823 = vmatprep.subr.mxu0 0.0
      %824 = vmatpush1.msra.mxu0 0.0
      %825 = vmatprep.subr.mxu0 0.0
      %826 = vmatpush1.msra.mxu0 %v784
      %827 = vmatprep.subr.mxu0 0.0
      %828 = vmatpush1.msra.mxu0 %v782
      %829 = vmatprep.subr.mxu0 0.0
      %830 = vmatpush1.msra.mxu0 %v780
      %831 = vmatprep.subr.mxu0 0.0
      %832 = vmatpush1.msra.mxu0 %v778
      %833 = vmatprep.subr.mxu0 0.0
      %834 = vmatpush2.msra.mxu0 0.0
      %835 = vmatprep.subr.mxu0 0.0
      %836 = vmatpush2.msra.mxu0 0.0
      %837 = vmatprep.subr.mxu0 0.0
      %838 = vmatpush2.msra.mxu0 0.0
      %839 = vmatprep.subr.mxu0 0.0
      %840 = vmatpush2.msra.mxu0 0.0
      %841 = vmatprep.subr.mxu0 0.0
      %842 = vmatpush2.msra.mxu0 0.0
      %843 = vmatprep.subr.mxu0 0.0
      %844 = vmatpush2.msra.mxu0 0.0
      %845 = vmatprep.subr.mxu0 0.0
      %846 = vmatpush2.msra.mxu0 0.0
      %847 = vmatprep.subr.mxu0 0.0
      %848 = vmatpush2.msra.mxu0 0.0
      %849 = vmatprep.subr.mxu0 0.0
      %850 = vmatpush2.msra.mxu0 0.0
      %851 = vmatprep.subr.mxu0 0.0
      %852 = vmatpush2.msra.mxu0 0.0
      %853 = vmatprep.subr.mxu0 0.0
      %854 = vmatpush2.msra.mxu0 0.0
      %855 = vmatprep.subr.mxu0 0.0
      %856 = vmatpush2.msra.mxu0 0.0
      %857 = vmatprep.subr.mxu0 0.0
      %858 = vmatpush2.msra.mxu0 0.0
      %859 = vmatprep.subr.mxu0 0.0
      %860 = vmatpush2.msra.mxu0 0.0
      %861 = vmatprep.subr.mxu0 0.0
      %862 = vmatpush2.msra.mxu0 0.0
      %863 = vmatprep.subr.mxu0 0.0
      %864 = vmatpush2.msra.mxu0 0.0
      %865 = vmatprep.mubr.f32.mxu0 0.0
      %866 = vmatmul.mubr.f32.gmra.mxu0 %v790
      %v867 = vpop.f32.mrf.mxu0
      %v868 = vadd.f32 0.0, %v867
      %v869 = vpop.f32.mrf.mxu0
      %870 = vmatprep.mubr.f32.mxu0 0.0
      %871 = vmatmul.mubr.f32.gmra.mxu0 %v793
      %v872 = vpop.f32.mrf.mxu0
      %v873 = vadd.f32 0.0, %v872
      %v874 = vpop.f32.mrf.mxu0
      %875 = vmatprep.mubr.f32.mxu0 0.0
      %876 = vmatmul.mubr.f32.gmra.mxu0 %v796
      %v877 = vpop.f32.mrf.mxu0
      %v878 = vadd.f32 0.0, %v877
      %v879 = vpop.f32.mrf.mxu0
      %880 = vmatprep.mubr.f32.mxu0 0.0
      %881 = vmatmul.mubr.f32.gmra.mxu0 %v799
      %v882 = vpop.f32.mrf.mxu0
      %v883 = vadd.f32 0.0, %v882
      %v884 = vpop.f32.mrf.mxu0
      %885 = vdwg.mxu0
      %v886 = vadd.f32 %v764, %v868
      %v887 = vadd.f32 %v765, %v873
      %v888 = vadd.f32 %v766, %v878
      %v889 = vadd.f32 %v767, %v883
      %v890 = vld [vmem:[%s3] sm:$0xff]
      %v891 = vld [vmem:[%s3 + $0x8] sm:$0xff]
      %v892 = vld [vmem:[%s3 + $0x10] sm:$0xff]
      %v893 = vld [vmem:[%s3 + $0x18] sm:$0xff]
      %895 = vset.pattern.permute.xlu0 0
      %896 = vperm.xlu0 %895, %v890
      %v897 = vpop.permute.xlu0 %896
      %900 = vset.pattern.permute.xlu0 0
      %901 = vperm.xlu0 %900, %v891
      %v902 = vpop.permute.xlu0 %901
      %905 = vset.pattern.permute.xlu0 0
      %906 = vperm.xlu0 %905, %v892
      %v907 = vpop.permute.xlu0 %906
      %910 = vset.pattern.permute.xlu0 0
      %911 = vperm.xlu0 %910, %v893
      %v912 = vpop.permute.xlu0 %911
      %v914 = vadd.f32 %v886, %v897
      %v915 = vadd.f32 %v887, %v902
      %v916 = vadd.f32 %v888, %v907
      %v917 = vadd.f32 %v889, %v912
      %v918 = vmax.f32 %v914, 0.0
      %v919 = vmax.f32 %v915, 0.0
      %v920 = vmax.f32 %v916, 0.0
      %v921 = vmax.f32 %v917, 0.0
      %v922 = vld [vmem:[%s4] sm:$0xff]
      %v923 = vld [vmem:[%s4 + $0x8] sm:$0xff]
      %v924 = vld [vmem:[%s4 + $0x10] sm:$0xff]
      %v925 = vld [vmem:[%s4 + $0x18] sm:$0xff]
      %v926 = vld [vmem:[%s4 + $0x20] sm:$0xff]
      %v927 = vld [vmem:[%s4 + $0x28] sm:$0xff]
      %v928 = vld [vmem:[%s4 + $0x30] sm:$0xff]
      %v929 = vld [vmem:[%s4 + $0x38] sm:$0xff]
      %v930 = vld [vmem:[%s5] sm:$0xff]
      %v931 = vld [vmem:[%s5 + $0x8] sm:$0xff]
      %v932 = vld [vmem:[%s5 + $0x10] sm:$0xff]
      %v933 = vld [vmem:[%s5 + $0x18] sm:$0xff]
      %v934 = vld [vmem:[%s5 + $0x20] sm:$0xff]
      %v935 = vld [vmem:[%s5 + $0x28] sm:$0xff]
      %v936 = vld [vmem:[%s5 + $0x30] sm:$0xff]
      %v937 = vld [vmem:[%s5 + $0x38] sm:$0xff]
      %939 = vset.pattern.permute.xlu0 0
      %940 = vperm.xlu0 %939, %v930
      %v941 = vpop.permute.xlu0 %940
      %944 = vset.pattern.permute.xlu0 0
      %945 = vperm.xlu0 %944, %v931
      %v946 = vpop.permute.xlu0 %945
      %949 = vset.pattern.permute.xlu0 0
      %950 = vperm.xlu0 %949, %v932
      %v951 = vpop.permute.xlu0 %950
      %954 = vset.pattern.permute.xlu0 0
      %955 = vperm.xlu0 %954, %v933
      %v956 = vpop.permute.xlu0 %955
      %959 = vset.pattern.permute.xlu0 0
      %960 = vperm.xlu0 %959, %v934
      %v961 = vpop.permute.xlu0 %960
      %964 = vset.pattern.permute.xlu0 0
      %965 = vperm.xlu0 %964, %v935
      %v966 = vpop.permute.xlu0 %965
      %969 = vset.pattern.permute.xlu0 0
      %970 = vperm.xlu0 %969, %v936
      %v971 = vpop.permute.xlu0 %970
      %974 = vset.pattern.permute.xlu0 0
      %975 = vperm.xlu0 %974, %v937
      %v976 = vpop.permute.xlu0 %975
      %v979 = vsel %vm451, %v922, 0
      %v982 = vsel %vm451, %v923, 0
      %v985 = vsel %vm451, %v924, 0
      %v988 = vsel %vm451, %v925, 0
      %v991 = vsel %vm451, %v926, 0
      %v994 = vsel %vm451, %v927, 0
      %v997 = vsel %vm451, %v928, 0
      %v1000 = vsel %vm451, %v929, 0
      %1002 = vmatprep.subr.mxu0 0.0
      %1003 = vmatpush1.msra.mxu0 0.0
      %1004 = vmatprep.subr.mxu0 0.0
      %1005 = vmatpush1.msra.mxu0 0.0
      %1006 = vmatprep.subr.mxu0 0.0
      %1007 = vmatpush1.msra.mxu0 0.0
      %1008 = vmatprep.subr.mxu0 0.0
      %1009 = vmatpush1.msra.mxu0 0.0
      %1010 = vmatprep.subr.mxu0 0.0
      %1011 = vmatpush1.msra.mxu0 0.0
      %1012 = vmatprep.subr.mxu0 0.0
      %1013 = vmatpush1.msra.mxu0 0.0
      %1014 = vmatprep.subr.mxu0 0.0
      %1015 = vmatpush1.msra.mxu0 0.0
      %1016 = vmatprep.subr.mxu0 0.0
      %1017 = vmatpush1.msra.mxu0 0.0
      %1018 = vmatprep.subr.mxu0 0.0
      %1019 = vmatpush1.msra.mxu0 0.0
      %1020 = vmatprep.subr.mxu0 0.0
      %1021 = vmatpush1.msra.mxu0 0.0
      %1022 = vmatprep.subr.mxu0 0.0
      %1023 = vmatpush1.msra.mxu0 0.0
      %1024 = vmatprep.subr.mxu0 0.0
      %1025 = vmatpush1.msra.mxu0 0.0
      %1026 = vmatprep.subr.mxu0 0.0
      %1027 = vmatpush1.msra.mxu0 %v921
      %1028 = vmatprep.subr.mxu0 0.0
      %1029 = vmatpush1.msra.mxu0 %v920
      %1030 = vmatprep.subr.mxu0 0.0
      %1031 = vmatpush1.msra.mxu0 %v919
      %1032 = vmatprep.subr.mxu0 0.0
      %1033 = vmatpush1.msra.mxu0 %v918
      %1034 = vmatprep.subr.mxu0 0.0
      %1035 = vmatpush2.msra.mxu0 0.0
      %1036 = vmatprep.subr.mxu0 0.0
      %1037 = vmatpush2.msra.mxu0 0.0
      %1038 = vmatprep.subr.mxu0 0.0
      %1039 = vmatpush2.msra.mxu0 0.0
      %1040 = vmatprep.subr.mxu0 0.0
      %1041 = vmatpush2.msra.mxu0 0.0
      %1042 = vmatprep.subr.mxu0 0.0
      %1043 = vmatpush2.msra.mxu0 0.0
      %1044 = vmatprep.subr.mxu0 0.0
      %1045 = vmatpush2.msra.mxu0 0.0
      %1046 = vmatprep.subr.mxu0 0.0
      %1047 = vmatpush2.msra.mxu0 0.0
      %1048 = vmatprep.subr.mxu0 0.0
      %1049 = vmatpush2.msra.mxu0 0.0
      %1050 = vmatprep.subr.mxu0 0.0
      %1051 = vmatpush2.msra.mxu0 0.0
      %1052 = vmatprep.subr.mxu0 0.0
      %1053 = vmatpush2.msra.mxu0 0.0
      %1054 = vmatprep.subr.mxu0 0.0
      %1055 = vmatpush2.msra.mxu0 0.0
      %1056 = vmatprep.subr.mxu0 0.0
      %1057 = vmatpush2.msra.mxu0 0.0
      %1058 = vmatprep.subr.mxu0 0.0
      %1059 = vmatpush2.msra.mxu0 0.0
      %1060 = vmatprep.subr.mxu0 0.0
      %1061 = vmatpush2.msra.mxu0 0.0
      %1062 = vmatprep.subr.mxu0 0.0
      %1063 = vmatpush2.msra.mxu0 0.0
      %1064 = vmatprep.subr.mxu0 0.0
      %1065 = vmatpush2.msra.mxu0 0.0
      %1066 = vmatprep.mubr.f32.mxu0 0.0
      %1067 = vmatmul.mubr.f32.gmra.mxu0 %v979
      %v1068 = vpop.f32.mrf.mxu0
      %v1069 = vadd.f32 %v941, %v1068
      %v1070 = vpop.f32.mrf.mxu0
      %1071 = vmatprep.mubr.f32.mxu0 0.0
      %1072 = vmatmul.mubr.f32.gmra.mxu0 %v982
      %v1073 = vpop.f32.mrf.mxu0
      %v1074 = vadd.f32 %v946, %v1073
      %v1075 = vpop.f32.mrf.mxu0
      %1076 = vmatprep.mubr.f32.mxu0 0.0
      %1077 = vmatmul.mubr.f32.gmra.mxu0 %v985
      %v1078 = vpop.f32.mrf.mxu0
      %v1079 = vadd.f32 %v951, %v1078
      %v1080 = vpop.f32.mrf.mxu0
      %1081 = vmatprep.mubr.f32.mxu0 0.0
      %1082 = vmatmul.mubr.f32.gmra.mxu0 %v988
      %v1083 = vpop.f32.mrf.mxu0
      %v1084 = vadd.f32 %v956, %v1083
      %v1085 = vpop.f32.mrf.mxu0
      %1086 = vmatprep.mubr.f32.mxu0 0.0
      %1087 = vmatmul.mubr.f32.gmra.mxu0 %v991
      %v1088 = vpop.f32.mrf.mxu0
      %v1089 = vadd.f32 %v961, %v1088
      %v1090 = vpop.f32.mrf.mxu0
      %1091 = vmatprep.mubr.f32.mxu0 0.0
      %1092 = vmatmul.mubr.f32.gmra.mxu0 %v994
      %v1093 = vpop.f32.mrf.mxu0
      %v1094 = vadd.f32 %v966, %v1093
      %v1095 = vpop.f32.mrf.mxu0
      %1096 = vmatprep.mubr.f32.mxu0 0.0
      %1097 = vmatmul.mubr.f32.gmra.mxu0 %v997
      %v1098 = vpop.f32.mrf.mxu0
      %v1099 = vadd.f32 %v971, %v1098
      %v1100 = vpop.f32.mrf.mxu0
      %1101 = vmatprep.mubr.f32.mxu0 0.0
      %1102 = vmatmul.mubr.f32.gmra.mxu0 %v1000
      %v1103 = vpop.f32.mrf.mxu0
      %v1104 = vadd.f32 %v976, %v1103
      %v1105 = vpop.f32.mrf.mxu0
      %1106 = vdwg.mxu0
      %v1107 = vmax.f32 %v1069, 0.0
      %v1108 = vmax.f32 %v1074, 0.0
      %v1109 = vmax.f32 %v1079, 0.0
      %v1110 = vmax.f32 %v1084, 0.0
      %v1111 = vmax.f32 %v1089, 0.0
      %v1112 = vmax.f32 %v1094, 0.0
      %v1113 = vmax.f32 %v1099, 0.0
      %v1114 = vmax.f32 %v1104, 0.0
      %vm1115 = vcmask 15360
      %1116 = vst.msk [vmem:[#allocation2] sm:$0xff] %vm1115, 0.0
      %1117 = vst.msk [vmem:[#allocation2 + $0x8] sm:$0xff] %vm1115, 0.0
      %1118 = vst.msk [vmem:[#allocation2 + $0x10] sm:$0xff] %vm1115, 0.0
      %1119 = vst.msk [vmem:[#allocation2 + $0x18] sm:$0xff] %vm1115, 0.0
      %1120 = vst.msk [vmem:[#allocation2 + $0x20] sm:$0xff] %vm1115, 0.0
      %1121 = vst.msk [vmem:[#allocation2 + $0x28] sm:$0xff] %vm1115, 0.0
      %1122 = vst.msk [vmem:[#allocation2 + $0x30] sm:$0xff] %vm1115, 0.0
      %1123 = vst.msk [vmem:[#allocation2 + $0x38] sm:$0xff] %vm1115, 0.0
      %vm1124 = vcmask 146560
      %1125 = vst.msk [vmem:[#allocation2] sm:$0xff] %vm1124, 0.0
      %1126 = vst.msk [vmem:[#allocation2 + $0x8] sm:$0xff] %vm1124, 0.0
      %1127 = vst.msk [vmem:[#allocation2 + $0x10] sm:$0xff] %vm1124, 0.0
      %1128 = vst.msk [vmem:[#allocation2 + $0x18] sm:$0xff] %vm1124, 0.0
      %1129 = vst.msk [vmem:[#allocation2 + $0x20] sm:$0xff] %vm1124, 0.0
      %1130 = vst.msk [vmem:[#allocation2 + $0x28] sm:$0xff] %vm1124, 0.0
      %1131 = vst.msk [vmem:[#allocation2 + $0x30] sm:$0xff] %vm1124, 0.0
      %1132 = vst.msk [vmem:[#allocation2 + $0x38] sm:$0xff] %vm1124, 0.0
      %1141 = vrot.lane.b32.xlu0 %v1107, 2
      %v1142 = vpop.permute.xlu0 %1141
      %1143 = vrot.lane.b32.xlu0 %v1108, 2
      %v1144 = vpop.permute.xlu0 %1143
      %1145 = vrot.lane.b32.xlu0 %v1109, 2
      %v1146 = vpop.permute.xlu0 %1145
      %1147 = vrot.lane.b32.xlu0 %v1110, 2
      %v1148 = vpop.permute.xlu0 %1147
      %1149 = vrot.lane.b32.xlu0 %v1111, 2
      %v1150 = vpop.permute.xlu0 %1149
      %1151 = vrot.lane.b32.xlu0 %v1112, 2
      %v1152 = vpop.permute.xlu0 %1151
      %1153 = vrot.lane.b32.xlu0 %v1113, 2
      %v1154 = vpop.permute.xlu0 %1153
      %1155 = vrot.lane.b32.xlu0 %v1114, 2
      %v1156 = vpop.permute.xlu0 %1155
      %vm1165 = vcmask 130064
      %1166 = vst.msk [vmem:[#allocation2] sm:$0xff] %vm1165, %v1142
      %1167 = vst.msk [vmem:[#allocation2 + $0x8] sm:$0xff] %vm1165, %v1144
      %1168 = vst.msk [vmem:[#allocation2 + $0x10] sm:$0xff] %vm1165, %v1146
      %1169 = vst.msk [vmem:[#allocation2 + $0x18] sm:$0xff] %vm1165, %v1148
      %1170 = vst.msk [vmem:[#allocation2 + $0x20] sm:$0xff] %vm1165, %v1150
      %1171 = vst.msk [vmem:[#allocation2 + $0x28] sm:$0xff] %vm1165, %v1152
      %1172 = vst.msk [vmem:[#allocation2 + $0x30] sm:$0xff] %vm1165, %v1154
      %1173 = vst.msk [vmem:[#allocation2 + $0x38] sm:$0xff] %vm1165, %v1156
      %v1174 = vld [vmem:[%s6] sm:$0xff]
      %v1175 = vld [vmem:[%s6 + $0x8] sm:$0xff]
      %v1176 = vld [vmem:[%s6 + $0x10] sm:$0xff]
      %v1177 = vld [vmem:[%s6 + $0x18] sm:$0xff]
      %v1178 = vld [vmem:[%s6 + $0x20] sm:$0xff]
      %v1179 = vld [vmem:[%s6 + $0x28] sm:$0xff]
      %v1180 = vld [vmem:[%s6 + $0x30] sm:$0xff]
      %v1181 = vld [vmem:[%s6 + $0x38] sm:$0xff]
      %v1182 = vld [vmem:[#allocation2] sm:$0xff]
      %v1183 = vld [vmem:[#allocation2 + $0x8] sm:$0xff]
      %v1184 = vld [vmem:[#allocation2 + $0x10] sm:$0xff]
      %v1185 = vld [vmem:[#allocation2 + $0x18] sm:$0xff]
      %v1186 = vld [vmem:[#allocation2 + $0x20] sm:$0xff]
      %v1187 = vld [vmem:[#allocation2 + $0x28] sm:$0xff]
      %v1188 = vld [vmem:[#allocation2 + $0x30] sm:$0xff]
      %v1189 = vld [vmem:[#allocation2 + $0x38] sm:$0xff]
      %1191 = vset.pattern.permute.xlu0 0
      %1192 = vperm.xlu0 %1191, %v1174
      %v1193 = vpop.permute.xlu0 %1192
      %1196 = vset.pattern.permute.xlu0 0
      %1197 = vperm.xlu0 %1196, %v1175
      %v1198 = vpop.permute.xlu0 %1197
      %1201 = vset.pattern.permute.xlu0 0
      %1202 = vperm.xlu0 %1201, %v1176
      %v1203 = vpop.permute.xlu0 %1202
      %1206 = vset.pattern.permute.xlu0 0
      %1207 = vperm.xlu0 %1206, %v1177
      %v1208 = vpop.permute.xlu0 %1207
      %1211 = vset.pattern.permute.xlu0 0
      %1212 = vperm.xlu0 %1211, %v1178
      %v1213 = vpop.permute.xlu0 %1212
      %1216 = vset.pattern.permute.xlu0 0
      %1217 = vperm.xlu0 %1216, %v1179
      %v1218 = vpop.permute.xlu0 %1217
      %1221 = vset.pattern.permute.xlu0 0
      %1222 = vperm.xlu0 %1221, %v1180
      %v1223 = vpop.permute.xlu0 %1222
      %1226 = vset.pattern.permute.xlu0 0
      %1227 = vperm.xlu0 %1226, %v1181
      %v1228 = vpop.permute.xlu0 %1227
      %v1230 = vmul.f32 %v1193, %v1182
      %v1231 = vmul.f32 %v1198, %v1183
      %v1232 = vmul.f32 %v1203, %v1184
      %v1233 = vmul.f32 %v1208, %v1185
      %v1234 = vmul.f32 %v1213, %v1186
      %v1235 = vmul.f32 %v1218, %v1187
      %v1236 = vmul.f32 %v1223, %v1188
      %v1237 = vmul.f32 %v1228, %v1189
      %v1238 = vadd.f32 %v1230, 0.0
      %v1239 = vadd.f32 %v1231, 0.0
      %v1240 = vadd.f32 %v1232, 0.0
      %v1241 = vadd.f32 %v1233, 0.0
      %v1242 = vadd.f32 %v1234, 0.0
      %v1243 = vadd.f32 %v1235, 0.0
      %v1244 = vadd.f32 %v1236, 0.0
      %v1245 = vadd.f32 %v1237, 0.0
      %s1246 = scalar_lea.vmem %s6, 64
      %v1247 = vld [vmem:[%s1246] sm:$0xff]
      %v1248 = vld [vmem:[%s1246 + $0x8] sm:$0xff]
      %v1249 = vld [vmem:[%s1246 + $0x10] sm:$0xff]
      %v1250 = vld [vmem:[%s1246 + $0x18] sm:$0xff]
      %v1251 = vld [vmem:[%s1246 + $0x20] sm:$0xff]
      %v1252 = vld [vmem:[%s1246 + $0x28] sm:$0xff]
      %v1253 = vld [vmem:[%s1246 + $0x30] sm:$0xff]
      %v1254 = vld [vmem:[%s1246 + $0x38] sm:$0xff]
      %1256 = vset.pattern.permute.xlu0 0
      %1257 = vperm.xlu0 %1256, %v1247
      %v1258 = vpop.permute.xlu0 %1257
      %1261 = vset.pattern.permute.xlu0 0
      %1262 = vperm.xlu0 %1261, %v1248
      %v1263 = vpop.permute.xlu0 %1262
      %1266 = vset.pattern.permute.xlu0 0
      %1267 = vperm.xlu0 %1266, %v1249
      %v1268 = vpop.permute.xlu0 %1267
      %1271 = vset.pattern.permute.xlu0 0
      %1272 = vperm.xlu0 %1271, %v1250
      %v1273 = vpop.permute.xlu0 %1272
      %1276 = vset.pattern.permute.xlu0 0
      %1277 = vperm.xlu0 %1276, %v1251
      %v1278 = vpop.permute.xlu0 %1277
      %1281 = vset.pattern.permute.xlu0 0
      %1282 = vperm.xlu0 %1281, %v1252
      %v1283 = vpop.permute.xlu0 %1282
      %1286 = vset.pattern.permute.xlu0 0
      %1287 = vperm.xlu0 %1286, %v1253
      %v1288 = vpop.permute.xlu0 %1287
      %1291 = vset.pattern.permute.xlu0 0
      %1292 = vperm.xlu0 %1291, %v1254
      %v1293 = vpop.permute.xlu0 %1292
      %v1295 = vmul.f32 %v1258, %v1182
      %v1296 = vmul.f32 %v1263, %v1183
      %v1297 = vmul.f32 %v1268, %v1184
      %v1298 = vmul.f32 %v1273, %v1185
      %v1299 = vmul.f32 %v1278, %v1186
      %v1300 = vmul.f32 %v1283, %v1187
      %v1301 = vmul.f32 %v1288, %v1188
      %v1302 = vmul.f32 %v1293, %v1189
      %1311 = vrot.lane.b32.xlu0 %v1295, 127
      %v1312 = vpop.permute.xlu0 %1311
      %1313 = vrot.lane.b32.xlu0 %v1296, 127
      %v1314 = vpop.permute.xlu0 %1313
      %1315 = vrot.lane.b32.xlu0 %v1297, 127
      %v1316 = vpop.permute.xlu0 %1315
      %1317 = vrot.lane.b32.xlu0 %v1298, 127
      %v1318 = vpop.permute.xlu0 %1317
      %1319 = vrot.lane.b32.xlu0 %v1299, 127
      %v1320 = vpop.permute.xlu0 %1319
      %1321 = vrot.lane.b32.xlu0 %v1300, 127
      %v1322 = vpop.permute.xlu0 %1321
      %1323 = vrot.lane.b32.xlu0 %v1301, 127
      %v1324 = vpop.permute.xlu0 %1323
      %1325 = vrot.lane.b32.xlu0 %v1302, 127
      %v1326 = vpop.permute.xlu0 %1325
      %v1335 = vadd.f32 %v1238, %v1312
      %v1336 = vadd.f32 %v1239, %v1314
      %v1337 = vadd.f32 %v1240, %v1316
      %v1338 = vadd.f32 %v1241, %v1318
      %v1339 = vadd.f32 %v1242, %v1320
      %v1340 = vadd.f32 %v1243, %v1322
      %v1341 = vadd.f32 %v1244, %v1324
      %v1342 = vadd.f32 %v1245, %v1326
      %s1343 = scalar_lea.vmem %s6, 128
      %v1344 = vld [vmem:[%s1343] sm:$0xff]
      %v1345 = vld [vmem:[%s1343 + $0x8] sm:$0xff]
      %v1346 = vld [vmem:[%s1343 + $0x10] sm:$0xff]
      %v1347 = vld [vmem:[%s1343 + $0x18] sm:$0xff]
      %v1348 = vld [vmem:[%s1343 + $0x20] sm:$0xff]
      %v1349 = vld [vmem:[%s1343 + $0x28] sm:$0xff]
      %v1350 = vld [vmem:[%s1343 + $0x30] sm:$0xff]
      %v1351 = vld [vmem:[%s1343 + $0x38] sm:$0xff]
      %1353 = vset.pattern.permute.xlu0 0
      %1354 = vperm.xlu0 %1353, %v1344
      %v1355 = vpop.permute.xlu0 %1354
      %1358 = vset.pattern.permute.xlu0 0
      %1359 = vperm.xlu0 %1358, %v1345
      %v1360 = vpop.permute.xlu0 %1359
      %1363 = vset.pattern.permute.xlu0 0
      %1364 = vperm.xlu0 %1363, %v1346
      %v1365 = vpop.permute.xlu0 %1364
      %1368 = vset.pattern.permute.xlu0 0
      %1369 = vperm.xlu0 %1368, %v1347
      %v1370 = vpop.permute.xlu0 %1369
      %1373 = vset.pattern.permute.xlu0 0
      %1374 = vperm.xlu0 %1373, %v1348
      %v1375 = vpop.permute.xlu0 %1374
      %1378 = vset.pattern.permute.xlu0 0
      %1379 = vperm.xlu0 %1378, %v1349
      %v1380 = vpop.permute.xlu0 %1379
      %1383 = vset.pattern.permute.xlu0 0
      %1384 = vperm.xlu0 %1383, %v1350
      %v1385 = vpop.permute.xlu0 %1384
      %1388 = vset.pattern.permute.xlu0 0
      %1389 = vperm.xlu0 %1388, %v1351
      %v1390 = vpop.permute.xlu0 %1389
      %v1392 = vmul.f32 %v1355, %v1182
      %v1393 = vmul.f32 %v1360, %v1183
      %v1394 = vmul.f32 %v1365, %v1184
      %v1395 = vmul.f32 %v1370, %v1185
      %v1396 = vmul.f32 %v1375, %v1186
      %v1397 = vmul.f32 %v1380, %v1187
      %v1398 = vmul.f32 %v1385, %v1188
      %v1399 = vmul.f32 %v1390, %v1189
      %1408 = vrot.lane.b32.xlu0 %v1392, 126
      %v1409 = vpop.permute.xlu0 %1408
      %1410 = vrot.lane.b32.xlu0 %v1393, 126
      %v1411 = vpop.permute.xlu0 %1410
      %1412 = vrot.lane.b32.xlu0 %v1394, 126
      %v1413 = vpop.permute.xlu0 %1412
      %1414 = vrot.lane.b32.xlu0 %v1395, 126
      %v1415 = vpop.permute.xlu0 %1414
      %1416 = vrot.lane.b32.xlu0 %v1396, 126
      %v1417 = vpop.permute.xlu0 %1416
      %1418 = vrot.lane.b32.xlu0 %v1397, 126
      %v1419 = vpop.permute.xlu0 %1418
      %1420 = vrot.lane.b32.xlu0 %v1398, 126
      %v1421 = vpop.permute.xlu0 %1420
      %1422 = vrot.lane.b32.xlu0 %v1399, 126
      %v1423 = vpop.permute.xlu0 %1422
      %v1432 = vadd.f32 %v1335, %v1409
      %v1433 = vadd.f32 %v1336, %v1411
      %v1434 = vadd.f32 %v1337, %v1413
      %v1435 = vadd.f32 %v1338, %v1415
      %v1436 = vadd.f32 %v1339, %v1417
      %v1437 = vadd.f32 %v1340, %v1419
      %v1438 = vadd.f32 %v1341, %v1421
      %v1439 = vadd.f32 %v1342, %v1423
      %s1440 = scalar_lea.vmem %s6, 192
      %v1441 = vld [vmem:[%s1440] sm:$0xff]
      %v1442 = vld [vmem:[%s1440 + $0x8] sm:$0xff]
      %v1443 = vld [vmem:[%s1440 + $0x10] sm:$0xff]
      %v1444 = vld [vmem:[%s1440 + $0x18] sm:$0xff]
      %v1445 = vld [vmem:[%s1440 + $0x20] sm:$0xff]
      %v1446 = vld [vmem:[%s1440 + $0x28] sm:$0xff]
      %v1447 = vld [vmem:[%s1440 + $0x30] sm:$0xff]
      %v1448 = vld [vmem:[%s1440 + $0x38] sm:$0xff]
      %1450 = vset.pattern.permute.xlu0 0
      %1451 = vperm.xlu0 %1450, %v1441
      %v1452 = vpop.permute.xlu0 %1451
      %1455 = vset.pattern.permute.xlu0 0
      %1456 = vperm.xlu0 %1455, %v1442
      %v1457 = vpop.permute.xlu0 %1456
      %1460 = vset.pattern.permute.xlu0 0
      %1461 = vperm.xlu0 %1460, %v1443
      %v1462 = vpop.permute.xlu0 %1461
      %1465 = vset.pattern.permute.xlu0 0
      %1466 = vperm.xlu0 %1465, %v1444
      %v1467 = vpop.permute.xlu0 %1466
      %1470 = vset.pattern.permute.xlu0 0
      %1471 = vperm.xlu0 %1470, %v1445
      %v1472 = vpop.permute.xlu0 %1471
      %1475 = vset.pattern.permute.xlu0 0
      %1476 = vperm.xlu0 %1475, %v1446
      %v1477 = vpop.permute.xlu0 %1476
      %1480 = vset.pattern.permute.xlu0 0
      %1481 = vperm.xlu0 %1480, %v1447
      %v1482 = vpop.permute.xlu0 %1481
      %1485 = vset.pattern.permute.xlu0 0
      %1486 = vperm.xlu0 %1485, %v1448
      %v1487 = vpop.permute.xlu0 %1486
      %v1489 = vmul.f32 %v1452, %v1182
      %v1490 = vmul.f32 %v1457, %v1183
      %v1491 = vmul.f32 %v1462, %v1184
      %v1492 = vmul.f32 %v1467, %v1185
      %v1493 = vmul.f32 %v1472, %v1186
      %v1494 = vmul.f32 %v1477, %v1187
      %v1495 = vmul.f32 %v1482, %v1188
      %v1496 = vmul.f32 %v1487, %v1189
      %1505 = vrot.lane.b32.xlu0 %v1489, 125
      %v1506 = vpop.permute.xlu0 %1505
      %1507 = vrot.lane.b32.xlu0 %v1490, 125
      %v1508 = vpop.permute.xlu0 %1507
      %1509 = vrot.lane.b32.xlu0 %v1491, 125
      %v1510 = vpop.permute.xlu0 %1509
      %1511 = vrot.lane.b32.xlu0 %v1492, 125
      %v1512 = vpop.permute.xlu0 %1511
      %1513 = vrot.lane.b32.xlu0 %v1493, 125
      %v1514 = vpop.permute.xlu0 %1513
      %1515 = vrot.lane.b32.xlu0 %v1494, 125
      %v1516 = vpop.permute.xlu0 %1515
      %1517 = vrot.lane.b32.xlu0 %v1495, 125
      %v1518 = vpop.permute.xlu0 %1517
      %1519 = vrot.lane.b32.xlu0 %v1496, 125
      %v1520 = vpop.permute.xlu0 %1519
      %v1529 = vadd.f32 %v1432, %v1506
      %v1530 = vadd.f32 %v1433, %v1508
      %v1531 = vadd.f32 %v1434, %v1510
      %v1532 = vadd.f32 %v1435, %v1512
      %v1533 = vadd.f32 %v1436, %v1514
      %v1534 = vadd.f32 %v1437, %v1516
      %v1535 = vadd.f32 %v1438, %v1518
      %v1536 = vadd.f32 %v1439, %v1520
      %s1537 = scalar_lea.vmem %s6, 256
      %v1538 = vld [vmem:[%s1537] sm:$0xff]
      %v1539 = vld [vmem:[%s1537 + $0x8] sm:$0xff]
      %v1540 = vld [vmem:[%s1537 + $0x10] sm:$0xff]
      %v1541 = vld [vmem:[%s1537 + $0x18] sm:$0xff]
      %v1542 = vld [vmem:[%s1537 + $0x20] sm:$0xff]
      %v1543 = vld [vmem:[%s1537 + $0x28] sm:$0xff]
      %v1544 = vld [vmem:[%s1537 + $0x30] sm:$0xff]
      %v1545 = vld [vmem:[%s1537 + $0x38] sm:$0xff]
      %1547 = vset.pattern.permute.xlu0 0
      %1548 = vperm.xlu0 %1547, %v1538
      %v1549 = vpop.permute.xlu0 %1548
      %1552 = vset.pattern.permute.xlu0 0
      %1553 = vperm.xlu0 %1552, %v1539
      %v1554 = vpop.permute.xlu0 %1553
      %1557 = vset.pattern.permute.xlu0 0
      %1558 = vperm.xlu0 %1557, %v1540
      %v1559 = vpop.permute.xlu0 %1558
      %1562 = vset.pattern.permute.xlu0 0
      %1563 = vperm.xlu0 %1562, %v1541
      %v1564 = vpop.permute.xlu0 %1563
      %1567 = vset.pattern.permute.xlu0 0
      %1568 = vperm.xlu0 %1567, %v1542
      %v1569 = vpop.permute.xlu0 %1568
      %1572 = vset.pattern.permute.xlu0 0
      %1573 = vperm.xlu0 %1572, %v1543
      %v1574 = vpop.permute.xlu0 %1573
      %1577 = vset.pattern.permute.xlu0 0
      %1578 = vperm.xlu0 %1577, %v1544
      %v1579 = vpop.permute.xlu0 %1578
      %1582 = vset.pattern.permute.xlu0 0
      %1583 = vperm.xlu0 %1582, %v1545
      %v1584 = vpop.permute.xlu0 %1583
      %v1586 = vmul.f32 %v1549, %v1182
      %v1587 = vmul.f32 %v1554, %v1183
      %v1588 = vmul.f32 %v1559, %v1184
      %v1589 = vmul.f32 %v1564, %v1185
      %v1590 = vmul.f32 %v1569, %v1186
      %v1591 = vmul.f32 %v1574, %v1187
      %v1592 = vmul.f32 %v1579, %v1188
      %v1593 = vmul.f32 %v1584, %v1189
      %1602 = vrot.lane.b32.xlu0 %v1586, 124
      %v1603 = vpop.permute.xlu0 %1602
      %1604 = vrot.lane.b32.xlu0 %v1587, 124
      %v1605 = vpop.permute.xlu0 %1604
      %1606 = vrot.lane.b32.xlu0 %v1588, 124
      %v1607 = vpop.permute.xlu0 %1606
      %1608 = vrot.lane.b32.xlu0 %v1589, 124
      %v1609 = vpop.permute.xlu0 %1608
      %1610 = vrot.lane.b32.xlu0 %v1590, 124
      %v1611 = vpop.permute.xlu0 %1610
      %1612 = vrot.lane.b32.xlu0 %v1591, 124
      %v1613 = vpop.permute.xlu0 %1612
      %1614 = vrot.lane.b32.xlu0 %v1592, 124
      %v1615 = vpop.permute.xlu0 %1614
      %1616 = vrot.lane.b32.xlu0 %v1593, 124
      %v1617 = vpop.permute.xlu0 %1616
      %v1626 = vadd.f32 %v1529, %v1603
      %v1627 = vadd.f32 %v1530, %v1605
      %v1628 = vadd.f32 %v1531, %v1607
      %v1629 = vadd.f32 %v1532, %v1609
      %v1630 = vadd.f32 %v1533, %v1611
      %v1631 = vadd.f32 %v1534, %v1613
      %v1632 = vadd.f32 %v1535, %v1615
      %v1633 = vadd.f32 %v1536, %v1617
      %v1634 = vld [vmem:[%s7] sm:$0xff]
      %v1635 = vld [vmem:[%s7 + $0x8] sm:$0xff]
      %v1636 = vld [vmem:[%s7 + $0x10] sm:$0xff]
      %v1637 = vld [vmem:[%s7 + $0x18] sm:$0xff]
      %v1638 = vld [vmem:[%s7 + $0x20] sm:$0xff]
      %v1639 = vld [vmem:[%s7 + $0x28] sm:$0xff]
      %v1640 = vld [vmem:[%s7 + $0x30] sm:$0xff]
      %v1641 = vld [vmem:[%s7 + $0x38] sm:$0xff]
      %1643 = vset.pattern.permute.xlu0 0
      %1644 = vperm.xlu0 %1643, %v1634
      %v1645 = vpop.permute.xlu0 %1644
      %1648 = vset.pattern.permute.xlu0 0
      %1649 = vperm.xlu0 %1648, %v1635
      %v1650 = vpop.permute.xlu0 %1649
      %1653 = vset.pattern.permute.xlu0 0
      %1654 = vperm.xlu0 %1653, %v1636
      %v1655 = vpop.permute.xlu0 %1654
      %1658 = vset.pattern.permute.xlu0 0
      %1659 = vperm.xlu0 %1658, %v1637
      %v1660 = vpop.permute.xlu0 %1659
      %1663 = vset.pattern.permute.xlu0 0
      %1664 = vperm.xlu0 %1663, %v1638
      %v1665 = vpop.permute.xlu0 %1664
      %1668 = vset.pattern.permute.xlu0 0
      %1669 = vperm.xlu0 %1668, %v1639
      %v1670 = vpop.permute.xlu0 %1669
      %1673 = vset.pattern.permute.xlu0 0
      %1674 = vperm.xlu0 %1673, %v1640
      %v1675 = vpop.permute.xlu0 %1674
      %1678 = vset.pattern.permute.xlu0 0
      %1679 = vperm.xlu0 %1678, %v1641
      %v1680 = vpop.permute.xlu0 %1679
      %v1682 = vadd.f32 %v1626, %v1645
      %v1683 = vadd.f32 %v1627, %v1650
      %v1684 = vadd.f32 %v1628, %v1655
      %v1685 = vadd.f32 %v1629, %v1660
      %v1686 = vadd.f32 %v1630, %v1665
      %v1687 = vadd.f32 %v1631, %v1670
      %v1688 = vadd.f32 %v1632, %v1675
      %v1689 = vadd.f32 %v1633, %v1680
      %v1690 = vmax.f32 %v1682, 0.0
      %v1691 = vmax.f32 %v1683, 0.0
      %v1692 = vmax.f32 %v1684, 0.0
      %v1693 = vmax.f32 %v1685, 0.0
      %v1694 = vmax.f32 %v1686, 0.0
      %v1695 = vmax.f32 %v1687, 0.0
      %v1696 = vmax.f32 %v1688, 0.0
      %v1697 = vmax.f32 %v1689, 0.0
      %v1698 = vld [vmem:[%s8] sm:$0xff]
      %v1699 = vld [vmem:[%s8 + $0x8] sm:$0xff]
      %v1700 = vld [vmem:[%s8 + $0x10] sm:$0xff]
      %v1701 = vld [vmem:[%s8 + $0x18] sm:$0xff]
      %v1702 = vld [vmem:[%s8 + $0x20] sm:$0xff]
      %v1703 = vld [vmem:[%s8 + $0x28] sm:$0xff]
      %v1704 = vld [vmem:[%s8 + $0x30] sm:$0xff]
      %v1705 = vld [vmem:[%s8 + $0x38] sm:$0xff]
      %v1706 = vld [vmem:[%s9] sm:$0xff]
      %v1707 = vld [vmem:[%s9 + $0x8] sm:$0xff]
      %v1708 = vld [vmem:[%s9 + $0x10] sm:$0xff]
      %v1709 = vld [vmem:[%s9 + $0x18] sm:$0xff]
      %v1710 = vld [vmem:[%s9 + $0x20] sm:$0xff]
      %v1711 = vld [vmem:[%s9 + $0x28] sm:$0xff]
      %v1712 = vld [vmem:[%s9 + $0x30] sm:$0xff]
      %v1713 = vld [vmem:[%s9 + $0x38] sm:$0xff]
      %1715 = vset.pattern.permute.xlu0 0
      %1716 = vperm.xlu0 %1715, %v1706
      %v1717 = vpop.permute.xlu0 %1716
      %1720 = vset.pattern.permute.xlu0 0
      %1721 = vperm.xlu0 %1720, %v1707
      %v1722 = vpop.permute.xlu0 %1721
      %1725 = vset.pattern.permute.xlu0 0
      %1726 = vperm.xlu0 %1725, %v1708
      %v1727 = vpop.permute.xlu0 %1726
      %1730 = vset.pattern.permute.xlu0 0
      %1731 = vperm.xlu0 %1730, %v1709
      %v1732 = vpop.permute.xlu0 %1731
      %1735 = vset.pattern.permute.xlu0 0
      %1736 = vperm.xlu0 %1735, %v1710
      %v1737 = vpop.permute.xlu0 %1736
      %1740 = vset.pattern.permute.xlu0 0
      %1741 = vperm.xlu0 %1740, %v1711
      %v1742 = vpop.permute.xlu0 %1741
      %1745 = vset.pattern.permute.xlu0 0
      %1746 = vperm.xlu0 %1745, %v1712
      %v1747 = vpop.permute.xlu0 %1746
      %1750 = vset.pattern.permute.xlu0 0
      %1751 = vperm.xlu0 %1750, %v1713
      %v1752 = vpop.permute.xlu0 %1751
      %vm1754 = vcmask 523264
      %v1756 = vsel %vm1754, %v1698, 0
      %v1759 = vsel %vm1754, %v1699, 0
      %v1762 = vsel %vm1754, %v1700, 0
      %v1765 = vsel %vm1754, %v1701, 0
      %v1768 = vsel %vm1754, %v1702, 0
      %v1771 = vsel %vm1754, %v1703, 0
      %v1774 = vsel %vm1754, %v1704, 0
      %v1777 = vsel %vm1754, %v1705, 0
      %1779 = vmatprep.subr.mxu0 0.0
      %1780 = vmatpush1.msra.mxu0 0.0
      %1781 = vmatprep.subr.mxu0 0.0
      %1782 = vmatpush1.msra.mxu0 0.0
      %1783 = vmatprep.subr.mxu0 0.0
      %1784 = vmatpush1.msra.mxu0 0.0
      %1785 = vmatprep.subr.mxu0 0.0
      %1786 = vmatpush1.msra.mxu0 0.0
      %1787 = vmatprep.subr.mxu0 0.0
      %1788 = vmatpush1.msra.mxu0 0.0
      %1789 = vmatprep.subr.mxu0 0.0
      %1790 = vmatpush1.msra.mxu0 0.0
      %1791 = vmatprep.subr.mxu0 0.0
      %1792 = vmatpush1.msra.mxu0 0.0
      %1793 = vmatprep.subr.mxu0 0.0
      %1794 = vmatpush1.msra.mxu0 0.0
      %1795 = vmatprep.subr.mxu0 0.0
      %1796 = vmatpush1.msra.mxu0 %v1697
      %1797 = vmatprep.subr.mxu0 0.0
      %1798 = vmatpush1.msra.mxu0 %v1696
      %1799 = vmatprep.subr.mxu0 0.0
      %1800 = vmatpush1.msra.mxu0 %v1695
      %1801 = vmatprep.subr.mxu0 0.0
      %1802 = vmatpush1.msra.mxu0 %v1694
      %1803 = vmatprep.subr.mxu0 0.0
      %1804 = vmatpush1.msra.mxu0 %v1693
      %1805 = vmatprep.subr.mxu0 0.0
      %1806 = vmatpush1.msra.mxu0 %v1692
      %1807 = vmatprep.subr.mxu0 0.0
      %1808 = vmatpush1.msra.mxu0 %v1691
      %1809 = vmatprep.subr.mxu0 0.0
      %1810 = vmatpush1.msra.mxu0 %v1690
      %1811 = vmatprep.subr.mxu0 0.0
      %1812 = vmatpush2.msra.mxu0 0.0
      %1813 = vmatprep.subr.mxu0 0.0
      %1814 = vmatpush2.msra.mxu0 0.0
      %1815 = vmatprep.subr.mxu0 0.0
      %1816 = vmatpush2.msra.mxu0 0.0
      %1817 = vmatprep.subr.mxu0 0.0
      %1818 = vmatpush2.msra.mxu0 0.0
      %1819 = vmatprep.subr.mxu0 0.0
      %1820 = vmatpush2.msra.mxu0 0.0
      %1821 = vmatprep.subr.mxu0 0.0
      %1822 = vmatpush2.msra.mxu0 0.0
      %1823 = vmatprep.subr.mxu0 0.0
      %1824 = vmatpush2.msra.mxu0 0.0
      %1825 = vmatprep.subr.mxu0 0.0
      %1826 = vmatpush2.msra.mxu0 0.0
      %1827 = vmatprep.subr.mxu0 0.0
      %1828 = vmatpush2.msra.mxu0 0.0
      %1829 = vmatprep.subr.mxu0 0.0
      %1830 = vmatpush2.msra.mxu0 0.0
      %1831 = vmatprep.subr.mxu0 0.0
      %1832 = vmatpush2.msra.mxu0 0.0
      %1833 = vmatprep.subr.mxu0 0.0
      %1834 = vmatpush2.msra.mxu0 0.0
      %1835 = vmatprep.subr.mxu0 0.0
      %1836 = vmatpush2.msra.mxu0 0.0
      %1837 = vmatprep.subr.mxu0 0.0
      %1838 = vmatpush2.msra.mxu0 0.0
      %1839 = vmatprep.subr.mxu0 0.0
      %1840 = vmatpush2.msra.mxu0 0.0
      %1841 = vmatprep.subr.mxu0 0.0
      %1842 = vmatpush2.msra.mxu0 0.0
      %1843 = vmatprep.mubr.f32.mxu0 0.0
      %1844 = vmatmul.mubr.f32.gmra.mxu0 %v1756
      %v1845 = vpop.f32.mrf.mxu0
      %v1846 = vadd.f32 %v1717, %v1845
      %v1847 = vpop.f32.mrf.mxu0
      %1848 = vmatprep.mubr.f32.mxu0 0.0
      %1849 = vmatmul.mubr.f32.gmra.mxu0 %v1759
      %v1850 = vpop.f32.mrf.mxu0
      %v1851 = vadd.f32 %v1722, %v1850
      %v1852 = vpop.f32.mrf.mxu0
      %1853 = vmatprep.mubr.f32.mxu0 0.0
      %1854 = vmatmul.mubr.f32.gmra.mxu0 %v1762
      %v1855 = vpop.f32.mrf.mxu0
      %v1856 = vadd.f32 %v1727, %v1855
      %v1857 = vpop.f32.mrf.mxu0
      %1858 = vmatprep.mubr.f32.mxu0 0.0
      %1859 = vmatmul.mubr.f32.gmra.mxu0 %v1765
      %v1860 = vpop.f32.mrf.mxu0
      %v1861 = vadd.f32 %v1732, %v1860
      %v1862 = vpop.f32.mrf.mxu0
      %1863 = vmatprep.mubr.f32.mxu0 0.0
      %1864 = vmatmul.mubr.f32.gmra.mxu0 %v1768
      %v1865 = vpop.f32.mrf.mxu0
      %v1866 = vadd.f32 %v1737, %v1865
      %v1867 = vpop.f32.mrf.mxu0
      %1868 = vmatprep.mubr.f32.mxu0 0.0
      %1869 = vmatmul.mubr.f32.gmra.mxu0 %v1771
      %v1870 = vpop.f32.mrf.mxu0
      %v1871 = vadd.f32 %v1742, %v1870
      %v1872 = vpop.f32.mrf.mxu0
      %1873 = vmatprep.mubr.f32.mxu0 0.0
      %1874 = vmatmul.mubr.f32.gmra.mxu0 %v1774
      %v1875 = vpop.f32.mrf.mxu0
      %v1876 = vadd.f32 %v1747, %v1875
      %v1877 = vpop.f32.mrf.mxu0
      %1878 = vmatprep.mubr.f32.mxu0 0.0
      %1879 = vmatmul.mubr.f32.gmra.mxu0 %v1777
      %v1880 = vpop.f32.mrf.mxu0
      %v1881 = vadd.f32 %v1752, %v1880
      %v1882 = vpop.f32.mrf.mxu0
      %1883 = vdwg.mxu0
      %v1884 = vmax.f32 %v1846, 0.0
      %v1885 = vmax.f32 %v1851, 0.0
      %v1886 = vmax.f32 %v1856, 0.0
      %v1887 = vmax.f32 %v1861, 0.0
      %v1888 = vmax.f32 %v1866, 0.0
      %v1889 = vmax.f32 %v1871, 0.0
      %v1890 = vmax.f32 %v1876, 0.0
      %v1891 = vmax.f32 %v1881, 0.0
      %v1892 = vld [vmem:[%s10] sm:$0xff]
      %v1893 = vld [vmem:[%s10 + $0x8] sm:$0xff]
      %v1894 = vld [vmem:[%s10 + $0x10] sm:$0xff]
      %v1895 = vld [vmem:[%s10 + $0x18] sm:$0xff]
      %v1896 = vld [vmem:[%s10 + $0x20] sm:$0xff]
      %v1897 = vld [vmem:[%s10 + $0x28] sm:$0xff]
      %v1898 = vld [vmem:[%s10 + $0x30] sm:$0xff]
      %v1899 = vld [vmem:[%s10 + $0x38] sm:$0xff]
      %v1900 = vld [vmem:[%s11] sm:$0xff]
      %v1901 = vld [vmem:[%s11 + $0x8] sm:$0xff]
      %v1902 = vld [vmem:[%s11 + $0x10] sm:$0xff]
      %v1903 = vld [vmem:[%s11 + $0x18] sm:$0xff]
      %v1904 = vld [vmem:[%s11 + $0x20] sm:$0xff]
      %v1905 = vld [vmem:[%s11 + $0x28] sm:$0xff]
      %v1906 = vld [vmem:[%s11 + $0x30] sm:$0xff]
      %v1907 = vld [vmem:[%s11 + $0x38] sm:$0xff]
      %1909 = vset.pattern.permute.xlu0 0
      %1910 = vperm.xlu0 %1909, %v1900
      %v1911 = vpop.permute.xlu0 %1910
      %1914 = vset.pattern.permute.xlu0 0
      %1915 = vperm.xlu0 %1914, %v1901
      %v1916 = vpop.permute.xlu0 %1915
      %1919 = vset.pattern.permute.xlu0 0
      %1920 = vperm.xlu0 %1919, %v1902
      %v1921 = vpop.permute.xlu0 %1920
      %1924 = vset.pattern.permute.xlu0 0
      %1925 = vperm.xlu0 %1924, %v1903
      %v1926 = vpop.permute.xlu0 %1925
      %1929 = vset.pattern.permute.xlu0 0
      %1930 = vperm.xlu0 %1929, %v1904
      %v1931 = vpop.permute.xlu0 %1930
      %1934 = vset.pattern.permute.xlu0 0
      %1935 = vperm.xlu0 %1934, %v1905
      %v1936 = vpop.permute.xlu0 %1935
      %1939 = vset.pattern.permute.xlu0 0
      %1940 = vperm.xlu0 %1939, %v1906
      %v1941 = vpop.permute.xlu0 %1940
      %1944 = vset.pattern.permute.xlu0 0
      %1945 = vperm.xlu0 %1944, %v1907
      %v1946 = vpop.permute.xlu0 %1945
      %v1949 = vsel %vm451, %v1892, 0
      %v1952 = vsel %vm451, %v1893, 0
      %v1955 = vsel %vm451, %v1894, 0
      %v1958 = vsel %vm451, %v1895, 0
      %v1961 = vsel %vm451, %v1896, 0
      %v1964 = vsel %vm451, %v1897, 0
      %v1967 = vsel %vm451, %v1898, 0
      %v1970 = vsel %vm451, %v1899, 0
      %1972 = vmatprep.subr.mxu0 0.0
      %1973 = vmatpush1.msra.mxu0 0.0
      %1974 = vmatprep.subr.mxu0 0.0
      %1975 = vmatpush1.msra.mxu0 0.0
      %1976 = vmatprep.subr.mxu0 0.0
      %1977 = vmatpush1.msra.mxu0 0.0
      %1978 = vmatprep.subr.mxu0 0.0
      %1979 = vmatpush1.msra.mxu0 0.0
      %1980 = vmatprep.subr.mxu0 0.0
      %1981 = vmatpush1.msra.mxu0 0.0
      %1982 = vmatprep.subr.mxu0 0.0
      %1983 = vmatpush1.msra.mxu0 0.0
      %1984 = vmatprep.subr.mxu0 0.0
      %1985 = vmatpush1.msra.mxu0 0.0
      %1986 = vmatprep.subr.mxu0 0.0
      %1987 = vmatpush1.msra.mxu0 0.0
      %1988 = vmatprep.subr.mxu0 0.0
      %1989 = vmatpush1.msra.mxu0 0.0
      %1990 = vmatprep.subr.mxu0 0.0
      %1991 = vmatpush1.msra.mxu0 0.0
      %1992 = vmatprep.subr.mxu0 0.0
      %1993 = vmatpush1.msra.mxu0 0.0
      %1994 = vmatprep.subr.mxu0 0.0
      %1995 = vmatpush1.msra.mxu0 0.0
      %1996 = vmatprep.subr.mxu0 0.0
      %1997 = vmatpush1.msra.mxu0 %v921
      %1998 = vmatprep.subr.mxu0 0.0
      %1999 = vmatpush1.msra.mxu0 %v920
      %2000 = vmatprep.subr.mxu0 0.0
      %2001 = vmatpush1.msra.mxu0 %v919
      %2002 = vmatprep.subr.mxu0 0.0
      %2003 = vmatpush1.msra.mxu0 %v918
      %2004 = vmatprep.subr.mxu0 0.0
      %2005 = vmatpush2.msra.mxu0 0.0
      %2006 = vmatprep.subr.mxu0 0.0
      %2007 = vmatpush2.msra.mxu0 0.0
      %2008 = vmatprep.subr.mxu0 0.0
      %2009 = vmatpush2.msra.mxu0 0.0
      %2010 = vmatprep.subr.mxu0 0.0
      %2011 = vmatpush2.msra.mxu0 0.0
      %2012 = vmatprep.subr.mxu0 0.0
      %2013 = vmatpush2.msra.mxu0 0.0
      %2014 = vmatprep.subr.mxu0 0.0
      %2015 = vmatpush2.msra.mxu0 0.0
      %2016 = vmatprep.subr.mxu0 0.0
      %2017 = vmatpush2.msra.mxu0 0.0
      %2018 = vmatprep.subr.mxu0 0.0
      %2019 = vmatpush2.msra.mxu0 0.0
      %2020 = vmatprep.subr.mxu0 0.0
      %2021 = vmatpush2.msra.mxu0 0.0
      %2022 = vmatprep.subr.mxu0 0.0
      %2023 = vmatpush2.msra.mxu0 0.0
      %2024 = vmatprep.subr.mxu0 0.0
      %2025 = vmatpush2.msra.mxu0 0.0
      %2026 = vmatprep.subr.mxu0 0.0
      %2027 = vmatpush2.msra.mxu0 0.0
      %2028 = vmatprep.subr.mxu0 0.0
      %2029 = vmatpush2.msra.mxu0 0.0
      %2030 = vmatprep.subr.mxu0 0.0
      %2031 = vmatpush2.msra.mxu0 0.0
      %2032 = vmatprep.subr.mxu0 0.0
      %2033 = vmatpush2.msra.mxu0 0.0
      %2034 = vmatprep.subr.mxu0 0.0
      %2035 = vmatpush2.msra.mxu0 0.0
      %2036 = vmatprep.mubr.f32.mxu0 0.0
      %2037 = vmatmul.mubr.f32.gmra.mxu0 %v1949
      %v2038 = vpop.f32.mrf.mxu0
      %v2039 = vadd.f32 %v1911, %v2038
      %v2040 = vpop.f32.mrf.mxu0
      %2041 = vmatprep.mubr.f32.mxu0 0.0
      %2042 = vmatmul.mubr.f32.gmra.mxu0 %v1952
      %v2043 = vpop.f32.mrf.mxu0
      %v2044 = vadd.f32 %v1916, %v2043
      %v2045 = vpop.f32.mrf.mxu0
      %2046 = vmatprep.mubr.f32.mxu0 0.0
      %2047 = vmatmul.mubr.f32.gmra.mxu0 %v1955
      %v2048 = vpop.f32.mrf.mxu0
      %v2049 = vadd.f32 %v1921, %v2048
      %v2050 = vpop.f32.mrf.mxu0
      %2051 = vmatprep.mubr.f32.mxu0 0.0
      %2052 = vmatmul.mubr.f32.gmra.mxu0 %v1958
      %v2053 = vpop.f32.mrf.mxu0
      %v2054 = vadd.f32 %v1926, %v2053
      %v2055 = vpop.f32.mrf.mxu0
      %2056 = vmatprep.mubr.f32.mxu0 0.0
      %2057 = vmatmul.mubr.f32.gmra.mxu0 %v1961
      %v2058 = vpop.f32.mrf.mxu0
      %v2059 = vadd.f32 %v1931, %v2058
      %v2060 = vpop.f32.mrf.mxu0
      %2061 = vmatprep.mubr.f32.mxu0 0.0
      %2062 = vmatmul.mubr.f32.gmra.mxu0 %v1964
      %v2063 = vpop.f32.mrf.mxu0
      %v2064 = vadd.f32 %v1936, %v2063
      %v2065 = vpop.f32.mrf.mxu0
      %2066 = vmatprep.mubr.f32.mxu0 0.0
      %2067 = vmatmul.mubr.f32.gmra.mxu0 %v1967
      %v2068 = vpop.f32.mrf.mxu0
      %v2069 = vadd.f32 %v1941, %v2068
      %v2070 = vpop.f32.mrf.mxu0
      %2071 = vmatprep.mubr.f32.mxu0 0.0
      %2072 = vmatmul.mubr.f32.gmra.mxu0 %v1970
      %v2073 = vpop.f32.mrf.mxu0
      %v2074 = vadd.f32 %v1946, %v2073
      %v2075 = vpop.f32.mrf.mxu0
      %2076 = vdwg.mxu0
      %v2077 = vmax.f32 %v2039, 0.0
      %v2078 = vmax.f32 %v2044, 0.0
      %v2079 = vmax.f32 %v2049, 0.0
      %v2080 = vmax.f32 %v2054, 0.0
      %v2081 = vmax.f32 %v2059, 0.0
      %v2082 = vmax.f32 %v2064, 0.0
      %v2083 = vmax.f32 %v2069, 0.0
      %v2084 = vmax.f32 %v2074, 0.0
      %v2085 = vadd.f32 %v1884, %v2077
      %v2086 = vadd.f32 %v1885, %v2078
      %v2087 = vadd.f32 %v1886, %v2079
      %v2088 = vadd.f32 %v1887, %v2080
      %v2089 = vadd.f32 %v1888, %v2081
      %v2090 = vadd.f32 %v1889, %v2082
      %v2091 = vadd.f32 %v1890, %v2083
      %v2092 = vadd.f32 %v1891, %v2084
      %vm2093 = vcmask 113664
      %2094 = vst.msk [vmem:[%s433] sm:$0xff] %vm2093, %v2085
      %2095 = vst.msk [vmem:[%s433 + $0x8] sm:$0xff] %vm2093, %v2086
      %2096 = vst.msk [vmem:[%s433 + $0x10] sm:$0xff] %vm2093, %v2087
      %2097 = vst.msk [vmem:[%s433 + $0x18] sm:$0xff] %vm2093, %v2088
      %2098 = vst.msk [vmem:[%s433 + $0x20] sm:$0xff] %vm2093, %v2089
      %2099 = vst.msk [vmem:[%s433 + $0x28] sm:$0xff] %vm2093, %v2090
      %2100 = vst.msk [vmem:[%s433 + $0x30] sm:$0xff] %vm2093, %v2091
      %2101 = vst.msk [vmem:[%s433 + $0x38] sm:$0xff] %vm2093, %v2092
      %p2102 = scmp.lt.s32.totalorder %s23, 1
      %s2103 = scalar_select %p2102, %s23, 1
      %s2104 = smul.addr %s2103, 8
      %s2105 = smul.addr %s2104, 8
      %s2106 = scalar_lea.vmem %s12, %s2105
      // Predicated region
      $region69: #{manner_block_forward.8} parent=67 // pred_check
        %p2107 = pneg %p303
      $region70: #{manner_block_forward.8} parent=67 // pred_check_branch
        %2109 = sbr.rel (%p2107) target = $region72
      $region71: #{manner_block_forward.8} parent=67 // pred_region
        _
      $region72: #{manner_block_forward.8} parent=67 // pred_fallthru
        _
    $region68: #{manner_block_forward.8} parent=5 // pred_fallthru
      _
    %p2110 = scmp.le.s32.totalorder 2, %s18
    // Predicated region
    $region73: #{manner_block_forward.8} parent=5 // pred_check
      %p2111 = pneg %p2110
    $region74: #{manner_block_forward.8} parent=5 // pred_check_branch
      %2113 = sbr.rel (%p2111) target = $region76
    $region75: #{manner_block_forward.8} parent=5 // pred_region
      %s2114 = ssub.s32 %s18, 2
      // Predicated region
      $region77: #{manner_block_forward.8} parent=75 // pred_check
        %p2115 = pneg %p309
      $region78: #{manner_block_forward.8} parent=75 // pred_check_branch
        %2117 = sbr.rel (%p2115) target = $region80
      $region79: #{manner_block_forward.8} parent=75 // pred_region
        %p2118 = scmp.lt.s32.totalorder %s24, 1
        %s2119 = scalar_select %p2118, %s24, 1
        %s2120 = smul.addr %s2119, 8
        %s2121 = smul.addr %s2120, 8
        %s2122 = scalar_lea.vmem %s12, %s2121
      $region80: #{manner_block_forward.8} parent=75 // pred_fallthru
        _
    $region76: #{manner_block_forward.8} parent=5 // pred_fallthru
      _
  $region6: #{manner_block_forward.8} parent=0 // loop_footer
    %s22 = sadd.s32 1, %s18
  $region7: #{manner_block_forward.8} parent=0 // loop_footer_branch
    %17 = sbr.rel target = $region3
  $region8: #{manner_block_forward.8} parent=0 // loop_exit
    _

// kernel: manner_block_forward.10
$region0: #{manner_block_forward.10}
  #allocation0 [shape = 'u32[]', space=smem, size = 0x4, offset = 0x4, fixed_abs, tag = 'smem constant byte address 0x4 - core index']
  #allocation1 [shape = 'u32[144,128]{1,0:T(1,128)}', space=vmem, size = 0x12000, scoped, tag = 'internal scratch']
  #allocation2 [shape = 'f32[64,34]{1,0:T(8,128)}', space=vmem, size = 0x8000, scoped, tag = 'scratch operand']
  #allocation3 [shape = 'f32[16,32]{1,0:T(8,128)}', space=vmem, size = 0x2000, scoped, tag = 'scratch operand']
  %s0 = inlined_call_operand.vmem [shape: f32[2,32,30], index: 0, kind: input, shape index: {}]
  %s1 = inlined_call_operand.vmem [shape: f32[2,32,30], index: 1, kind: input, shape index: {}]
  %s2 = inlined_call_operand.vmem [shape: f32[64,32], index: 2, kind: input, shape index: {}]
  %s3 = inlined_call_operand.vmem [shape: f32[64,1], index: 3, kind: input, shape index: {}]
  %s4 = inlined_call_operand.vmem [shape: f32[5,64,1], index: 4, kind: input, shape index: {}]
  %s5 = inlined_call_operand.vmem [shape: f32[64,1], index: 5, kind: input, shape index: {}]
  %s6 = inlined_call_operand.vmem [shape: f32[16,64], index: 6, kind: input, shape index: {}]
  %s7 = inlined_call_operand.vmem [shape: f32[16,1], index: 7, kind: input, shape index: {}]
  %s8 = inlined_call_operand.vmem [shape: f32[16,32], index: 8, kind: input, shape index: {}]
  %s9 = inlined_call_operand.vmem [shape: f32[16,1], index: 9, kind: input, shape index: {}]
  %s10 = inlined_call_operand.vmem [shape: f32[4,16,16], index: 10, kind: input, shape index: {}]
  %s11 = inlined_call_operand.vmem [shape: f32[16,1], index: 11, kind: input, shape index: {}]
  %s12 = inlined_call_operand.vmem [shape: f32[2,2,16,31], index: 12, kind: output, shape index: {}]
  %s13 = sld [smem:[#allocation0]]
  $region81: #{manner_block_forward.10} parent=0
    _
  %s15 = ssub.s32 1, %s13
  %s16 = scalar_select 0, %s15, %s13
  loop: start=0, step=1, limit=4
  $region2: #{manner_block_forward.10} parent=0 // loop_pre_header
    _
  $region3: #{manner_block_forward.10} parent=0 // loop_header
    %s18 = sphi 0, %s22
    %p19 = scmp.ge.s32.totalorder %s18, 4
    %s28 = sphi 0, %s30
    %s31 = sphi 0, %s28
    %s32 = sphi 0, %s31
    %s48 = sphi 0, %s32
    %s54 = sphi 0, %s56
    %s57 = sphi 0, %s54
    %s58 = sphi 0, %s57
    %s74 = sphi 0, %s58
    %s78 = sphi 0, %s78
    %s80 = sphi 0, %s78
    %s81 = sphi 0, %s80
    %s95 = sphi 0, %s81
    %s99 = sphi 0, %s99
    %s101 = sphi 0, %s99
    %s102 = sphi 0, %s101
    %s116 = sphi 0, %s102
    %s120 = sphi 0, %s120
    %s122 = sphi 0, %s120
    %s123 = sphi 0, %s122
    %s137 = sphi 0, %s123
    %s141 = sphi 0, %s141
    %s143 = sphi 0, %s141
    %s144 = sphi 0, %s143
    %s158 = sphi 0, %s144
    %s162 = sphi 0, %s162
    %s164 = sphi 0, %s162
    %s165 = sphi 0, %s164
    %s179 = sphi 0, %s165
    %s183 = sphi 0, %s183
    %s185 = sphi 0, %s183
    %s186 = sphi 0, %s185
    %s200 = sphi 0, %s186
    %s204 = sphi 0, %s204
    %s206 = sphi 0, %s204
    %s207 = sphi 0, %s206
    %s221 = sphi 0, %s207
    %s225 = sphi 0, %s225
    %s227 = sphi 0, %s225
    %s228 = sphi 0, %s227
    %s242 = sphi 0, %s228
    %s246 = sphi 0, %s246
    %s248 = sphi 0, %s246
    %s249 = sphi 0, %s248
    %s263 = sphi 0, %s249
    %s267 = sphi 0, %s267
    %s269 = sphi 0, %s267
    %s270 = sphi 0, %s269
    %s284 = sphi 0, %s270
    %s290 = sphi 0, %s292
    %s293 = sphi 0, %s290
    %s294 = sphi 0, %s293
    %s310 = sphi 0, %s294
  $region4: #{manner_block_forward.10} parent=0 // loop_header_branch
    %21 = sbr.rel (%p19) target = $region8
  $region5: #{manner_block_forward.10} parent=0 // loop_body
    %s23 = ssub.s32 %s18, 1
    %s24 = ssub.s32 %s18, 2
    %s25 = sadd.s32 %s18, 1
    %s26 = ssub.s32 %s18, %s25
    %p27 = scmp.eq.s32.totalorder %s26, 0
    %s29 = sadd.s32 %s28, 1
    %s30 = scalar_select %p27, %s28, %s29
    %p33 = pneg %p27
    %p34 = scmp.eq.s32.totalorder %s18, 1
    %p35 = por %p33, %p34
    %p36 = scmp.ne.s32.totalorder %s28, %s31
    %p37 = scmp.eq.s32.totalorder %s18, 0
    %p38 = por %p36, %p37
    %p39 = scmp.ne.s32.totalorder %s28, %s31
    %p40 = scmp.eq.s32.totalorder %s23, 1
    %p41 = por %p39, %p40
    %p42 = scmp.ne.s32.totalorder %s31, %s32
    %p43 = scmp.eq.s32.totalorder %s23, 0
    %p44 = por %p42, %p43
    %p45 = scmp.ne.s32.totalorder %s31, %s32
    %p46 = scmp.eq.s32.totalorder %s24, 1
    %p47 = por %p45, %p46
    %p49 = scmp.ne.s32.totalorder %s32, %s48
    %p50 = scmp.eq.s32.totalorder %s24, 0
    %p51 = por %p49, %p50
    %s52 = ssub.s32 %s18, %s25
    %p53 = scmp.eq.s32.totalorder %s52, 0
    %s55 = sadd.s32 %s54, 1
    %s56 = scalar_select %p53, %s54, %s55
    %p59 = pneg %p53
    %p60 = scmp.eq.s32.totalorder %s18, 1
    %p61 = por %p59, %p60
    %p62 = scmp.ne.s32.totalorder %s54, %s57
    %p63 = scmp.eq.s32.totalorder %s18, 0
    %p64 = por %p62, %p63
    %p65 = scmp.ne.s32.totalorder %s54, %s57
    %p66 = scmp.eq.s32.totalorder %s23, 1
    %p67 = por %p65, %p66
    %p68 = scmp.ne.s32.totalorder %s57, %s58
    %p69 = scmp.eq.s32.totalorder %s23, 0
    %p70 = por %p68, %p69
    %p71 = scmp.ne.s32.totalorder %s57, %s58
    %p72 = scmp.eq.s32.totalorder %s24, 1
    %p73 = por %p71, %p72
    %p75 = scmp.ne.s32.totalorder %s58, %s74
    %p76 = scmp.eq.s32.totalorder %s24, 0
    %p77 = por %p75, %p76
    %s79 = sadd.s32 %s78, 1
    %p82 = scmp.eq.s32.totalorder %s18, 1
    %p83 = scmp.ne.s32.totalorder %s78, %s80
    %p84 = scmp.eq.s32.totalorder %s18, 0
    %p85 = por %p83, %p84
    %p86 = scmp.ne.s32.totalorder %s78, %s80
    %p87 = scmp.eq.s32.totalorder %s23, 1
    %p88 = por %p86, %p87
    %p89 = scmp.ne.s32.totalorder %s80, %s81
    %p90 = scmp.eq.s32.totalorder %s23, 0
    %p91 = por %p89, %p90
    %p92 = scmp.ne.s32.totalorder %s80, %s81
    %p93 = scmp.eq.s32.totalorder %s24, 1
    %p94 = por %p92, %p93
    %p96 = scmp.ne.s32.totalorder %s81, %s95
    %p97 = scmp.eq.s32.totalorder %s24, 0
    %p98 = por %p96, %p97
    %s100 = sadd.s32 %s99, 1
    %p103 = scmp.eq.s32.totalorder %s18, 1
    %p104 = scmp.ne.s32.totalorder %s99, %s101
    %p105 = scmp.eq.s32.totalorder %s18, 0
    %p106 = por %p104, %p105
    %p107 = scmp.ne.s32.totalorder %s99, %s101
    %p108 = scmp.eq.s32.totalorder %s23, 1
    %p109 = por %p107, %p108
    %p110 = scmp.ne.s32.totalorder %s101, %s102
    %p111 = scmp.eq.s32.totalorder %s23, 0
    %p112 = por %p110, %p111
    %p113 = scmp.ne.s32.totalorder %s101, %s102
    %p114 = scmp.eq.s32.totalorder %s24, 1
    %p115 = por %p113, %p114
    %p117 = scmp.ne.s32.totalorder %s102, %s116
    %p118 = scmp.eq.s32.totalorder %s24, 0
    %p119 = por %p117, %p118
    %s121 = sadd.s32 %s120, 1
    %p124 = scmp.eq.s32.totalorder %s18, 1
    %p125 = scmp.ne.s32.totalorder %s120, %s122
    %p126 = scmp.eq.s32.totalorder %s18, 0
    %p127 = por %p125, %p126
    %p128 = scmp.ne.s32.totalorder %s120, %s122
    %p129 = scmp.eq.s32.totalorder %s23, 1
    %p130 = por %p128, %p129
    %p131 = scmp.ne.s32.totalorder %s122, %s123
    %p132 = scmp.eq.s32.totalorder %s23, 0
    %p133 = por %p131, %p132
    %p134 = scmp.ne.s32.totalorder %s122, %s123
    %p135 = scmp.eq.s32.totalorder %s24, 1
    %p136 = por %p134, %p135
    %p138 = scmp.ne.s32.totalorder %s123, %s137
    %p139 = scmp.eq.s32.totalorder %s24, 0
    %p140 = por %p138, %p139
    %s142 = sadd.s32 %s141, 1
    %p145 = scmp.eq.s32.totalorder %s18, 1
    %p146 = scmp.ne.s32.totalorder %s141, %s143
    %p147 = scmp.eq.s32.totalorder %s18, 0
    %p148 = por %p146, %p147
    %p149 = scmp.ne.s32.totalorder %s141, %s143
    %p150 = scmp.eq.s32.totalorder %s23, 1
    %p151 = por %p149, %p150
    %p152 = scmp.ne.s32.totalorder %s143, %s144
    %p153 = scmp.eq.s32.totalorder %s23, 0
    %p154 = por %p152, %p153
    %p155 = scmp.ne.s32.totalorder %s143, %s144
    %p156 = scmp.eq.s32.totalorder %s24, 1
    %p157 = por %p155, %p156
    %p159 = scmp.ne.s32.totalorder %s144, %s158
    %p160 = scmp.eq.s32.totalorder %s24, 0
    %p161 = por %p159, %p160
    %s163 = sadd.s32 %s162, 1
    %p166 = scmp.eq.s32.totalorder %s18, 1
    %p167 = scmp.ne.s32.totalorder %s162, %s164
    %p168 = scmp.eq.s32.totalorder %s18, 0
    %p169 = por %p167, %p168
    %p170 = scmp.ne.s32.totalorder %s162, %s164
    %p171 = scmp.eq.s32.totalorder %s23, 1
    %p172 = por %p170, %p171
    %p173 = scmp.ne.s32.totalorder %s164, %s165
    %p174 = scmp.eq.s32.totalorder %s23, 0
    %p175 = por %p173, %p174
    %p176 = scmp.ne.s32.totalorder %s164, %s165
    %p177 = scmp.eq.s32.totalorder %s24, 1
    %p178 = por %p176, %p177
    %p180 = scmp.ne.s32.totalorder %s165, %s179
    %p181 = scmp.eq.s32.totalorder %s24, 0
    %p182 = por %p180, %p181
    %s184 = sadd.s32 %s183, 1
    %p187 = scmp.eq.s32.totalorder %s18, 1
    %p188 = scmp.ne.s32.totalorder %s183, %s185
    %p189 = scmp.eq.s32.totalorder %s18, 0
    %p190 = por %p188, %p189
    %p191 = scmp.ne.s32.totalorder %s183, %s185
    %p192 = scmp.eq.s32.totalorder %s23, 1
    %p193 = por %p191, %p192
    %p194 = scmp.ne.s32.totalorder %s185, %s186
    %p195 = scmp.eq.s32.totalorder %s23, 0
    %p196 = por %p194, %p195
    %p197 = scmp.ne.s32.totalorder %s185, %s186
    %p198 = scmp.eq.s32.totalorder %s24, 1
    %p199 = por %p197, %p198
    %p201 = scmp.ne.s32.totalorder %s186, %s200
    %p202 = scmp.eq.s32.totalorder %s24, 0
    %p203 = por %p201, %p202
    %s205 = sadd.s32 %s204, 1
    %p208 = scmp.eq.s32.totalorder %s18, 1
    %p209 = scmp.ne.s32.totalorder %s204, %s206
    %p210 = scmp.eq.s32.totalorder %s18, 0
    %p211 = por %p209, %p210
    %p212 = scmp.ne.s32.totalorder %s204, %s206
    %p213 = scmp.eq.s32.totalorder %s23, 1
    %p214 = por %p212, %p213
    %p215 = scmp.ne.s32.totalorder %s206, %s207
    %p216 = scmp.eq.s32.totalorder %s23, 0
    %p217 = por %p215, %p216
    %p218 = scmp.ne.s32.totalorder %s206, %s207
    %p219 = scmp.eq.s32.totalorder %s24, 1
    %p220 = por %p218, %p219
    %p222 = scmp.ne.s32.totalorder %s207, %s221
    %p223 = scmp.eq.s32.totalorder %s24, 0
    %p224 = por %p222, %p223
    %s226 = sadd.s32 %s225, 1
    %p229 = scmp.eq.s32.totalorder %s18, 1
    %p230 = scmp.ne.s32.totalorder %s225, %s227
    %p231 = scmp.eq.s32.totalorder %s18, 0
    %p232 = por %p230, %p231
    %p233 = scmp.ne.s32.totalorder %s225, %s227
    %p234 = scmp.eq.s32.totalorder %s23, 1
    %p235 = por %p233, %p234
    %p236 = scmp.ne.s32.totalorder %s227, %s228
    %p237 = scmp.eq.s32.totalorder %s23, 0
    %p238 = por %p236, %p237
    %p239 = scmp.ne.s32.totalorder %s227, %s228
    %p240 = scmp.eq.s32.totalorder %s24, 1
    %p241 = por %p239, %p240
    %p243 = scmp.ne.s32.totalorder %s228, %s242
    %p244 = scmp.eq.s32.totalorder %s24, 0
    %p245 = por %p243, %p244
    %s247 = sadd.s32 %s246, 1
    %p250 = scmp.eq.s32.totalorder %s18, 1
    %p251 = scmp.ne.s32.totalorder %s246, %s248
    %p252 = scmp.eq.s32.totalorder %s18, 0
    %p253 = por %p251, %p252
    %p254 = scmp.ne.s32.totalorder %s246, %s248
    %p255 = scmp.eq.s32.totalorder %s23, 1
    %p256 = por %p254, %p255
    %p257 = scmp.ne.s32.totalorder %s248, %s249
    %p258 = scmp.eq.s32.totalorder %s23, 0
    %p259 = por %p257, %p258
    %p260 = scmp.ne.s32.totalorder %s248, %s249
    %p261 = scmp.eq.s32.totalorder %s24, 1
    %p262 = por %p260, %p261
    %p264 = scmp.ne.s32.totalorder %s249, %s263
    %p265 = scmp.eq.s32.totalorder %s24, 0
    %p266 = por %p264, %p265
    %s268 = sadd.s32 %s267, 1
    %p271 = scmp.eq.s32.totalorder %s18, 1
    %p272 = scmp.ne.s32.totalorder %s267, %s269
    %p273 = scmp.eq.s32.totalorder %s18, 0
    %p274 = por %p272, %p273
    %p275 = scmp.ne.s32.totalorder %s267, %s269
    %p276 = scmp.eq.s32.totalorder %s23, 1
    %p277 = por %p275, %p276
    %p278 = scmp.ne.s32.totalorder %s269, %s270
    %p279 = scmp.eq.s32.totalorder %s23, 0
    %p280 = por %p278, %p279
    %p281 = scmp.ne.s32.totalorder %s269, %s270
    %p282 = scmp.eq.s32.totalorder %s24, 1
    %p283 = por %p281, %p282
    %p285 = scmp.ne.s32.totalorder %s270, %s284
    %p286 = scmp.eq.s32.totalorder %s24, 0
    %p287 = por %p285, %p286
    %s288 = ssub.s32 %s18, %s25
    %p289 = scmp.eq.s32.totalorder %s288, 0
    %s291 = sadd.s32 %s290, 1
    %s292 = scalar_select %p289, %s290, %s291
    %p295 = pneg %p289
    %p296 = scmp.eq.s32.totalorder %s18, 1
    %p297 = por %p295, %p296
    %p298 = scmp.ne.s32.totalorder %s290, %s293
    %p299 = scmp.eq.s32.totalorder %s18, 0
    %p300 = por %p298, %p299
    %p301 = scmp.ne.s32.totalorder %s290, %s293
    %p302 = scmp.eq.s32.totalorder %s23, 1
    %p303 = por %p301, %p302
    %p304 = scmp.ne.s32.totalorder %s293, %s294
    %p305 = scmp.eq.s32.totalorder %s23, 0
    %p306 = por %p304, %p305
    %p307 = scmp.ne.s32.totalorder %s293, %s294
    %p308 = scmp.eq.s32.totalorder %s24, 1
    %p309 = por %p307, %p308
    %p311 = scmp.ne.s32.totalorder %s294, %s310
    %p312 = scmp.eq.s32.totalorder %s24, 0
    %p313 = por %p311, %p312
    %p314 = scmp.le.s32.totalorder 1, %s18
    %p315 = scmp.lt.s32.totalorder %s18, 3
    %p316 = pnand %p314, %p315
    %p317 = pneg %p316
    // Predicated region
    $region9: #{manner_block_forward.10} parent=5 // pred_check
      _
    $region10: #{manner_block_forward.10} parent=5 // pred_check_branch
      %319 = sbr.rel (%p316) target = $region12
    $region11: #{manner_block_forward.10} parent=5 // pred_region
      %s320 = ssub.s32 %s18, 1
      // Predicated region
      $region13: #{manner_block_forward.10} parent=11 // pred_check
        %p321 = pneg %p91
      $region14: #{manner_block_forward.10} parent=11 // pred_check_branch
        %323 = sbr.rel (%p321) target = $region16
      $region15: #{manner_block_forward.10} parent=11 // pred_region
        _
      $region16: #{manner_block_forward.10} parent=11 // pred_fallthru
        _
      // Predicated region
      $region17: #{manner_block_forward.10} parent=11 // pred_check
        %p324 = pneg %p112
      $region18: #{manner_block_forward.10} parent=11 // pred_check_branch
        %326 = sbr.rel (%p324) target = $region20
      $region19: #{manner_block_forward.10} parent=11 // pred_region
        _
      $region20: #{manner_block_forward.10} parent=11 // pred_fallthru
        _
      // Predicated region
      $region21: #{manner_block_forward.10} parent=11 // pred_check
        %p327 = pneg %p133
      $region22: #{manner_block_forward.10} parent=11 // pred_check_branch
        %329 = sbr.rel (%p327) target = $region24
      $region23: #{manner_block_forward.10} parent=11 // pred_region
        _
      $region24: #{manner_block_forward.10} parent=11 // pred_fallthru
        _
      // Predicated region
      $region25: #{manner_block_forward.10} parent=11 // pred_check
        %p330 = pneg %p154
      $region26: #{manner_block_forward.10} parent=11 // pred_check_branch
        %332 = sbr.rel (%p330) target = $region28
      $region27: #{manner_block_forward.10} parent=11 // pred_region
        _
      $region28: #{manner_block_forward.10} parent=11 // pred_fallthru
        _
      // Predicated region
      $region29: #{manner_block_forward.10} parent=11 // pred_check
        %p333 = pneg %p175
      $region30: #{manner_block_forward.10} parent=11 // pred_check_branch
        %335 = sbr.rel (%p333) target = $region32
      $region31: #{manner_block_forward.10} parent=11 // pred_region
        _
      $region32: #{manner_block_forward.10} parent=11 // pred_fallthru
        _
      // Predicated region
      $region33: #{manner_block_forward.10} parent=11 // pred_check
        %p336 = pneg %p196
      $region34: #{manner_block_forward.10} parent=11 // pred_check_branch
        %338 = sbr.rel (%p336) target = $region36
      $region35: #{manner_block_forward.10} parent=11 // pred_region
        _
      $region36: #{manner_block_forward.10} parent=11 // pred_fallthru
        _
      // Predicated region
      $region37: #{manner_block_forward.10} parent=11 // pred_check
        %p339 = pneg %p217
      $region38: #{manner_block_forward.10} parent=11 // pred_check_branch
        %341 = sbr.rel (%p339) target = $region40
      $region39: #{manner_block_forward.10} parent=11 // pred_region
        _
      $region40: #{manner_block_forward.10} parent=11 // pred_fallthru
        _
      // Predicated region
      $region41: #{manner_block_forward.10} parent=11 // pred_check
        %p342 = pneg %p238
      $region42: #{manner_block_forward.10} parent=11 // pred_check_branch
        %344 = sbr.rel (%p342) target = $region44
      $region43: #{manner_block_forward.10} parent=11 // pred_region
        _
      $region44: #{manner_block_forward.10} parent=11 // pred_fallthru
        _
      // Predicated region
      $region45: #{manner_block_forward.10} parent=11 // pred_check
        %p345 = pneg %p259
      $region46: #{manner_block_forward.10} parent=11 // pred_check_branch
        %347 = sbr.rel (%p345) target = $region48
      $region47: #{manner_block_forward.10} parent=11 // pred_region
        _
      $region48: #{manner_block_forward.10} parent=11 // pred_fallthru
        _
      // Predicated region
      $region49: #{manner_block_forward.10} parent=11 // pred_check
        %p348 = pneg %p280
      $region50: #{manner_block_forward.10} parent=11 // pred_check_branch
        %350 = sbr.rel (%p348) target = $region52
      $region51: #{manner_block_forward.10} parent=11 // pred_region
        _
      $region52: #{manner_block_forward.10} parent=11 // pred_fallthru
        _
    $region12: #{manner_block_forward.10} parent=5 // pred_fallthru
      _
    %p351 = scmp.lt.s32.totalorder %s18, 2
    // Predicated region
    $region53: #{manner_block_forward.10} parent=5 // pred_check
      %p352 = pneg %p351
    $region54: #{manner_block_forward.10} parent=5 // pred_check_branch
      %354 = sbr.rel (%p352) target = $region56
    $region55: #{manner_block_forward.10} parent=5 // pred_region
      // Predicated region
      $region57: #{manner_block_forward.10} parent=55 // pred_check
        %p355 = pneg %p38
      $region58: #{manner_block_forward.10} parent=55 // pred_check_branch
        %357 = sbr.rel (%p355) target = $region60
      $region59: #{manner_block_forward.10} parent=55 // pred_region
        %p358 = scmp.lt.s32.totalorder %s18, 1
        %s359 = scalar_select %p358, %s18, 1
        %s360 = smul.addr %s359, 4
        %s361 = smul.addr %s360, 8
        %s362 = scalar_lea.vmem %s0, %s361
      $region60: #{manner_block_forward.10} parent=55 // pred_fallthru
        _
      // Predicated region
      $region61: #{manner_block_forward.10} parent=55 // pred_check
        %p363 = pneg %p64
      $region62: #{manner_block_forward.10} parent=55 // pred_check_branch
        %365 = sbr.rel (%p363) target = $region64
      $region63: #{manner_block_forward.10} parent=55 // pred_region
        %p366 = scmp.lt.s32.totalorder %s18, 1
        %s367 = scalar_select %p366, %s18, 1
        %s368 = smul.addr %s367, 4
        %s369 = smul.addr %s368, 8
        %s370 = scalar_lea.vmem %s1, %s369
      $region64: #{manner_block_forward.10} parent=55 // pred_fallthru
        _
    $region56: #{manner_block_forward.10} parent=5 // pred_fallthru
      _
    %p371 = scmp.le.s32.totalorder 1, %s18
    %p372 = scmp.lt.s32.totalorder %s18, 3
    %p373 = pnand %p371, %p372
    %p374 = pneg %p373
    // Predicated region
    $region65: #{manner_block_forward.10} parent=5 // pred_check
      _
    $region66: #{manner_block_forward.10} parent=5 // pred_check_branch
      %376 = sbr.rel (%p373) target = $region68
    $region67: #{manner_block_forward.10} parent=5 // pred_region
      %s377 = ssub.s32 %s18, 1
      %p378 = scmp.lt.s32.totalorder %s23, 1
      %s379 = scalar_select %p378, %s23, 1
      %s380 = smul.addr %s379, 4
      %s381 = smul.addr %s380, 8
      %s382 = scalar_lea.vmem %s0, %s381
      %p383 = pneg %p44
      %p384 = pneg %p41
      %p385 = scmp.lt.s32.totalorder %s23, 1
      %s386 = scalar_select %p385, %s23, 1
      %s387 = smul.addr %s386, 4
      %s388 = smul.addr %s387, 8
      %s389 = scalar_lea.vmem %s1, %s388
      %p390 = pneg %p70
      %p391 = pneg %p67
      %p392 = pneg %p91
      %p393 = pneg %p88
      %p394 = pneg %p112
      %p395 = pneg %p109
      %p396 = pneg %p133
      %p397 = pneg %p130
      %p398 = pneg %p154
      %p399 = pneg %p151
      %p400 = pneg %p175
      %p401 = pneg %p172
      %p402 = pneg %p196
      %p403 = pneg %p193
      %p404 = pneg %p217
      %p405 = pneg %p214
      %p406 = pneg %p238
      %p407 = pneg %p235
      %p408 = pneg %p259
      %p409 = pneg %p256
      %p410 = pneg %p280
      %p411 = pneg %p277
      %p412 = pneg %p306
      %p413 = pneg %p303
      %p414 = scmp.lt.s32.totalorder %s23, 1
      %s415 = scalar_select %p414, %s23, 1
      %s416 = smul.addr %s415, 4
      %s417 = smul.addr %s416, 8
      %s418 = scalar_lea.vmem %s12, %s417
      %p419 = scmp.lt.s32.totalorder %s23, 1
      %s420 = scalar_select %p419, %s23, 1
      %s421 = smul.addr %s420, 4
      %s422 = smul.addr %s421, 8
      %s423 = scalar_lea.vmem %s0, %s422
      %p424 = scmp.lt.s32.totalorder %s23, 1
      %s425 = scalar_select %p424, %s23, 1
      %s426 = smul.addr %s425, 4
      %s427 = smul.addr %s426, 8
      %s428 = scalar_lea.vmem %s1, %s427
      %p429 = scmp.lt.s32.totalorder %s23, 1
      %s430 = scalar_select %p429, %s23, 1
      %s431 = smul.addr %s430, 4
      %s432 = smul.addr %s431, 8
      %s433 = scalar_lea.vmem %s12, %s432
      %v434 = vld [vmem:[%s423] sm:$0xff]
      %v435 = vld [vmem:[%s423 + $0x8] sm:$0xff]
      %v436 = vld [vmem:[%s423 + $0x10] sm:$0xff]
      %v437 = vld [vmem:[%s423 + $0x18] sm:$0xff]
      %v438 = vld [vmem:[%s428] sm:$0xff]
      %v439 = vld [vmem:[%s428 + $0x8] sm:$0xff]
      %v440 = vld [vmem:[%s428 + $0x10] sm:$0xff]
      %v441 = vld [vmem:[%s428 + $0x18] sm:$0xff]
      %v442 = vadd.f32 %v434, %v438
      %v443 = vadd.f32 %v435, %v439
      %v444 = vadd.f32 %v436, %v440
      %v445 = vadd.f32 %v437, %v441
      %v446 = vld [vmem:[%s2] sm:$0xff]
      %v447 = vld [vmem:[%s2 + $0x8] sm:$0xff]
      %v448 = vld [vmem:[%s2 + $0x10] sm:$0xff]
      %v449 = vld [vmem:[%s2 + $0x18] sm:$0xff]
      %v450 = vld [vmem:[%s2 + $0x20] sm:$0xff]
      %v451 = vld [vmem:[%s2 + $0x28] sm:$0xff]
      %v452 = vld [vmem:[%s2 + $0x30] sm:$0xff]
      %v453 = vld [vmem:[%s2 + $0x38] sm:$0xff]
      %v454 = vld [vmem:[%s3] sm:$0xff]
      %v455 = vld [vmem:[%s3 + $0x8] sm:$0xff]
      %v456 = vld [vmem:[%s3 + $0x10] sm:$0xff]
      %v457 = vld [vmem:[%s3 + $0x18] sm:$0xff]
      %v458 = vld [vmem:[%s3 + $0x20] sm:$0xff]
      %v459 = vld [vmem:[%s3 + $0x28] sm:$0xff]
      %v460 = vld [vmem:[%s3 + $0x30] sm:$0xff]
      %v461 = vld [vmem:[%s3 + $0x38] sm:$0xff]
      %463 = vset.pattern.permute.xlu0 0
      %464 = vperm.xlu0 %463, %v454
      %v465 = vpop.permute.xlu0 %464
      %468 = vset.pattern.permute.xlu0 0
      %469 = vperm.xlu0 %468, %v455
      %v470 = vpop.permute.xlu0 %469
      %473 = vset.pattern.permute.xlu0 0
      %474 = vperm.xlu0 %473, %v456
      %v475 = vpop.permute.xlu0 %474
      %478 = vset.pattern.permute.xlu0 0
      %479 = vperm.xlu0 %478, %v457
      %v480 = vpop.permute.xlu0 %479
      %483 = vset.pattern.permute.xlu0 0
      %484 = vperm.xlu0 %483, %v458
      %v485 = vpop.permute.xlu0 %484
      %488 = vset.pattern.permute.xlu0 0
      %489 = vperm.xlu0 %488, %v459
      %v490 = vpop.permute.xlu0 %489
      %493 = vset.pattern.permute.xlu0 0
      %494 = vperm.xlu0 %493, %v460
      %v495 = vpop.permute.xlu0 %494
      %498 = vset.pattern.permute.xlu0 0
      %499 = vperm.xlu0 %498, %v461
      %v500 = vpop.permute.xlu0 %499
      %vm502 = vcmask 261120
      %v504 = vsel %vm502, %v446, 0
      %v507 = vsel %vm502, %v447, 0
      %v510 = vsel %vm502, %v448, 0
      %v513 = vsel %vm502, %v449, 0
      %v516 = vsel %vm502, %v450, 0
      %v519 = vsel %vm502, %v451, 0
      %v522 = vsel %vm502, %v452, 0
      %v525 = vsel %vm502, %v453, 0
      %527 = vmatprep.subr.mxu0 0.0
      %528 = vmatpush1.msra.mxu0 0.0
      %529 = vmatprep.subr.mxu0 0.0
      %530 = vmatpush1.msra.mxu0 0.0
      %531 = vmatprep.subr.mxu0 0.0
      %532 = vmatpush1.msra.mxu0 0.0
      %533 = vmatprep.subr.mxu0 0.0
      %534 = vmatpush1.msra.mxu0 0.0
      %535 = vmatprep.subr.mxu0 0.0
      %536 = vmatpush1.msra.mxu0 0.0
      %537 = vmatprep.subr.mxu0 0.0
      %538 = vmatpush1.msra.mxu0 0.0
      %539 = vmatprep.subr.mxu0 0.0
      %540 = vmatpush1.msra.mxu0 0.0
      %541 = vmatprep.subr.mxu0 0.0
      %542 = vmatpush1.msra.mxu0 0.0
      %543 = vmatprep.subr.mxu0 0.0
      %544 = vmatpush1.msra.mxu0 0.0
      %545 = vmatprep.subr.mxu0 0.0
      %546 = vmatpush1.msra.mxu0 0.0
      %547 = vmatprep.subr.mxu0 0.0
      %548 = vmatpush1.msra.mxu0 0.0
      %549 = vmatprep.subr.mxu0 0.0
      %550 = vmatpush1.msra.mxu0 0.0
      %551 = vmatprep.subr.mxu0 0.0
      %552 = vmatpush1.msra.mxu0 %v445
      %553 = vmatprep.subr.mxu0 0.0
      %554 = vmatpush1.msra.mxu0 %v444
      %555 = vmatprep.subr.mxu0 0.0
      %556 = vmatpush1.msra.mxu0 %v443
      %557 = vmatprep.subr.mxu0 0.0
      %558 = vmatpush1.msra.mxu0 %v442
      %559 = vmatprep.subr.mxu0 0.0
      %560 = vmatpush2.msra.mxu0 0.0
      %561 = vmatprep.subr.mxu0 0.0
      %562 = vmatpush2.msra.mxu0 0.0
      %563 = vmatprep.subr.mxu0 0.0
      %564 = vmatpush2.msra.mxu0 0.0
      %565 = vmatprep.subr.mxu0 0.0
      %566 = vmatpush2.msra.mxu0 0.0
      %567 = vmatprep.subr.mxu0 0.0
      %568 = vmatpush2.msra.mxu0 0.0
      %569 = vmatprep.subr.mxu0 0.0
      %570 = vmatpush2.msra.mxu0 0.0
      %571 = vmatprep.subr.mxu0 0.0
      %572 = vmatpush2.msra.mxu0 0.0
      %573 = vmatprep.subr.mxu0 0.0
      %574 = vmatpush2.msra.mxu0 0.0
      %575 = vmatprep.subr.mxu0 0.0
      %576 = vmatpush2.msra.mxu0 0.0
      %577 = vmatprep.subr.mxu0 0.0
      %578 = vmatpush2.msra.mxu0 0.0
      %579 = vmatprep.subr.mxu0 0.0
      %580 = vmatpush2.msra.mxu0 0.0
      %581 = vmatprep.subr.mxu0 0.0
      %582 = vmatpush2.msra.mxu0 0.0
      %583 = vmatprep.subr.mxu0 0.0
      %584 = vmatpush2.msra.mxu0 0.0
      %585 = vmatprep.subr.mxu0 0.0
      %586 = vmatpush2.msra.mxu0 0.0
      %587 = vmatprep.subr.mxu0 0.0
      %588 = vmatpush2.msra.mxu0 0.0
      %589 = vmatprep.subr.mxu0 0.0
      %590 = vmatpush2.msra.mxu0 0.0
      %591 = vmatprep.mubr.f32.mxu0 0.0
      %592 = vmatmul.mubr.f32.gmra.mxu0 %v504
      %v593 = vpop.f32.mrf.mxu0
      %v594 = vadd.f32 %v465, %v593
      %v595 = vpop.f32.mrf.mxu0
      %596 = vmatprep.mubr.f32.mxu0 0.0
      %597 = vmatmul.mubr.f32.gmra.mxu0 %v507
      %v598 = vpop.f32.mrf.mxu0
      %v599 = vadd.f32 %v470, %v598
      %v600 = vpop.f32.mrf.mxu0
      %601 = vmatprep.mubr.f32.mxu0 0.0
      %602 = vmatmul.mubr.f32.gmra.mxu0 %v510
      %v603 = vpop.f32.mrf.mxu0
      %v604 = vadd.f32 %v475, %v603
      %v605 = vpop.f32.mrf.mxu0
      %606 = vmatprep.mubr.f32.mxu0 0.0
      %607 = vmatmul.mubr.f32.gmra.mxu0 %v513
      %v608 = vpop.f32.mrf.mxu0
      %v609 = vadd.f32 %v480, %v608
      %v610 = vpop.f32.mrf.mxu0
      %611 = vmatprep.mubr.f32.mxu0 0.0
      %612 = vmatmul.mubr.f32.gmra.mxu0 %v516
      %v613 = vpop.f32.mrf.mxu0
      %v614 = vadd.f32 %v485, %v613
      %v615 = vpop.f32.mrf.mxu0
      %616 = vmatprep.mubr.f32.mxu0 0.0
      %617 = vmatmul.mubr.f32.gmra.mxu0 %v519
      %v618 = vpop.f32.mrf.mxu0
      %v619 = vadd.f32 %v490, %v618
      %v620 = vpop.f32.mrf.mxu0
      %621 = vmatprep.mubr.f32.mxu0 0.0
      %622 = vmatmul.mubr.f32.gmra.mxu0 %v522
      %v623 = vpop.f32.mrf.mxu0
      %v624 = vadd.f32 %v495, %v623
      %v625 = vpop.f32.mrf.mxu0
      %626 = vmatprep.mubr.f32.mxu0 0.0
      %627 = vmatmul.mubr.f32.gmra.mxu0 %v525
      %v628 = vpop.f32.mrf.mxu0
      %v629 = vadd.f32 %v500, %v628
      %v630 = vpop.f32.mrf.mxu0
      %631 = vdwg.mxu0
      %v632 = vmax.f32 %v594, 0.0
      %v633 = vmax.f32 %v599, 0.0
      %v634 = vmax.f32 %v604, 0.0
      %v635 = vmax.f32 %v609, 0.0
      %v636 = vmax.f32 %v614, 0.0
      %v637 = vmax.f32 %v619, 0.0
      %v638 = vmax.f32 %v624, 0.0
      %v639 = vmax.f32 %v629, 0.0
      %vm640 = vcmask 15360
      %641 = vst.msk [vmem:[#allocation2] sm:$0xff] %vm640, 0.0
      %642 = vst.msk [vmem:[#allocation2 + $0x8] sm:$0xff] %vm640, 0.0
      %643 = vst.msk [vmem:[#allocation2 + $0x10] sm:$0xff] %vm640, 0.0
      %644 = vst.msk [vmem:[#allocation2 + $0x18] sm:$0xff] %vm640, 0.0
      %645 = vst.msk [vmem:[#allocation2 + $0x20] sm:$0xff] %vm640, 0.0
      %646 = vst.msk [vmem:[#allocation2 + $0x28] sm:$0xff] %vm640, 0.0
      %647 = vst.msk [vmem:[#allocation2 + $0x30] sm:$0xff] %vm640, 0.0
      %648 = vst.msk [vmem:[#allocation2 + $0x38] sm:$0xff] %vm640, 0.0
      %vm649 = vcmask 277760
      %650 = vst.msk [vmem:[#allocation2] sm:$0xff] %vm649, 0.0
      %651 = vst.msk [vmem:[#allocation2 + $0x8] sm:$0xff] %vm649, 0.0
      %652 = vst.msk [vmem:[#allocation2 + $0x10] sm:$0xff] %vm649, 0.0
      %653 = vst.msk [vmem:[#allocation2 + $0x18] sm:$0xff] %vm649, 0.0
      %654 = vst.msk [vmem:[#allocation2 + $0x20] sm:$0xff] %vm649, 0.0
      %655 = vst.msk [vmem:[#allocation2 + $0x28] sm:$0xff] %vm649, 0.0
      %656 = vst.msk [vmem:[#allocation2 + $0x30] sm:$0xff] %vm649, 0.0
      %657 = vst.msk [vmem:[#allocation2 + $0x38] sm:$0xff] %vm649, 0.0
      %666 = vrot.lane.b32.xlu0 %v632, 2
      %v667 = vpop.permute.xlu0 %666
      %668 = vrot.lane.b32.xlu0 %v633, 2
      %v669 = vpop.permute.xlu0 %668
      %670 = vrot.lane.b32.xlu0 %v634, 2
      %v671 = vpop.permute.xlu0 %670
      %672 = vrot.lane.b32.xlu0 %v635, 2
      %v673 = vpop.permute.xlu0 %672
      %674 = vrot.lane.b32.xlu0 %v636, 2
      %v675 = vpop.permute.xlu0 %674
      %676 = vrot.lane.b32.xlu0 %v637, 2
      %v677 = vpop.permute.xlu0 %676
      %678 = vrot.lane.b32.xlu0 %v638, 2
      %v679 = vpop.permute.xlu0 %678
      %680 = vrot.lane.b32.xlu0 %v639, 2
      %v681 = vpop.permute.xlu0 %680
      %vm690 = vcmask 261136
      %691 = vst.msk [vmem:[#allocation2] sm:$0xff] %vm690, %v667
      %692 = vst.msk [vmem:[#allocation2 + $0x8] sm:$0xff] %vm690, %v669
      %693 = vst.msk [vmem:[#allocation2 + $0x10] sm:$0xff] %vm690, %v671
      %694 = vst.msk [vmem:[#allocation2 + $0x18] sm:$0xff] %vm690, %v673
      %695 = vst.msk [vmem:[#allocation2 + $0x20] sm:$0xff] %vm690, %v675
      %696 = vst.msk [vmem:[#allocation2 + $0x28] sm:$0xff] %vm690, %v677
      %697 = vst.msk [vmem:[#allocation2 + $0x30] sm:$0xff] %vm690, %v679
      %698 = vst.msk [vmem:[#allocation2 + $0x38] sm:$0xff] %vm690, %v681
      %v699 = vld [vmem:[%s4] sm:$0xff]
      %v700 = vld [vmem:[%s4 + $0x8] sm:$0xff]
      %v701 = vld [vmem:[%s4 + $0x10] sm:$0xff]
      %v702 = vld [vmem:[%s4 + $0x18] sm:$0xff]
      %v703 = vld [vmem:[%s4 + $0x20] sm:$0xff]
      %v704 = vld [vmem:[%s4 + $0x28] sm:$0xff]
      %v705 = vld [vmem:[%s4 + $0x30] sm:$0xff]
      %v706 = vld [vmem:[%s4 + $0x38] sm:$0xff]
      %v707 = vld [vmem:[#allocation2] sm:$0xff]
      %v708 = vld [vmem:[#allocation2 + $0x8] sm:$0xff]
      %v709 = vld [vmem:[#allocation2 + $0x10] sm:$0xff]
      %v710 = vld [vmem:[#allocation2 + $0x18] sm:$0xff]
      %v711 = vld [vmem:[#allocation2 + $0x20] sm:$0xff]
      %v712 = vld [vmem:[#allocation2 + $0x28] sm:$0xff]
      %v713 = vld [vmem:[#allocation2 + $0x30] sm:$0xff]
      %v714 = vld [vmem:[#allocation2 + $0x38] sm:$0xff]
      %716 = vset.pattern.permute.xlu0 0
      %717 = vperm.xlu0 %716, %v699
      %v718 = vpop.permute.xlu0 %717
      %721 = vset.pattern.permute.xlu0 0
      %722 = vperm.xlu0 %721, %v700
      %v723 = vpop.permute.xlu0 %722
      %726 = vset.pattern.permute.xlu0 0
      %727 = vperm.xlu0 %726, %v701
      %v728 = vpop.permute.xlu0 %727
      %731 = vset.pattern.permute.xlu0 0
      %732 = vperm.xlu0 %731, %v702
      %v733 = vpop.permute.xlu0 %732
      %736 = vset.pattern.permute.xlu0 0
      %737 = vperm.xlu0 %736, %v703
      %v738 = vpop.permute.xlu0 %737
      %741 = vset.pattern.permute.xlu0 0
      %742 = vperm.xlu0 %741, %v704
      %v743 = vpop.permute.xlu0 %742
      %746 = vset.pattern.permute.xlu0 0
      %747 = vperm.xlu0 %746, %v705
      %v748 = vpop.permute.xlu0 %747
      %751 = vset.pattern.permute.xlu0 0
      %752 = vperm.xlu0 %751, %v706
      %v753 = vpop.permute.xlu0 %752
      %v755 = vmul.f32 %v718, %v707
      %v756 = vmul.f32 %v723, %v708
      %v757 = vmul.f32 %v728, %v709
      %v758 = vmul.f32 %v733, %v710
      %v759 = vmul.f32 %v738, %v711
      %v760 = vmul.f32 %v743, %v712
      %v761 = vmul.f32 %v748, %v713
      %v762 = vmul.f32 %v753, %v714
      %v763 = vadd.f32 %v755, 0.0
      %v764 = vadd.f32 %v756, 0.0
      %v765 = vadd.f32 %v757, 0.0
      %v766 = vadd.f32 %v758, 0.0
      %v767 = vadd.f32 %v759, 0.0
      %v768 = vadd.f32 %v760, 0.0
      %v769 = vadd.f32 %v761, 0.0
      %v770 = vadd.f32 %v762, 0.0
      %s771 = scalar_lea.vmem %s4, 64
      %v772 = vld [vmem:[%s771] sm:$0xff]
      %v773 = vld [vmem:[%s771 + $0x8] sm:$0xff]
      %v774 = vld [vmem:[%s771 + $0x10] sm:$0xff]
      %v775 = vld [vmem:[%s771 + $0x18] sm:$0xff]
      %v776 = vld [vmem:[%s771 + $0x20] sm:$0xff]
      %v777 = vld [vmem:[%s771 + $0x28] sm:$0xff]
      %v778 = vld [vmem:[%s771 + $0x30] sm:$0xff]
      %v779 = vld [vmem:[%s771 + $0x38] sm:$0xff]
      %781 = vset.pattern.permute.xlu0 0
      %782 = vperm.xlu0 %781, %v772
      %v783 = vpop.permute.xlu0 %782
      %786 = vset.pattern.permute.xlu0 0
      %787 = vperm.xlu0 %786, %v773
      %v788 = vpop.permute.xlu0 %787
      %791 = vset.pattern.permute.xlu0 0
      %792 = vperm.xlu0 %791, %v774
      %v793 = vpop.permute.xlu0 %792
      %796 = vset.pattern.permute.xlu0 0
      %797 = vperm.xlu0 %796, %v775
      %v798 = vpop.permute.xlu0 %797
      %801 = vset.pattern.permute.xlu0 0
      %802 = vperm.xlu0 %801, %v776
      %v803 = vpop.permute.xlu0 %802
      %806 = vset.pattern.permute.xlu0 0
      %807 = vperm.xlu0 %806, %v777
      %v808 = vpop.permute.xlu0 %807
      %811 = vset.pattern.permute.xlu0 0
      %812 = vperm.xlu0 %811, %v778
      %v813 = vpop.permute.xlu0 %812
      %816 = vset.pattern.permute.xlu0 0
      %817 = vperm.xlu0 %816, %v779
      %v818 = vpop.permute.xlu0 %817
      %v820 = vmul.f32 %v783, %v707
      %v821 = vmul.f32 %v788, %v708
      %v822 = vmul.f32 %v793, %v709
      %v823 = vmul.f32 %v798, %v710
      %v824 = vmul.f32 %v803, %v711
      %v825 = vmul.f32 %v808, %v712
      %v826 = vmul.f32 %v813, %v713
      %v827 = vmul.f32 %v818, %v714
      %836 = vrot.lane.b32.xlu0 %v820, 127
      %v837 = vpop.permute.xlu0 %836
      %838 = vrot.lane.b32.xlu0 %v821, 127
      %v839 = vpop.permute.xlu0 %838
      %840 = vrot.lane.b32.xlu0 %v822, 127
      %v841 = vpop.permute.xlu0 %840
      %842 = vrot.lane.b32.xlu0 %v823, 127
      %v843 = vpop.permute.xlu0 %842
      %844 = vrot.lane.b32.xlu0 %v824, 127
      %v845 = vpop.permute.xlu0 %844
      %846 = vrot.lane.b32.xlu0 %v825, 127
      %v847 = vpop.permute.xlu0 %846
      %848 = vrot.lane.b32.xlu0 %v826, 127
      %v849 = vpop.permute.xlu0 %848
      %850 = vrot.lane.b32.xlu0 %v827, 127
      %v851 = vpop.permute.xlu0 %850
      %v860 = vadd.f32 %v763, %v837
      %v861 = vadd.f32 %v764, %v839
      %v862 = vadd.f32 %v765, %v841
      %v863 = vadd.f32 %v766, %v843
      %v864 = vadd.f32 %v767, %v845
      %v865 = vadd.f32 %v768, %v847
      %v866 = vadd.f32 %v769, %v849
      %v867 = vadd.f32 %v770, %v851
      %s868 = scalar_lea.vmem %s4, 128
      %v869 = vld [vmem:[%s868] sm:$0xff]
      %v870 = vld [vmem:[%s868 + $0x8] sm:$0xff]
      %v871 = vld [vmem:[%s868 + $0x10] sm:$0xff]
      %v872 = vld [vmem:[%s868 + $0x18] sm:$0xff]
      %v873 = vld [vmem:[%s868 + $0x20] sm:$0xff]
      %v874 = vld [vmem:[%s868 + $0x28] sm:$0xff]
      %v875 = vld [vmem:[%s868 + $0x30] sm:$0xff]
      %v876 = vld [vmem:[%s868 + $0x38] sm:$0xff]
      %878 = vset.pattern.permute.xlu0 0
      %879 = vperm.xlu0 %878, %v869
      %v880 = vpop.permute.xlu0 %879
      %883 = vset.pattern.permute.xlu0 0
      %884 = vperm.xlu0 %883, %v870
      %v885 = vpop.permute.xlu0 %884
      %888 = vset.pattern.permute.xlu0 0
      %889 = vperm.xlu0 %888, %v871
      %v890 = vpop.permute.xlu0 %889
      %893 = vset.pattern.permute.xlu0 0
      %894 = vperm.xlu0 %893, %v872
      %v895 = vpop.permute.xlu0 %894
      %898 = vset.pattern.permute.xlu0 0
      %899 = vperm.xlu0 %898, %v873
      %v900 = vpop.permute.xlu0 %899
      %903 = vset.pattern.permute.xlu0 0
      %904 = vperm.xlu0 %903, %v874
      %v905 = vpop.permute.xlu0 %904
      %908 = vset.pattern.permute.xlu0 0
      %909 = vperm.xlu0 %908, %v875
      %v910 = vpop.permute.xlu0 %909
      %913 = vset.pattern.permute.xlu0 0
      %914 = vperm.xlu0 %913, %v876
      %v915 = vpop.permute.xlu0 %914
      %v917 = vmul.f32 %v880, %v707
      %v918 = vmul.f32 %v885, %v708
      %v919 = vmul.f32 %v890, %v709
      %v920 = vmul.f32 %v895, %v710
      %v921 = vmul.f32 %v900, %v711
      %v922 = vmul.f32 %v905, %v712
      %v923 = vmul.f32 %v910, %v713
      %v924 = vmul.f32 %v915, %v714
      %933 = vrot.lane.b32.xlu0 %v917, 126
      %v934 = vpop.permute.xlu0 %933
      %935 = vrot.lane.b32.xlu0 %v918, 126
      %v936 = vpop.permute.xlu0 %935
      %937 = vrot.lane.b32.xlu0 %v919, 126
      %v938 = vpop.permute.xlu0 %937
      %939 = vrot.lane.b32.xlu0 %v920, 126
      %v940 = vpop.permute.xlu0 %939
      %941 = vrot.lane.b32.xlu0 %v921, 126
      %v942 = vpop.permute.xlu0 %941
      %943 = vrot.lane.b32.xlu0 %v922, 126
      %v944 = vpop.permute.xlu0 %943
      %945 = vrot.lane.b32.xlu0 %v923, 126
      %v946 = vpop.permute.xlu0 %945
      %947 = vrot.lane.b32.xlu0 %v924, 126
      %v948 = vpop.permute.xlu0 %947
      %v957 = vadd.f32 %v860, %v934
      %v958 = vadd.f32 %v861, %v936
      %v959 = vadd.f32 %v862, %v938
      %v960 = vadd.f32 %v863, %v940
      %v961 = vadd.f32 %v864, %v942
      %v962 = vadd.f32 %v865, %v944
      %v963 = vadd.f32 %v866, %v946
      %v964 = vadd.f32 %v867, %v948
      %s965 = scalar_lea.vmem %s4, 192
      %v966 = vld [vmem:[%s965] sm:$0xff]
      %v967 = vld [vmem:[%s965 + $0x8] sm:$0xff]
      %v968 = vld [vmem:[%s965 + $0x10] sm:$0xff]
      %v969 = vld [vmem:[%s965 + $0x18] sm:$0xff]
      %v970 = vld [vmem:[%s965 + $0x20] sm:$0xff]
      %v971 = vld [vmem:[%s965 + $0x28] sm:$0xff]
      %v972 = vld [vmem:[%s965 + $0x30] sm:$0xff]
      %v973 = vld [vmem:[%s965 + $0x38] sm:$0xff]
      %975 = vset.pattern.permute.xlu0 0
      %976 = vperm.xlu0 %975, %v966
      %v977 = vpop.permute.xlu0 %976
      %980 = vset.pattern.permute.xlu0 0
      %981 = vperm.xlu0 %980, %v967
      %v982 = vpop.permute.xlu0 %981
      %985 = vset.pattern.permute.xlu0 0
      %986 = vperm.xlu0 %985, %v968
      %v987 = vpop.permute.xlu0 %986
      %990 = vset.pattern.permute.xlu0 0
      %991 = vperm.xlu0 %990, %v969
      %v992 = vpop.permute.xlu0 %991
      %995 = vset.pattern.permute.xlu0 0
      %996 = vperm.xlu0 %995, %v970
      %v997 = vpop.permute.xlu0 %996
      %1000 = vset.pattern.permute.xlu0 0
      %1001 = vperm.xlu0 %1000, %v971
      %v1002 = vpop.permute.xlu0 %1001
      %1005 = vset.pattern.permute.xlu0 0
      %1006 = vperm.xlu0 %1005, %v972
      %v1007 = vpop.permute.xlu0 %1006
      %1010 = vset.pattern.permute.xlu0 0
      %1011 = vperm.xlu0 %1010, %v973
      %v1012 = vpop.permute.xlu0 %1011
      %v1014 = vmul.f32 %v977, %v707
      %v1015 = vmul.f32 %v982, %v708
      %v1016 = vmul.f32 %v987, %v709
      %v1017 = vmul.f32 %v992, %v710
      %v1018 = vmul.f32 %v997, %v711
      %v1019 = vmul.f32 %v1002, %v712
      %v1020 = vmul.f32 %v1007, %v713
      %v1021 = vmul.f32 %v1012, %v714
      %1030 = vrot.lane.b32.xlu0 %v1014, 125
      %v1031 = vpop.permute.xlu0 %1030
      %1032 = vrot.lane.b32.xlu0 %v1015, 125
      %v1033 = vpop.permute.xlu0 %1032
      %1034 = vrot.lane.b32.xlu0 %v1016, 125
      %v1035 = vpop.permute.xlu0 %1034
      %1036 = vrot.lane.b32.xlu0 %v1017, 125
      %v1037 = vpop.permute.xlu0 %1036
      %1038 = vrot.lane.b32.xlu0 %v1018, 125
      %v1039 = vpop.permute.xlu0 %1038
      %1040 = vrot.lane.b32.xlu0 %v1019, 125
      %v1041 = vpop.permute.xlu0 %1040
      %1042 = vrot.lane.b32.xlu0 %v1020, 125
      %v1043 = vpop.permute.xlu0 %1042
      %1044 = vrot.lane.b32.xlu0 %v1021, 125
      %v1045 = vpop.permute.xlu0 %1044
      %v1054 = vadd.f32 %v957, %v1031
      %v1055 = vadd.f32 %v958, %v1033
      %v1056 = vadd.f32 %v959, %v1035
      %v1057 = vadd.f32 %v960, %v1037
      %v1058 = vadd.f32 %v961, %v1039
      %v1059 = vadd.f32 %v962, %v1041
      %v1060 = vadd.f32 %v963, %v1043
      %v1061 = vadd.f32 %v964, %v1045
      %s1062 = scalar_lea.vmem %s4, 256
      %v1063 = vld [vmem:[%s1062] sm:$0xff]
      %v1064 = vld [vmem:[%s1062 + $0x8] sm:$0xff]
      %v1065 = vld [vmem:[%s1062 + $0x10] sm:$0xff]
      %v1066 = vld [vmem:[%s1062 + $0x18] sm:$0xff]
      %v1067 = vld [vmem:[%s1062 + $0x20] sm:$0xff]
      %v1068 = vld [vmem:[%s1062 + $0x28] sm:$0xff]
      %v1069 = vld [vmem:[%s1062 + $0x30] sm:$0xff]
      %v1070 = vld [vmem:[%s1062 + $0x38] sm:$0xff]
      %1072 = vset.pattern.permute.xlu0 0
      %1073 = vperm.xlu0 %1072, %v1063
      %v1074 = vpop.permute.xlu0 %1073
      %1077 = vset.pattern.permute.xlu0 0
      %1078 = vperm.xlu0 %1077, %v1064
      %v1079 = vpop.permute.xlu0 %1078
      %1082 = vset.pattern.permute.xlu0 0
      %1083 = vperm.xlu0 %1082, %v1065
      %v1084 = vpop.permute.xlu0 %1083
      %1087 = vset.pattern.permute.xlu0 0
      %1088 = vperm.xlu0 %1087, %v1066
      %v1089 = vpop.permute.xlu0 %1088
      %1092 = vset.pattern.permute.xlu0 0
      %1093 = vperm.xlu0 %1092, %v1067
      %v1094 = vpop.permute.xlu0 %1093
      %1097 = vset.pattern.permute.xlu0 0
      %1098 = vperm.xlu0 %1097, %v1068
      %v1099 = vpop.permute.xlu0 %1098
      %1102 = vset.pattern.permute.xlu0 0
      %1103 = vperm.xlu0 %1102, %v1069
      %v1104 = vpop.permute.xlu0 %1103
      %1107 = vset.pattern.permute.xlu0 0
      %1108 = vperm.xlu0 %1107, %v1070
      %v1109 = vpop.permute.xlu0 %1108
      %v1111 = vmul.f32 %v1074, %v707
      %v1112 = vmul.f32 %v1079, %v708
      %v1113 = vmul.f32 %v1084, %v709
      %v1114 = vmul.f32 %v1089, %v710
      %v1115 = vmul.f32 %v1094, %v711
      %v1116 = vmul.f32 %v1099, %v712
      %v1117 = vmul.f32 %v1104, %v713
      %v1118 = vmul.f32 %v1109, %v714
      %1127 = vrot.lane.b32.xlu0 %v1111, 124
      %v1128 = vpop.permute.xlu0 %1127
      %1129 = vrot.lane.b32.xlu0 %v1112, 124
      %v1130 = vpop.permute.xlu0 %1129
      %1131 = vrot.lane.b32.xlu0 %v1113, 124
      %v1132 = vpop.permute.xlu0 %1131
      %1133 = vrot.lane.b32.xlu0 %v1114, 124
      %v1134 = vpop.permute.xlu0 %1133
      %1135 = vrot.lane.b32.xlu0 %v1115, 124
      %v1136 = vpop.permute.xlu0 %1135
      %1137 = vrot.lane.b32.xlu0 %v1116, 124
      %v1138 = vpop.permute.xlu0 %1137
      %1139 = vrot.lane.b32.xlu0 %v1117, 124
      %v1140 = vpop.permute.xlu0 %1139
      %1141 = vrot.lane.b32.xlu0 %v1118, 124
      %v1142 = vpop.permute.xlu0 %1141
      %v1151 = vadd.f32 %v1054, %v1128
      %v1152 = vadd.f32 %v1055, %v1130
      %v1153 = vadd.f32 %v1056, %v1132
      %v1154 = vadd.f32 %v1057, %v1134
      %v1155 = vadd.f32 %v1058, %v1136
      %v1156 = vadd.f32 %v1059, %v1138
      %v1157 = vadd.f32 %v1060, %v1140
      %v1158 = vadd.f32 %v1061, %v1142
      %v1159 = vld [vmem:[%s5] sm:$0xff]
      %v1160 = vld [vmem:[%s5 + $0x8] sm:$0xff]
      %v1161 = vld [vmem:[%s5 + $0x10] sm:$0xff]
      %v1162 = vld [vmem:[%s5 + $0x18] sm:$0xff]
      %v1163 = vld [vmem:[%s5 + $0x20] sm:$0xff]
      %v1164 = vld [vmem:[%s5 + $0x28] sm:$0xff]
      %v1165 = vld [vmem:[%s5 + $0x30] sm:$0xff]
      %v1166 = vld [vmem:[%s5 + $0x38] sm:$0xff]
      %1168 = vset.pattern.permute.xlu0 0
      %1169 = vperm.xlu0 %1168, %v1159
      %v1170 = vpop.permute.xlu0 %1169
      %1173 = vset.pattern.permute.xlu0 0
      %1174 = vperm.xlu0 %1173, %v1160
      %v1175 = vpop.permute.xlu0 %1174
      %1178 = vset.pattern.permute.xlu0 0
      %1179 = vperm.xlu0 %1178, %v1161
      %v1180 = vpop.permute.xlu0 %1179
      %1183 = vset.pattern.permute.xlu0 0
      %1184 = vperm.xlu0 %1183, %v1162
      %v1185 = vpop.permute.xlu0 %1184
      %1188 = vset.pattern.permute.xlu0 0
      %1189 = vperm.xlu0 %1188, %v1163
      %v1190 = vpop.permute.xlu0 %1189
      %1193 = vset.pattern.permute.xlu0 0
      %1194 = vperm.xlu0 %1193, %v1164
      %v1195 = vpop.permute.xlu0 %1194
      %1198 = vset.pattern.permute.xlu0 0
      %1199 = vperm.xlu0 %1198, %v1165
      %v1200 = vpop.permute.xlu0 %1199
      %1203 = vset.pattern.permute.xlu0 0
      %1204 = vperm.xlu0 %1203, %v1166
      %v1205 = vpop.permute.xlu0 %1204
      %v1207 = vadd.f32 %v1151, %v1170
      %v1208 = vadd.f32 %v1152, %v1175
      %v1209 = vadd.f32 %v1153, %v1180
      %v1210 = vadd.f32 %v1154, %v1185
      %v1211 = vadd.f32 %v1155, %v1190
      %v1212 = vadd.f32 %v1156, %v1195
      %v1213 = vadd.f32 %v1157, %v1200
      %v1214 = vadd.f32 %v1158, %v1205
      %v1215 = vmax.f32 %v1207, 0.0
      %v1216 = vmax.f32 %v1208, 0.0
      %v1217 = vmax.f32 %v1209, 0.0
      %v1218 = vmax.f32 %v1210, 0.0
      %v1219 = vmax.f32 %v1211, 0.0
      %v1220 = vmax.f32 %v1212, 0.0
      %v1221 = vmax.f32 %v1213, 0.0
      %v1222 = vmax.f32 %v1214, 0.0
      %v1223 = vld [vmem:[%s6] sm:$0xff]
      %v1224 = vld [vmem:[%s6 + $0x8] sm:$0xff]
      %v1225 = vld [vmem:[%s7] sm:$0xff]
      %v1226 = vld [vmem:[%s7 + $0x8] sm:$0xff]
      %1228 = vset.pattern.permute.xlu0 0
      %1229 = vperm.xlu0 %1228, %v1225
      %v1230 = vpop.permute.xlu0 %1229
      %1233 = vset.pattern.permute.xlu0 0
      %1234 = vperm.xlu0 %1233, %v1226
      %v1235 = vpop.permute.xlu0 %1234
      %vm1237 = vcmask 523264
      %v1239 = vsel %vm1237, %v1223, 0
      %v1242 = vsel %vm1237, %v1224, 0
      %1244 = vmatprep.subr.mxu0 0.0
      %1245 = vmatpush1.msra.mxu0 0.0
      %1246 = vmatprep.subr.mxu0 0.0
      %1247 = vmatpush1.msra.mxu0 0.0
      %1248 = vmatprep.subr.mxu0 0.0
      %1249 = vmatpush1.msra.mxu0 0.0
      %1250 = vmatprep.subr.mxu0 0.0
      %1251 = vmatpush1.msra.mxu0 0.0
      %1252 = vmatprep.subr.mxu0 0.0
      %1253 = vmatpush1.msra.mxu0 0.0
      %1254 = vmatprep.subr.mxu0 0.0
      %1255 = vmatpush1.msra.mxu0 0.0
      %1256 = vmatprep.subr.mxu0 0.0
      %1257 = vmatpush1.msra.mxu0 0.0
      %1258 = vmatprep.subr.mxu0 0.0
      %1259 = vmatpush1.msra.mxu0 0.0
      %1260 = vmatprep.subr.mxu0 0.0
      %1261 = vmatpush1.msra.mxu0 %v1222
      %1262 = vmatprep.subr.mxu0 0.0
      %1263 = vmatpush1.msra.mxu0 %v1221
      %1264 = vmatprep.subr.mxu0 0.0
      %1265 = vmatpush1.msra.mxu0 %v1220
      %1266 = vmatprep.subr.mxu0 0.0
      %1267 = vmatpush1.msra.mxu0 %v1219
      %1268 = vmatprep.subr.mxu0 0.0
      %1269 = vmatpush1.msra.mxu0 %v1218
      %1270 = vmatprep.subr.mxu0 0.0
      %1271 = vmatpush1.msra.mxu0 %v1217
      %1272 = vmatprep.subr.mxu0 0.0
      %1273 = vmatpush1.msra.mxu0 %v1216
      %1274 = vmatprep.subr.mxu0 0.0
      %1275 = vmatpush1.msra.mxu0 %v1215
      %1276 = vmatprep.subr.mxu0 0.0
      %1277 = vmatpush2.msra.mxu0 0.0
      %1278 = vmatprep.subr.mxu0 0.0
      %1279 = vmatpush2.msra.mxu0 0.0
      %1280 = vmatprep.subr.mxu0 0.0
      %1281 = vmatpush2.msra.mxu0 0.0
      %1282 = vmatprep.subr.mxu0 0.0
      %1283 = vmatpush2.msra.mxu0 0.0
      %1284 = vmatprep.subr.mxu0 0.0
      %1285 = vmatpush2.msra.mxu0 0.0
      %1286 = vmatprep.subr.mxu0 0.0
      %1287 = vmatpush2.msra.mxu0 0.0
      %1288 = vmatprep.subr.mxu0 0.0
      %1289 = vmatpush2.msra.mxu0 0.0
      %1290 = vmatprep.subr.mxu0 0.0
      %1291 = vmatpush2.msra.mxu0 0.0
      %1292 = vmatprep.subr.mxu0 0.0
      %1293 = vmatpush2.msra.mxu0 0.0
      %1294 = vmatprep.subr.mxu0 0.0
      %1295 = vmatpush2.msra.mxu0 0.0
      %1296 = vmatprep.subr.mxu0 0.0
      %1297 = vmatpush2.msra.mxu0 0.0
      %1298 = vmatprep.subr.mxu0 0.0
      %1299 = vmatpush2.msra.mxu0 0.0
      %1300 = vmatprep.subr.mxu0 0.0
      %1301 = vmatpush2.msra.mxu0 0.0
      %1302 = vmatprep.subr.mxu0 0.0
      %1303 = vmatpush2.msra.mxu0 0.0
      %1304 = vmatprep.subr.mxu0 0.0
      %1305 = vmatpush2.msra.mxu0 0.0
      %1306 = vmatprep.subr.mxu0 0.0
      %1307 = vmatpush2.msra.mxu0 0.0
      %1308 = vmatprep.mubr.f32.mxu0 0.0
      %1309 = vmatmul.mubr.f32.gmra.mxu0 %v1239
      %v1310 = vpop.f32.mrf.mxu0
      %v1311 = vadd.f32 %v1230, %v1310
      %v1312 = vpop.f32.mrf.mxu0
      %1313 = vmatprep.mubr.f32.mxu0 0.0
      %1314 = vmatmul.mubr.f32.gmra.mxu0 %v1242
      %v1315 = vpop.f32.mrf.mxu0
      %v1316 = vadd.f32 %v1235, %v1315
      %v1317 = vpop.f32.mrf.mxu0
      %1318 = vdwg.mxu0
      %v1319 = vmax.f32 %v1311, 0.0
      %v1320 = vmax.f32 %v1316, 0.0
      %v1321 = vld [vmem:[%s8] sm:$0xff]
      %v1322 = vld [vmem:[%s8 + $0x8] sm:$0xff]
      %v1323 = vld [vmem:[%s9] sm:$0xff]
      %v1324 = vld [vmem:[%s9 + $0x8] sm:$0xff]
      %1326 = vset.pattern.permute.xlu0 0
      %1327 = vperm.xlu0 %1326, %v1323
      %v1328 = vpop.permute.xlu0 %1327
      %1331 = vset.pattern.permute.xlu0 0
      %1332 = vperm.xlu0 %1331, %v1324
      %v1333 = vpop.permute.xlu0 %1332
      %v1336 = vsel %vm502, %v1321, 0
      %v1339 = vsel %vm502, %v1322, 0
      %1341 = vmatprep.subr.mxu0 0.0
      %1342 = vmatpush1.msra.mxu0 0.0
      %1343 = vmatprep.subr.mxu0 0.0
      %1344 = vmatpush1.msra.mxu0 0.0
      %1345 = vmatprep.subr.mxu0 0.0
      %1346 = vmatpush1.msra.mxu0 0.0
      %1347 = vmatprep.subr.mxu0 0.0
      %1348 = vmatpush1.msra.mxu0 0.0
      %1349 = vmatprep.subr.mxu0 0.0
      %1350 = vmatpush1.msra.mxu0 0.0
      %1351 = vmatprep.subr.mxu0 0.0
      %1352 = vmatpush1.msra.mxu0 0.0
      %1353 = vmatprep.subr.mxu0 0.0
      %1354 = vmatpush1.msra.mxu0 0.0
      %1355 = vmatprep.subr.mxu0 0.0
      %1356 = vmatpush1.msra.mxu0 0.0
      %1357 = vmatprep.subr.mxu0 0.0
      %1358 = vmatpush1.msra.mxu0 0.0
      %1359 = vmatprep.subr.mxu0 0.0
      %1360 = vmatpush1.msra.mxu0 0.0
      %1361 = vmatprep.subr.mxu0 0.0
      %1362 = vmatpush1.msra.mxu0 0.0
      %1363 = vmatprep.subr.mxu0 0.0
      %1364 = vmatpush1.msra.mxu0 0.0
      %1365 = vmatprep.subr.mxu0 0.0
      %1366 = vmatpush1.msra.mxu0 %v445
      %1367 = vmatprep.subr.mxu0 0.0
      %1368 = vmatpush1.msra.mxu0 %v444
      %1369 = vmatprep.subr.mxu0 0.0
      %1370 = vmatpush1.msra.mxu0 %v443
      %1371 = vmatprep.subr.mxu0 0.0
      %1372 = vmatpush1.msra.mxu0 %v442
      %1373 = vmatprep.subr.mxu0 0.0
      %1374 = vmatpush2.msra.mxu0 0.0
      %1375 = vmatprep.subr.mxu0 0.0
      %1376 = vmatpush2.msra.mxu0 0.0
      %1377 = vmatprep.subr.mxu0 0.0
      %1378 = vmatpush2.msra.mxu0 0.0
      %1379 = vmatprep.subr.mxu0 0.0
      %1380 = vmatpush2.msra.mxu0 0.0
      %1381 = vmatprep.subr.mxu0 0.0
      %1382 = vmatpush2.msra.mxu0 0.0
      %1383 = vmatprep.subr.mxu0 0.0
      %1384 = vmatpush2.msra.mxu0 0.0
      %1385 = vmatprep.subr.mxu0 0.0
      %1386 = vmatpush2.msra.mxu0 0.0
      %1387 = vmatprep.subr.mxu0 0.0
      %1388 = vmatpush2.msra.mxu0 0.0
      %1389 = vmatprep.subr.mxu0 0.0
      %1390 = vmatpush2.msra.mxu0 0.0
      %1391 = vmatprep.subr.mxu0 0.0
      %1392 = vmatpush2.msra.mxu0 0.0
      %1393 = vmatprep.subr.mxu0 0.0
      %1394 = vmatpush2.msra.mxu0 0.0
      %1395 = vmatprep.subr.mxu0 0.0
      %1396 = vmatpush2.msra.mxu0 0.0
      %1397 = vmatprep.subr.mxu0 0.0
      %1398 = vmatpush2.msra.mxu0 0.0
      %1399 = vmatprep.subr.mxu0 0.0
      %1400 = vmatpush2.msra.mxu0 0.0
      %1401 = vmatprep.subr.mxu0 0.0
      %1402 = vmatpush2.msra.mxu0 0.0
      %1403 = vmatprep.subr.mxu0 0.0
      %1404 = vmatpush2.msra.mxu0 0.0
      %1405 = vmatprep.mubr.f32.mxu0 0.0
      %1406 = vmatmul.mubr.f32.gmra.mxu0 %v1336
      %v1407 = vpop.f32.mrf.mxu0
      %v1408 = vadd.f32 %v1328, %v1407
      %v1409 = vpop.f32.mrf.mxu0
      %1410 = vmatprep.mubr.f32.mxu0 0.0
      %1411 = vmatmul.mubr.f32.gmra.mxu0 %v1339
      %v1412 = vpop.f32.mrf.mxu0
      %v1413 = vadd.f32 %v1333, %v1412
      %v1414 = vpop.f32.mrf.mxu0
      %1415 = vdwg.mxu0
      %v1416 = vmax.f32 %v1408, 0.0
      %v1417 = vmax.f32 %v1413, 0.0
      %v1418 = vadd.f32 %v1319, %v1416
      %v1419 = vadd.f32 %v1320, %v1417
      %vm1420 = vcmask 7168
      %1421 = vst.msk [vmem:[#allocation3] sm:$0xff] %vm1420, 0.0
      %1422 = vst.msk [vmem:[#allocation3 + $0x8] sm:$0xff] %vm1420, 0.0
      %vm1423 = vcmask 261368
      %1424 = vst.msk [vmem:[#allocation3] sm:$0xff] %vm1423, 0.0
      %1425 = vst.msk [vmem:[#allocation3 + $0x8] sm:$0xff] %vm1423, 0.0
      %1428 = vrot.lane.b32.xlu0 %v1418, 1
      %v1429 = vpop.permute.xlu0 %1428
      %1430 = vrot.lane.b32.xlu0 %v1419, 1
      %v1431 = vpop.permute.xlu0 %1430
      %vm1434 = vcmask 252936
      %1435 = vst.msk [vmem:[#allocation3] sm:$0xff] %vm1434, %v1429
      %1436 = vst.msk [vmem:[#allocation3 + $0x8] sm:$0xff] %vm1434, %v1431
      %v1437 = vld [vmem:[%s10] sm:$0xff]
      %v1438 = vld [vmem:[%s10 + $0x8] sm:$0xff]
      %v1439 = vld [vmem:[#allocation3] sm:$0xff]
      %v1440 = vld [vmem:[#allocation3 + $0x8] sm:$0xff]
      %s1441 = scalar_lea.vmem %s10, 32
      %v1442 = vld [vmem:[%s1441] sm:$0xff]
      %v1443 = vld [vmem:[%s1441 + $0x8] sm:$0xff]
      %vm1444 = vcmask 130048
      %v1446 = vsel %vm1444, %v1442, 0
      %v1449 = vsel %vm1444, %v1443, 0
      %1451 = vmatprep.subr.mxu0 0.0
      %1452 = vmatpush1.msra.mxu0 0.0
      %1453 = vmatprep.subr.mxu0 0.0
      %1454 = vmatpush1.msra.mxu0 0.0
      %1455 = vmatprep.subr.mxu0 0.0
      %1456 = vmatpush1.msra.mxu0 0.0
      %1457 = vmatprep.subr.mxu0 0.0
      %1458 = vmatpush1.msra.mxu0 0.0
      %1459 = vmatprep.subr.mxu0 0.0
      %1460 = vmatpush1.msra.mxu0 0.0
      %1461 = vmatprep.subr.mxu0 0.0
      %1462 = vmatpush1.msra.mxu0 0.0
      %1463 = vmatprep.subr.mxu0 0.0
      %1464 = vmatpush1.msra.mxu0 0.0
      %1465 = vmatprep.subr.mxu0 0.0
      %1466 = vmatpush1.msra.mxu0 0.0
      %1467 = vmatprep.subr.mxu0 0.0
      %1468 = vmatpush1.msra.mxu0 0.0
      %1469 = vmatprep.subr.mxu0 0.0
      %1470 = vmatpush1.msra.mxu0 0.0
      %1471 = vmatprep.subr.mxu0 0.0
      %1472 = vmatpush1.msra.mxu0 0.0
      %1473 = vmatprep.subr.mxu0 0.0
      %1474 = vmatpush1.msra.mxu0 0.0
      %1475 = vmatprep.subr.mxu0 0.0
      %1476 = vmatpush1.msra.mxu0 0.0
      %1477 = vmatprep.subr.mxu0 0.0
      %1478 = vmatpush1.msra.mxu0 0.0
      %1479 = vmatprep.subr.mxu0 0.0
      %1480 = vmatpush1.msra.mxu0 %v1440
      %1481 = vmatprep.subr.mxu0 0.0
      %1482 = vmatpush1.msra.mxu0 %v1439
      %1483 = vmatprep.subr.mxu0 0.0
      %1484 = vmatpush2.msra.mxu0 0.0
      %1485 = vmatprep.subr.mxu0 0.0
      %1486 = vmatpush2.msra.mxu0 0.0
      %1487 = vmatprep.subr.mxu0 0.0
      %1488 = vmatpush2.msra.mxu0 0.0
      %1489 = vmatprep.subr.mxu0 0.0
      %1490 = vmatpush2.msra.mxu0 0.0
      %1491 = vmatprep.subr.mxu0 0.0
      %1492 = vmatpush2.msra.mxu0 0.0
      %1493 = vmatprep.subr.mxu0 0.0
      %1494 = vmatpush2.msra.mxu0 0.0
      %1495 = vmatprep.subr.mxu0 0.0
      %1496 = vmatpush2.msra.mxu0 0.0
      %1497 = vmatprep.subr.mxu0 0.0
      %1498 = vmatpush2.msra.mxu0 0.0
      %1499 = vmatprep.subr.mxu0 0.0
      %1500 = vmatpush2.msra.mxu0 0.0
      %1501 = vmatprep.subr.mxu0 0.0
      %1502 = vmatpush2.msra.mxu0 0.0
      %1503 = vmatprep.subr.mxu0 0.0
      %1504 = vmatpush2.msra.mxu0 0.0
      %1505 = vmatprep.subr.mxu0 0.0
      %1506 = vmatpush2.msra.mxu0 0.0
      %1507 = vmatprep.subr.mxu0 0.0
      %1508 = vmatpush2.msra.mxu0 0.0
      %1509 = vmatprep.subr.mxu0 0.0
      %1510 = vmatpush2.msra.mxu0 0.0
      %1511 = vmatprep.subr.mxu0 0.0
      %1512 = vmatpush2.msra.mxu0 0.0
      %1513 = vmatprep.subr.mxu0 0.0
      %1514 = vmatpush2.msra.mxu0 0.0
      %1515 = vmatprep.mubr.f32.mxu0 0.0
      %1516 = vmatmul.mubr.f32.gmra.mxu0 %v1446
      %v1517 = vpop.f32.mrf.mxu0
      %v1518 = vadd.f32 0.0, %v1517
      %v1519 = vpop.f32.mrf.mxu0
      %1520 = vmatprep.mubr.f32.mxu0 0.0
      %1521 = vmatmul.mubr.f32.gmra.mxu0 %v1449
      %v1522 = vpop.f32.mrf.mxu0
      %v1523 = vadd.f32 0.0, %v1522
      %v1524 = vpop.f32.mrf.mxu0
      %1525 = vdwg.mxu0
      %1528 = vrot.lane.b32.xlu0 %v1439, 127
      %v1529 = vpop.permute.xlu0 %1528
      %1530 = vrot.lane.b32.xlu0 %v1440, 127
      %v1531 = vpop.permute.xlu0 %1530
      %v1535 = vsel %vm1444, %v1437, 0
      %v1538 = vsel %vm1444, %v1438, 0
      %1540 = vmatprep.subr.mxu0 0.0
      %1541 = vmatpush1.msra.mxu0 0.0
      %1542 = vmatprep.subr.mxu0 0.0
      %1543 = vmatpush1.msra.mxu0 0.0
      %1544 = vmatprep.subr.mxu0 0.0
      %1545 = vmatpush1.msra.mxu0 0.0
      %1546 = vmatprep.subr.mxu0 0.0
      %1547 = vmatpush1.msra.mxu0 0.0
      %1548 = vmatprep.subr.mxu0 0.0
      %1549 = vmatpush1.msra.mxu0 0.0
      %1550 = vmatprep.subr.mxu0 0.0
      %1551 = vmatpush1.msra.mxu0 0.0
      %1552 = vmatprep.subr.mxu0 0.0
      %1553 = vmatpush1.msra.mxu0 0.0
      %1554 = vmatprep.subr.mxu0 0.0
      %1555 = vmatpush1.msra.mxu0 0.0
      %1556 = vmatprep.subr.mxu0 0.0
      %1557 = vmatpush1.msra.mxu0 0.0
      %1558 = vmatprep.subr.mxu0 0.0
      %1559 = vmatpush1.msra.mxu0 0.0
      %1560 = vmatprep.subr.mxu0 0.0
      %1561 = vmatpush1.msra.mxu0 0.0
      %1562 = vmatprep.subr.mxu0 0.0
      %1563 = vmatpush1.msra.mxu0 0.0
      %1564 = vmatprep.subr.mxu0 0.0
      %1565 = vmatpush1.msra.mxu0 0.0
      %1566 = vmatprep.subr.mxu0 0.0
      %1567 = vmatpush1.msra.mxu0 0.0
      %1568 = vmatprep.subr.mxu0 0.0
      %1569 = vmatpush1.msra.mxu0 %v1531
      %1570 = vmatprep.subr.mxu0 0.0
      %1571 = vmatpush1.msra.mxu0 %v1529
      %1572 = vmatprep.subr.mxu0 0.0
      %1573 = vmatpush2.msra.mxu0 0.0
      %1574 = vmatprep.subr.mxu0 0.0
      %1575 = vmatpush2.msra.mxu0 0.0
      %1576 = vmatprep.subr.mxu0 0.0
      %1577 = vmatpush2.msra.mxu0 0.0
      %1578 = vmatprep.subr.mxu0 0.0
      %1579 = vmatpush2.msra.mxu0 0.0
      %1580 = vmatprep.subr.mxu0 0.0
      %1581 = vmatpush2.msra.mxu0 0.0
      %1582 = vmatprep.subr.mxu0 0.0
      %1583 = vmatpush2.msra.mxu0 0.0
      %1584 = vmatprep.subr.mxu0 0.0
      %1585 = vmatpush2.msra.mxu0 0.0
      %1586 = vmatprep.subr.mxu0 0.0
      %1587 = vmatpush2.msra.mxu0 0.0
      %1588 = vmatprep.subr.mxu0 0.0
      %1589 = vmatpush2.msra.mxu0 0.0
      %1590 = vmatprep.subr.mxu0 0.0
      %1591 = vmatpush2.msra.mxu0 0.0
      %1592 = vmatprep.subr.mxu0 0.0
      %1593 = vmatpush2.msra.mxu0 0.0
      %1594 = vmatprep.subr.mxu0 0.0
      %1595 = vmatpush2.msra.mxu0 0.0
      %1596 = vmatprep.subr.mxu0 0.0
      %1597 = vmatpush2.msra.mxu0 0.0
      %1598 = vmatprep.subr.mxu0 0.0
      %1599 = vmatpush2.msra.mxu0 0.0
      %1600 = vmatprep.subr.mxu0 0.0
      %1601 = vmatpush2.msra.mxu0 0.0
      %1602 = vmatprep.subr.mxu0 0.0
      %1603 = vmatpush2.msra.mxu0 0.0
      %1604 = vmatprep.mubr.f32.mxu0 0.0
      %1605 = vmatmul.mubr.f32.gmra.mxu0 %v1535
      %v1606 = vpop.f32.mrf.mxu0
      %v1607 = vadd.f32 %v1518, %v1606
      %v1608 = vpop.f32.mrf.mxu0
      %1609 = vmatprep.mubr.f32.mxu0 0.0
      %1610 = vmatmul.mubr.f32.gmra.mxu0 %v1538
      %v1611 = vpop.f32.mrf.mxu0
      %v1612 = vadd.f32 %v1523, %v1611
      %v1613 = vpop.f32.mrf.mxu0
      %1614 = vdwg.mxu0
      %v1615 = vld [vmem:[%s11] sm:$0xff]
      %v1616 = vld [vmem:[%s11 + $0x8] sm:$0xff]
      %1618 = vset.pattern.permute.xlu0 0
      %1619 = vperm.xlu0 %1618, %v1615
      %v1620 = vpop.permute.xlu0 %1619
      %1623 = vset.pattern.permute.xlu0 0
      %1624 = vperm.xlu0 %1623, %v1616
      %v1625 = vpop.permute.xlu0 %1624
      %v1627 = vadd.f32 %v1607, %v1620
      %v1628 = vadd.f32 %v1612, %v1625
      %v1629 = vmax.f32 %v1627, 0.0
      %v1630 = vmax.f32 %v1628, 0.0
      %vm1631 = vcmask 252928
      %1632 = vst.msk [vmem:[%s433] sm:$0xff] %vm1631, %v1629
      %1633 = vst.msk [vmem:[%s433 + $0x8] sm:$0xff] %vm1631, %v1630
      %s1634 = scalar_lea.vmem %s10, 16
      %v1635 = vld [vmem:[%s1634] sm:$0xff]
      %v1636 = vld [vmem:[%s1634 + $0x8] sm:$0xff]
      %v1637 = vld [vmem:[#allocation3] sm:$0xff]
      %v1638 = vld [vmem:[#allocation3 + $0x8] sm:$0xff]
      %s1639 = scalar_lea.vmem %s10, 48
      %v1640 = vld [vmem:[%s1639] sm:$0xff]
      %v1641 = vld [vmem:[%s1639 + $0x8] sm:$0xff]
      %v1643 = vsel %vm1444, %v1640, 0
      %v1646 = vsel %vm1444, %v1641, 0
      %1648 = vmatprep.subr.mxu0 0.0
      %1649 = vmatpush1.msra.mxu0 0.0
      %1650 = vmatprep.subr.mxu0 0.0
      %1651 = vmatpush1.msra.mxu0 0.0
      %1652 = vmatprep.subr.mxu0 0.0
      %1653 = vmatpush1.msra.mxu0 0.0
      %1654 = vmatprep.subr.mxu0 0.0
      %1655 = vmatpush1.msra.mxu0 0.0
      %1656 = vmatprep.subr.mxu0 0.0
      %1657 = vmatpush1.msra.mxu0 0.0
      %1658 = vmatprep.subr.mxu0 0.0
      %1659 = vmatpush1.msra.mxu0 0.0
      %1660 = vmatprep.subr.mxu0 0.0
      %1661 = vmatpush1.msra.mxu0 0.0
      %1662 = vmatprep.subr.mxu0 0.0
      %1663 = vmatpush1.msra.mxu0 0.0
      %1664 = vmatprep.subr.mxu0 0.0
      %1665 = vmatpush1.msra.mxu0 0.0
      %1666 = vmatprep.subr.mxu0 0.0
      %1667 = vmatpush1.msra.mxu0 0.0
      %1668 = vmatprep.subr.mxu0 0.0
      %1669 = vmatpush1.msra.mxu0 0.0
      %1670 = vmatprep.subr.mxu0 0.0
      %1671 = vmatpush1.msra.mxu0 0.0
      %1672 = vmatprep.subr.mxu0 0.0
      %1673 = vmatpush1.msra.mxu0 0.0
      %1674 = vmatprep.subr.mxu0 0.0
      %1675 = vmatpush1.msra.mxu0 0.0
      %1676 = vmatprep.subr.mxu0 0.0
      %1677 = vmatpush1.msra.mxu0 %v1638
      %1678 = vmatprep.subr.mxu0 0.0
      %1679 = vmatpush1.msra.mxu0 %v1637
      %1680 = vmatprep.subr.mxu0 0.0
      %1681 = vmatpush2.msra.mxu0 0.0
      %1682 = vmatprep.subr.mxu0 0.0
      %1683 = vmatpush2.msra.mxu0 0.0
      %1684 = vmatprep.subr.mxu0 0.0
      %1685 = vmatpush2.msra.mxu0 0.0
      %1686 = vmatprep.subr.mxu0 0.0
      %1687 = vmatpush2.msra.mxu0 0.0
      %1688 = vmatprep.subr.mxu0 0.0
      %1689 = vmatpush2.msra.mxu0 0.0
      %1690 = vmatprep.subr.mxu0 0.0
      %1691 = vmatpush2.msra.mxu0 0.0
      %1692 = vmatprep.subr.mxu0 0.0
      %1693 = vmatpush2.msra.mxu0 0.0
      %1694 = vmatprep.subr.mxu0 0.0
      %1695 = vmatpush2.msra.mxu0 0.0
      %1696 = vmatprep.subr.mxu0 0.0
      %1697 = vmatpush2.msra.mxu0 0.0
      %1698 = vmatprep.subr.mxu0 0.0
      %1699 = vmatpush2.msra.mxu0 0.0
      %1700 = vmatprep.subr.mxu0 0.0
      %1701 = vmatpush2.msra.mxu0 0.0
      %1702 = vmatprep.subr.mxu0 0.0
      %1703 = vmatpush2.msra.mxu0 0.0
      %1704 = vmatprep.subr.mxu0 0.0
      %1705 = vmatpush2.msra.mxu0 0.0
      %1706 = vmatprep.subr.mxu0 0.0
      %1707 = vmatpush2.msra.mxu0 0.0
      %1708 = vmatprep.subr.mxu0 0.0
      %1709 = vmatpush2.msra.mxu0 0.0
      %1710 = vmatprep.subr.mxu0 0.0
      %1711 = vmatpush2.msra.mxu0 0.0
      %1712 = vmatprep.mubr.f32.mxu0 0.0
      %1713 = vmatmul.mubr.f32.gmra.mxu0 %v1643
      %v1714 = vpop.f32.mrf.mxu0
      %v1715 = vadd.f32 0.0, %v1714
      %v1716 = vpop.f32.mrf.mxu0
      %1717 = vmatprep.mubr.f32.mxu0 0.0
      %1718 = vmatmul.mubr.f32.gmra.mxu0 %v1646
      %v1719 = vpop.f32.mrf.mxu0
      %v1720 = vadd.f32 0.0, %v1719
      %v1721 = vpop.f32.mrf.mxu0
      %1722 = vdwg.mxu0
      %1725 = vrot.lane.b32.xlu0 %v1637, 127
      %v1726 = vpop.permute.xlu0 %1725
      %1727 = vrot.lane.b32.xlu0 %v1638, 127
      %v1728 = vpop.permute.xlu0 %1727
      %v1732 = vsel %vm1444, %v1635, 0
      %v1735 = vsel %vm1444, %v1636, 0
      %1737 = vmatprep.subr.mxu0 0.0
      %1738 = vmatpush1.msra.mxu0 0.0
      %1739 = vmatprep.subr.mxu0 0.0
      %1740 = vmatpush1.msra.mxu0 0.0
      %1741 = vmatprep.subr.mxu0 0.0
      %1742 = vmatpush1.msra.mxu0 0.0
      %1743 = vmatprep.subr.mxu0 0.0
      %1744 = vmatpush1.msra.mxu0 0.0
      %1745 = vmatprep.subr.mxu0 0.0
      %1746 = vmatpush1.msra.mxu0 0.0
      %1747 = vmatprep.subr.mxu0 0.0
      %1748 = vmatpush1.msra.mxu0 0.0
      %1749 = vmatprep.subr.mxu0 0.0
      %1750 = vmatpush1.msra.mxu0 0.0
      %1751 = vmatprep.subr.mxu0 0.0
      %1752 = vmatpush1.msra.mxu0 0.0
      %1753 = vmatprep.subr.mxu0 0.0
      %1754 = vmatpush1.msra.mxu0 0.0
      %1755 = vmatprep.subr.mxu0 0.0
      %1756 = vmatpush1.msra.mxu0 0.0
      %1757 = vmatprep.subr.mxu0 0.0
      %1758 = vmatpush1.msra.mxu0 0.0
      %1759 = vmatprep.subr.mxu0 0.0
      %1760 = vmatpush1.msra.mxu0 0.0
      %1761 = vmatprep.subr.mxu0 0.0
      %1762 = vmatpush1.msra.mxu0 0.0
      %1763 = vmatprep.subr.mxu0 0.0
      %1764 = vmatpush1.msra.mxu0 0.0
      %1765 = vmatprep.subr.mxu0 0.0
      %1766 = vmatpush1.msra.mxu0 %v1728
      %1767 = vmatprep.subr.mxu0 0.0
      %1768 = vmatpush1.msra.mxu0 %v1726
      %1769 = vmatprep.subr.mxu0 0.0
      %1770 = vmatpush2.msra.mxu0 0.0
      %1771 = vmatprep.subr.mxu0 0.0
      %1772 = vmatpush2.msra.mxu0 0.0
      %1773 = vmatprep.subr.mxu0 0.0
      %1774 = vmatpush2.msra.mxu0 0.0
      %1775 = vmatprep.subr.mxu0 0.0
      %1776 = vmatpush2.msra.mxu0 0.0
      %1777 = vmatprep.subr.mxu0 0.0
      %1778 = vmatpush2.msra.mxu0 0.0
      %1779 = vmatprep.subr.mxu0 0.0
      %1780 = vmatpush2.msra.mxu0 0.0
      %1781 = vmatprep.subr.mxu0 0.0
      %1782 = vmatpush2.msra.mxu0 0.0
      %1783 = vmatprep.subr.mxu0 0.0
      %1784 = vmatpush2.msra.mxu0 0.0
      %1785 = vmatprep.subr.mxu0 0.0
      %1786 = vmatpush2.msra.mxu0 0.0
      %1787 = vmatprep.subr.mxu0 0.0
      %1788 = vmatpush2.msra.mxu0 0.0
      %1789 = vmatprep.subr.mxu0 0.0
      %1790 = vmatpush2.msra.mxu0 0.0
      %1791 = vmatprep.subr.mxu0 0.0
      %1792 = vmatpush2.msra.mxu0 0.0
      %1793 = vmatprep.subr.mxu0 0.0
      %1794 = vmatpush2.msra.mxu0 0.0
      %1795 = vmatprep.subr.mxu0 0.0
      %1796 = vmatpush2.msra.mxu0 0.0
      %1797 = vmatprep.subr.mxu0 0.0
      %1798 = vmatpush2.msra.mxu0 0.0
      %1799 = vmatprep.subr.mxu0 0.0
      %1800 = vmatpush2.msra.mxu0 0.0
      %1801 = vmatprep.mubr.f32.mxu0 0.0
      %1802 = vmatmul.mubr.f32.gmra.mxu0 %v1732
      %v1803 = vpop.f32.mrf.mxu0
      %v1804 = vadd.f32 %v1715, %v1803
      %v1805 = vpop.f32.mrf.mxu0
      %1806 = vmatprep.mubr.f32.mxu0 0.0
      %1807 = vmatmul.mubr.f32.gmra.mxu0 %v1735
      %v1808 = vpop.f32.mrf.mxu0
      %v1809 = vadd.f32 %v1720, %v1808
      %v1810 = vpop.f32.mrf.mxu0
      %1811 = vdwg.mxu0
      %v1812 = vld [vmem:[%s11] sm:$0xff]
      %v1813 = vld [vmem:[%s11 + $0x8] sm:$0xff]
      %1815 = vset.pattern.permute.xlu0 0
      %1816 = vperm.xlu0 %1815, %v1812
      %v1817 = vpop.permute.xlu0 %1816
      %1820 = vset.pattern.permute.xlu0 0
      %1821 = vperm.xlu0 %1820, %v1813
      %v1822 = vpop.permute.xlu0 %1821
      %v1824 = vadd.f32 %v1804, %v1817
      %v1825 = vadd.f32 %v1809, %v1822
      %v1826 = vmax.f32 %v1824, 0.0
      %v1827 = vmax.f32 %v1825, 0.0
      %s1828 = scalar_lea.vmem %s433, 16
      %1829 = vst.msk [vmem:[%s1828] sm:$0xff] %vm1631, %v1826
      %1830 = vst.msk [vmem:[%s1828 + $0x8] sm:$0xff] %vm1631, %v1827
      %p1831 = scmp.lt.s32.totalorder %s23, 1
      %s1832 = scalar_select %p1831, %s23, 1
      %s1833 = smul.addr %s1832, 4
      %s1834 = smul.addr %s1833, 8
      %s1835 = scalar_lea.vmem %s12, %s1834
      // Predicated region
      $region69: #{manner_block_forward.10} parent=67 // pred_check
        %p1836 = pneg %p303
      $region70: #{manner_block_forward.10} parent=67 // pred_check_branch
        %1838 = sbr.rel (%p1836) target = $region72
      $region71: #{manner_block_forward.10} parent=67 // pred_region
        _
      $region72: #{manner_block_forward.10} parent=67 // pred_fallthru
        _
    $region68: #{manner_block_forward.10} parent=5 // pred_fallthru
      _
    %p1839 = scmp.le.s32.totalorder 2, %s18
    // Predicated region
    $region73: #{manner_block_forward.10} parent=5 // pred_check
      %p1840 = pneg %p1839
    $region74: #{manner_block_forward.10} parent=5 // pred_check_branch
      %1842 = sbr.rel (%p1840) target = $region76
    $region75: #{manner_block_forward.10} parent=5 // pred_region
      %s1843 = ssub.s32 %s18, 2
      // Predicated region
      $region77: #{manner_block_forward.10} parent=75 // pred_check
        %p1844 = pneg %p309
      $region78: #{manner_block_forward.10} parent=75 // pred_check_branch
        %1846 = sbr.rel (%p1844) target = $region80
      $region79: #{manner_block_forward.10} parent=75 // pred_region
        %p1847 = scmp.lt.s32.totalorder %s24, 1
        %s1848 = scalar_select %p1847, %s24, 1
        %s1849 = smul.addr %s1848, 4
        %s1850 = smul.addr %s1849, 8
        %s1851 = scalar_lea.vmem %s12, %s1850
      $region80: #{manner_block_forward.10} parent=75 // pred_fallthru
        _
    $region76: #{manner_block_forward.10} parent=5 // pred_fallthru
      _
  $region6: #{manner_block_forward.10} parent=0 // loop_footer
    %s22 = sadd.s32 1, %s18
  $region7: #{manner_block_forward.10} parent=0 // loop_footer_branch
    %17 = sbr.rel target = $region3
  $region8: #{manner_block_forward.10} parent=0 // loop_exit
    _

// kernel: manner_block_forward.11
$region0: #{manner_block_forward.11}
  #allocation0 [shape = 'u32[]', space=smem, size = 0x4, offset = 0x4, fixed_abs, tag = 'smem constant byte address 0x4 - core index']
  #allocation1 [shape = 'u32[144,128]{1,0:T(1,128)}', space=vmem, size = 0x12000, scoped, tag = 'internal scratch']
  #allocation2 [shape = 'f32[16,64]{1,0:T(8,128)}', space=vmem, size = 0x2000, scoped, tag = 'scratch operand']
  #allocation3 [shape = 'f32[1,1]{1,0:T(1,128)S(1)}', space=vmem, size = 0x200, scoped, tag = 'scoped memory for manner_block_forward.11']
  %s0 = inlined_call_operand.vmem [shape: f32[2,16,62], index: 0, kind: input, shape index: {}]
  %s1 = inlined_call_operand.vmem [shape: f32[2,16,62], index: 1, kind: input, shape index: {}]
  %s2 = inlined_call_operand.vmem [shape: f32[16,16], index: 2, kind: input, shape index: {}]
  %s3 = inlined_call_operand.vmem [shape: f32[16,1], index: 3, kind: input, shape index: {}]
  %s4 = inlined_call_operand.vmem [shape: f32[16,16], index: 4, kind: input, shape index: {}]
  %s5 = inlined_call_operand.vmem [shape: f32[16,1], index: 5, kind: input, shape index: {}]
  %s6 = inlined_call_operand.vmem [shape: f32[16,16], index: 6, kind: input, shape index: {}]
  %s7 = inlined_call_operand.vmem [shape: f32[16,1], index: 7, kind: input, shape index: {}]
  %s8 = inlined_call_operand.vmem [shape: f32[3,1,16], index: 8, kind: input, shape index: {}]
  %s9 = inlined_call_operand.<no memory space> [shape: f32[1,1], index: 9, kind: input, shape index: {}]
  %s10 = inlined_call_operand.hbm [shape: f32[2,1,62], index: 10, kind: output, shape index: {}]
  %s11 = sld [smem:[#allocation0]]
  $region73: #{manner_block_forward.11} parent=0
    _
  %s13 = ssub.s32 1, %s11
  %s14 = scalar_select 0, %s13, %s11
  %v15 = vstv %s9
  %16 = vst [vmem:[#allocation3] sm:$0x1] %v15
  $region1: #{manner_block_forward.11} parent=0
    #allocation4 [shape = 'u8[1024]{0}', space=vmem, size = 0x400, scoped, tag = 'output window, operand 0']
    #allocation5 [shape = 's32[2]{0}', space=sflag, size = 0x8, scoped, tag = 'scoped memory for manner_block_forward.11']
    %17 = vsyncpa [#allocation5], 0
    %s18 = scalar_lea.sflag [#allocation5], 1
    %19 = vsyncpa %s18, 0
    loop: start=0, step=1, limit=4
    $region2: #{manner_block_forward.11} parent=1 // loop_pre_header
      _
    $region3: #{manner_block_forward.11} parent=1 // loop_header
      %s21 = sphi 0, %s25
      %p22 = scmp.ge.s32.totalorder %s21, 4
      %s31 = sphi 0, %s33
      %s34 = sphi 0, %s31
      %s35 = sphi 0, %s34
      %s51 = sphi 0, %s35
      %s57 = sphi 0, %s59
      %s60 = sphi 0, %s57
      %s61 = sphi 0, %s60
      %s77 = sphi 0, %s61
      %s81 = sphi 0, %s81
      %s83 = sphi 0, %s81
      %s84 = sphi 0, %s83
      %s98 = sphi 0, %s84
      %s102 = sphi 0, %s102
      %s104 = sphi 0, %s102
      %s105 = sphi 0, %s104
      %s119 = sphi 0, %s105
      %s123 = sphi 0, %s123
      %s125 = sphi 0, %s123
      %s126 = sphi 0, %s125
      %s140 = sphi 0, %s126
      %s144 = sphi 0, %s144
      %s146 = sphi 0, %s144
      %s147 = sphi 0, %s146
      %s161 = sphi 0, %s147
      %s165 = sphi 0, %s165
      %s167 = sphi 0, %s165
      %s168 = sphi 0, %s167
      %s182 = sphi 0, %s168
      %s186 = sphi 0, %s186
      %s188 = sphi 0, %s186
      %s189 = sphi 0, %s188
      %s203 = sphi 0, %s189
      %s207 = sphi 0, %s207
      %s209 = sphi 0, %s207
      %s210 = sphi 0, %s209
      %s224 = sphi 0, %s210
      %s228 = sphi 0, %s228
      %s230 = sphi 0, %s228
      %s231 = sphi 0, %s230
      %s245 = sphi 0, %s231
      %s251 = sphi 0, %s253
      %s254 = sphi 0, %s251
      %s255 = sphi 0, %s254
      %s271 = sphi 0, %s255
    $region4: #{manner_block_forward.11} parent=1 // loop_header_branch
      %24 = sbr.rel (%p22) target = $region8
    $region5: #{manner_block_forward.11} parent=1 // loop_body
      %s26 = ssub.s32 %s21, 1
      %s27 = ssub.s32 %s21, 2
      %s28 = sadd.s32 %s21, 1
      %s29 = ssub.s32 %s21, %s28
      %p30 = scmp.eq.s32.totalorder %s29, 0
      %s32 = sadd.s32 %s31, 1
      %s33 = scalar_select %p30, %s31, %s32
      %p36 = pneg %p30
      %p37 = scmp.eq.s32.totalorder %s21, 1
      %p38 = por %p36, %p37
      %p39 = scmp.ne.s32.totalorder %s31, %s34
      %p40 = scmp.eq.s32.totalorder %s21, 0
      %p41 = por %p39, %p40
      %p42 = scmp.ne.s32.totalorder %s31, %s34
      %p43 = scmp.eq.s32.totalorder %s26, 1
      %p44 = por %p42, %p43
      %p45 = scmp.ne.s32.totalorder %s34, %s35
      %p46 = scmp.eq.s32.totalorder %s26, 0
      %p47 = por %p45, %p46
      %p48 = scmp.ne.s32.totalorder %s34, %s35
      %p49 = scmp.eq.s32.totalorder %s27, 1
      %p50 = por %p48, %p49
      %p52 = scmp.ne.s32.totalorder %s35, %s51
      %p53 = scmp.eq.s32.totalorder %s27, 0
      %p54 = por %p52, %p53
      %s55 = ssub.s32 %s21, %s28
      %p56 = scmp.eq.s32.totalorder %s55, 0
      %s58 = sadd.s32 %s57, 1
      %s59 = scalar_select %p56, %s57, %s58
      %p62 = pneg %p56
      %p63 = scmp.eq.s32.totalorder %s21, 1
      %p64 = por %p62, %p63
      %p65 = scmp.ne.s32.totalorder %s57, %s60
      %p66 = scmp.eq.s32.totalorder %s21, 0
      %p67 = por %p65, %p66
      %p68 = scmp.ne.s32.totalorder %s57, %s60
      %p69 = scmp.eq.s32.totalorder %s26, 1
      %p70 = por %p68, %p69
      %p71 = scmp.ne.s32.totalorder %s60, %s61
      %p72 = scmp.eq.s32.totalorder %s26, 0
      %p73 = por %p71, %p72
      %p74 = scmp.ne.s32.totalorder %s60, %s61
      %p75 = scmp.eq.s32.totalorder %s27, 1
      %p76 = por %p74, %p75
      %p78 = scmp.ne.s32.totalorder %s61, %s77
      %p79 = scmp.eq.s32.totalorder %s27, 0
      %p80 = por %p78, %p79
      %s82 = sadd.s32 %s81, 1
      %p85 = scmp.eq.s32.totalorder %s21, 1
      %p86 = scmp.ne.s32.totalorder %s81, %s83
      %p87 = scmp.eq.s32.totalorder %s21, 0
      %p88 = por %p86, %p87
      %p89 = scmp.ne.s32.totalorder %s81, %s83
      %p90 = scmp.eq.s32.totalorder %s26, 1
      %p91 = por %p89, %p90
      %p92 = scmp.ne.s32.totalorder %s83, %s84
      %p93 = scmp.eq.s32.totalorder %s26, 0
      %p94 = por %p92, %p93
      %p95 = scmp.ne.s32.totalorder %s83, %s84
      %p96 = scmp.eq.s32.totalorder %s27, 1
      %p97 = por %p95, %p96
      %p99 = scmp.ne.s32.totalorder %s84, %s98
      %p100 = scmp.eq.s32.totalorder %s27, 0
      %p101 = por %p99, %p100
      %s103 = sadd.s32 %s102, 1
      %p106 = scmp.eq.s32.totalorder %s21, 1
      %p107 = scmp.ne.s32.totalorder %s102, %s104
      %p108 = scmp.eq.s32.totalorder %s21, 0
      %p109 = por %p107, %p108
      %p110 = scmp.ne.s32.totalorder %s102, %s104
      %p111 = scmp.eq.s32.totalorder %s26, 1
      %p112 = por %p110, %p111
      %p113 = scmp.ne.s32.totalorder %s104, %s105
      %p114 = scmp.eq.s32.totalorder %s26, 0
      %p115 = por %p113, %p114
      %p116 = scmp.ne.s32.totalorder %s104, %s105
      %p117 = scmp.eq.s32.totalorder %s27, 1
      %p118 = por %p116, %p117
      %p120 = scmp.ne.s32.totalorder %s105, %s119
      %p121 = scmp.eq.s32.totalorder %s27, 0
      %p122 = por %p120, %p121
      %s124 = sadd.s32 %s123, 1
      %p127 = scmp.eq.s32.totalorder %s21, 1
      %p128 = scmp.ne.s32.totalorder %s123, %s125
      %p129 = scmp.eq.s32.totalorder %s21, 0
      %p130 = por %p128, %p129
      %p131 = scmp.ne.s32.totalorder %s123, %s125
      %p132 = scmp.eq.s32.totalorder %s26, 1
      %p133 = por %p131, %p132
      %p134 = scmp.ne.s32.totalorder %s125, %s126
      %p135 = scmp.eq.s32.totalorder %s26, 0
      %p136 = por %p134, %p135
      %p137 = scmp.ne.s32.totalorder %s125, %s126
      %p138 = scmp.eq.s32.totalorder %s27, 1
      %p139 = por %p137, %p138
      %p141 = scmp.ne.s32.totalorder %s126, %s140
      %p142 = scmp.eq.s32.totalorder %s27, 0
      %p143 = por %p141, %p142
      %s145 = sadd.s32 %s144, 1
      %p148 = scmp.eq.s32.totalorder %s21, 1
      %p149 = scmp.ne.s32.totalorder %s144, %s146
      %p150 = scmp.eq.s32.totalorder %s21, 0
      %p151 = por %p149, %p150
      %p152 = scmp.ne.s32.totalorder %s144, %s146
      %p153 = scmp.eq.s32.totalorder %s26, 1
      %p154 = por %p152, %p153
      %p155 = scmp.ne.s32.totalorder %s146, %s147
      %p156 = scmp.eq.s32.totalorder %s26, 0
      %p157 = por %p155, %p156
      %p158 = scmp.ne.s32.totalorder %s146, %s147
      %p159 = scmp.eq.s32.totalorder %s27, 1
      %p160 = por %p158, %p159
      %p162 = scmp.ne.s32.totalorder %s147, %s161
      %p163 = scmp.eq.s32.totalorder %s27, 0
      %p164 = por %p162, %p163
      %s166 = sadd.s32 %s165, 1
      %p169 = scmp.eq.s32.totalorder %s21, 1
      %p170 = scmp.ne.s32.totalorder %s165, %s167
      %p171 = scmp.eq.s32.totalorder %s21, 0
      %p172 = por %p170, %p171
      %p173 = scmp.ne.s32.totalorder %s165, %s167
      %p174 = scmp.eq.s32.totalorder %s26, 1
      %p175 = por %p173, %p174
      %p176 = scmp.ne.s32.totalorder %s167, %s168
      %p177 = scmp.eq.s32.totalorder %s26, 0
      %p178 = por %p176, %p177
      %p179 = scmp.ne.s32.totalorder %s167, %s168
      %p180 = scmp.eq.s32.totalorder %s27, 1
      %p181 = por %p179, %p180
      %p183 = scmp.ne.s32.totalorder %s168, %s182
      %p184 = scmp.eq.s32.totalorder %s27, 0
      %p185 = por %p183, %p184
      %s187 = sadd.s32 %s186, 1
      %p190 = scmp.eq.s32.totalorder %s21, 1
      %p191 = scmp.ne.s32.totalorder %s186, %s188
      %p192 = scmp.eq.s32.totalorder %s21, 0
      %p193 = por %p191, %p192
      %p194 = scmp.ne.s32.totalorder %s186, %s188
      %p195 = scmp.eq.s32.totalorder %s26, 1
      %p196 = por %p194, %p195
      %p197 = scmp.ne.s32.totalorder %s188, %s189
      %p198 = scmp.eq.s32.totalorder %s26, 0
      %p199 = por %p197, %p198
      %p200 = scmp.ne.s32.totalorder %s188, %s189
      %p201 = scmp.eq.s32.totalorder %s27, 1
      %p202 = por %p200, %p201
      %p204 = scmp.ne.s32.totalorder %s189, %s203
      %p205 = scmp.eq.s32.totalorder %s27, 0
      %p206 = por %p204, %p205
      %s208 = sadd.s32 %s207, 1
      %p211 = scmp.eq.s32.totalorder %s21, 1
      %p212 = scmp.ne.s32.totalorder %s207, %s209
      %p213 = scmp.eq.s32.totalorder %s21, 0
      %p214 = por %p212, %p213
      %p215 = scmp.ne.s32.totalorder %s207, %s209
      %p216 = scmp.eq.s32.totalorder %s26, 1
      %p217 = por %p215, %p216
      %p218 = scmp.ne.s32.totalorder %s209, %s210
      %p219 = scmp.eq.s32.totalorder %s26, 0
      %p220 = por %p218, %p219
      %p221 = scmp.ne.s32.totalorder %s209, %s210
      %p222 = scmp.eq.s32.totalorder %s27, 1
      %p223 = por %p221, %p222
      %p225 = scmp.ne.s32.totalorder %s210, %s224
      %p226 = scmp.eq.s32.totalorder %s27, 0
      %p227 = por %p225, %p226
      %s229 = sadd.s32 %s228, 1
      %p232 = scmp.eq.s32.totalorder %s21, 1
      %p233 = scmp.ne.s32.totalorder %s228, %s230
      %p234 = scmp.eq.s32.totalorder %s21, 0
      %p235 = por %p233, %p234
      %p236 = scmp.ne.s32.totalorder %s228, %s230
      %p237 = scmp.eq.s32.totalorder %s26, 1
      %p238 = por %p236, %p237
      %p239 = scmp.ne.s32.totalorder %s230, %s231
      %p240 = scmp.eq.s32.totalorder %s26, 0
      %p241 = por %p239, %p240
      %p242 = scmp.ne.s32.totalorder %s230, %s231
      %p243 = scmp.eq.s32.totalorder %s27, 1
      %p244 = por %p242, %p243
      %p246 = scmp.ne.s32.totalorder %s231, %s245
      %p247 = scmp.eq.s32.totalorder %s27, 0
      %p248 = por %p246, %p247
      %s249 = ssub.s32 %s21, %s28
      %p250 = scmp.eq.s32.totalorder %s249, 0
      %s252 = sadd.s32 %s251, 1
      %s253 = scalar_select %p250, %s251, %s252
      %p256 = pneg %p250
      %p257 = scmp.eq.s32.totalorder %s21, 1
      %p258 = por %p256, %p257
      %p259 = scmp.ne.s32.totalorder %s251, %s254
      %p260 = scmp.eq.s32.totalorder %s21, 0
      %p261 = por %p259, %p260
      %p262 = scmp.ne.s32.totalorder %s251, %s254
      %p263 = scmp.eq.s32.totalorder %s26, 1
      %p264 = por %p262, %p263
      %p265 = scmp.ne.s32.totalorder %s254, %s255
      %p266 = scmp.eq.s32.totalorder %s26, 0
      %p267 = por %p265, %p266
      %p268 = scmp.ne.s32.totalorder %s254, %s255
      %p269 = scmp.eq.s32.totalorder %s27, 1
      %p270 = por %p268, %p269
      %p272 = scmp.ne.s32.totalorder %s255, %s271
      %p273 = scmp.eq.s32.totalorder %s27, 0
      %p274 = por %p272, %p273
      %p275 = scmp.le.s32.totalorder 1, %s21
      %p276 = scmp.lt.s32.totalorder %s21, 3
      %p277 = pnand %p275, %p276
      %p278 = pneg %p277
      // Predicated region
      $region9: #{manner_block_forward.11} parent=5 // pred_check
        _
      $region10: #{manner_block_forward.11} parent=5 // pred_check_branch
        %280 = sbr.rel (%p277) target = $region12
      $region11: #{manner_block_forward.11} parent=5 // pred_region
        %s281 = ssub.s32 %s21, 1
        // Predicated region
        $region13: #{manner_block_forward.11} parent=11 // pred_check
          %p282 = pneg %p94
        $region14: #{manner_block_forward.11} parent=11 // pred_check_branch
          %284 = sbr.rel (%p282) target = $region16
        $region15: #{manner_block_forward.11} parent=11 // pred_region
          _
        $region16: #{manner_block_forward.11} parent=11 // pred_fallthru
          _
        // Predicated region
        $region17: #{manner_block_forward.11} parent=11 // pred_check
          %p285 = pneg %p115
        $region18: #{manner_block_forward.11} parent=11 // pred_check_branch
          %287 = sbr.rel (%p285) target = $region20
        $region19: #{manner_block_forward.11} parent=11 // pred_region
          _
        $region20: #{manner_block_forward.11} parent=11 // pred_fallthru
          _
        // Predicated region
        $region21: #{manner_block_forward.11} parent=11 // pred_check
          %p288 = pneg %p136
        $region22: #{manner_block_forward.11} parent=11 // pred_check_branch
          %290 = sbr.rel (%p288) target = $region24
        $region23: #{manner_block_forward.11} parent=11 // pred_region
          _
        $region24: #{manner_block_forward.11} parent=11 // pred_fallthru
          _
        // Predicated region
        $region25: #{manner_block_forward.11} parent=11 // pred_check
          %p291 = pneg %p157
        $region26: #{manner_block_forward.11} parent=11 // pred_check_branch
          %293 = sbr.rel (%p291) target = $region28
        $region27: #{manner_block_forward.11} parent=11 // pred_region
          _
        $region28: #{manner_block_forward.11} parent=11 // pred_fallthru
          _
        // Predicated region
        $region29: #{manner_block_forward.11} parent=11 // pred_check
          %p294 = pneg %p178
        $region30: #{manner_block_forward.11} parent=11 // pred_check_branch
          %296 = sbr.rel (%p294) target = $region32
        $region31: #{manner_block_forward.11} parent=11 // pred_region
          _
        $region32: #{manner_block_forward.11} parent=11 // pred_fallthru
          _
        // Predicated region
        $region33: #{manner_block_forward.11} parent=11 // pred_check
          %p297 = pneg %p199
        $region34: #{manner_block_forward.11} parent=11 // pred_check_branch
          %299 = sbr.rel (%p297) target = $region36
        $region35: #{manner_block_forward.11} parent=11 // pred_region
          _
        $region36: #{manner_block_forward.11} parent=11 // pred_fallthru
          _
        // Predicated region
        $region37: #{manner_block_forward.11} parent=11 // pred_check
          %p300 = pneg %p220
        $region38: #{manner_block_forward.11} parent=11 // pred_check_branch
          %302 = sbr.rel (%p300) target = $region40
        $region39: #{manner_block_forward.11} parent=11 // pred_region
          _
        $region40: #{manner_block_forward.11} parent=11 // pred_fallthru
          _
        // Predicated region
        $region41: #{manner_block_forward.11} parent=11 // pred_check
          %p303 = pneg %p241
        $region42: #{manner_block_forward.11} parent=11 // pred_check_branch
          %305 = sbr.rel (%p303) target = $region44
        $region43: #{manner_block_forward.11} parent=11 // pred_region
          _
        $region44: #{manner_block_forward.11} parent=11 // pred_fallthru
          _
      $region12: #{manner_block_forward.11} parent=5 // pred_fallthru
        _
      %p306 = scmp.lt.s32.totalorder %s21, 2
      // Predicated region
      $region45: #{manner_block_forward.11} parent=5 // pred_check
        %p307 = pneg %p306
      $region46: #{manner_block_forward.11} parent=5 // pred_check_branch
        %309 = sbr.rel (%p307) target = $region48
      $region47: #{manner_block_forward.11} parent=5 // pred_region
        // Predicated region
        $region49: #{manner_block_forward.11} parent=47 // pred_check
          %p310 = pneg %p41
        $region50: #{manner_block_forward.11} parent=47 // pred_check_branch
          %312 = sbr.rel (%p310) target = $region52
        $region51: #{manner_block_forward.11} parent=47 // pred_region
          %p313 = scmp.lt.s32.totalorder %s21, 1
          %s314 = scalar_select %p313, %s21, 1
          %s315 = smul.addr %s314, 2
          %s316 = smul.addr %s315, 8
          %s317 = scalar_lea.vmem %s0, %s316
        $region52: #{manner_block_forward.11} parent=47 // pred_fallthru
          _
        // Predicated region
        $region53: #{manner_block_forward.11} parent=47 // pred_check
          %p318 = pneg %p67
        $region54: #{manner_block_forward.11} parent=47 // pred_check_branch
          %320 = sbr.rel (%p318) target = $region56
        $region55: #{manner_block_forward.11} parent=47 // pred_region
          %p321 = scmp.lt.s32.totalorder %s21, 1
          %s322 = scalar_select %p321, %s21, 1
          %s323 = smul.addr %s322, 2
          %s324 = smul.addr %s323, 8
          %s325 = scalar_lea.vmem %s1, %s324
        $region56: #{manner_block_forward.11} parent=47 // pred_fallthru
          _
      $region48: #{manner_block_forward.11} parent=5 // pred_fallthru
        _
      %p326 = scmp.le.s32.totalorder 1, %s21
      %p327 = scmp.lt.s32.totalorder %s21, 3
      %p328 = pnand %p326, %p327
      %p329 = pneg %p328
      // Predicated region
      $region57: #{manner_block_forward.11} parent=5 // pred_check
        _
      $region58: #{manner_block_forward.11} parent=5 // pred_check_branch
        %331 = sbr.rel (%p328) target = $region60
      $region59: #{manner_block_forward.11} parent=5 // pred_region
        %s332 = ssub.s32 %s21, 1
        %p333 = scmp.lt.s32.totalorder %s26, 1
        %s334 = scalar_select %p333, %s26, 1
        %s335 = smul.addr %s334, 2
        %s336 = smul.addr %s335, 8
        %s337 = scalar_lea.vmem %s0, %s336
        %p338 = pneg %p47
        %p339 = pneg %p44
        %p340 = scmp.lt.s32.totalorder %s26, 1
        %s341 = scalar_select %p340, %s26, 1
        %s342 = smul.addr %s341, 2
        %s343 = smul.addr %s342, 8
        %s344 = scalar_lea.vmem %s1, %s343
        %p345 = pneg %p73
        %p346 = pneg %p70
        %p347 = pneg %p94
        %p348 = pneg %p91
        %p349 = pneg %p115
        %p350 = pneg %p112
        %p351 = pneg %p136
        %p352 = pneg %p133
        %p353 = pneg %p157
        %p354 = pneg %p154
        %p355 = pneg %p178
        %p356 = pneg %p175
        %p357 = pneg %p199
        %p358 = pneg %p196
        %p359 = pneg %p220
        %p360 = pneg %p217
        %p361 = pneg %p241
        %p362 = pneg %p238
        %p363 = pneg %p267
        %p364 = pneg %p264
        %s365 = sand.u32 %s254, 1
        %s366 = scalar_lea.sflag [#allocation5], %s365
        %s367 = sand.u32 %s254, 1
        %s368 = scalar_lea.vmem [#allocation4], %s367
        %p369 = scmp.lt.s32.totalorder %s26, 1
        %s370 = scalar_select %p369, %s26, 1
        %s371 = smul.addr %s370, 2
        %s372 = smul.addr %s371, 8
        %s373 = scalar_lea.vmem %s0, %s372
        %p374 = scmp.lt.s32.totalorder %s26, 1
        %s375 = scalar_select %p374, %s26, 1
        %s376 = smul.addr %s375, 2
        %s377 = smul.addr %s376, 8
        %s378 = scalar_lea.vmem %s1, %s377
        %v379 = vld [vmem:[%s373] sm:$0xff]
        %v380 = vld [vmem:[%s373 + $0x8] sm:$0xff]
        %v381 = vld [vmem:[%s2] sm:$0xff]
        %v382 = vld [vmem:[%s2 + $0x8] sm:$0xff]
        %v383 = vld [vmem:[%s3] sm:$0xff]
        %v384 = vld [vmem:[%s3 + $0x8] sm:$0xff]
        %386 = vset.pattern.permute.xlu0 0
        %387 = vperm.xlu0 %386, %v383
        %v388 = vpop.permute.xlu0 %387
        %391 = vset.pattern.permute.xlu0 0
        %392 = vperm.xlu0 %391, %v384
        %v393 = vpop.permute.xlu0 %392
        %vm395 = vcmask 130048
        %v397 = vsel %vm395, %v381, 0
        %v400 = vsel %vm395, %v382, 0
        %402 = vmatprep.subr.mxu0 0.0
        %403 = vmatpush1.msra.mxu0 0.0
        %404 = vmatprep.subr.mxu0 0.0
        %405 = vmatpush1.msra.mxu0 0.0
        %406 = vmatprep.subr.mxu0 0.0
        %407 = vmatpush1.msra.mxu0 0.0
        %408 = vmatprep.subr.mxu0 0.0
        %409 = vmatpush1.msra.mxu0 0.0
        %410 = vmatprep.subr.mxu0 0.0
        %411 = vmatpush1.msra.mxu0 0.0
        %412 = vmatprep.subr.mxu0 0.0
        %413 = vmatpush1.msra.mxu0 0.0
        %414 = vmatprep.subr.mxu0 0.0
        %415 = vmatpush1.msra.mxu0 0.0
        %416 = vmatprep.subr.mxu0 0.0
        %417 = vmatpush1.msra.mxu0 0.0
        %418 = vmatprep.subr.mxu0 0.0
        %419 = vmatpush1.msra.mxu0 0.0
        %420 = vmatprep.subr.mxu0 0.0
        %421 = vmatpush1.msra.mxu0 0.0
        %422 = vmatprep.subr.mxu0 0.0
        %423 = vmatpush1.msra.mxu0 0.0
        %424 = vmatprep.subr.mxu0 0.0
        %425 = vmatpush1.msra.mxu0 0.0
        %426 = vmatprep.subr.mxu0 0.0
        %427 = vmatpush1.msra.mxu0 0.0
        %428 = vmatprep.subr.mxu0 0.0
        %429 = vmatpush1.msra.mxu0 0.0
        %430 = vmatprep.subr.mxu0 0.0
        %431 = vmatpush1.msra.mxu0 %v380
        %432 = vmatprep.subr.mxu0 0.0
        %433 = vmatpush1.msra.mxu0 %v379
        %434 = vmatprep.subr.mxu0 0.0
        %435 = vmatpush2.msra.mxu0 0.0
        %436 = vmatprep.subr.mxu0 0.0
        %437 = vmatpush2.msra.mxu0 0.0
        %438 = vmatprep.subr.mxu0 0.0
        %439 = vmatpush2.msra.mxu0 0.0
        %440 = vmatprep.subr.mxu0 0.0
        %441 = vmatpush2.msra.mxu0 0.0
        %442 = vmatprep.subr.mxu0 0.0
        %443 = vmatpush2.msra.mxu0 0.0
        %444 = vmatprep.subr.mxu0 0.0
        %445 = vmatpush2.msra.mxu0 0.0
        %446 = vmatprep.subr.mxu0 0.0
        %447 = vmatpush2.msra.mxu0 0.0
        %448 = vmatprep.subr.mxu0 0.0
        %449 = vmatpush2.msra.mxu0 0.0
        %450 = vmatprep.subr.mxu0 0.0
        %451 = vmatpush2.msra.mxu0 0.0
        %452 = vmatprep.subr.mxu0 0.0
        %453 = vmatpush2.msra.mxu0 0.0
        %454 = vmatprep.subr.mxu0 0.0
        %455 = vmatpush2.msra.mxu0 0.0
        %456 = vmatprep.subr.mxu0 0.0
        %457 = vmatpush2.msra.mxu0 0.0
        %458 = vmatprep.subr.mxu0 0.0
        %459 = vmatpush2.msra.mxu0 0.0
        %460 = vmatprep.subr.mxu0 0.0
        %461 = vmatpush2.msra.mxu0 0.0
        %462 = vmatprep.subr.mxu0 0.0
        %463 = vmatpush2.msra.mxu0 0.0
        %464 = vmatprep.subr.mxu0 0.0
        %465 = vmatpush2.msra.mxu0 0.0
        %466 = vmatprep.mubr.f32.mxu0 0.0
        %467 = vmatmul.mubr.f32.gmra.mxu0 %v397
        %v468 = vpop.f32.mrf.mxu0
        %v469 = vadd.f32 %v388, %v468
        %v470 = vpop.f32.mrf.mxu0
        %471 = vmatprep.mubr.f32.mxu0 0.0
        %472 = vmatmul.mubr.f32.gmra.mxu0 %v400
        %v473 = vpop.f32.mrf.mxu0
        %v474 = vadd.f32 %v393, %v473
        %v475 = vpop.f32.mrf.mxu0
        %476 = vdwg.mxu0
        %v477 = vtanh.pop %v469
        %v478 = vtanh.pop %v474
        %v479 = vld [vmem:[%s4] sm:$0xff]
        %v480 = vld [vmem:[%s4 + $0x8] sm:$0xff]
        %v481 = vld [vmem:[%s5] sm:$0xff]
        %v482 = vld [vmem:[%s5 + $0x8] sm:$0xff]
        %484 = vset.pattern.permute.xlu0 0
        %485 = vperm.xlu0 %484, %v481
        %v486 = vpop.permute.xlu0 %485
        %489 = vset.pattern.permute.xlu0 0
        %490 = vperm.xlu0 %489, %v482
        %v491 = vpop.permute.xlu0 %490
        %v494 = vsel %vm395, %v479, 0
        %v497 = vsel %vm395, %v480, 0
        %499 = vmatprep.subr.mxu0 0.0
        %500 = vmatpush1.msra.mxu0 0.0
        %501 = vmatprep.subr.mxu0 0.0
        %502 = vmatpush1.msra.mxu0 0.0
        %503 = vmatprep.subr.mxu0 0.0
        %504 = vmatpush1.msra.mxu0 0.0
        %505 = vmatprep.subr.mxu0 0.0
        %506 = vmatpush1.msra.mxu0 0.0
        %507 = vmatprep.subr.mxu0 0.0
        %508 = vmatpush1.msra.mxu0 0.0
        %509 = vmatprep.subr.mxu0 0.0
        %510 = vmatpush1.msra.mxu0 0.0
        %511 = vmatprep.subr.mxu0 0.0
        %512 = vmatpush1.msra.mxu0 0.0
        %513 = vmatprep.subr.mxu0 0.0
        %514 = vmatpush1.msra.mxu0 0.0
        %515 = vmatprep.subr.mxu0 0.0
        %516 = vmatpush1.msra.mxu0 0.0
        %517 = vmatprep.subr.mxu0 0.0
        %518 = vmatpush1.msra.mxu0 0.0
        %519 = vmatprep.subr.mxu0 0.0
        %520 = vmatpush1.msra.mxu0 0.0
        %521 = vmatprep.subr.mxu0 0.0
        %522 = vmatpush1.msra.mxu0 0.0
        %523 = vmatprep.subr.mxu0 0.0
        %524 = vmatpush1.msra.mxu0 0.0
        %525 = vmatprep.subr.mxu0 0.0
        %526 = vmatpush1.msra.mxu0 0.0
        %527 = vmatprep.subr.mxu0 0.0
        %528 = vmatpush1.msra.mxu0 %v380
        %529 = vmatprep.subr.mxu0 0.0
        %530 = vmatpush1.msra.mxu0 %v379
        %531 = vmatprep.subr.mxu0 0.0
        %532 = vmatpush2.msra.mxu0 0.0
        %533 = vmatprep.subr.mxu0 0.0
        %534 = vmatpush2.msra.mxu0 0.0
        %535 = vmatprep.subr.mxu0 0.0
        %536 = vmatpush2.msra.mxu0 0.0
        %537 = vmatprep.subr.mxu0 0.0
        %538 = vmatpush2.msra.mxu0 0.0
        %539 = vmatprep.subr.mxu0 0.0
        %540 = vmatpush2.msra.mxu0 0.0
        %541 = vmatprep.subr.mxu0 0.0
        %542 = vmatpush2.msra.mxu0 0.0
        %543 = vmatprep.subr.mxu0 0.0
        %544 = vmatpush2.msra.mxu0 0.0
        %545 = vmatprep.subr.mxu0 0.0
        %546 = vmatpush2.msra.mxu0 0.0
        %547 = vmatprep.subr.mxu0 0.0
        %548 = vmatpush2.msra.mxu0 0.0
        %549 = vmatprep.subr.mxu0 0.0
        %550 = vmatpush2.msra.mxu0 0.0
        %551 = vmatprep.subr.mxu0 0.0
        %552 = vmatpush2.msra.mxu0 0.0
        %553 = vmatprep.subr.mxu0 0.0
        %554 = vmatpush2.msra.mxu0 0.0
        %555 = vmatprep.subr.mxu0 0.0
        %556 = vmatpush2.msra.mxu0 0.0
        %557 = vmatprep.subr.mxu0 0.0
        %558 = vmatpush2.msra.mxu0 0.0
        %559 = vmatprep.subr.mxu0 0.0
        %560 = vmatpush2.msra.mxu0 0.0
        %561 = vmatprep.subr.mxu0 0.0
        %562 = vmatpush2.msra.mxu0 0.0
        %563 = vmatprep.mubr.f32.mxu0 0.0
        %564 = vmatmul.mubr.f32.gmra.mxu0 %v494
        %v565 = vpop.f32.mrf.mxu0
        %v566 = vadd.f32 %v486, %v565
        %v567 = vpop.f32.mrf.mxu0
        %568 = vmatprep.mubr.f32.mxu0 0.0
        %569 = vmatmul.mubr.f32.gmra.mxu0 %v497
        %v570 = vpop.f32.mrf.mxu0
        %v571 = vadd.f32 %v491, %v570
        %v572 = vpop.f32.mrf.mxu0
        %573 = vdwg.mxu0
        %v574 = vxor.u32 %v566, 2147483648
        %v575 = vxor.u32 %v571, 2147483648
        %v576 = vmul.f32 %v574, 1.442695
        %v577 = vpow.pop %v576
        %v578 = vmul.f32 %v575, 1.442695
        %v579 = vpow.pop %v578
        %v580 = vadd.f32 %v577, 1.0
        %v581 = vadd.f32 %v579, 1.0
        %v582 = vrcp.pop %v580
        %v583 = vmul.f32 1.0, %v582
        %v584 = vrcp.pop %v581
        %v585 = vmul.f32 1.0, %v584
        %v586 = vld [vmem:[%s6] sm:$0xff]
        %v587 = vld [vmem:[%s6 + $0x8] sm:$0xff]
        %v588 = vmul.f32 %v477, %v583
        %v589 = vmul.f32 %v478, %v585
        %v590 = vld [vmem:[%s7] sm:$0xff]
        %v591 = vld [vmem:[%s7 + $0x8] sm:$0xff]
        %593 = vset.pattern.permute.xlu0 0
        %594 = vperm.xlu0 %593, %v590
        %v595 = vpop.permute.xlu0 %594
        %598 = vset.pattern.permute.xlu0 0
        %599 = vperm.xlu0 %598, %v591
        %v600 = vpop.permute.xlu0 %599
        %v603 = vsel %vm395, %v586, 0
        %v606 = vsel %vm395, %v587, 0
        %608 = vmatprep.subr.mxu0 0.0
        %609 = vmatpush1.msra.mxu0 0.0
        %610 = vmatprep.subr.mxu0 0.0
        %611 = vmatpush1.msra.mxu0 0.0
        %612 = vmatprep.subr.mxu0 0.0
        %613 = vmatpush1.msra.mxu0 0.0
        %614 = vmatprep.subr.mxu0 0.0
        %615 = vmatpush1.msra.mxu0 0.0
        %616 = vmatprep.subr.mxu0 0.0
        %617 = vmatpush1.msra.mxu0 0.0
        %618 = vmatprep.subr.mxu0 0.0
        %619 = vmatpush1.msra.mxu0 0.0
        %620 = vmatprep.subr.mxu0 0.0
        %621 = vmatpush1.msra.mxu0 0.0
        %622 = vmatprep.subr.mxu0 0.0
        %623 = vmatpush1.msra.mxu0 0.0
        %624 = vmatprep.subr.mxu0 0.0
        %625 = vmatpush1.msra.mxu0 0.0
        %626 = vmatprep.subr.mxu0 0.0
        %627 = vmatpush1.msra.mxu0 0.0
        %628 = vmatprep.subr.mxu0 0.0
        %629 = vmatpush1.msra.mxu0 0.0
        %630 = vmatprep.subr.mxu0 0.0
        %631 = vmatpush1.msra.mxu0 0.0
        %632 = vmatprep.subr.mxu0 0.0
        %633 = vmatpush1.msra.mxu0 0.0
        %634 = vmatprep.subr.mxu0 0.0
        %635 = vmatpush1.msra.mxu0 0.0
        %636 = vmatprep.subr.mxu0 0.0
        %637 = vmatpush1.msra.mxu0 %v589
        %638 = vmatprep.subr.mxu0 0.0
        %639 = vmatpush1.msra.mxu0 %v588
        %640 = vmatprep.subr.mxu0 0.0
        %641 = vmatpush2.msra.mxu0 0.0
        %642 = vmatprep.subr.mxu0 0.0
        %643 = vmatpush2.msra.mxu0 0.0
        %644 = vmatprep.subr.mxu0 0.0
        %645 = vmatpush2.msra.mxu0 0.0
        %646 = vmatprep.subr.mxu0 0.0
        %647 = vmatpush2.msra.mxu0 0.0
        %648 = vmatprep.subr.mxu0 0.0
        %649 = vmatpush2.msra.mxu0 0.0
        %650 = vmatprep.subr.mxu0 0.0
        %651 = vmatpush2.msra.mxu0 0.0
        %652 = vmatprep.subr.mxu0 0.0
        %653 = vmatpush2.msra.mxu0 0.0
        %654 = vmatprep.subr.mxu0 0.0
        %655 = vmatpush2.msra.mxu0 0.0
        %656 = vmatprep.subr.mxu0 0.0
        %657 = vmatpush2.msra.mxu0 0.0
        %658 = vmatprep.subr.mxu0 0.0
        %659 = vmatpush2.msra.mxu0 0.0
        %660 = vmatprep.subr.mxu0 0.0
        %661 = vmatpush2.msra.mxu0 0.0
        %662 = vmatprep.subr.mxu0 0.0
        %663 = vmatpush2.msra.mxu0 0.0
        %664 = vmatprep.subr.mxu0 0.0
        %665 = vmatpush2.msra.mxu0 0.0
        %666 = vmatprep.subr.mxu0 0.0
        %667 = vmatpush2.msra.mxu0 0.0
        %668 = vmatprep.subr.mxu0 0.0
        %669 = vmatpush2.msra.mxu0 0.0
        %670 = vmatprep.subr.mxu0 0.0
        %671 = vmatpush2.msra.mxu0 0.0
        %672 = vmatprep.mubr.f32.mxu0 0.0
        %673 = vmatmul.mubr.f32.gmra.mxu0 %v603
        %v674 = vpop.f32.mrf.mxu0
        %v675 = vadd.f32 %v595, %v674
        %v676 = vpop.f32.mrf.mxu0
        %677 = vmatprep.mubr.f32.mxu0 0.0
        %678 = vmatmul.mubr.f32.gmra.mxu0 %v606
        %v679 = vpop.f32.mrf.mxu0
        %v680 = vadd.f32 %v600, %v679
        %v681 = vpop.f32.mrf.mxu0
        %682 = vdwg.mxu0
        %v683 = vmax.f32 %v675, 0.0
        %v684 = vmax.f32 %v680, 0.0
        %v685 = vld [vmem:[%s378] sm:$0xff]
        %v686 = vld [vmem:[%s378 + $0x8] sm:$0xff]
        %v687 = vmul.f32 %v685, %v683
        %v688 = vmul.f32 %v686, %v684
        %vm689 = vcmask 7168
        %690 = vst.msk [vmem:[#allocation2] sm:$0xff] %vm689, 0.0
        %691 = vst.msk [vmem:[#allocation2 + $0x8] sm:$0xff] %vm689, 0.0
        %vm692 = vcmask 523768
        %693 = vst.msk [vmem:[#allocation2] sm:$0xff] %vm692, 0.0
        %694 = vst.msk [vmem:[#allocation2 + $0x8] sm:$0xff] %vm692, 0.0
        %697 = vrot.lane.b32.xlu0 %v687, 1
        %v698 = vpop.permute.xlu0 %697
        %699 = vrot.lane.b32.xlu0 %v688, 1
        %v700 = vpop.permute.xlu0 %699
        %vm703 = vcmask 515080
        %704 = vst.msk [vmem:[#allocation2] sm:$0xff] %vm703, %v698
        %705 = vst.msk [vmem:[#allocation2 + $0x8] sm:$0xff] %vm703, %v700
        %v706 = vld [vmem:[%s8] sm:$0x1]
        %v707 = vld [vmem:[#allocation2] sm:$0xff]
        %v708 = vld [vmem:[#allocation2 + $0x8] sm:$0xff]
        %s709 = scalar_lea.vmem %s8, 1
        %v710 = vld [vmem:[%s709] sm:$0x1]
        %713 = vrot.lane.b32.xlu0 %v707, 127
        %v714 = vpop.permute.xlu0 %713
        %715 = vrot.lane.b32.xlu0 %v708, 127
        %v716 = vpop.permute.xlu0 %715
        %v720 = vsel %vm395, %v710, 0
        %722 = vmatprep.subr.mxu0 0.0
        %723 = vmatpush1.msra.mxu0 0.0
        %724 = vmatprep.subr.mxu0 0.0
        %725 = vmatpush1.msra.mxu0 0.0
        %726 = vmatprep.subr.mxu0 0.0
        %727 = vmatpush1.msra.mxu0 0.0
        %728 = vmatprep.subr.mxu0 0.0
        %729 = vmatpush1.msra.mxu0 0.0
        %730 = vmatprep.subr.mxu0 0.0
        %731 = vmatpush1.msra.mxu0 0.0
        %732 = vmatprep.subr.mxu0 0.0
        %733 = vmatpush1.msra.mxu0 0.0
        %734 = vmatprep.subr.mxu0 0.0
        %735 = vmatpush1.msra.mxu0 0.0
        %736 = vmatprep.subr.mxu0 0.0
        %737 = vmatpush1.msra.mxu0 0.0
        %738 = vmatprep.subr.mxu0 0.0
        %739 = vmatpush1.msra.mxu0 0.0
        %740 = vmatprep.subr.mxu0 0.0
        %741 = vmatpush1.msra.mxu0 0.0
        %742 = vmatprep.subr.mxu0 0.0
        %743 = vmatpush1.msra.mxu0 0.0
        %744 = vmatprep.subr.mxu0 0.0
        %745 = vmatpush1.msra.mxu0 0.0
        %746 = vmatprep.subr.mxu0 0.0
        %747 = vmatpush1.msra.mxu0 0.0
        %748 = vmatprep.subr.mxu0 0.0
        %749 = vmatpush1.msra.mxu0 0.0
        %750 = vmatprep.subr.mxu0 0.0
        %751 = vmatpush1.msra.mxu0 %v716
        %752 = vmatprep.subr.mxu0 0.0
        %753 = vmatpush1.msra.mxu0 %v714
        %754 = vmatprep.subr.mxu0 0.0
        %755 = vmatpush2.msra.mxu0 0.0
        %756 = vmatprep.subr.mxu0 0.0
        %757 = vmatpush2.msra.mxu0 0.0
        %758 = vmatprep.subr.mxu0 0.0
        %759 = vmatpush2.msra.mxu0 0.0
        %760 = vmatprep.subr.mxu0 0.0
        %761 = vmatpush2.msra.mxu0 0.0
        %762 = vmatprep.subr.mxu0 0.0
        %763 = vmatpush2.msra.mxu0 0.0
        %764 = vmatprep.subr.mxu0 0.0
        %765 = vmatpush2.msra.mxu0 0.0
        %766 = vmatprep.subr.mxu0 0.0
        %767 = vmatpush2.msra.mxu0 0.0
        %768 = vmatprep.subr.mxu0 0.0
        %769 = vmatpush2.msra.mxu0 0.0
        %770 = vmatprep.subr.mxu0 0.0
        %771 = vmatpush2.msra.mxu0 0.0
        %772 = vmatprep.subr.mxu0 0.0
        %773 = vmatpush2.msra.mxu0 0.0
        %774 = vmatprep.subr.mxu0 0.0
        %775 = vmatpush2.msra.mxu0 0.0
        %776 = vmatprep.subr.mxu0 0.0
        %777 = vmatpush2.msra.mxu0 0.0
        %778 = vmatprep.subr.mxu0 0.0
        %779 = vmatpush2.msra.mxu0 0.0
        %780 = vmatprep.subr.mxu0 0.0
        %781 = vmatpush2.msra.mxu0 0.0
        %782 = vmatprep.subr.mxu0 0.0
        %783 = vmatpush2.msra.mxu0 0.0
        %784 = vmatprep.subr.mxu0 0.0
        %785 = vmatpush2.msra.mxu0 0.0
        %786 = vmatprep.mubr.f32.mxu0 0.0
        %787 = vmatmul.mubr.f32.gmra.mxu0 %v720
        %v788 = vpop.f32.mrf.mxu0
        %v789 = vadd.f32 0.0, %v788
        %v790 = vpop.f32.mrf.mxu0
        %791 = vdwg.mxu0
        %v793 = vsel %vm395, %v706, 0
        %795 = vmatprep.subr.mxu0 0.0
        %796 = vmatpush1.msra.mxu0 0.0
        %797 = vmatprep.subr.mxu0 0.0
        %798 = vmatpush1.msra.mxu0 0.0
        %799 = vmatprep.subr.mxu0 0.0
        %800 = vmatpush1.msra.mxu0 0.0
        %801 = vmatprep.subr.mxu0 0.0
        %802 = vmatpush1.msra.mxu0 0.0
        %803 = vmatprep.subr.mxu0 0.0
        %804 = vmatpush1.msra.mxu0 0.0
        %805 = vmatprep.subr.mxu0 0.0
        %806 = vmatpush1.msra.mxu0 0.0
        %807 = vmatprep.subr.mxu0 0.0
        %808 = vmatpush1.msra.mxu0 0.0
        %809 = vmatprep.subr.mxu0 0.0
        %810 = vmatpush1.msra.mxu0 0.0
        %811 = vmatprep.subr.mxu0 0.0
        %812 = vmatpush1.msra.mxu0 0.0
        %813 = vmatprep.subr.mxu0 0.0
        %814 = vmatpush1.msra.mxu0 0.0
        %815 = vmatprep.subr.mxu0 0.0
        %816 = vmatpush1.msra.mxu0 0.0
        %817 = vmatprep.subr.mxu0 0.0
        %818 = vmatpush1.msra.mxu0 0.0
        %819 = vmatprep.subr.mxu0 0.0
        %820 = vmatpush1.msra.mxu0 0.0
        %821 = vmatprep.subr.mxu0 0.0
        %822 = vmatpush1.msra.mxu0 0.0
        %823 = vmatprep.subr.mxu0 0.0
        %824 = vmatpush1.msra.mxu0 %v708
        %825 = vmatprep.subr.mxu0 0.0
        %826 = vmatpush1.msra.mxu0 %v707
        %827 = vmatprep.subr.mxu0 0.0
        %828 = vmatpush2.msra.mxu0 0.0
        %829 = vmatprep.subr.mxu0 0.0
        %830 = vmatpush2.msra.mxu0 0.0
        %831 = vmatprep.subr.mxu0 0.0
        %832 = vmatpush2.msra.mxu0 0.0
        %833 = vmatprep.subr.mxu0 0.0
        %834 = vmatpush2.msra.mxu0 0.0
        %835 = vmatprep.subr.mxu0 0.0
        %836 = vmatpush2.msra.mxu0 0.0
        %837 = vmatprep.subr.mxu0 0.0
        %838 = vmatpush2.msra.mxu0 0.0
        %839 = vmatprep.subr.mxu0 0.0
        %840 = vmatpush2.msra.mxu0 0.0
        %841 = vmatprep.subr.mxu0 0.0
        %842 = vmatpush2.msra.mxu0 0.0
        %843 = vmatprep.subr.mxu0 0.0
        %844 = vmatpush2.msra.mxu0 0.0
        %845 = vmatprep.subr.mxu0 0.0
        %846 = vmatpush2.msra.mxu0 0.0
        %847 = vmatprep.subr.mxu0 0.0
        %848 = vmatpush2.msra.mxu0 0.0
        %849 = vmatprep.subr.mxu0 0.0
        %850 = vmatpush2.msra.mxu0 0.0
        %851 = vmatprep.subr.mxu0 0.0
        %852 = vmatpush2.msra.mxu0 0.0
        %853 = vmatprep.subr.mxu0 0.0
        %854 = vmatpush2.msra.mxu0 0.0
        %855 = vmatprep.subr.mxu0 0.0
        %856 = vmatpush2.msra.mxu0 0.0
        %857 = vmatprep.subr.mxu0 0.0
        %858 = vmatpush2.msra.mxu0 0.0
        %859 = vmatprep.mubr.f32.mxu0 0.0
        %860 = vmatmul.mubr.f32.gmra.mxu0 %v793
        %v861 = vpop.f32.mrf.mxu0
        %v862 = vadd.f32 %v789, %v861
        %v863 = vpop.f32.mrf.mxu0
        %864 = vdwg.mxu0
        %s865 = scalar_lea.vmem %s8, 2
        %v866 = vld [vmem:[%s865] sm:$0x1]
        %867 = vrot.lane.b32.xlu0 %v707, 126
        %v868 = vpop.permute.xlu0 %867
        %869 = vrot.lane.b32.xlu0 %v708, 126
        %v870 = vpop.permute.xlu0 %869
        %v874 = vsel %vm395, %v866, 0
        %876 = vmatprep.subr.mxu0 0.0
        %877 = vmatpush1.msra.mxu0 0.0
        %878 = vmatprep.subr.mxu0 0.0
        %879 = vmatpush1.msra.mxu0 0.0
        %880 = vmatprep.subr.mxu0 0.0
        %881 = vmatpush1.msra.mxu0 0.0
        %882 = vmatprep.subr.mxu0 0.0
        %883 = vmatpush1.msra.mxu0 0.0
        %884 = vmatprep.subr.mxu0 0.0
        %885 = vmatpush1.msra.mxu0 0.0
        %886 = vmatprep.subr.mxu0 0.0
        %887 = vmatpush1.msra.mxu0 0.0
        %888 = vmatprep.subr.mxu0 0.0
        %889 = vmatpush1.msra.mxu0 0.0
        %890 = vmatprep.subr.mxu0 0.0
        %891 = vmatpush1.msra.mxu0 0.0
        %892 = vmatprep.subr.mxu0 0.0
        %893 = vmatpush1.msra.mxu0 0.0
        %894 = vmatprep.subr.mxu0 0.0
        %895 = vmatpush1.msra.mxu0 0.0
        %896 = vmatprep.subr.mxu0 0.0
        %897 = vmatpush1.msra.mxu0 0.0
        %898 = vmatprep.subr.mxu0 0.0
        %899 = vmatpush1.msra.mxu0 0.0
        %900 = vmatprep.subr.mxu0 0.0
        %901 = vmatpush1.msra.mxu0 0.0
        %902 = vmatprep.subr.mxu0 0.0
        %903 = vmatpush1.msra.mxu0 0.0
        %904 = vmatprep.subr.mxu0 0.0
        %905 = vmatpush1.msra.mxu0 %v870
        %906 = vmatprep.subr.mxu0 0.0
        %907 = vmatpush1.msra.mxu0 %v868
        %908 = vmatprep.subr.mxu0 0.0
        %909 = vmatpush2.msra.mxu0 0.0
        %910 = vmatprep.subr.mxu0 0.0
        %911 = vmatpush2.msra.mxu0 0.0
        %912 = vmatprep.subr.mxu0 0.0
        %913 = vmatpush2.msra.mxu0 0.0
        %914 = vmatprep.subr.mxu0 0.0
        %915 = vmatpush2.msra.mxu0 0.0
        %916 = vmatprep.subr.mxu0 0.0
        %917 = vmatpush2.msra.mxu0 0.0
        %918 = vmatprep.subr.mxu0 0.0
        %919 = vmatpush2.msra.mxu0 0.0
        %920 = vmatprep.subr.mxu0 0.0
        %921 = vmatpush2.msra.mxu0 0.0
        %922 = vmatprep.subr.mxu0 0.0
        %923 = vmatpush2.msra.mxu0 0.0
        %924 = vmatprep.subr.mxu0 0.0
        %925 = vmatpush2.msra.mxu0 0.0
        %926 = vmatprep.subr.mxu0 0.0
        %927 = vmatpush2.msra.mxu0 0.0
        %928 = vmatprep.subr.mxu0 0.0
        %929 = vmatpush2.msra.mxu0 0.0
        %930 = vmatprep.subr.mxu0 0.0
        %931 = vmatpush2.msra.mxu0 0.0
        %932 = vmatprep.subr.mxu0 0.0
        %933 = vmatpush2.msra.mxu0 0.0
        %934 = vmatprep.subr.mxu0 0.0
        %935 = vmatpush2.msra.mxu0 0.0
        %936 = vmatprep.subr.mxu0 0.0
        %937 = vmatpush2.msra.mxu0 0.0
        %938 = vmatprep.subr.mxu0 0.0
        %939 = vmatpush2.msra.mxu0 0.0
        %940 = vmatprep.mubr.f32.mxu0 0.0
        %941 = vmatmul.mubr.f32.gmra.mxu0 %v874
        %v942 = vpop.f32.mrf.mxu0
        %v943 = vadd.f32 0.0, %v942
        %v944 = vpop.f32.mrf.mxu0
        %945 = vdwg.mxu0
        %v946 = vadd.f32 %v862, %v943
        %v947 = vld [vmem:[#allocation3] sm:$0x1]
        %949 = vset.pattern.permute.xlu0 0
        %950 = vperm.xlu0 %949, %v947
        %v951 = vpop.permute.xlu0 %950
        %v953 = vlaneseq
        %v954 = vshrl.u32 %v953, 7
        %v955 = vsub.s32 0, %v954
        %v956 = vrot.slane %v951, %v955
        %v957 = vadd.f32 %v946, %v956
        %vm958 = vcmask 499712
        %959 = vst.msk [vmem:[%s368] sm:$0x1] %vm958, %v957
        %s960 = sand.u32 %s254, 1
        %s961 = scalar_lea.sflag [#allocation5], %s960
        %s962 = sand.u32 %s254, 1
        %s963 = scalar_lea.vmem [#allocation4], %s962
        // Predicated region
        $region61: #{manner_block_forward.11} parent=59 // pred_check
          %p964 = pneg %p264
        $region62: #{manner_block_forward.11} parent=59 // pred_check_branch
          %966 = sbr.rel (%p964) target = $region64
        $region63: #{manner_block_forward.11} parent=59 // pred_region
          %s968 = ssub.s32 16, 16
          %969 = vsyncadd %s961, %s968
          %s970 = smul.addr %s26, 16
          %s971 = scalar_lea.hbm %s10, %s970
          %s973 = sshll.u32 %s963, 4
          %s974 = int_to_ptr.vmem [resolvable:$true] %s973
          %976 = dma.vmem_to_hbm [thread:$0]  %s974, 16, %s971, %s961
        $region64: #{manner_block_forward.11} parent=59 // pred_fallthru
          _
      $region60: #{manner_block_forward.11} parent=5 // pred_fallthru
        _
      %p977 = scmp.le.s32.totalorder 2, %s21
      // Predicated region
      $region65: #{manner_block_forward.11} parent=5 // pred_check
        %p978 = pneg %p977
      $region66: #{manner_block_forward.11} parent=5 // pred_check_branch
        %980 = sbr.rel (%p978) target = $region68
      $region67: #{manner_block_forward.11} parent=5 // pred_region
        %s981 = ssub.s32 %s21, 2
        // Predicated region
        $region69: #{manner_block_forward.11} parent=67 // pred_check
          %p982 = pneg %p270
        $region70: #{manner_block_forward.11} parent=67 // pred_check_branch
          %984 = sbr.rel (%p982) target = $region72
        $region71: #{manner_block_forward.11} parent=67 // pred_region
          %s985 = sand.u32 %s255, 1
          %s986 = scalar_lea.sflag [#allocation5], %s985
          %s987 = sand.u32 %s255, 1
          %s988 = scalar_lea.vmem [#allocation4], %s987
          %989 = dma.done %s986, 16
        $region72: #{manner_block_forward.11} parent=67 // pred_fallthru
          _
      $region68: #{manner_block_forward.11} parent=5 // pred_fallthru
        _
    $region6: #{manner_block_forward.11} parent=1 // loop_footer
      %s25 = sadd.s32 1, %s21
    $region7: #{manner_block_forward.11} parent=1 // loop_footer_branch
      %20 = sbr.rel target = $region3
    $region8: #{manner_block_forward.11} parent=1 // loop_exit
      _
    %990 = vsyncpa [#allocation5], 1
    %s991 = scalar_lea.sflag [#allocation5], 1
    %992 = vsyncpa %s991, 1

// kernel: manner_block_forward.9
$region0: #{manner_block_forward.9}
  #allocation0 [shape = 'u32[]', space=smem, size = 0x4, offset = 0x4, fixed_abs, tag = 'smem constant byte address 0x4 - core index']
  #allocation1 [shape = 'u32[144,128]{1,0:T(1,128)}', space=vmem, size = 0x12000, scoped, tag = 'internal scratch']
  #allocation2 [shape = 'f32[128,18]{1,0:T(8,128)}', space=vmem, size = 0x10000, scoped, tag = 'scratch operand']
  #allocation3 [shape = 'f32[32,16]{1,0:T(8,128)}', space=vmem, size = 0x4000, scoped, tag = 'scratch operand']
  %s0 = inlined_call_operand.vmem [shape: f32[2,64,14], index: 0, kind: input, shape index: {}, may-alias: {0,1}]
  %s1 = inlined_call_operand.vmem [shape: f32[2,64,14], index: 1, kind: input, shape index: {}, may-alias: {0,1}]
  %s2 = inlined_call_operand.vmem [shape: f32[64,64], index: 2, kind: input, shape index: {}]
  %s3 = inlined_call_operand.vmem [shape: f32[128,64], index: 3, kind: input, shape index: {}]
  %s4 = inlined_call_operand.vmem [shape: f32[128,1], index: 4, kind: input, shape index: {}]
  %s5 = inlined_call_operand.vmem [shape: f32[5,128,1], index: 5, kind: input, shape index: {}]
  %s6 = inlined_call_operand.vmem [shape: f32[128,1], index: 6, kind: input, shape index: {}]
  %s7 = inlined_call_operand.vmem [shape: f32[32,128], index: 7, kind: input, shape index: {}]
  %s8 = inlined_call_operand.vmem [shape: f32[32,1], index: 8, kind: input, shape index: {}]
  %s9 = inlined_call_operand.vmem [shape: f32[32,64], index: 9, kind: input, shape index: {}]
  %s10 = inlined_call_operand.vmem [shape: f32[32,1], index: 10, kind: input, shape index: {}]
  %s11 = inlined_call_operand.vmem [shape: f32[4,32,32], index: 11, kind: input, shape index: {}]
  %s12 = inlined_call_operand.vmem [shape: f32[32,1], index: 12, kind: input, shape index: {}]
  %s13 = inlined_call_operand.vmem [shape: f32[2,2,32,15], index: 13, kind: output, shape index: {}]
  %s14 = sld [smem:[#allocation0]]
  $region85: #{manner_block_forward.9} parent=0
    _
  %s16 = ssub.s32 1, %s14
  %s17 = scalar_select 0, %s16, %s14
  loop: start=0, step=1, limit=4
  $region2: #{manner_block_forward.9} parent=0 // loop_pre_header
    _
  $region3: #{manner_block_forward.9} parent=0 // loop_header
    %s19 = sphi 0, %s23
    %p20 = scmp.ge.s32.totalorder %s19, 4
    %s29 = sphi 0, %s31
    %s32 = sphi 0, %s29
    %s33 = sphi 0, %s32
    %s49 = sphi 0, %s33
    %s55 = sphi 0, %s57
    %s58 = sphi 0, %s55
    %s59 = sphi 0, %s58
    %s75 = sphi 0, %s59
    %s79 = sphi 0, %s79
    %s81 = sphi 0, %s79
    %s82 = sphi 0, %s81
    %s96 = sphi 0, %s82
    %s100 = sphi 0, %s100
    %s102 = sphi 0, %s100
    %s103 = sphi 0, %s102
    %s117 = sphi 0, %s103
    %s121 = sphi 0, %s121
    %s123 = sphi 0, %s121
    %s124 = sphi 0, %s123
    %s138 = sphi 0, %s124
    %s142 = sphi 0, %s142
    %s144 = sphi 0, %s142
    %s145 = sphi 0, %s144
    %s159 = sphi 0, %s145
    %s163 = sphi 0, %s163
    %s165 = sphi 0, %s163
    %s166 = sphi 0, %s165
    %s180 = sphi 0, %s166
    %s184 = sphi 0, %s184
    %s186 = sphi 0, %s184
    %s187 = sphi 0, %s186
    %s201 = sphi 0, %s187
    %s205 = sphi 0, %s205
    %s207 = sphi 0, %s205
    %s208 = sphi 0, %s207
    %s222 = sphi 0, %s208
    %s226 = sphi 0, %s226
    %s228 = sphi 0, %s226
    %s229 = sphi 0, %s228
    %s243 = sphi 0, %s229
    %s247 = sphi 0, %s247
    %s249 = sphi 0, %s247
    %s250 = sphi 0, %s249
    %s264 = sphi 0, %s250
    %s268 = sphi 0, %s268
    %s270 = sphi 0, %s268
    %s271 = sphi 0, %s270
    %s285 = sphi 0, %s271
    %s289 = sphi 0, %s289
    %s291 = sphi 0, %s289
    %s292 = sphi 0, %s291
    %s306 = sphi 0, %s292
    %s312 = sphi 0, %s314
    %s315 = sphi 0, %s312
    %s316 = sphi 0, %s315
    %s332 = sphi 0, %s316
  $region4: #{manner_block_forward.9} parent=0 // loop_header_branch
    %22 = sbr.rel (%p20) target = $region8
  $region5: #{manner_block_forward.9} parent=0 // loop_body
    %s24 = ssub.s32 %s19, 1
    %s25 = ssub.s32 %s19, 2
    %s26 = sadd.s32 %s19, 1
    %s27 = ssub.s32 %s19, %s26
    %p28 = scmp.eq.s32.totalorder %s27, 0
    %s30 = sadd.s32 %s29, 1
    %s31 = scalar_select %p28, %s29, %s30
    %p34 = pneg %p28
    %p35 = scmp.eq.s32.totalorder %s19, 1
    %p36 = por %p34, %p35
    %p37 = scmp.ne.s32.totalorder %s29, %s32
    %p38 = scmp.eq.s32.totalorder %s19, 0
    %p39 = por %p37, %p38
    %p40 = scmp.ne.s32.totalorder %s29, %s32
    %p41 = scmp.eq.s32.totalorder %s24, 1
    %p42 = por %p40, %p41
    %p43 = scmp.ne.s32.totalorder %s32, %s33
    %p44 = scmp.eq.s32.totalorder %s24, 0
    %p45 = por %p43, %p44
    %p46 = scmp.ne.s32.totalorder %s32, %s33
    %p47 = scmp.eq.s32.totalorder %s25, 1
    %p48 = por %p46, %p47
    %p50 = scmp.ne.s32.totalorder %s33, %s49
    %p51 = scmp.eq.s32.totalorder %s25, 0
    %p52 = por %p50, %p51
    %s53 = ssub.s32 %s19, %s26
    %p54 = scmp.eq.s32.totalorder %s53, 0
    %s56 = sadd.s32 %s55, 1
    %s57 = scalar_select %p54, %s55, %s56
    %p60 = pneg %p54
    %p61 = scmp.eq.s32.totalorder %s19, 1
    %p62 = por %p60, %p61
    %p63 = scmp.ne.s32.totalorder %s55, %s58
    %p64 = scmp.eq.s32.totalorder %s19, 0
    %p65 = por %p63, %p64
    %p66 = scmp.ne.s32.totalorder %s55, %s58
    %p67 = scmp.eq.s32.totalorder %s24, 1
    %p68 = por %p66, %p67
    %p69 = scmp.ne.s32.totalorder %s58, %s59
    %p70 = scmp.eq.s32.totalorder %s24, 0
    %p71 = por %p69, %p70
    %p72 = scmp.ne.s32.totalorder %s58, %s59
    %p73 = scmp.eq.s32.totalorder %s25, 1
    %p74 = por %p72, %p73
    %p76 = scmp.ne.s32.totalorder %s59, %s75
    %p77 = scmp.eq.s32.totalorder %s25, 0
    %p78 = por %p76, %p77
    %s80 = sadd.s32 %s79, 1
    %p83 = scmp.eq.s32.totalorder %s19, 1
    %p84 = scmp.ne.s32.totalorder %s79, %s81
    %p85 = scmp.eq.s32.totalorder %s19, 0
    %p86 = por %p84, %p85
    %p87 = scmp.ne.s32.totalorder %s79, %s81
    %p88 = scmp.eq.s32.totalorder %s24, 1
    %p89 = por %p87, %p88
    %p90 = scmp.ne.s32.totalorder %s81, %s82
    %p91 = scmp.eq.s32.totalorder %s24, 0
    %p92 = por %p90, %p91
    %p93 = scmp.ne.s32.totalorder %s81, %s82
    %p94 = scmp.eq.s32.totalorder %s25, 1
    %p95 = por %p93, %p94
    %p97 = scmp.ne.s32.totalorder %s82, %s96
    %p98 = scmp.eq.s32.totalorder %s25, 0
    %p99 = por %p97, %p98
    %s101 = sadd.s32 %s100, 1
    %p104 = scmp.eq.s32.totalorder %s19, 1
    %p105 = scmp.ne.s32.totalorder %s100, %s102
    %p106 = scmp.eq.s32.totalorder %s19, 0
    %p107 = por %p105, %p106
    %p108 = scmp.ne.s32.totalorder %s100, %s102
    %p109 = scmp.eq.s32.totalorder %s24, 1
    %p110 = por %p108, %p109
    %p111 = scmp.ne.s32.totalorder %s102, %s103
    %p112 = scmp.eq.s32.totalorder %s24, 0
    %p113 = por %p111, %p112
    %p114 = scmp.ne.s32.totalorder %s102, %s103
    %p115 = scmp.eq.s32.totalorder %s25, 1
    %p116 = por %p114, %p115
    %p118 = scmp.ne.s32.totalorder %s103, %s117
    %p119 = scmp.eq.s32.totalorder %s25, 0
    %p120 = por %p118, %p119
    %s122 = sadd.s32 %s121, 1
    %p125 = scmp.eq.s32.totalorder %s19, 1
    %p126 = scmp.ne.s32.totalorder %s121, %s123
    %p127 = scmp.eq.s32.totalorder %s19, 0
    %p128 = por %p126, %p127
    %p129 = scmp.ne.s32.totalorder %s121, %s123
    %p130 = scmp.eq.s32.totalorder %s24, 1
    %p131 = por %p129, %p130
    %p132 = scmp.ne.s32.totalorder %s123, %s124
    %p133 = scmp.eq.s32.totalorder %s24, 0
    %p134 = por %p132, %p133
    %p135 = scmp.ne.s32.totalorder %s123, %s124
    %p136 = scmp.eq.s32.totalorder %s25, 1
    %p137 = por %p135, %p136
    %p139 = scmp.ne.s32.totalorder %s124, %s138
    %p140 = scmp.eq.s32.totalorder %s25, 0
    %p141 = por %p139, %p140
    %s143 = sadd.s32 %s142, 1
    %p146 = scmp.eq.s32.totalorder %s19, 1
    %p147 = scmp.ne.s32.totalorder %s142, %s144
    %p148 = scmp.eq.s32.totalorder %s19, 0
    %p149 = por %p147, %p148
    %p150 = scmp.ne.s32.totalorder %s142, %s144
    %p151 = scmp.eq.s32.totalorder %s24, 1
    %p152 = por %p150, %p151
    %p153 = scmp.ne.s32.totalorder %s144, %s145
    %p154 = scmp.eq.s32.totalorder %s24, 0
    %p155 = por %p153, %p154
    %p156 = scmp.ne.s32.totalorder %s144, %s145
    %p157 = scmp.eq.s32.totalorder %s25, 1
    %p158 = por %p156, %p157
    %p160 = scmp.ne.s32.totalorder %s145, %s159
    %p161 = scmp.eq.s32.totalorder %s25, 0
    %p162 = por %p160, %p161
    %s164 = sadd.s32 %s163, 1
    %p167 = scmp.eq.s32.totalorder %s19, 1
    %p168 = scmp.ne.s32.totalorder %s163, %s165
    %p169 = scmp.eq.s32.totalorder %s19, 0
    %p170 = por %p168, %p169
    %p171 = scmp.ne.s32.totalorder %s163, %s165
    %p172 = scmp.eq.s32.totalorder %s24, 1
    %p173 = por %p171, %p172
    %p174 = scmp.ne.s32.totalorder %s165, %s166
    %p175 = scmp.eq.s32.totalorder %s24, 0
    %p176 = por %p174, %p175
    %p177 = scmp.ne.s32.totalorder %s165, %s166
    %p178 = scmp.eq.s32.totalorder %s25, 1
    %p179 = por %p177, %p178
    %p181 = scmp.ne.s32.totalorder %s166, %s180
    %p182 = scmp.eq.s32.totalorder %s25, 0
    %p183 = por %p181, %p182
    %s185 = sadd.s32 %s184, 1
    %p188 = scmp.eq.s32.totalorder %s19, 1
    %p189 = scmp.ne.s32.totalorder %s184, %s186
    %p190 = scmp.eq.s32.totalorder %s19, 0
    %p191 = por %p189, %p190
    %p192 = scmp.ne.s32.totalorder %s184, %s186
    %p193 = scmp.eq.s32.totalorder %s24, 1
    %p194 = por %p192, %p193
    %p195 = scmp.ne.s32.totalorder %s186, %s187
    %p196 = scmp.eq.s32.totalorder %s24, 0
    %p197 = por %p195, %p196
    %p198 = scmp.ne.s32.totalorder %s186, %s187
    %p199 = scmp.eq.s32.totalorder %s25, 1
    %p200 = por %p198, %p199
    %p202 = scmp.ne.s32.totalorder %s187, %s201
    %p203 = scmp.eq.s32.totalorder %s25, 0
    %p204 = por %p202, %p203
    %s206 = sadd.s32 %s205, 1
    %p209 = scmp.eq.s32.totalorder %s19, 1
    %p210 = scmp.ne.s32.totalorder %s205, %s207
    %p211 = scmp.eq.s32.totalorder %s19, 0
    %p212 = por %p210, %p211
    %p213 = scmp.ne.s32.totalorder %s205, %s207
    %p214 = scmp.eq.s32.totalorder %s24, 1
    %p215 = por %p213, %p214
    %p216 = scmp.ne.s32.totalorder %s207, %s208
    %p217 = scmp.eq.s32.totalorder %s24, 0
    %p218 = por %p216, %p217
    %p219 = scmp.ne.s32.totalorder %s207, %s208
    %p220 = scmp.eq.s32.totalorder %s25, 1
    %p221 = por %p219, %p220
    %p223 = scmp.ne.s32.totalorder %s208, %s222
    %p224 = scmp.eq.s32.totalorder %s25, 0
    %p225 = por %p223, %p224
    %s227 = sadd.s32 %s226, 1
    %p230 = scmp.eq.s32.totalorder %s19, 1
    %p231 = scmp.ne.s32.totalorder %s226, %s228
    %p232 = scmp.eq.s32.totalorder %s19, 0
    %p233 = por %p231, %p232
    %p234 = scmp.ne.s32.totalorder %s226, %s228
    %p235 = scmp.eq.s32.totalorder %s24, 1
    %p236 = por %p234, %p235
    %p237 = scmp.ne.s32.totalorder %s228, %s229
    %p238 = scmp.eq.s32.totalorder %s24, 0
    %p239 = por %p237, %p238
    %p240 = scmp.ne.s32.totalorder %s228, %s229
    %p241 = scmp.eq.s32.totalorder %s25, 1
    %p242 = por %p240, %p241
    %p244 = scmp.ne.s32.totalorder %s229, %s243
    %p245 = scmp.eq.s32.totalorder %s25, 0
    %p246 = por %p244, %p245
    %s248 = sadd.s32 %s247, 1
    %p251 = scmp.eq.s32.totalorder %s19, 1
    %p252 = scmp.ne.s32.totalorder %s247, %s249
    %p253 = scmp.eq.s32.totalorder %s19, 0
    %p254 = por %p252, %p253
    %p255 = scmp.ne.s32.totalorder %s247, %s249
    %p256 = scmp.eq.s32.totalorder %s24, 1
    %p257 = por %p255, %p256
    %p258 = scmp.ne.s32.totalorder %s249, %s250
    %p259 = scmp.eq.s32.totalorder %s24, 0
    %p260 = por %p258, %p259
    %p261 = scmp.ne.s32.totalorder %s249, %s250
    %p262 = scmp.eq.s32.totalorder %s25, 1
    %p263 = por %p261, %p262
    %p265 = scmp.ne.s32.totalorder %s250, %s264
    %p266 = scmp.eq.s32.totalorder %s25, 0
    %p267 = por %p265, %p266
    %s269 = sadd.s32 %s268, 1
    %p272 = scmp.eq.s32.totalorder %s19, 1
    %p273 = scmp.ne.s32.totalorder %s268, %s270
    %p274 = scmp.eq.s32.totalorder %s19, 0
    %p275 = por %p273, %p274
    %p276 = scmp.ne.s32.totalorder %s268, %s270
    %p277 = scmp.eq.s32.totalorder %s24, 1
    %p278 = por %p276, %p277
    %p279 = scmp.ne.s32.totalorder %s270, %s271
    %p280 = scmp.eq.s32.totalorder %s24, 0
    %p281 = por %p279, %p280
    %p282 = scmp.ne.s32.totalorder %s270, %s271
    %p283 = scmp.eq.s32.totalorder %s25, 1
    %p284 = por %p282, %p283
    %p286 = scmp.ne.s32.totalorder %s271, %s285
    %p287 = scmp.eq.s32.totalorder %s25, 0
    %p288 = por %p286, %p287
    %s290 = sadd.s32 %s289, 1
    %p293 = scmp.eq.s32.totalorder %s19, 1
    %p294 = scmp.ne.s32.totalorder %s289, %s291
    %p295 = scmp.eq.s32.totalorder %s19, 0
    %p296 = por %p294, %p295
    %p297 = scmp.ne.s32.totalorder %s289, %s291
    %p298 = scmp.eq.s32.totalorder %s24, 1
    %p299 = por %p297, %p298
    %p300 = scmp.ne.s32.totalorder %s291, %s292
    %p301 = scmp.eq.s32.totalorder %s24, 0
    %p302 = por %p300, %p301
    %p303 = scmp.ne.s32.totalorder %s291, %s292
    %p304 = scmp.eq.s32.totalorder %s25, 1
    %p305 = por %p303, %p304
    %p307 = scmp.ne.s32.totalorder %s292, %s306
    %p308 = scmp.eq.s32.totalorder %s25, 0
    %p309 = por %p307, %p308
    %s310 = ssub.s32 %s19, %s26
    %p311 = scmp.eq.s32.totalorder %s310, 0
    %s313 = sadd.s32 %s312, 1
    %s314 = scalar_select %p311, %s312, %s313
    %p317 = pneg %p311
    %p318 = scmp.eq.s32.totalorder %s19, 1
    %p319 = por %p317, %p318
    %p320 = scmp.ne.s32.totalorder %s312, %s315
    %p321 = scmp.eq.s32.totalorder %s19, 0
    %p322 = por %p320, %p321
    %p323 = scmp.ne.s32.totalorder %s312, %s315
    %p324 = scmp.eq.s32.totalorder %s24, 1
    %p325 = por %p323, %p324
    %p326 = scmp.ne.s32.totalorder %s315, %s316
    %p327 = scmp.eq.s32.totalorder %s24, 0
    %p328 = por %p326, %p327
    %p329 = scmp.ne.s32.totalorder %s315, %s316
    %p330 = scmp.eq.s32.totalorder %s25, 1
    %p331 = por %p329, %p330
    %p333 = scmp.ne.s32.totalorder %s316, %s332
    %p334 = scmp.eq.s32.totalorder %s25, 0
    %p335 = por %p333, %p334
    %p336 = scmp.le.s32.totalorder 1, %s19
    %p337 = scmp.lt.s32.totalorder %s19, 3
    %p338 = pnand %p336, %p337
    %p339 = pneg %p338
    // Predicated region
    $region9: #{manner_block_forward.9} parent=5 // pred_check
      _
    $region10: #{manner_block_forward.9} parent=5 // pred_check_branch
      %341 = sbr.rel (%p338) target = $region12
    $region11: #{manner_block_forward.9} parent=5 // pred_region
      %s342 = ssub.s32 %s19, 1
      // Predicated region
      $region13: #{manner_block_forward.9} parent=11 // pred_check
        %p343 = pneg %p92
      $region14: #{manner_block_forward.9} parent=11 // pred_check_branch
        %345 = sbr.rel (%p343) target = $region16
      $region15: #{manner_block_forward.9} parent=11 // pred_region
        _
      $region16: #{manner_block_forward.9} parent=11 // pred_fallthru
        _
      // Predicated region
      $region17: #{manner_block_forward.9} parent=11 // pred_check
        %p346 = pneg %p113
      $region18: #{manner_block_forward.9} parent=11 // pred_check_branch
        %348 = sbr.rel (%p346) target = $region20
      $region19: #{manner_block_forward.9} parent=11 // pred_region
        _
      $region20: #{manner_block_forward.9} parent=11 // pred_fallthru
        _
      // Predicated region
      $region21: #{manner_block_forward.9} parent=11 // pred_check
        %p349 = pneg %p134
      $region22: #{manner_block_forward.9} parent=11 // pred_check_branch
        %351 = sbr.rel (%p349) target = $region24
      $region23: #{manner_block_forward.9} parent=11 // pred_region
        _
      $region24: #{manner_block_forward.9} parent=11 // pred_fallthru
        _
      // Predicated region
      $region25: #{manner_block_forward.9} parent=11 // pred_check
        %p352 = pneg %p155
      $region26: #{manner_block_forward.9} parent=11 // pred_check_branch
        %354 = sbr.rel (%p352) target = $region28
      $region27: #{manner_block_forward.9} parent=11 // pred_region
        _
      $region28: #{manner_block_forward.9} parent=11 // pred_fallthru
        _
      // Predicated region
      $region29: #{manner_block_forward.9} parent=11 // pred_check
        %p355 = pneg %p176
      $region30: #{manner_block_forward.9} parent=11 // pred_check_branch
        %357 = sbr.rel (%p355) target = $region32
      $region31: #{manner_block_forward.9} parent=11 // pred_region
        _
      $region32: #{manner_block_forward.9} parent=11 // pred_fallthru
        _
      // Predicated region
      $region33: #{manner_block_forward.9} parent=11 // pred_check
        %p358 = pneg %p197
      $region34: #{manner_block_forward.9} parent=11 // pred_check_branch
        %360 = sbr.rel (%p358) target = $region36
      $region35: #{manner_block_forward.9} parent=11 // pred_region
        _
      $region36: #{manner_block_forward.9} parent=11 // pred_fallthru
        _
      // Predicated region
      $region37: #{manner_block_forward.9} parent=11 // pred_check
        %p361 = pneg %p218
      $region38: #{manner_block_forward.9} parent=11 // pred_check_branch
        %363 = sbr.rel (%p361) target = $region40
      $region39: #{manner_block_forward.9} parent=11 // pred_region
        _
      $region40: #{manner_block_forward.9} parent=11 // pred_fallthru
        _
      // Predicated region
      $region41: #{manner_block_forward.9} parent=11 // pred_check
        %p364 = pneg %p239
      $region42: #{manner_block_forward.9} parent=11 // pred_check_branch
        %366 = sbr.rel (%p364) target = $region44
      $region43: #{manner_block_forward.9} parent=11 // pred_region
        _
      $region44: #{manner_block_forward.9} parent=11 // pred_fallthru
        _
      // Predicated region
      $region45: #{manner_block_forward.9} parent=11 // pred_check
        %p367 = pneg %p260
      $region46: #{manner_block_forward.9} parent=11 // pred_check_branch
        %369 = sbr.rel (%p367) target = $region48
      $region47: #{manner_block_forward.9} parent=11 // pred_region
        _
      $region48: #{manner_block_forward.9} parent=11 // pred_fallthru
        _
      // Predicated region
      $region49: #{manner_block_forward.9} parent=11 // pred_check
        %p370 = pneg %p281
      $region50: #{manner_block_forward.9} parent=11 // pred_check_branch
        %372 = sbr.rel (%p370) target = $region52
      $region51: #{manner_block_forward.9} parent=11 // pred_region
        _
      $region52: #{manner_block_forward.9} parent=11 // pred_fallthru
        _
      // Predicated region
      $region53: #{manner_block_forward.9} parent=11 // pred_check
        %p373 = pneg %p302
      $region54: #{manner_block_forward.9} parent=11 // pred_check_branch
        %375 = sbr.rel (%p373) target = $region56
      $region55: #{manner_block_forward.9} parent=11 // pred_region
        _
      $region56: #{manner_block_forward.9} parent=11 // pred_fallthru
        _
    $region12: #{manner_block_forward.9} parent=5 // pred_fallthru
      _
    %p376 = scmp.lt.s32.totalorder %s19, 2
    // Predicated region
    $region57: #{manner_block_forward.9} parent=5 // pred_check
      %p377 = pneg %p376
    $region58: #{manner_block_forward.9} parent=5 // pred_check_branch
      %379 = sbr.rel (%p377) target = $region60
    $region59: #{manner_block_forward.9} parent=5 // pred_region
      // Predicated region
      $region61: #{manner_block_forward.9} parent=59 // pred_check
        %p380 = pneg %p39
      $region62: #{manner_block_forward.9} parent=59 // pred_check_branch
        %382 = sbr.rel (%p380) target = $region64
      $region63: #{manner_block_forward.9} parent=59 // pred_region
        %p383 = scmp.lt.s32.totalorder %s19, 1
        %s384 = scalar_select %p383, %s19, 1
        %s385 = smul.addr %s384, 8
        %s386 = smul.addr %s385, 8
        %s387 = scalar_lea.vmem %s0, %s386
      $region64: #{manner_block_forward.9} parent=59 // pred_fallthru
        _
      // Predicated region
      $region65: #{manner_block_forward.9} parent=59 // pred_check
        %p388 = pneg %p65
      $region66: #{manner_block_forward.9} parent=59 // pred_check_branch
        %390 = sbr.rel (%p388) target = $region68
      $region67: #{manner_block_forward.9} parent=59 // pred_region
        %p391 = scmp.lt.s32.totalorder %s19, 1
        %s392 = scalar_select %p391, %s19, 1
        %s393 = smul.addr %s392, 8
        %s394 = smul.addr %s393, 8
        %s395 = scalar_lea.vmem %s1, %s394
      $region68: #{manner_block_forward.9} parent=59 // pred_fallthru
        _
    $region60: #{manner_block_forward.9} parent=5 // pred_fallthru
      _
    %p396 = scmp.le.s32.totalorder 1, %s19
    %p397 = scmp.lt.s32.totalorder %s19, 3
    %p398 = pnand %p396, %p397
    %p399 = pneg %p398
    // Predicated region
    $region69: #{manner_block_forward.9} parent=5 // pred_check
      _
    $region70: #{manner_block_forward.9} parent=5 // pred_check_branch
      %401 = sbr.rel (%p398) target = $region72
    $region71: #{manner_block_forward.9} parent=5 // pred_region
      %s402 = ssub.s32 %s19, 1
      %p403 = scmp.lt.s32.totalorder %s24, 1
      %s404 = scalar_select %p403, %s24, 1
      %s405 = smul.addr %s404, 8
      %s406 = smul.addr %s405, 8
      %s407 = scalar_lea.vmem %s0, %s406
      %p408 = pneg %p45
      %p409 = pneg %p42
      %p410 = scmp.lt.s32.totalorder %s24, 1
      %s411 = scalar_select %p410, %s24, 1
      %s412 = smul.addr %s411, 8
      %s413 = smul.addr %s412, 8
      %s414 = scalar_lea.vmem %s1, %s413
      %p415 = pneg %p71
      %p416 = pneg %p68
      %p417 = pneg %p92
      %p418 = pneg %p89
      %p419 = pneg %p113
      %p420 = pneg %p110
      %p421 = pneg %p134
      %p422 = pneg %p131
      %p423 = pneg %p155
      %p424 = pneg %p152
      %p425 = pneg %p176
      %p426 = pneg %p173
      %p427 = pneg %p197
      %p428 = pneg %p194
      %p429 = pneg %p218
      %p430 = pneg %p215
      %p431 = pneg %p239
      %p432 = pneg %p236
      %p433 = pneg %p260
      %p434 = pneg %p257
      %p435 = pneg %p281
      %p436 = pneg %p278
      %p437 = pneg %p302
      %p438 = pneg %p299
      %p439 = pneg %p328
      %p440 = pneg %p325
      %p441 = scmp.lt.s32.totalorder %s24, 1
      %s442 = scalar_select %p441, %s24, 1
      %s443 = smul.addr %s442, 8
      %s444 = smul.addr %s443, 8
      %s445 = scalar_lea.vmem %s13, %s444
      %p446 = scmp.lt.s32.totalorder %s24, 1
      %s447 = scalar_select %p446, %s24, 1
      %s448 = smul.addr %s447, 8
      %s449 = smul.addr %s448, 8
      %s450 = scalar_lea.vmem %s0, %s449
      %p451 = scmp.lt.s32.totalorder %s24, 1
      %s452 = scalar_select %p451, %s24, 1
      %s453 = smul.addr %s452, 8
      %s454 = smul.addr %s453, 8
      %s455 = scalar_lea.vmem %s1, %s454
      %p456 = scmp.lt.s32.totalorder %s24, 1
      %s457 = scalar_select %p456, %s24, 1
      %s458 = smul.addr %s457, 8
      %s459 = smul.addr %s458, 8
      %s460 = scalar_lea.vmem %s13, %s459
      %v461 = vld [vmem:[%s450] sm:$0xff]
      %v462 = vld [vmem:[%s450 + $0x8] sm:$0xff]
      %v463 = vld [vmem:[%s450 + $0x10] sm:$0xff]
      %v464 = vld [vmem:[%s450 + $0x18] sm:$0xff]
      %v465 = vld [vmem:[%s450 + $0x20] sm:$0xff]
      %v466 = vld [vmem:[%s450 + $0x28] sm:$0xff]
      %v467 = vld [vmem:[%s450 + $0x30] sm:$0xff]
      %v468 = vld [vmem:[%s450 + $0x38] sm:$0xff]
      %v469 = vld [vmem:[%s2] sm:$0xff]
      %v470 = vld [vmem:[%s2 + $0x8] sm:$0xff]
      %v471 = vld [vmem:[%s2 + $0x10] sm:$0xff]
      %v472 = vld [vmem:[%s2 + $0x18] sm:$0xff]
      %v473 = vld [vmem:[%s2 + $0x20] sm:$0xff]
      %v474 = vld [vmem:[%s2 + $0x28] sm:$0xff]
      %v475 = vld [vmem:[%s2 + $0x30] sm:$0xff]
      %v476 = vld [vmem:[%s2 + $0x38] sm:$0xff]
      %vm477 = vcmask 523264
      %v479 = vsel %vm477, %v469, 0
      %v482 = vsel %vm477, %v470, 0
      %v485 = vsel %vm477, %v471, 0
      %v488 = vsel %vm477, %v472, 0
      %v491 = vsel %vm477, %v473, 0
      %v494 = vsel %vm477, %v474, 0
      %v497 = vsel %vm477, %v475, 0
      %v500 = vsel %vm477, %v476, 0
      %502 = vmatprep.subr.mxu0 0.0
      %503 = vmatpush1.msra.mxu0 0.0
      %504 = vmatprep.subr.mxu0 0.0
      %505 = vmatpush1.msra.mxu0 0.0
      %506 = vmatprep.subr.mxu0 0.0
      %507 = vmatpush1.msra.mxu0 0.0
      %508 = vmatprep.subr.mxu0 0.0
      %509 = vmatpush1.msra.mxu0 0.0
      %510 = vmatprep.subr.mxu0 0.0
      %511 = vmatpush1.msra.mxu0 0.0
      %512 = vmatprep.subr.mxu0 0.0
      %513 = vmatpush1.msra.mxu0 0.0
      %514 = vmatprep.subr.mxu0 0.0
      %515 = vmatpush1.msra.mxu0 0.0
      %516 = vmatprep.subr.mxu0 0.0
      %517 = vmatpush1.msra.mxu0 0.0
      %518 = vmatprep.subr.mxu0 0.0
      %519 = vmatpush1.msra.mxu0 %v468
      %520 = vmatprep.subr.mxu0 0.0
      %521 = vmatpush1.msra.mxu0 %v467
      %522 = vmatprep.subr.mxu0 0.0
      %523 = vmatpush1.msra.mxu0 %v466
      %524 = vmatprep.subr.mxu0 0.0
      %525 = vmatpush1.msra.mxu0 %v465
      %526 = vmatprep.subr.mxu0 0.0
      %527 = vmatpush1.msra.mxu0 %v464
      %528 = vmatprep.subr.mxu0 0.0
      %529 = vmatpush1.msra.mxu0 %v463
      %530 = vmatprep.subr.mxu0 0.0
      %531 = vmatpush1.msra.mxu0 %v462
      %532 = vmatprep.subr.mxu0 0.0
      %533 = vmatpush1.msra.mxu0 %v461
      %534 = vmatprep.subr.mxu0 0.0
      %535 = vmatpush2.msra.mxu0 0.0
      %536 = vmatprep.subr.mxu0 0.0
      %537 = vmatpush2.msra.mxu0 0.0
      %538 = vmatprep.subr.mxu0 0.0
      %539 = vmatpush2.msra.mxu0 0.0
      %540 = vmatprep.subr.mxu0 0.0
      %541 = vmatpush2.msra.mxu0 0.0
      %542 = vmatprep.subr.mxu0 0.0
      %543 = vmatpush2.msra.mxu0 0.0
      %544 = vmatprep.subr.mxu0 0.0
      %545 = vmatpush2.msra.mxu0 0.0
      %546 = vmatprep.subr.mxu0 0.0
      %547 = vmatpush2.msra.mxu0 0.0
      %548 = vmatprep.subr.mxu0 0.0
      %549 = vmatpush2.msra.mxu0 0.0
      %550 = vmatprep.subr.mxu0 0.0
      %551 = vmatpush2.msra.mxu0 0.0
      %552 = vmatprep.subr.mxu0 0.0
      %553 = vmatpush2.msra.mxu0 0.0
      %554 = vmatprep.subr.mxu0 0.0
      %555 = vmatpush2.msra.mxu0 0.0
      %556 = vmatprep.subr.mxu0 0.0
      %557 = vmatpush2.msra.mxu0 0.0
      %558 = vmatprep.subr.mxu0 0.0
      %559 = vmatpush2.msra.mxu0 0.0
      %560 = vmatprep.subr.mxu0 0.0
      %561 = vmatpush2.msra.mxu0 0.0
      %562 = vmatprep.subr.mxu0 0.0
      %563 = vmatpush2.msra.mxu0 0.0
      %564 = vmatprep.subr.mxu0 0.0
      %565 = vmatpush2.msra.mxu0 0.0
      %566 = vmatprep.mubr.f32.mxu0 0.0
      %567 = vmatmul.mubr.f32.gmra.mxu0 %v479
      %v568 = vpop.f32.mrf.mxu0
      %v569 = vadd.f32 0.0, %v568
      %v570 = vpop.f32.mrf.mxu0
      %571 = vmatprep.mubr.f32.mxu0 0.0
      %572 = vmatmul.mubr.f32.gmra.mxu0 %v482
      %v573 = vpop.f32.mrf.mxu0
      %v574 = vadd.f32 0.0, %v573
      %v575 = vpop.f32.mrf.mxu0
      %576 = vmatprep.mubr.f32.mxu0 0.0
      %577 = vmatmul.mubr.f32.gmra.mxu0 %v485
      %v578 = vpop.f32.mrf.mxu0
      %v579 = vadd.f32 0.0, %v578
      %v580 = vpop.f32.mrf.mxu0
      %581 = vmatprep.mubr.f32.mxu0 0.0
      %582 = vmatmul.mubr.f32.gmra.mxu0 %v488
      %v583 = vpop.f32.mrf.mxu0
      %v584 = vadd.f32 0.0, %v583
      %v585 = vpop.f32.mrf.mxu0
      %586 = vmatprep.mubr.f32.mxu0 0.0
      %587 = vmatmul.mubr.f32.gmra.mxu0 %v491
      %v588 = vpop.f32.mrf.mxu0
      %v589 = vadd.f32 0.0, %v588
      %v590 = vpop.f32.mrf.mxu0
      %591 = vmatprep.mubr.f32.mxu0 0.0
      %592 = vmatmul.mubr.f32.gmra.mxu0 %v494
      %v593 = vpop.f32.mrf.mxu0
      %v594 = vadd.f32 0.0, %v593
      %v595 = vpop.f32.mrf.mxu0
      %596 = vmatprep.mubr.f32.mxu0 0.0
      %597 = vmatmul.mubr.f32.gmra.mxu0 %v497
      %v598 = vpop.f32.mrf.mxu0
      %v599 = vadd.f32 0.0, %v598
      %v600 = vpop.f32.mrf.mxu0
      %601 = vmatprep.mubr.f32.mxu0 0.0
      %602 = vmatmul.mubr.f32.gmra.mxu0 %v500
      %v603 = vpop.f32.mrf.mxu0
      %v604 = vadd.f32 0.0, %v603
      %v605 = vpop.f32.mrf.mxu0
      %606 = vdwg.mxu0
      %v607 = vmax.f32 %v569, 0.0
      %v608 = vmax.f32 %v574, 0.0
      %v609 = vmax.f32 %v579, 0.0
      %v610 = vmax.f32 %v584, 0.0
      %v611 = vmax.f32 %v589, 0.0
      %v612 = vmax.f32 %v594, 0.0
      %v613 = vmax.f32 %v599, 0.0
      %v614 = vmax.f32 %v604, 0.0
      %v615 = vld [vmem:[%s455] sm:$0xff]
      %v616 = vld [vmem:[%s455 + $0x8] sm:$0xff]
      %v617 = vld [vmem:[%s455 + $0x10] sm:$0xff]
      %v618 = vld [vmem:[%s455 + $0x18] sm:$0xff]
      %v619 = vld [vmem:[%s455 + $0x20] sm:$0xff]
      %v620 = vld [vmem:[%s455 + $0x28] sm:$0xff]
      %v621 = vld [vmem:[%s455 + $0x30] sm:$0xff]
      %v622 = vld [vmem:[%s455 + $0x38] sm:$0xff]
      %v623 = vadd.f32 %v607, %v615
      %v624 = vadd.f32 %v608, %v616
      %v625 = vadd.f32 %v609, %v617
      %v626 = vadd.f32 %v610, %v618
      %v627 = vadd.f32 %v611, %v619
      %v628 = vadd.f32 %v612, %v620
      %v629 = vadd.f32 %v613, %v621
      %v630 = vadd.f32 %v614, %v622
      %v631 = vld [vmem:[%s3] sm:$0xff]
      %v632 = vld [vmem:[%s3 + $0x8] sm:$0xff]
      %v633 = vld [vmem:[%s3 + $0x10] sm:$0xff]
      %v634 = vld [vmem:[%s3 + $0x18] sm:$0xff]
      %v635 = vld [vmem:[%s3 + $0x20] sm:$0xff]
      %v636 = vld [vmem:[%s3 + $0x28] sm:$0xff]
      %v637 = vld [vmem:[%s3 + $0x30] sm:$0xff]
      %v638 = vld [vmem:[%s3 + $0x38] sm:$0xff]
      %v639 = vld [vmem:[%s3 + $0x40] sm:$0xff]
      %v640 = vld [vmem:[%s3 + $0x48] sm:$0xff]
      %v641 = vld [vmem:[%s3 + $0x50] sm:$0xff]
      %v642 = vld [vmem:[%s3 + $0x58] sm:$0xff]
      %v643 = vld [vmem:[%s3 + $0x60] sm:$0xff]
      %v644 = vld [vmem:[%s3 + $0x68] sm:$0xff]
      %v645 = vld [vmem:[%s3 + $0x70] sm:$0xff]
      %v646 = vld [vmem:[%s3 + $0x78] sm:$0xff]
      %v647 = vld [vmem:[%s4] sm:$0xff]
      %v648 = vld [vmem:[%s4 + $0x8] sm:$0xff]
      %v649 = vld [vmem:[%s4 + $0x10] sm:$0xff]
      %v650 = vld [vmem:[%s4 + $0x18] sm:$0xff]
      %v651 = vld [vmem:[%s4 + $0x20] sm:$0xff]
      %v652 = vld [vmem:[%s4 + $0x28] sm:$0xff]
      %v653 = vld [vmem:[%s4 + $0x30] sm:$0xff]
      %v654 = vld [vmem:[%s4 + $0x38] sm:$0xff]
      %v655 = vld [vmem:[%s4 + $0x40] sm:$0xff]
      %v656 = vld [vmem:[%s4 + $0x48] sm:$0xff]
      %v657 = vld [vmem:[%s4 + $0x50] sm:$0xff]
      %v658 = vld [vmem:[%s4 + $0x58] sm:$0xff]
      %v659 = vld [vmem:[%s4 + $0x60] sm:$0xff]
      %v660 = vld [vmem:[%s4 + $0x68] sm:$0xff]
      %v661 = vld [vmem:[%s4 + $0x70] sm:$0xff]
      %v662 = vld [vmem:[%s4 + $0x78] sm:$0xff]
      %664 = vset.pattern.permute.xlu0 0
      %665 = vperm.xlu0 %664, %v647
      %v666 = vpop.permute.xlu0 %665
      %669 = vset.pattern.permute.xlu0 0
      %670 = vperm.xlu0 %669, %v648
      %v671 = vpop.permute.xlu0 %670
      %674 = vset.pattern.permute.xlu0 0
      %675 = vperm.xlu0 %674, %v649
      %v676 = vpop.permute.xlu0 %675
      %679 = vset.pattern.permute.xlu0 0
      %680 = vperm.xlu0 %679, %v650
      %v681 = vpop.permute.xlu0 %680
      %684 = vset.pattern.permute.xlu0 0
      %685 = vperm.xlu0 %684, %v651
      %v686 = vpop.permute.xlu0 %685
      %689 = vset.pattern.permute.xlu0 0
      %690 = vperm.xlu0 %689, %v652
      %v691 = vpop.permute.xlu0 %690
      %694 = vset.pattern.permute.xlu0 0
      %695 = vperm.xlu0 %694, %v653
      %v696 = vpop.permute.xlu0 %695
      %699 = vset.pattern.permute.xlu0 0
      %700 = vperm.xlu0 %699, %v654
      %v701 = vpop.permute.xlu0 %700
      %704 = vset.pattern.permute.xlu0 0
      %705 = vperm.xlu0 %704, %v655
      %v706 = vpop.permute.xlu0 %705
      %709 = vset.pattern.permute.xlu0 0
      %710 = vperm.xlu0 %709, %v656
      %v711 = vpop.permute.xlu0 %710
      %714 = vset.pattern.permute.xlu0 0
      %715 = vperm.xlu0 %714, %v657
      %v716 = vpop.permute.xlu0 %715
      %719 = vset.pattern.permute.xlu0 0
      %720 = vperm.xlu0 %719, %v658
      %v721 = vpop.permute.xlu0 %720
      %724 = vset.pattern.permute.xlu0 0
      %725 = vperm.xlu0 %724, %v659
      %v726 = vpop.permute.xlu0 %725
      %729 = vset.pattern.permute.xlu0 0
      %730 = vperm.xlu0 %729, %v660
      %v731 = vpop.permute.xlu0 %730
      %734 = vset.pattern.permute.xlu0 0
      %735 = vperm.xlu0 %734, %v661
      %v736 = vpop.permute.xlu0 %735
      %739 = vset.pattern.permute.xlu0 0
      %740 = vperm.xlu0 %739, %v662
      %v741 = vpop.permute.xlu0 %740
      %v744 = vsel %vm477, %v631, 0
      %v747 = vsel %vm477, %v632, 0
      %v750 = vsel %vm477, %v633, 0
      %v753 = vsel %vm477, %v634, 0
      %v756 = vsel %vm477, %v635, 0
      %v759 = vsel %vm477, %v636, 0
      %v762 = vsel %vm477, %v637, 0
      %v765 = vsel %vm477, %v638, 0
      %v768 = vsel %vm477, %v639, 0
      %v771 = vsel %vm477, %v640, 0
      %v774 = vsel %vm477, %v641, 0
      %v777 = vsel %vm477, %v642, 0
      %v780 = vsel %vm477, %v643, 0
      %v783 = vsel %vm477, %v644, 0
      %v786 = vsel %vm477, %v645, 0
      %v789 = vsel %vm477, %v646, 0
      %791 = vmatprep.subr.mxu0 0.0
      %792 = vmatpush1.msra.mxu0 0.0
      %793 = vmatprep.subr.mxu0 0.0
      %794 = vmatpush1.msra.mxu0 0.0
      %795 = vmatprep.subr.mxu0 0.0
      %796 = vmatpush1.msra.mxu0 0.0
      %797 = vmatprep.subr.mxu0 0.0
      %798 = vmatpush1.msra.mxu0 0.0
      %799 = vmatprep.subr.mxu0 0.0
      %800 = vmatpush1.msra.mxu0 0.0
      %801 = vmatprep.subr.mxu0 0.0
      %802 = vmatpush1.msra.mxu0 0.0
      %803 = vmatprep.subr.mxu0 0.0
      %804 = vmatpush1.msra.mxu0 0.0
      %805 = vmatprep.subr.mxu0 0.0
      %806 = vmatpush1.msra.mxu0 0.0
      %807 = vmatprep.subr.mxu0 0.0
      %808 = vmatpush1.msra.mxu0 %v630
      %809 = vmatprep.subr.mxu0 0.0
      %810 = vmatpush1.msra.mxu0 %v629
      %811 = vmatprep.subr.mxu0 0.0
      %812 = vmatpush1.msra.mxu0 %v628
      %813 = vmatprep.subr.mxu0 0.0
      %814 = vmatpush1.msra.mxu0 %v627
      %815 = vmatprep.subr.mxu0 0.0
      %816 = vmatpush1.msra.mxu0 %v626
      %817 = vmatprep.subr.mxu0 0.0
      %818 = vmatpush1.msra.mxu0 %v625
      %819 = vmatprep.subr.mxu0 0.0
      %820 = vmatpush1.msra.mxu0 %v624
      %821 = vmatprep.subr.mxu0 0.0
      %822 = vmatpush1.msra.mxu0 %v623
      %823 = vmatprep.subr.mxu0 0.0
      %824 = vmatpush2.msra.mxu0 0.0
      %825 = vmatprep.subr.mxu0 0.0
      %826 = vmatpush2.msra.mxu0 0.0
      %827 = vmatprep.subr.mxu0 0.0
      %828 = vmatpush2.msra.mxu0 0.0
      %829 = vmatprep.subr.mxu0 0.0
      %830 = vmatpush2.msra.mxu0 0.0
      %831 = vmatprep.subr.mxu0 0.0
      %832 = vmatpush2.msra.mxu0 0.0
      %833 = vmatprep.subr.mxu0 0.0
      %834 = vmatpush2.msra.mxu0 0.0
      %835 = vmatprep.subr.mxu0 0.0
      %836 = vmatpush2.msra.mxu0 0.0
      %837 = vmatprep.subr.mxu0 0.0
      %838 = vmatpush2.msra.mxu0 0.0
      %839 = vmatprep.subr.mxu0 0.0
      %840 = vmatpush2.msra.mxu0 0.0
      %841 = vmatprep.subr.mxu0 0.0
      %842 = vmatpush2.msra.mxu0 0.0
      %843 = vmatprep.subr.mxu0 0.0
      %844 = vmatpush2.msra.mxu0 0.0
      %845 = vmatprep.subr.mxu0 0.0
      %846 = vmatpush2.msra.mxu0 0.0
      %847 = vmatprep.subr.mxu0 0.0
      %848 = vmatpush2.msra.mxu0 0.0
      %849 = vmatprep.subr.mxu0 0.0
      %850 = vmatpush2.msra.mxu0 0.0
      %851 = vmatprep.subr.mxu0 0.0
      %852 = vmatpush2.msra.mxu0 0.0
      %853 = vmatprep.subr.mxu0 0.0
      %854 = vmatpush2.msra.mxu0 0.0
      %855 = vmatprep.mubr.f32.mxu0 0.0
      %856 = vmatmul.mubr.f32.gmra.mxu0 %v744
      %v857 = vpop.f32.mrf.mxu0
      %v858 = vadd.f32 %v666, %v857
      %v859 = vpop.f32.mrf.mxu0
      %860 = vmatprep.mubr.f32.mxu0 0.0
      %861 = vmatmul.mubr.f32.gmra.mxu0 %v747
      %v862 = vpop.f32.mrf.mxu0
      %v863 = vadd.f32 %v671, %v862
      %v864 = vpop.f32.mrf.mxu0
      %865 = vmatprep.mubr.f32.mxu0 0.0
      %866 = vmatmul.mubr.f32.gmra.mxu0 %v750
      %v867 = vpop.f32.mrf.mxu0
      %v868 = vadd.f32 %v676, %v867
      %v869 = vpop.f32.mrf.mxu0
      %870 = vmatprep.mubr.f32.mxu0 0.0
      %871 = vmatmul.mubr.f32.gmra.mxu0 %v753
      %v872 = vpop.f32.mrf.mxu0
      %v873 = vadd.f32 %v681, %v872
      %v874 = vpop.f32.mrf.mxu0
      %875 = vmatprep.mubr.f32.mxu0 0.0
      %876 = vmatmul.mubr.f32.gmra.mxu0 %v756
      %v877 = vpop.f32.mrf.mxu0
      %v878 = vadd.f32 %v686, %v877
      %v879 = vpop.f32.mrf.mxu0
      %880 = vmatprep.mubr.f32.mxu0 0.0
      %881 = vmatmul.mubr.f32.gmra.mxu0 %v759
      %v882 = vpop.f32.mrf.mxu0
      %v883 = vadd.f32 %v691, %v882
      %v884 = vpop.f32.mrf.mxu0
      %885 = vmatprep.mubr.f32.mxu0 0.0
      %886 = vmatmul.mubr.f32.gmra.mxu0 %v762
      %v887 = vpop.f32.mrf.mxu0
      %v888 = vadd.f32 %v696, %v887
      %v889 = vpop.f32.mrf.mxu0
      %890 = vmatprep.mubr.f32.mxu0 0.0
      %891 = vmatmul.mubr.f32.gmra.mxu0 %v765
      %v892 = vpop.f32.mrf.mxu0
      %v893 = vadd.f32 %v701, %v892
      %v894 = vpop.f32.mrf.mxu0
      %895 = vmatprep.mubr.f32.mxu0 0.0
      %896 = vmatmul.mubr.f32.gmra.mxu0 %v768
      %v897 = vpop.f32.mrf.mxu0
      %v898 = vadd.f32 %v706, %v897
      %v899 = vpop.f32.mrf.mxu0
      %900 = vmatprep.mubr.f32.mxu0 0.0
      %901 = vmatmul.mubr.f32.gmra.mxu0 %v771
      %v902 = vpop.f32.mrf.mxu0
      %v903 = vadd.f32 %v711, %v902
      %v904 = vpop.f32.mrf.mxu0
      %905 = vmatprep.mubr.f32.mxu0 0.0
      %906 = vmatmul.mubr.f32.gmra.mxu0 %v774
      %v907 = vpop.f32.mrf.mxu0
      %v908 = vadd.f32 %v716, %v907
      %v909 = vpop.f32.mrf.mxu0
      %910 = vmatprep.mubr.f32.mxu0 0.0
      %911 = vmatmul.mubr.f32.gmra.mxu0 %v777
      %v912 = vpop.f32.mrf.mxu0
      %v913 = vadd.f32 %v721, %v912
      %v914 = vpop.f32.mrf.mxu0
      %915 = vmatprep.mubr.f32.mxu0 0.0
      %916 = vmatmul.mubr.f32.gmra.mxu0 %v780
      %v917 = vpop.f32.mrf.mxu0
      %v918 = vadd.f32 %v726, %v917
      %v919 = vpop.f32.mrf.mxu0
      %920 = vmatprep.mubr.f32.mxu0 0.0
      %921 = vmatmul.mubr.f32.gmra.mxu0 %v783
      %v922 = vpop.f32.mrf.mxu0
      %v923 = vadd.f32 %v731, %v922
      %v924 = vpop.f32.mrf.mxu0
      %925 = vmatprep.mubr.f32.mxu0 0.0
      %926 = vmatmul.mubr.f32.gmra.mxu0 %v786
      %v927 = vpop.f32.mrf.mxu0
      %v928 = vadd.f32 %v736, %v927
      %v929 = vpop.f32.mrf.mxu0
      %930 = vmatprep.mubr.f32.mxu0 0.0
      %931 = vmatmul.mubr.f32.gmra.mxu0 %v789
      %v932 = vpop.f32.mrf.mxu0
      %v933 = vadd.f32 %v741, %v932
      %v934 = vpop.f32.mrf.mxu0
      %935 = vdwg.mxu0
      %v936 = vmax.f32 %v858, 0.0
      %v937 = vmax.f32 %v863, 0.0
      %v938 = vmax.f32 %v868, 0.0
      %v939 = vmax.f32 %v873, 0.0
      %v940 = vmax.f32 %v878, 0.0
      %v941 = vmax.f32 %v883, 0.0
      %v942 = vmax.f32 %v888, 0.0
      %v943 = vmax.f32 %v893, 0.0
      %v944 = vmax.f32 %v898, 0.0
      %v945 = vmax.f32 %v903, 0.0
      %v946 = vmax.f32 %v908, 0.0
      %v947 = vmax.f32 %v913, 0.0
      %v948 = vmax.f32 %v918, 0.0
      %v949 = vmax.f32 %v923, 0.0
      %v950 = vmax.f32 %v928, 0.0
      %v951 = vmax.f32 %v933, 0.0
      %vm952 = vcmask 15360
      %953 = vst.msk [vmem:[#allocation2] sm:$0xff] %vm952, 0.0
      %954 = vst.msk [vmem:[#allocation2 + $0x8] sm:$0xff] %vm952, 0.0
      %955 = vst.msk [vmem:[#allocation2 + $0x10] sm:$0xff] %vm952, 0.0
      %956 = vst.msk [vmem:[#allocation2 + $0x18] sm:$0xff] %vm952, 0.0
      %957 = vst.msk [vmem:[#allocation2 + $0x20] sm:$0xff] %vm952, 0.0
      %958 = vst.msk [vmem:[#allocation2 + $0x28] sm:$0xff] %vm952, 0.0
      %959 = vst.msk [vmem:[#allocation2 + $0x30] sm:$0xff] %vm952, 0.0
      %960 = vst.msk [vmem:[#allocation2 + $0x38] sm:$0xff] %vm952, 0.0
      %961 = vst.msk [vmem:[#allocation2 + $0x40] sm:$0xff] %vm952, 0.0
      %962 = vst.msk [vmem:[#allocation2 + $0x48] sm:$0xff] %vm952, 0.0
      %963 = vst.msk [vmem:[#allocation2 + $0x50] sm:$0xff] %vm952, 0.0
      %964 = vst.msk [vmem:[#allocation2 + $0x58] sm:$0xff] %vm952, 0.0
      %965 = vst.msk [vmem:[#allocation2 + $0x60] sm:$0xff] %vm952, 0.0
      %966 = vst.msk [vmem:[#allocation2 + $0x68] sm:$0xff] %vm952, 0.0
      %967 = vst.msk [vmem:[#allocation2 + $0x70] sm:$0xff] %vm952, 0.0
      %968 = vst.msk [vmem:[#allocation2 + $0x78] sm:$0xff] %vm952, 0.0
      %vm969 = vcmask 146560
      %970 = vst.msk [vmem:[#allocation2] sm:$0xff] %vm969, 0.0
      %971 = vst.msk [vmem:[#allocation2 + $0x8] sm:$0xff] %vm969, 0.0
      %972 = vst.msk [vmem:[#allocation2 + $0x10] sm:$0xff] %vm969, 0.0
      %973 = vst.msk [vmem:[#allocation2 + $0x18] sm:$0xff] %vm969, 0.0
      %974 = vst.msk [vmem:[#allocation2 + $0x20] sm:$0xff] %vm969, 0.0
      %975 = vst.msk [vmem:[#allocation2 + $0x28] sm:$0xff] %vm969, 0.0
      %976 = vst.msk [vmem:[#allocation2 + $0x30] sm:$0xff] %vm969, 0.0
      %977 = vst.msk [vmem:[#allocation2 + $0x38] sm:$0xff] %vm969, 0.0
      %978 = vst.msk [vmem:[#allocation2 + $0x40] sm:$0xff] %vm969, 0.0
      %979 = vst.msk [vmem:[#allocation2 + $0x48] sm:$0xff] %vm969, 0.0
      %980 = vst.msk [vmem:[#allocation2 + $0x50] sm:$0xff] %vm969, 0.0
      %981 = vst.msk [vmem:[#allocation2 + $0x58] sm:$0xff] %vm969, 0.0
      %982 = vst.msk [vmem:[#allocation2 + $0x60] sm:$0xff] %vm969, 0.0
      %983 = vst.msk [vmem:[#allocation2 + $0x68] sm:$0xff] %vm969, 0.0
      %984 = vst.msk [vmem:[#allocation2 + $0x70] sm:$0xff] %vm969, 0.0
      %985 = vst.msk [vmem:[#allocation2 + $0x78] sm:$0xff] %vm969, 0.0
      %1002 = vrot.lane.b32.xlu0 %v936, 2
      %v1003 = vpop.permute.xlu0 %1002
      %1004 = vrot.lane.b32.xlu0 %v937, 2
      %v1005 = vpop.permute.xlu0 %1004
      %1006 = vrot.lane.b32.xlu0 %v938, 2
      %v1007 = vpop.permute.xlu0 %1006
      %1008 = vrot.lane.b32.xlu0 %v939, 2
      %v1009 = vpop.permute.xlu0 %1008
      %1010 = vrot.lane.b32.xlu0 %v940, 2
      %v1011 = vpop.permute.xlu0 %1010
      %1012 = vrot.lane.b32.xlu0 %v941, 2
      %v1013 = vpop.permute.xlu0 %1012
      %1014 = vrot.lane.b32.xlu0 %v942, 2
      %v1015 = vpop.permute.xlu0 %1014
      %1016 = vrot.lane.b32.xlu0 %v943, 2
      %v1017 = vpop.permute.xlu0 %1016
      %1018 = vrot.lane.b32.xlu0 %v944, 2
      %v1019 = vpop.permute.xlu0 %1018
      %1020 = vrot.lane.b32.xlu0 %v945, 2
      %v1021 = vpop.permute.xlu0 %1020
      %1022 = vrot.lane.b32.xlu0 %v946, 2
      %v1023 = vpop.permute.xlu0 %1022
      %1024 = vrot.lane.b32.xlu0 %v947, 2
      %v1025 = vpop.permute.xlu0 %1024
      %1026 = vrot.lane.b32.xlu0 %v948, 2
      %v1027 = vpop.permute.xlu0 %1026
      %1028 = vrot.lane.b32.xlu0 %v949, 2
      %v1029 = vpop.permute.xlu0 %1028
      %1030 = vrot.lane.b32.xlu0 %v950, 2
      %v1031 = vpop.permute.xlu0 %1030
      %1032 = vrot.lane.b32.xlu0 %v951, 2
      %v1033 = vpop.permute.xlu0 %1032
      %vm1050 = vcmask 130064
      %1051 = vst.msk [vmem:[#allocation2] sm:$0xff] %vm1050, %v1003
      %1052 = vst.msk [vmem:[#allocation2 + $0x8] sm:$0xff] %vm1050, %v1005
      %1053 = vst.msk [vmem:[#allocation2 + $0x10] sm:$0xff] %vm1050, %v1007
      %1054 = vst.msk [vmem:[#allocation2 + $0x18] sm:$0xff] %vm1050, %v1009
      %1055 = vst.msk [vmem:[#allocation2 + $0x20] sm:$0xff] %vm1050, %v1011
      %1056 = vst.msk [vmem:[#allocation2 + $0x28] sm:$0xff] %vm1050, %v1013
      %1057 = vst.msk [vmem:[#allocation2 + $0x30] sm:$0xff] %vm1050, %v1015
      %1058 = vst.msk [vmem:[#allocation2 + $0x38] sm:$0xff] %vm1050, %v1017
      %1059 = vst.msk [vmem:[#allocation2 + $0x40] sm:$0xff] %vm1050, %v1019
      %1060 = vst.msk [vmem:[#allocation2 + $0x48] sm:$0xff] %vm1050, %v1021
      %1061 = vst.msk [vmem:[#allocation2 + $0x50] sm:$0xff] %vm1050, %v1023
      %1062 = vst.msk [vmem:[#allocation2 + $0x58] sm:$0xff] %vm1050, %v1025
      %1063 = vst.msk [vmem:[#allocation2 + $0x60] sm:$0xff] %vm1050, %v1027
      %1064 = vst.msk [vmem:[#allocation2 + $0x68] sm:$0xff] %vm1050, %v1029
      %1065 = vst.msk [vmem:[#allocation2 + $0x70] sm:$0xff] %vm1050, %v1031
      %1066 = vst.msk [vmem:[#allocation2 + $0x78] sm:$0xff] %vm1050, %v1033
      %v1067 = vld [vmem:[%s5] sm:$0xff]
      %v1068 = vld [vmem:[%s5 + $0x8] sm:$0xff]
      %v1069 = vld [vmem:[%s5 + $0x10] sm:$0xff]
      %v1070 = vld [vmem:[%s5 + $0x18] sm:$0xff]
      %v1071 = vld [vmem:[%s5 + $0x20] sm:$0xff]
      %v1072 = vld [vmem:[%s5 + $0x28] sm:$0xff]
      %v1073 = vld [vmem:[%s5 + $0x30] sm:$0xff]
      %v1074 = vld [vmem:[%s5 + $0x38] sm:$0xff]
      %v1075 = vld [vmem:[%s5 + $0x40] sm:$0xff]
      %v1076 = vld [vmem:[%s5 + $0x48] sm:$0xff]
      %v1077 = vld [vmem:[%s5 + $0x50] sm:$0xff]
      %v1078 = vld [vmem:[%s5 + $0x58] sm:$0xff]
      %v1079 = vld [vmem:[%s5 + $0x60] sm:$0xff]
      %v1080 = vld [vmem:[%s5 + $0x68] sm:$0xff]
      %v1081 = vld [vmem:[%s5 + $0x70] sm:$0xff]
      %v1082 = vld [vmem:[%s5 + $0x78] sm:$0xff]
      %v1083 = vld [vmem:[#allocation2] sm:$0xff]
      %v1084 = vld [vmem:[#allocation2 + $0x8] sm:$0xff]
      %v1085 = vld [vmem:[#allocation2 + $0x10] sm:$0xff]
      %v1086 = vld [vmem:[#allocation2 + $0x18] sm:$0xff]
      %v1087 = vld [vmem:[#allocation2 + $0x20] sm:$0xff]
      %v1088 = vld [vmem:[#allocation2 + $0x28] sm:$0xff]
      %v1089 = vld [vmem:[#allocation2 + $0x30] sm:$0xff]
      %v1090 = vld [vmem:[#allocation2 + $0x38] sm:$0xff]
      %v1091 = vld [vmem:[#allocation2 + $0x40] sm:$0xff]
      %v1092 = vld [vmem:[#allocation2 + $0x48] sm:$0xff]
      %v1093 = vld [vmem:[#allocation2 + $0x50] sm:$0xff]
      %v1094 = vld [vmem:[#allocation2 + $0x58] sm:$0xff]
      %v1095 = vld [vmem:[#allocation2 + $0x60] sm:$0xff]
      %v1096 = vld [vmem:[#allocation2 + $0x68] sm:$0xff]
      %v1097 = vld [vmem:[#allocation2 + $0x70] sm:$0xff]
      %v1098 = vld [vmem:[#allocation2 + $0x78] sm:$0xff]
      %1100 = vset.pattern.permute.xlu0 0
      %1101 = vperm.xlu0 %1100, %v1067
      %v1102 = vpop.permute.xlu0 %1101
      %1105 = vset.pattern.permute.xlu0 0
      %1106 = vperm.xlu0 %1105, %v1068
      %v1107 = vpop.permute.xlu0 %1106
      %1110 = vset.pattern.permute.xlu0 0
      %1111 = vperm.xlu0 %1110, %v1069
      %v1112 = vpop.permute.xlu0 %1111
      %1115 = vset.pattern.permute.xlu0 0
      %1116 = vperm.xlu0 %1115, %v1070
      %v1117 = vpop.permute.xlu0 %1116
      %1120 = vset.pattern.permute.xlu0 0
      %1121 = vperm.xlu0 %1120, %v1071
      %v1122 = vpop.permute.xlu0 %1121
      %1125 = vset.pattern.permute.xlu0 0
      %1126 = vperm.xlu0 %1125, %v1072
      %v1127 = vpop.permute.xlu0 %1126
      %1130 = vset.pattern.permute.xlu0 0
      %1131 = vperm.xlu0 %1130, %v1073
      %v1132 = vpop.permute.xlu0 %1131
      %1135 = vset.pattern.permute.xlu0 0
      %1136 = vperm.xlu0 %1135, %v1074
      %v1137 = vpop.permute.xlu0 %1136
      %1140 = vset.pattern.permute.xlu0 0
      %1141 = vperm.xlu0 %1140, %v1075
      %v1142 = vpop.permute.xlu0 %1141
      %1145 = vset.pattern.permute.xlu0 0
      %1146 = vperm.xlu0 %1145, %v1076
      %v1147 = vpop.permute.xlu0 %1146
      %1150 = vset.pattern.permute.xlu0 0
      %1151 = vperm.xlu0 %1150, %v1077
      %v1152 = vpop.permute.xlu0 %1151
      %1155 = vset.pattern.permute.xlu0 0
      %1156 = vperm.xlu0 %1155, %v1078
      %v1157 = vpop.permute.xlu0 %1156
      %1160 = vset.pattern.permute.xlu0 0
      %1161 = vperm.xlu0 %1160, %v1079
      %v1162 = vpop.permute.xlu0 %1161
      %1165 = vset.pattern.permute.xlu0 0
      %1166 = vperm.xlu0 %1165, %v1080
      %v1167 = vpop.permute.xlu0 %1166
      %1170 = vset.pattern.permute.xlu0 0
      %1171 = vperm.xlu0 %1170, %v1081
      %v1172 = vpop.permute.xlu0 %1171
      %1175 = vset.pattern.permute.xlu0 0
      %1176 = vperm.xlu0 %1175, %v1082
      %v1177 = vpop.permute.xlu0 %1176
      %v1179 = vmul.f32 %v1102, %v1083
      %v1180 = vmul.f32 %v1107, %v1084
      %v1181 = vmul.f32 %v1112, %v1085
      %v1182 = vmul.f32 %v1117, %v1086
      %v1183 = vmul.f32 %v1122, %v1087
      %v1184 = vmul.f32 %v1127, %v1088
      %v1185 = vmul.f32 %v1132, %v1089
      %v1186 = vmul.f32 %v1137, %v1090
      %v1187 = vmul.f32 %v1142, %v1091
      %v1188 = vmul.f32 %v1147, %v1092
      %v1189 = vmul.f32 %v1152, %v1093
      %v1190 = vmul.f32 %v1157, %v1094
      %v1191 = vmul.f32 %v1162, %v1095
      %v1192 = vmul.f32 %v1167, %v1096
      %v1193 = vmul.f32 %v1172, %v1097
      %v1194 = vmul.f32 %v1177, %v1098
      %v1195 = vadd.f32 %v1179, 0.0
      %v1196 = vadd.f32 %v1180, 0.0
      %v1197 = vadd.f32 %v1181, 0.0
      %v1198 = vadd.f32 %v1182, 0.0
      %v1199 = vadd.f32 %v1183, 0.0
      %v1200 = vadd.f32 %v1184, 0.0
      %v1201 = vadd.f32 %v1185, 0.0
      %v1202 = vadd.f32 %v1186, 0.0
      %v1203 = vadd.f32 %v1187, 0.0
      %v1204 = vadd.f32 %v1188, 0.0
      %v1205 = vadd.f32 %v1189, 0.0
      %v1206 = vadd.f32 %v1190, 0.0
      %v1207 = vadd.f32 %v1191, 0.0
      %v1208 = vadd.f32 %v1192, 0.0
      %v1209 = vadd.f32 %v1193, 0.0
      %v1210 = vadd.f32 %v1194, 0.0
      %s1211 = scalar_lea.vmem %s5, 128
      %v1212 = vld [vmem:[%s1211] sm:$0xff]
      %v1213 = vld [vmem:[%s1211 + $0x8] sm:$0xff]
      %v1214 = vld [vmem:[%s1211 + $0x10] sm:$0xff]
      %v1215 = vld [vmem:[%s1211 + $0x18] sm:$0xff]
      %v1216 = vld [vmem:[%s1211 + $0x20] sm:$0xff]
      %v1217 = vld [vmem:[%s1211 + $0x28] sm:$0xff]
      %v1218 = vld [vmem:[%s1211 + $0x30] sm:$0xff]
      %v1219 = vld [vmem:[%s1211 + $0x38] sm:$0xff]
      %v1220 = vld [vmem:[%s1211 + $0x40] sm:$0xff]
      %v1221 = vld [vmem:[%s1211 + $0x48] sm:$0xff]
      %v1222 = vld [vmem:[%s1211 + $0x50] sm:$0xff]
      %v1223 = vld [vmem:[%s1211 + $0x58] sm:$0xff]
      %v1224 = vld [vmem:[%s1211 + $0x60] sm:$0xff]
      %v1225 = vld [vmem:[%s1211 + $0x68] sm:$0xff]
      %v1226 = vld [vmem:[%s1211 + $0x70] sm:$0xff]
      %v1227 = vld [vmem:[%s1211 + $0x78] sm:$0xff]
      %1229 = vset.pattern.permute.xlu0 0
      %1230 = vperm.xlu0 %1229, %v1212
      %v1231 = vpop.permute.xlu0 %1230
      %1234 = vset.pattern.permute.xlu0 0
      %1235 = vperm.xlu0 %1234, %v1213
      %v1236 = vpop.permute.xlu0 %1235
      %1239 = vset.pattern.permute.xlu0 0
      %1240 = vperm.xlu0 %1239, %v1214
      %v1241 = vpop.permute.xlu0 %1240
      %1244 = vset.pattern.permute.xlu0 0
      %1245 = vperm.xlu0 %1244, %v1215
      %v1246 = vpop.permute.xlu0 %1245
      %1249 = vset.pattern.permute.xlu0 0
      %1250 = vperm.xlu0 %1249, %v1216
      %v1251 = vpop.permute.xlu0 %1250
      %1254 = vset.pattern.permute.xlu0 0
      %1255 = vperm.xlu0 %1254, %v1217
      %v1256 = vpop.permute.xlu0 %1255
      %1259 = vset.pattern.permute.xlu0 0
      %1260 = vperm.xlu0 %1259, %v1218
      %v1261 = vpop.permute.xlu0 %1260
      %1264 = vset.pattern.permute.xlu0 0
      %1265 = vperm.xlu0 %1264, %v1219
      %v1266 = vpop.permute.xlu0 %1265
      %1269 = vset.pattern.permute.xlu0 0
      %1270 = vperm.xlu0 %1269, %v1220
      %v1271 = vpop.permute.xlu0 %1270
      %1274 = vset.pattern.permute.xlu0 0
      %1275 = vperm.xlu0 %1274, %v1221
      %v1276 = vpop.permute.xlu0 %1275
      %1279 = vset.pattern.permute.xlu0 0
      %1280 = vperm.xlu0 %1279, %v1222
      %v1281 = vpop.permute.xlu0 %1280
      %1284 = vset.pattern.permute.xlu0 0
      %1285 = vperm.xlu0 %1284, %v1223
      %v1286 = vpop.permute.xlu0 %1285
      %1289 = vset.pattern.permute.xlu0 0
      %1290 = vperm.xlu0 %1289, %v1224
      %v1291 = vpop.permute.xlu0 %1290
      %1294 = vset.pattern.permute.xlu0 0
      %1295 = vperm.xlu0 %1294, %v1225
      %v1296 = vpop.permute.xlu0 %1295
      %1299 = vset.pattern.permute.xlu0 0
      %1300 = vperm.xlu0 %1299, %v1226
      %v1301 = vpop.permute.xlu0 %1300
      %1304 = vset.pattern.permute.xlu0 0
      %1305 = vperm.xlu0 %1304, %v1227
      %v1306 = vpop.permute.xlu0 %1305
      %v1308 = vmul.f32 %v1231, %v1083
      %v1309 = vmul.f32 %v1236, %v1084
      %v1310 = vmul.f32 %v1241, %v1085
      %v1311 = vmul.f32 %v1246, %v1086
      %v1312 = vmul.f32 %v1251, %v1087
      %v1313 = vmul.f32 %v1256, %v1088
      %v1314 = vmul.f32 %v1261, %v1089
      %v1315 = vmul.f32 %v1266, %v1090
      %v1316 = vmul.f32 %v1271, %v1091
      %v1317 = vmul.f32 %v1276, %v1092
      %v1318 = vmul.f32 %v1281, %v1093
      %v1319 = vmul.f32 %v1286, %v1094
      %v1320 = vmul.f32 %v1291, %v1095
      %v1321 = vmul.f32 %v1296, %v1096
      %v1322 = vmul.f32 %v1301, %v1097
      %v1323 = vmul.f32 %v1306, %v1098
      %1340 = vrot.lane.b32.xlu0 %v1308, 127
      %v1341 = vpop.permute.xlu0 %1340
      %1342 = vrot.lane.b32.xlu0 %v1309, 127
      %v1343 = vpop.permute.xlu0 %1342
      %1344 = vrot.lane.b32.xlu0 %v1310, 127
      %v1345 = vpop.permute.xlu0 %1344
      %1346 = vrot.lane.b32.xlu0 %v1311, 127
      %v1347 = vpop.permute.xlu0 %1346
      %1348 = vrot.lane.b32.xlu0 %v1312, 127
      %v1349 = vpop.permute.xlu0 %1348
      %1350 = vrot.lane.b32.xlu0 %v1313, 127
      %v1351 = vpop.permute.xlu0 %1350
      %1352 = vrot.lane.b32.xlu0 %v1314, 127
      %v1353 = vpop.permute.xlu0 %1352
      %1354 = vrot.lane.b32.xlu0 %v1315, 127
      %v1355 = vpop.permute.xlu0 %1354
      %1356 = vrot.lane.b32.xlu0 %v1316, 127
      %v1357 = vpop.permute.xlu0 %1356
      %1358 = vrot.lane.b32.xlu0 %v1317, 127
      %v1359 = vpop.permute.xlu0 %1358
      %1360 = vrot.lane.b32.xlu0 %v1318, 127
      %v1361 = vpop.permute.xlu0 %1360
      %1362 = vrot.lane.b32.xlu0 %v1319, 127
      %v1363 = vpop.permute.xlu0 %1362
      %1364 = vrot.lane.b32.xlu0 %v1320, 127
      %v1365 = vpop.permute.xlu0 %1364
      %1366 = vrot.lane.b32.xlu0 %v1321, 127
      %v1367 = vpop.permute.xlu0 %1366
      %1368 = vrot.lane.b32.xlu0 %v1322, 127
      %v1369 = vpop.permute.xlu0 %1368
      %1370 = vrot.lane.b32.xlu0 %v1323, 127
      %v1371 = vpop.permute.xlu0 %1370
      %v1388 = vadd.f32 %v1195, %v1341
      %v1389 = vadd.f32 %v1196, %v1343
      %v1390 = vadd.f32 %v1197, %v1345
      %v1391 = vadd.f32 %v1198, %v1347
      %v1392 = vadd.f32 %v1199, %v1349
      %v1393 = vadd.f32 %v1200, %v1351
      %v1394 = vadd.f32 %v1201, %v1353
      %v1395 = vadd.f32 %v1202, %v1355
      %v1396 = vadd.f32 %v1203, %v1357
      %v1397 = vadd.f32 %v1204, %v1359
      %v1398 = vadd.f32 %v1205, %v1361
      %v1399 = vadd.f32 %v1206, %v1363
      %v1400 = vadd.f32 %v1207, %v1365
      %v1401 = vadd.f32 %v1208, %v1367
      %v1402 = vadd.f32 %v1209, %v1369
      %v1403 = vadd.f32 %v1210, %v1371
      %s1404 = scalar_lea.vmem %s5, 256
      %v1405 = vld [vmem:[%s1404] sm:$0xff]
      %v1406 = vld [vmem:[%s1404 + $0x8] sm:$0xff]
      %v1407 = vld [vmem:[%s1404 + $0x10] sm:$0xff]
      %v1408 = vld [vmem:[%s1404 + $0x18] sm:$0xff]
      %v1409 = vld [vmem:[%s1404 + $0x20] sm:$0xff]
      %v1410 = vld [vmem:[%s1404 + $0x28] sm:$0xff]
      %v1411 = vld [vmem:[%s1404 + $0x30] sm:$0xff]
      %v1412 = vld [vmem:[%s1404 + $0x38] sm:$0xff]
      %v1413 = vld [vmem:[%s1404 + $0x40] sm:$0xff]
      %v1414 = vld [vmem:[%s1404 + $0x48] sm:$0xff]
      %v1415 = vld [vmem:[%s1404 + $0x50] sm:$0xff]
      %v1416 = vld [vmem:[%s1404 + $0x58] sm:$0xff]
      %v1417 = vld [vmem:[%s1404 + $0x60] sm:$0xff]
      %v1418 = vld [vmem:[%s1404 + $0x68] sm:$0xff]
      %v1419 = vld [vmem:[%s1404 + $0x70] sm:$0xff]
      %v1420 = vld [vmem:[%s1404 + $0x78] sm:$0xff]
      %1422 = vset.pattern.permute.xlu0 0
      %1423 = vperm.xlu0 %1422, %v1405
      %v1424 = vpop.permute.xlu0 %1423
      %1427 = vset.pattern.permute.xlu0 0
      %1428 = vperm.xlu0 %1427, %v1406
      %v1429 = vpop.permute.xlu0 %1428
      %1432 = vset.pattern.permute.xlu0 0
      %1433 = vperm.xlu0 %1432, %v1407
      %v1434 = vpop.permute.xlu0 %1433
      %1437 = vset.pattern.permute.xlu0 0
      %1438 = vperm.xlu0 %1437, %v1408
      %v1439 = vpop.permute.xlu0 %1438
      %1442 = vset.pattern.permute.xlu0 0
      %1443 = vperm.xlu0 %1442, %v1409
      %v1444 = vpop.permute.xlu0 %1443
      %1447 = vset.pattern.permute.xlu0 0
      %1448 = vperm.xlu0 %1447, %v1410
      %v1449 = vpop.permute.xlu0 %1448
      %1452 = vset.pattern.permute.xlu0 0
      %1453 = vperm.xlu0 %1452, %v1411
      %v1454 = vpop.permute.xlu0 %1453
      %1457 = vset.pattern.permute.xlu0 0
      %1458 = vperm.xlu0 %1457, %v1412
      %v1459 = vpop.permute.xlu0 %1458
      %1462 = vset.pattern.permute.xlu0 0
      %1463 = vperm.xlu0 %1462, %v1413
      %v1464 = vpop.permute.xlu0 %1463
      %1467 = vset.pattern.permute.xlu0 0
      %1468 = vperm.xlu0 %1467, %v1414
      %v1469 = vpop.permute.xlu0 %1468
      %1472 = vset.pattern.permute.xlu0 0
      %1473 = vperm.xlu0 %1472, %v1415
      %v1474 = vpop.permute.xlu0 %1473
      %1477 = vset.pattern.permute.xlu0 0
      %1478 = vperm.xlu0 %1477, %v1416
      %v1479 = vpop.permute.xlu0 %1478
      %1482 = vset.pattern.permute.xlu0 0
      %1483 = vperm.xlu0 %1482, %v1417
      %v1484 = vpop.permute.xlu0 %1483
      %1487 = vset.pattern.permute.xlu0 0
      %1488 = vperm.xlu0 %1487, %v1418
      %v1489 = vpop.permute.xlu0 %1488
      %1492 = vset.pattern.permute.xlu0 0
      %1493 = vperm.xlu0 %1492, %v1419
      %v1494 = vpop.permute.xlu0 %1493
      %1497 = vset.pattern.permute.xlu0 0
      %1498 = vperm.xlu0 %1497, %v1420
      %v1499 = vpop.permute.xlu0 %1498
      %v1501 = vmul.f32 %v1424, %v1083
      %v1502 = vmul.f32 %v1429, %v1084
      %v1503 = vmul.f32 %v1434, %v1085
      %v1504 = vmul.f32 %v1439, %v1086
      %v1505 = vmul.f32 %v1444, %v1087
      %v1506 = vmul.f32 %v1449, %v1088
      %v1507 = vmul.f32 %v1454, %v1089
      %v1508 = vmul.f32 %v1459, %v1090
      %v1509 = vmul.f32 %v1464, %v1091
      %v1510 = vmul.f32 %v1469, %v1092
      %v1511 = vmul.f32 %v1474, %v1093
      %v1512 = vmul.f32 %v1479, %v1094
      %v1513 = vmul.f32 %v1484, %v1095
      %v1514 = vmul.f32 %v1489, %v1096
      %v1515 = vmul.f32 %v1494, %v1097
      %v1516 = vmul.f32 %v1499, %v1098
      %1533 = vrot.lane.b32.xlu0 %v1501, 126
      %v1534 = vpop.permute.xlu0 %1533
      %1535 = vrot.lane.b32.xlu0 %v1502, 126
      %v1536 = vpop.permute.xlu0 %1535
      %1537 = vrot.lane.b32.xlu0 %v1503, 126
      %v1538 = vpop.permute.xlu0 %1537
      %1539 = vrot.lane.b32.xlu0 %v1504, 126
      %v1540 = vpop.permute.xlu0 %1539
      %1541 = vrot.lane.b32.xlu0 %v1505, 126
      %v1542 = vpop.permute.xlu0 %1541
      %1543 = vrot.lane.b32.xlu0 %v1506, 126
      %v1544 = vpop.permute.xlu0 %1543
      %1545 = vrot.lane.b32.xlu0 %v1507, 126
      %v1546 = vpop.permute.xlu0 %1545
      %1547 = vrot.lane.b32.xlu0 %v1508, 126
      %v1548 = vpop.permute.xlu0 %1547
      %1549 = vrot.lane.b32.xlu0 %v1509, 126
      %v1550 = vpop.permute.xlu0 %1549
      %1551 = vrot.lane.b32.xlu0 %v1510, 126
      %v1552 = vpop.permute.xlu0 %1551
      %1553 = vrot.lane.b32.xlu0 %v1511, 126
      %v1554 = vpop.permute.xlu0 %1553
      %1555 = vrot.lane.b32.xlu0 %v1512, 126
      %v1556 = vpop.permute.xlu0 %1555
      %1557 = vrot.lane.b32.xlu0 %v1513, 126
      %v1558 = vpop.permute.xlu0 %1557
      %1559 = vrot.lane.b32.xlu0 %v1514, 126
      %v1560 = vpop.permute.xlu0 %1559
      %1561 = vrot.lane.b32.xlu0 %v1515, 126
      %v1562 = vpop.permute.xlu0 %1561
      %1563 = vrot.lane.b32.xlu0 %v1516, 126
      %v1564 = vpop.permute.xlu0 %1563
      %v1581 = vadd.f32 %v1388, %v1534
      %v1582 = vadd.f32 %v1389, %v1536
      %v1583 = vadd.f32 %v1390, %v1538
      %v1584 = vadd.f32 %v1391, %v1540
      %v1585 = vadd.f32 %v1392, %v1542
      %v1586 = vadd.f32 %v1393, %v1544
      %v1587 = vadd.f32 %v1394, %v1546
      %v1588 = vadd.f32 %v1395, %v1548
      %v1589 = vadd.f32 %v1396, %v1550
      %v1590 = vadd.f32 %v1397, %v1552
      %v1591 = vadd.f32 %v1398, %v1554
      %v1592 = vadd.f32 %v1399, %v1556
      %v1593 = vadd.f32 %v1400, %v1558
      %v1594 = vadd.f32 %v1401, %v1560
      %v1595 = vadd.f32 %v1402, %v1562
      %v1596 = vadd.f32 %v1403, %v1564
      %s1597 = scalar_lea.vmem %s5, 384
      %v1598 = vld [vmem:[%s1597] sm:$0xff]
      %v1599 = vld [vmem:[%s1597 + $0x8] sm:$0xff]
      %v1600 = vld [vmem:[%s1597 + $0x10] sm:$0xff]
      %v1601 = vld [vmem:[%s1597 + $0x18] sm:$0xff]
      %v1602 = vld [vmem:[%s1597 + $0x20] sm:$0xff]
      %v1603 = vld [vmem:[%s1597 + $0x28] sm:$0xff]
      %v1604 = vld [vmem:[%s1597 + $0x30] sm:$0xff]
      %v1605 = vld [vmem:[%s1597 + $0x38] sm:$0xff]
      %v1606 = vld [vmem:[%s1597 + $0x40] sm:$0xff]
      %v1607 = vld [vmem:[%s1597 + $0x48] sm:$0xff]
      %v1608 = vld [vmem:[%s1597 + $0x50] sm:$0xff]
      %v1609 = vld [vmem:[%s1597 + $0x58] sm:$0xff]
      %v1610 = vld [vmem:[%s1597 + $0x60] sm:$0xff]
      %v1611 = vld [vmem:[%s1597 + $0x68] sm:$0xff]
      %v1612 = vld [vmem:[%s1597 + $0x70] sm:$0xff]
      %v1613 = vld [vmem:[%s1597 + $0x78] sm:$0xff]
      %1615 = vset.pattern.permute.xlu0 0
      %1616 = vperm.xlu0 %1615, %v1598
      %v1617 = vpop.permute.xlu0 %1616
      %1620 = vset.pattern.permute.xlu0 0
      %1621 = vperm.xlu0 %1620, %v1599
      %v1622 = vpop.permute.xlu0 %1621
      %1625 = vset.pattern.permute.xlu0 0
      %1626 = vperm.xlu0 %1625, %v1600
      %v1627 = vpop.permute.xlu0 %1626
      %1630 = vset.pattern.permute.xlu0 0
      %1631 = vperm.xlu0 %1630, %v1601
      %v1632 = vpop.permute.xlu0 %1631
      %1635 = vset.pattern.permute.xlu0 0
      %1636 = vperm.xlu0 %1635, %v1602
      %v1637 = vpop.permute.xlu0 %1636
      %1640 = vset.pattern.permute.xlu0 0
      %1641 = vperm.xlu0 %1640, %v1603
      %v1642 = vpop.permute.xlu0 %1641
      %1645 = vset.pattern.permute.xlu0 0
      %1646 = vperm.xlu0 %1645, %v1604
      %v1647 = vpop.permute.xlu0 %1646
      %1650 = vset.pattern.permute.xlu0 0
      %1651 = vperm.xlu0 %1650, %v1605
      %v1652 = vpop.permute.xlu0 %1651
      %1655 = vset.pattern.permute.xlu0 0
      %1656 = vperm.xlu0 %1655, %v1606
      %v1657 = vpop.permute.xlu0 %1656
      %1660 = vset.pattern.permute.xlu0 0
      %1661 = vperm.xlu0 %1660, %v1607
      %v1662 = vpop.permute.xlu0 %1661
      %1665 = vset.pattern.permute.xlu0 0
      %1666 = vperm.xlu0 %1665, %v1608
      %v1667 = vpop.permute.xlu0 %1666
      %1670 = vset.pattern.permute.xlu0 0
      %1671 = vperm.xlu0 %1670, %v1609
      %v1672 = vpop.permute.xlu0 %1671
      %1675 = vset.pattern.permute.xlu0 0
      %1676 = vperm.xlu0 %1675, %v1610
      %v1677 = vpop.permute.xlu0 %1676
      %1680 = vset.pattern.permute.xlu0 0
      %1681 = vperm.xlu0 %1680, %v1611
      %v1682 = vpop.permute.xlu0 %1681
      %1685 = vset.pattern.permute.xlu0 0
      %1686 = vperm.xlu0 %1685, %v1612
      %v1687 = vpop.permute.xlu0 %1686
      %1690 = vset.pattern.permute.xlu0 0
      %1691 = vperm.xlu0 %1690, %v1613
      %v1692 = vpop.permute.xlu0 %1691
      %v1694 = vmul.f32 %v1617, %v1083
      %v1695 = vmul.f32 %v1622, %v1084
      %v1696 = vmul.f32 %v1627, %v1085
      %v1697 = vmul.f32 %v1632, %v1086
      %v1698 = vmul.f32 %v1637, %v1087
      %v1699 = vmul.f32 %v1642, %v1088
      %v1700 = vmul.f32 %v1647, %v1089
      %v1701 = vmul.f32 %v1652, %v1090
      %v1702 = vmul.f32 %v1657, %v1091
      %v1703 = vmul.f32 %v1662, %v1092
      %v1704 = vmul.f32 %v1667, %v1093
      %v1705 = vmul.f32 %v1672, %v1094
      %v1706 = vmul.f32 %v1677, %v1095
      %v1707 = vmul.f32 %v1682, %v1096
      %v1708 = vmul.f32 %v1687, %v1097
      %v1709 = vmul.f32 %v1692, %v1098
      %1726 = vrot.lane.b32.xlu0 %v1694, 125
      %v1727 = vpop.permute.xlu0 %1726
      %1728 = vrot.lane.b32.xlu0 %v1695, 125
      %v1729 = vpop.permute.xlu0 %1728
      %1730 = vrot.lane.b32.xlu0 %v1696, 125
      %v1731 = vpop.permute.xlu0 %1730
      %1732 = vrot.lane.b32.xlu0 %v1697, 125
      %v1733 = vpop.permute.xlu0 %1732
      %1734 = vrot.lane.b32.xlu0 %v1698, 125
      %v1735 = vpop.permute.xlu0 %1734
      %1736 = vrot.lane.b32.xlu0 %v1699, 125
      %v1737 = vpop.permute.xlu0 %1736
      %1738 = vrot.lane.b32.xlu0 %v1700, 125
      %v1739 = vpop.permute.xlu0 %1738
      %1740 = vrot.lane.b32.xlu0 %v1701, 125
      %v1741 = vpop.permute.xlu0 %1740
      %1742 = vrot.lane.b32.xlu0 %v1702, 125
      %v1743 = vpop.permute.xlu0 %1742
      %1744 = vrot.lane.b32.xlu0 %v1703, 125
      %v1745 = vpop.permute.xlu0 %1744
      %1746 = vrot.lane.b32.xlu0 %v1704, 125
      %v1747 = vpop.permute.xlu0 %1746
      %1748 = vrot.lane.b32.xlu0 %v1705, 125
      %v1749 = vpop.permute.xlu0 %1748
      %1750 = vrot.lane.b32.xlu0 %v1706, 125
      %v1751 = vpop.permute.xlu0 %1750
      %1752 = vrot.lane.b32.xlu0 %v1707, 125
      %v1753 = vpop.permute.xlu0 %1752
      %1754 = vrot.lane.b32.xlu0 %v1708, 125
      %v1755 = vpop.permute.xlu0 %1754
      %1756 = vrot.lane.b32.xlu0 %v1709, 125
      %v1757 = vpop.permute.xlu0 %1756
      %v1774 = vadd.f32 %v1581, %v1727
      %v1775 = vadd.f32 %v1582, %v1729
      %v1776 = vadd.f32 %v1583, %v1731
      %v1777 = vadd.f32 %v1584, %v1733
      %v1778 = vadd.f32 %v1585, %v1735
      %v1779 = vadd.f32 %v1586, %v1737
      %v1780 = vadd.f32 %v1587, %v1739
      %v1781 = vadd.f32 %v1588, %v1741
      %v1782 = vadd.f32 %v1589, %v1743
      %v1783 = vadd.f32 %v1590, %v1745
      %v1784 = vadd.f32 %v1591, %v1747
      %v1785 = vadd.f32 %v1592, %v1749
      %v1786 = vadd.f32 %v1593, %v1751
      %v1787 = vadd.f32 %v1594, %v1753
      %v1788 = vadd.f32 %v1595, %v1755
      %v1789 = vadd.f32 %v1596, %v1757
      %s1790 = scalar_lea.vmem %s5, 512
      %v1791 = vld [vmem:[%s1790] sm:$0xff]
      %v1792 = vld [vmem:[%s1790 + $0x8] sm:$0xff]
      %v1793 = vld [vmem:[%s1790 + $0x10] sm:$0xff]
      %v1794 = vld [vmem:[%s1790 + $0x18] sm:$0xff]
      %v1795 = vld [vmem:[%s1790 + $0x20] sm:$0xff]
      %v1796 = vld [vmem:[%s1790 + $0x28] sm:$0xff]
      %v1797 = vld [vmem:[%s1790 + $0x30] sm:$0xff]
      %v1798 = vld [vmem:[%s1790 + $0x38] sm:$0xff]
      %v1799 = vld [vmem:[%s1790 + $0x40] sm:$0xff]
      %v1800 = vld [vmem:[%s1790 + $0x48] sm:$0xff]
      %v1801 = vld [vmem:[%s1790 + $0x50] sm:$0xff]
      %v1802 = vld [vmem:[%s1790 + $0x58] sm:$0xff]
      %v1803 = vld [vmem:[%s1790 + $0x60] sm:$0xff]
      %v1804 = vld [vmem:[%s1790 + $0x68] sm:$0xff]
      %v1805 = vld [vmem:[%s1790 + $0x70] sm:$0xff]
      %v1806 = vld [vmem:[%s1790 + $0x78] sm:$0xff]
      %1808 = vset.pattern.permute.xlu0 0
      %1809 = vperm.xlu0 %1808, %v1791
      %v1810 = vpop.permute.xlu0 %1809
      %1813 = vset.pattern.permute.xlu0 0
      %1814 = vperm.xlu0 %1813, %v1792
      %v1815 = vpop.permute.xlu0 %1814
      %1818 = vset.pattern.permute.xlu0 0
      %1819 = vperm.xlu0 %1818, %v1793
      %v1820 = vpop.permute.xlu0 %1819
      %1823 = vset.pattern.permute.xlu0 0
      %1824 = vperm.xlu0 %1823, %v1794
      %v1825 = vpop.permute.xlu0 %1824
      %1828 = vset.pattern.permute.xlu0 0
      %1829 = vperm.xlu0 %1828, %v1795
      %v1830 = vpop.permute.xlu0 %1829
      %1833 = vset.pattern.permute.xlu0 0
      %1834 = vperm.xlu0 %1833, %v1796
      %v1835 = vpop.permute.xlu0 %1834
      %1838 = vset.pattern.permute.xlu0 0
      %1839 = vperm.xlu0 %1838, %v1797
      %v1840 = vpop.permute.xlu0 %1839
      %1843 = vset.pattern.permute.xlu0 0
      %1844 = vperm.xlu0 %1843, %v1798
      %v1845 = vpop.permute.xlu0 %1844
      %1848 = vset.pattern.permute.xlu0 0
      %1849 = vperm.xlu0 %1848, %v1799
      %v1850 = vpop.permute.xlu0 %1849
      %1853 = vset.pattern.permute.xlu0 0
      %1854 = vperm.xlu0 %1853, %v1800
      %v1855 = vpop.permute.xlu0 %1854
      %1858 = vset.pattern.permute.xlu0 0
      %1859 = vperm.xlu0 %1858, %v1801
      %v1860 = vpop.permute.xlu0 %1859
      %1863 = vset.pattern.permute.xlu0 0
      %1864 = vperm.xlu0 %1863, %v1802
      %v1865 = vpop.permute.xlu0 %1864
      %1868 = vset.pattern.permute.xlu0 0
      %1869 = vperm.xlu0 %1868, %v1803
      %v1870 = vpop.permute.xlu0 %1869
      %1873 = vset.pattern.permute.xlu0 0
      %1874 = vperm.xlu0 %1873, %v1804
      %v1875 = vpop.permute.xlu0 %1874
      %1878 = vset.pattern.permute.xlu0 0
      %1879 = vperm.xlu0 %1878, %v1805
      %v1880 = vpop.permute.xlu0 %1879
      %1883 = vset.pattern.permute.xlu0 0
      %1884 = vperm.xlu0 %1883, %v1806
      %v1885 = vpop.permute.xlu0 %1884
      %v1887 = vmul.f32 %v1810, %v1083
      %v1888 = vmul.f32 %v1815, %v1084
      %v1889 = vmul.f32 %v1820, %v1085
      %v1890 = vmul.f32 %v1825, %v1086
      %v1891 = vmul.f32 %v1830, %v1087
      %v1892 = vmul.f32 %v1835, %v1088
      %v1893 = vmul.f32 %v1840, %v1089
      %v1894 = vmul.f32 %v1845, %v1090
      %v1895 = vmul.f32 %v1850, %v1091
      %v1896 = vmul.f32 %v1855, %v1092
      %v1897 = vmul.f32 %v1860, %v1093
      %v1898 = vmul.f32 %v1865, %v1094
      %v1899 = vmul.f32 %v1870, %v1095
      %v1900 = vmul.f32 %v1875, %v1096
      %v1901 = vmul.f32 %v1880, %v1097
      %v1902 = vmul.f32 %v1885, %v1098
      %1919 = vrot.lane.b32.xlu0 %v1887, 124
      %v1920 = vpop.permute.xlu0 %1919
      %1921 = vrot.lane.b32.xlu0 %v1888, 124
      %v1922 = vpop.permute.xlu0 %1921
      %1923 = vrot.lane.b32.xlu0 %v1889, 124
      %v1924 = vpop.permute.xlu0 %1923
      %1925 = vrot.lane.b32.xlu0 %v1890, 124
      %v1926 = vpop.permute.xlu0 %1925
      %1927 = vrot.lane.b32.xlu0 %v1891, 124
      %v1928 = vpop.permute.xlu0 %1927
      %1929 = vrot.lane.b32.xlu0 %v1892, 124
      %v1930 = vpop.permute.xlu0 %1929
      %1931 = vrot.lane.b32.xlu0 %v1893, 124
      %v1932 = vpop.permute.xlu0 %1931
      %1933 = vrot.lane.b32.xlu0 %v1894, 124
      %v1934 = vpop.permute.xlu0 %1933
      %1935 = vrot.lane.b32.xlu0 %v1895, 124
      %v1936 = vpop.permute.xlu0 %1935
      %1937 = vrot.lane.b32.xlu0 %v1896, 124
      %v1938 = vpop.permute.xlu0 %1937
      %1939 = vrot.lane.b32.xlu0 %v1897, 124
      %v1940 = vpop.permute.xlu0 %1939
      %1941 = vrot.lane.b32.xlu0 %v1898, 124
      %v1942 = vpop.permute.xlu0 %1941
      %1943 = vrot.lane.b32.xlu0 %v1899, 124
      %v1944 = vpop.permute.xlu0 %1943
      %1945 = vrot.lane.b32.xlu0 %v1900, 124
      %v1946 = vpop.permute.xlu0 %1945
      %1947 = vrot.lane.b32.xlu0 %v1901, 124
      %v1948 = vpop.permute.xlu0 %1947
      %1949 = vrot.lane.b32.xlu0 %v1902, 124
      %v1950 = vpop.permute.xlu0 %1949
      %v1967 = vadd.f32 %v1774, %v1920
      %v1968 = vadd.f32 %v1775, %v1922
      %v1969 = vadd.f32 %v1776, %v1924
      %v1970 = vadd.f32 %v1777, %v1926
      %v1971 = vadd.f32 %v1778, %v1928
      %v1972 = vadd.f32 %v1779, %v1930
      %v1973 = vadd.f32 %v1780, %v1932
      %v1974 = vadd.f32 %v1781, %v1934
      %v1975 = vadd.f32 %v1782, %v1936
      %v1976 = vadd.f32 %v1783, %v1938
      %v1977 = vadd.f32 %v1784, %v1940
      %v1978 = vadd.f32 %v1785, %v1942
      %v1979 = vadd.f32 %v1786, %v1944
      %v1980 = vadd.f32 %v1787, %v1946
      %v1981 = vadd.f32 %v1788, %v1948
      %v1982 = vadd.f32 %v1789, %v1950
      %v1983 = vld [vmem:[%s6] sm:$0xff]
      %v1984 = vld [vmem:[%s6 + $0x8] sm:$0xff]
      %v1985 = vld [vmem:[%s6 + $0x10] sm:$0xff]
      %v1986 = vld [vmem:[%s6 + $0x18] sm:$0xff]
      %v1987 = vld [vmem:[%s6 + $0x20] sm:$0xff]
      %v1988 = vld [vmem:[%s6 + $0x28] sm:$0xff]
      %v1989 = vld [vmem:[%s6 + $0x30] sm:$0xff]
      %v1990 = vld [vmem:[%s6 + $0x38] sm:$0xff]
      %v1991 = vld [vmem:[%s6 + $0x40] sm:$0xff]
      %v1992 = vld [vmem:[%s6 + $0x48] sm:$0xff]
      %v1993 = vld [vmem:[%s6 + $0x50] sm:$0xff]
      %v1994 = vld [vmem:[%s6 + $0x58] sm:$0xff]
      %v1995 = vld [vmem:[%s6 + $0x60] sm:$0xff]
      %v1996 = vld [vmem:[%s6 + $0x68] sm:$0xff]
      %v1997 = vld [vmem:[%s6 + $0x70] sm:$0xff]
      %v1998 = vld [vmem:[%s6 + $0x78] sm:$0xff]
      %2000 = vset.pattern.permute.xlu0 0
      %2001 = vperm.xlu0 %2000, %v1983
      %v2002 = vpop.permute.xlu0 %2001
      %2005 = vset.pattern.permute.xlu0 0
      %2006 = vperm.xlu0 %2005, %v1984
      %v2007 = vpop.permute.xlu0 %2006
      %2010 = vset.pattern.permute.xlu0 0
      %2011 = vperm.xlu0 %2010, %v1985
      %v2012 = vpop.permute.xlu0 %2011
      %2015 = vset.pattern.permute.xlu0 0
      %2016 = vperm.xlu0 %2015, %v1986
      %v2017 = vpop.permute.xlu0 %2016
      %2020 = vset.pattern.permute.xlu0 0
      %2021 = vperm.xlu0 %2020, %v1987
      %v2022 = vpop.permute.xlu0 %2021
      %2025 = vset.pattern.permute.xlu0 0
      %2026 = vperm.xlu0 %2025, %v1988
      %v2027 = vpop.permute.xlu0 %2026
      %2030 = vset.pattern.permute.xlu0 0
      %2031 = vperm.xlu0 %2030, %v1989
      %v2032 = vpop.permute.xlu0 %2031
      %2035 = vset.pattern.permute.xlu0 0
      %2036 = vperm.xlu0 %2035, %v1990
      %v2037 = vpop.permute.xlu0 %2036
      %2040 = vset.pattern.permute.xlu0 0
      %2041 = vperm.xlu0 %2040, %v1991
      %v2042 = vpop.permute.xlu0 %2041
      %2045 = vset.pattern.permute.xlu0 0
      %2046 = vperm.xlu0 %2045, %v1992
      %v2047 = vpop.permute.xlu0 %2046
      %2050 = vset.pattern.permute.xlu0 0
      %2051 = vperm.xlu0 %2050, %v1993
      %v2052 = vpop.permute.xlu0 %2051
      %2055 = vset.pattern.permute.xlu0 0
      %2056 = vperm.xlu0 %2055, %v1994
      %v2057 = vpop.permute.xlu0 %2056
      %2060 = vset.pattern.permute.xlu0 0
      %2061 = vperm.xlu0 %2060, %v1995
      %v2062 = vpop.permute.xlu0 %2061
      %2065 = vset.pattern.permute.xlu0 0
      %2066 = vperm.xlu0 %2065, %v1996
      %v2067 = vpop.permute.xlu0 %2066
      %2070 = vset.pattern.permute.xlu0 0
      %2071 = vperm.xlu0 %2070, %v1997
      %v2072 = vpop.permute.xlu0 %2071
      %2075 = vset.pattern.permute.xlu0 0
      %2076 = vperm.xlu0 %2075, %v1998
      %v2077 = vpop.permute.xlu0 %2076
      %v2079 = vadd.f32 %v1967, %v2002
      %v2080 = vadd.f32 %v1968, %v2007
      %v2081 = vadd.f32 %v1969, %v2012
      %v2082 = vadd.f32 %v1970, %v2017
      %v2083 = vadd.f32 %v1971, %v2022
      %v2084 = vadd.f32 %v1972, %v2027
      %v2085 = vadd.f32 %v1973, %v2032
      %v2086 = vadd.f32 %v1974, %v2037
      %v2087 = vadd.f32 %v1975, %v2042
      %v2088 = vadd.f32 %v1976, %v2047
      %v2089 = vadd.f32 %v1977, %v2052
      %v2090 = vadd.f32 %v1978, %v2057
      %v2091 = vadd.f32 %v1979, %v2062
      %v2092 = vadd.f32 %v1980, %v2067
      %v2093 = vadd.f32 %v1981, %v2072
      %v2094 = vadd.f32 %v1982, %v2077
      %v2095 = vmax.f32 %v2079, 0.0
      %v2096 = vmax.f32 %v2080, 0.0
      %v2097 = vmax.f32 %v2081, 0.0
      %v2098 = vmax.f32 %v2082, 0.0
      %v2099 = vmax.f32 %v2083, 0.0
      %v2100 = vmax.f32 %v2084, 0.0
      %v2101 = vmax.f32 %v2085, 0.0
      %v2102 = vmax.f32 %v2086, 0.0
      %v2103 = vmax.f32 %v2087, 0.0
      %v2104 = vmax.f32 %v2088, 0.0
      %v2105 = vmax.f32 %v2089, 0.0
      %v2106 = vmax.f32 %v2090, 0.0
      %v2107 = vmax.f32 %v2091, 0.0
      %v2108 = vmax.f32 %v2092, 0.0
      %v2109 = vmax.f32 %v2093, 0.0
      %v2110 = vmax.f32 %v2094, 0.0
      %v2111 = vld [vmem:[%s7] sm:$0xff]
      %v2112 = vld [vmem:[%s7 + $0x8] sm:$0xff]
      %v2113 = vld [vmem:[%s7 + $0x10] sm:$0xff]
      %v2114 = vld [vmem:[%s7 + $0x18] sm:$0xff]
      %v2115 = vld [vmem:[%s8] sm:$0xff]
      %v2116 = vld [vmem:[%s8 + $0x8] sm:$0xff]
      %v2117 = vld [vmem:[%s8 + $0x10] sm:$0xff]
      %v2118 = vld [vmem:[%s8 + $0x18] sm:$0xff]
      %2120 = vset.pattern.permute.xlu0 0
      %2121 = vperm.xlu0 %2120, %v2115
      %v2122 = vpop.permute.xlu0 %2121
      %2125 = vset.pattern.permute.xlu0 0
      %2126 = vperm.xlu0 %2125, %v2116
      %v2127 = vpop.permute.xlu0 %2126
      %2130 = vset.pattern.permute.xlu0 0
      %2131 = vperm.xlu0 %2130, %v2117
      %v2132 = vpop.permute.xlu0 %2131
      %2135 = vset.pattern.permute.xlu0 0
      %2136 = vperm.xlu0 %2135, %v2118
      %v2137 = vpop.permute.xlu0 %2136
      %2139 = vmatprep.subr.mxu0 0.0
      %2140 = vmatpush1.msra.mxu0 %v2110
      %2141 = vmatprep.subr.mxu0 0.0
      %2142 = vmatpush1.msra.mxu0 %v2109
      %2143 = vmatprep.subr.mxu0 0.0
      %2144 = vmatpush1.msra.mxu0 %v2108
      %2145 = vmatprep.subr.mxu0 0.0
      %2146 = vmatpush1.msra.mxu0 %v2107
      %2147 = vmatprep.subr.mxu0 0.0
      %2148 = vmatpush1.msra.mxu0 %v2106
      %2149 = vmatprep.subr.mxu0 0.0
      %2150 = vmatpush1.msra.mxu0 %v2105
      %2151 = vmatprep.subr.mxu0 0.0
      %2152 = vmatpush1.msra.mxu0 %v2104
      %2153 = vmatprep.subr.mxu0 0.0
      %2154 = vmatpush1.msra.mxu0 %v2103
      %2155 = vmatprep.subr.mxu0 0.0
      %2156 = vmatpush1.msra.mxu0 %v2102
      %2157 = vmatprep.subr.mxu0 0.0
      %2158 = vmatpush1.msra.mxu0 %v2101
      %2159 = vmatprep.subr.mxu0 0.0
      %2160 = vmatpush1.msra.mxu0 %v2100
      %2161 = vmatprep.subr.mxu0 0.0
      %2162 = vmatpush1.msra.mxu0 %v2099
      %2163 = vmatprep.subr.mxu0 0.0
      %2164 = vmatpush1.msra.mxu0 %v2098
      %2165 = vmatprep.subr.mxu0 0.0
      %2166 = vmatpush1.msra.mxu0 %v2097
      %2167 = vmatprep.subr.mxu0 0.0
      %2168 = vmatpush1.msra.mxu0 %v2096
      %2169 = vmatprep.subr.mxu0 0.0
      %2170 = vmatpush1.msra.mxu0 %v2095
      %2171 = vmatprep.subr.mxu0 0.0
      %2172 = vmatpush2.msra.mxu0 0.0
      %2173 = vmatprep.subr.mxu0 0.0
      %2174 = vmatpush2.msra.mxu0 0.0
      %2175 = vmatprep.subr.mxu0 0.0
      %2176 = vmatpush2.msra.mxu0 0.0
      %2177 = vmatprep.subr.mxu0 0.0
      %2178 = vmatpush2.msra.mxu0 0.0
      %2179 = vmatprep.subr.mxu0 0.0
      %2180 = vmatpush2.msra.mxu0 0.0
      %2181 = vmatprep.subr.mxu0 0.0
      %2182 = vmatpush2.msra.mxu0 0.0
      %2183 = vmatprep.subr.mxu0 0.0
      %2184 = vmatpush2.msra.mxu0 0.0
      %2185 = vmatprep.subr.mxu0 0.0
      %2186 = vmatpush2.msra.mxu0 0.0
      %2187 = vmatprep.subr.mxu0 0.0
      %2188 = vmatpush2.msra.mxu0 0.0
      %2189 = vmatprep.subr.mxu0 0.0
      %2190 = vmatpush2.msra.mxu0 0.0
      %2191 = vmatprep.subr.mxu0 0.0
      %2192 = vmatpush2.msra.mxu0 0.0
      %2193 = vmatprep.subr.mxu0 0.0
      %2194 = vmatpush2.msra.mxu0 0.0
      %2195 = vmatprep.subr.mxu0 0.0
      %2196 = vmatpush2.msra.mxu0 0.0
      %2197 = vmatprep.subr.mxu0 0.0
      %2198 = vmatpush2.msra.mxu0 0.0
      %2199 = vmatprep.subr.mxu0 0.0
      %2200 = vmatpush2.msra.mxu0 0.0
      %2201 = vmatprep.subr.mxu0 0.0
      %2202 = vmatpush2.msra.mxu0 0.0
      %2203 = vmatprep.mubr.f32.mxu0 0.0
      %2204 = vmatmul.mubr.f32.gmra.mxu0 %v2111
      %v2205 = vpop.f32.mrf.mxu0
      %v2206 = vadd.f32 %v2122, %v2205
      %v2207 = vpop.f32.mrf.mxu0
      %2208 = vmatprep.mubr.f32.mxu0 0.0
      %2209 = vmatmul.mubr.f32.gmra.mxu0 %v2112
      %v2210 = vpop.f32.mrf.mxu0
      %v2211 = vadd.f32 %v2127, %v2210
      %v2212 = vpop.f32.mrf.mxu0
      %2213 = vmatprep.mubr.f32.mxu0 0.0
      %2214 = vmatmul.mubr.f32.gmra.mxu0 %v2113
      %v2215 = vpop.f32.mrf.mxu0
      %v2216 = vadd.f32 %v2132, %v2215
      %v2217 = vpop.f32.mrf.mxu0
      %2218 = vmatprep.mubr.f32.mxu0 0.0
      %2219 = vmatmul.mubr.f32.gmra.mxu0 %v2114
      %v2220 = vpop.f32.mrf.mxu0
      %v2221 = vadd.f32 %v2137, %v2220
      %v2222 = vpop.f32.mrf.mxu0
      %2223 = vdwg.mxu0
      %v2224 = vmax.f32 %v2206, 0.0
      %v2225 = vmax.f32 %v2211, 0.0
      %v2226 = vmax.f32 %v2216, 0.0
      %v2227 = vmax.f32 %v2221, 0.0
      %v2228 = vld [vmem:[%s9] sm:$0xff]
      %v2229 = vld [vmem:[%s9 + $0x8] sm:$0xff]
      %v2230 = vld [vmem:[%s9 + $0x10] sm:$0xff]
      %v2231 = vld [vmem:[%s9 + $0x18] sm:$0xff]
      %v2232 = vld [vmem:[%s10] sm:$0xff]
      %v2233 = vld [vmem:[%s10 + $0x8] sm:$0xff]
      %v2234 = vld [vmem:[%s10 + $0x10] sm:$0xff]
      %v2235 = vld [vmem:[%s10 + $0x18] sm:$0xff]
      %2237 = vset.pattern.permute.xlu0 0
      %2238 = vperm.xlu0 %2237, %v2232
      %v2239 = vpop.permute.xlu0 %2238
      %2242 = vset.pattern.permute.xlu0 0
      %2243 = vperm.xlu0 %2242, %v2233
      %v2244 = vpop.permute.xlu0 %2243
      %2247 = vset.pattern.permute.xlu0 0
      %2248 = vperm.xlu0 %2247, %v2234
      %v2249 = vpop.permute.xlu0 %2248
      %2252 = vset.pattern.permute.xlu0 0
      %2253 = vperm.xlu0 %2252, %v2235
      %v2254 = vpop.permute.xlu0 %2253
      %v2257 = vsel %vm477, %v2228, 0
      %v2260 = vsel %vm477, %v2229, 0
      %v2263 = vsel %vm477, %v2230, 0
      %v2266 = vsel %vm477, %v2231, 0
      %2268 = vmatprep.subr.mxu0 0.0
      %2269 = vmatpush1.msra.mxu0 0.0
      %2270 = vmatprep.subr.mxu0 0.0
      %2271 = vmatpush1.msra.mxu0 0.0
      %2272 = vmatprep.subr.mxu0 0.0
      %2273 = vmatpush1.msra.mxu0 0.0
      %2274 = vmatprep.subr.mxu0 0.0
      %2275 = vmatpush1.msra.mxu0 0.0
      %2276 = vmatprep.subr.mxu0 0.0
      %2277 = vmatpush1.msra.mxu0 0.0
      %2278 = vmatprep.subr.mxu0 0.0
      %2279 = vmatpush1.msra.mxu0 0.0
      %2280 = vmatprep.subr.mxu0 0.0
      %2281 = vmatpush1.msra.mxu0 0.0
      %2282 = vmatprep.subr.mxu0 0.0
      %2283 = vmatpush1.msra.mxu0 0.0
      %2284 = vmatprep.subr.mxu0 0.0
      %2285 = vmatpush1.msra.mxu0 %v630
      %2286 = vmatprep.subr.mxu0 0.0
      %2287 = vmatpush1.msra.mxu0 %v629
      %2288 = vmatprep.subr.mxu0 0.0
      %2289 = vmatpush1.msra.mxu0 %v628
      %2290 = vmatprep.subr.mxu0 0.0
      %2291 = vmatpush1.msra.mxu0 %v627
      %2292 = vmatprep.subr.mxu0 0.0
      %2293 = vmatpush1.msra.mxu0 %v626
      %2294 = vmatprep.subr.mxu0 0.0
      %2295 = vmatpush1.msra.mxu0 %v625
      %2296 = vmatprep.subr.mxu0 0.0
      %2297 = vmatpush1.msra.mxu0 %v624
      %2298 = vmatprep.subr.mxu0 0.0
      %2299 = vmatpush1.msra.mxu0 %v623
      %2300 = vmatprep.subr.mxu0 0.0
      %2301 = vmatpush2.msra.mxu0 0.0
      %2302 = vmatprep.subr.mxu0 0.0
      %2303 = vmatpush2.msra.mxu0 0.0
      %2304 = vmatprep.subr.mxu0 0.0
      %2305 = vmatpush2.msra.mxu0 0.0
      %2306 = vmatprep.subr.mxu0 0.0
      %2307 = vmatpush2.msra.mxu0 0.0
      %2308 = vmatprep.subr.mxu0 0.0
      %2309 = vmatpush2.msra.mxu0 0.0
      %2310 = vmatprep.subr.mxu0 0.0
      %2311 = vmatpush2.msra.mxu0 0.0
      %2312 = vmatprep.subr.mxu0 0.0
      %2313 = vmatpush2.msra.mxu0 0.0
      %2314 = vmatprep.subr.mxu0 0.0
      %2315 = vmatpush2.msra.mxu0 0.0
      %2316 = vmatprep.subr.mxu0 0.0
      %2317 = vmatpush2.msra.mxu0 0.0
      %2318 = vmatprep.subr.mxu0 0.0
      %2319 = vmatpush2.msra.mxu0 0.0
      %2320 = vmatprep.subr.mxu0 0.0
      %2321 = vmatpush2.msra.mxu0 0.0
      %2322 = vmatprep.subr.mxu0 0.0
      %2323 = vmatpush2.msra.mxu0 0.0
      %2324 = vmatprep.subr.mxu0 0.0
      %2325 = vmatpush2.msra.mxu0 0.0
      %2326 = vmatprep.subr.mxu0 0.0
      %2327 = vmatpush2.msra.mxu0 0.0
      %2328 = vmatprep.subr.mxu0 0.0
      %2329 = vmatpush2.msra.mxu0 0.0
      %2330 = vmatprep.subr.mxu0 0.0
      %2331 = vmatpush2.msra.mxu0 0.0
      %2332 = vmatprep.mubr.f32.mxu0 0.0
      %2333 = vmatmul.mubr.f32.gmra.mxu0 %v2257
      %v2334 = vpop.f32.mrf.mxu0
      %v2335 = vadd.f32 %v2239, %v2334
      %v2336 = vpop.f32.mrf.mxu0
      %2337 = vmatprep.mubr.f32.mxu0 0.0
      %2338 = vmatmul.mubr.f32.gmra.mxu0 %v2260
      %v2339 = vpop.f32.mrf.mxu0
      %v2340 = vadd.f32 %v2244, %v2339
      %v2341 = vpop.f32.mrf.mxu0
      %2342 = vmatprep.mubr.f32.mxu0 0.0
      %2343 = vmatmul.mubr.f32.gmra.mxu0 %v2263
      %v2344 = vpop.f32.mrf.mxu0
      %v2345 = vadd.f32 %v2249, %v2344
      %v2346 = vpop.f32.mrf.mxu0
      %2347 = vmatprep.mubr.f32.mxu0 0.0
      %2348 = vmatmul.mubr.f32.gmra.mxu0 %v2266
      %v2349 = vpop.f32.mrf.mxu0
      %v2350 = vadd.f32 %v2254, %v2349
      %v2351 = vpop.f32.mrf.mxu0
      %2352 = vdwg.mxu0
      %v2353 = vmax.f32 %v2335, 0.0
      %v2354 = vmax.f32 %v2340, 0.0
      %v2355 = vmax.f32 %v2345, 0.0
      %v2356 = vmax.f32 %v2350, 0.0
      %v2357 = vadd.f32 %v2224, %v2353
      %v2358 = vadd.f32 %v2225, %v2354
      %v2359 = vadd.f32 %v2226, %v2355
      %v2360 = vadd.f32 %v2227, %v2356
      %vm2361 = vcmask 7168
      %2362 = vst.msk [vmem:[#allocation3] sm:$0xff] %vm2361, 0.0
      %2363 = vst.msk [vmem:[#allocation3 + $0x8] sm:$0xff] %vm2361, 0.0
      %2364 = vst.msk [vmem:[#allocation3 + $0x10] sm:$0xff] %vm2361, 0.0
      %2365 = vst.msk [vmem:[#allocation3 + $0x18] sm:$0xff] %vm2361, 0.0
      %vm2366 = vcmask 130168
      %2367 = vst.msk [vmem:[#allocation3] sm:$0xff] %vm2366, 0.0
      %2368 = vst.msk [vmem:[#allocation3 + $0x8] sm:$0xff] %vm2366, 0.0
      %2369 = vst.msk [vmem:[#allocation3 + $0x10] sm:$0xff] %vm2366, 0.0
      %2370 = vst.msk [vmem:[#allocation3 + $0x18] sm:$0xff] %vm2366, 0.0
      %2375 = vrot.lane.b32.xlu0 %v2357, 1
      %v2376 = vpop.permute.xlu0 %2375
      %2377 = vrot.lane.b32.xlu0 %v2358, 1
      %v2378 = vpop.permute.xlu0 %2377
      %2379 = vrot.lane.b32.xlu0 %v2359, 1
      %v2380 = vpop.permute.xlu0 %2379
      %2381 = vrot.lane.b32.xlu0 %v2360, 1
      %v2382 = vpop.permute.xlu0 %2381
      %vm2387 = vcmask 121864
      %2388 = vst.msk [vmem:[#allocation3] sm:$0xff] %vm2387, %v2376
      %2389 = vst.msk [vmem:[#allocation3 + $0x8] sm:$0xff] %vm2387, %v2378
      %2390 = vst.msk [vmem:[#allocation3 + $0x10] sm:$0xff] %vm2387, %v2380
      %2391 = vst.msk [vmem:[#allocation3 + $0x18] sm:$0xff] %vm2387, %v2382
      %v2392 = vld [vmem:[%s11] sm:$0xff]
      %v2393 = vld [vmem:[%s11 + $0x8] sm:$0xff]
      %v2394 = vld [vmem:[%s11 + $0x10] sm:$0xff]
      %v2395 = vld [vmem:[%s11 + $0x18] sm:$0xff]
      %v2396 = vld [vmem:[#allocation3] sm:$0xff]
      %v2397 = vld [vmem:[#allocation3 + $0x8] sm:$0xff]
      %v2398 = vld [vmem:[#allocation3 + $0x10] sm:$0xff]
      %v2399 = vld [vmem:[#allocation3 + $0x18] sm:$0xff]
      %s2400 = scalar_lea.vmem %s11, 64
      %v2401 = vld [vmem:[%s2400] sm:$0xff]
      %v2402 = vld [vmem:[%s2400 + $0x8] sm:$0xff]
      %v2403 = vld [vmem:[%s2400 + $0x10] sm:$0xff]
      %v2404 = vld [vmem:[%s2400 + $0x18] sm:$0xff]
      %vm2405 = vcmask 261120
      %v2407 = vsel %vm2405, %v2401, 0
      %v2410 = vsel %vm2405, %v2402, 0
      %v2413 = vsel %vm2405, %v2403, 0
      %v2416 = vsel %vm2405, %v2404, 0
      %2418 = vmatprep.subr.mxu0 0.0
      %2419 = vmatpush1.msra.mxu0 0.0
      %2420 = vmatprep.subr.mxu0 0.0
      %2421 = vmatpush1.msra.mxu0 0.0
      %2422 = vmatprep.subr.mxu0 0.0
      %2423 = vmatpush1.msra.mxu0 0.0
      %2424 = vmatprep.subr.mxu0 0.0
      %2425 = vmatpush1.msra.mxu0 0.0
      %2426 = vmatprep.subr.mxu0 0.0
      %2427 = vmatpush1.msra.mxu0 0.0
      %2428 = vmatprep.subr.mxu0 0.0
      %2429 = vmatpush1.msra.mxu0 0.0
      %2430 = vmatprep.subr.mxu0 0.0
      %2431 = vmatpush1.msra.mxu0 0.0
      %2432 = vmatprep.subr.mxu0 0.0
      %2433 = vmatpush1.msra.mxu0 0.0
      %2434 = vmatprep.subr.mxu0 0.0
      %2435 = vmatpush1.msra.mxu0 0.0
      %2436 = vmatprep.subr.mxu0 0.0
      %2437 = vmatpush1.msra.mxu0 0.0
      %2438 = vmatprep.subr.mxu0 0.0
      %2439 = vmatpush1.msra.mxu0 0.0
      %2440 = vmatprep.subr.mxu0 0.0
      %2441 = vmatpush1.msra.mxu0 0.0
      %2442 = vmatprep.subr.mxu0 0.0
      %2443 = vmatpush1.msra.mxu0 %v2399
      %2444 = vmatprep.subr.mxu0 0.0
      %2445 = vmatpush1.msra.mxu0 %v2398
      %2446 = vmatprep.subr.mxu0 0.0
      %2447 = vmatpush1.msra.mxu0 %v2397
      %2448 = vmatprep.subr.mxu0 0.0
      %2449 = vmatpush1.msra.mxu0 %v2396
      %2450 = vmatprep.subr.mxu0 0.0
      %2451 = vmatpush2.msra.mxu0 0.0
      %2452 = vmatprep.subr.mxu0 0.0
      %2453 = vmatpush2.msra.mxu0 0.0
      %2454 = vmatprep.subr.mxu0 0.0
      %2455 = vmatpush2.msra.mxu0 0.0
      %2456 = vmatprep.subr.mxu0 0.0
      %2457 = vmatpush2.msra.mxu0 0.0
      %2458 = vmatprep.subr.mxu0 0.0
      %2459 = vmatpush2.msra.mxu0 0.0
      %2460 = vmatprep.subr.mxu0 0.0
      %2461 = vmatpush2.msra.mxu0 0.0
      %2462 = vmatprep.subr.mxu0 0.0
      %2463 = vmatpush2.msra.mxu0 0.0
      %2464 = vmatprep.subr.mxu0 0.0
      %2465 = vmatpush2.msra.mxu0 0.0
      %2466 = vmatprep.subr.mxu0 0.0
      %2467 = vmatpush2.msra.mxu0 0.0
      %2468 = vmatprep.subr.mxu0 0.0
      %2469 = vmatpush2.msra.mxu0 0.0
      %2470 = vmatprep.subr.mxu0 0.0
      %2471 = vmatpush2.msra.mxu0 0.0
      %2472 = vmatprep.subr.mxu0 0.0
      %2473 = vmatpush2.msra.mxu0 0.0
      %2474 = vmatprep.subr.mxu0 0.0
      %2475 = vmatpush2.msra.mxu0 0.0
      %2476 = vmatprep.subr.mxu0 0.0
      %2477 = vmatpush2.msra.mxu0 0.0
      %2478 = vmatprep.subr.mxu0 0.0
      %2479 = vmatpush2.msra.mxu0 0.0
      %2480 = vmatprep.subr.mxu0 0.0
      %2481 = vmatpush2.msra.mxu0 0.0
      %2482 = vmatprep.mubr.f32.mxu0 0.0
      %2483 = vmatmul.mubr.f32.gmra.mxu0 %v2407
      %v2484 = vpop.f32.mrf.mxu0
      %v2485 = vadd.f32 0.0, %v2484
      %v2486 = vpop.f32.mrf.mxu0
      %2487 = vmatprep.mubr.f32.mxu0 0.0
      %2488 = vmatmul.mubr.f32.gmra.mxu0 %v2410
      %v2489 = vpop.f32.mrf.mxu0
      %v2490 = vadd.f32 0.0, %v2489
      %v2491 = vpop.f32.mrf.mxu0
      %2492 = vmatprep.mubr.f32.mxu0 0.0
      %2493 = vmatmul.mubr.f32.gmra.mxu0 %v2413
      %v2494 = vpop.f32.mrf.mxu0
      %v2495 = vadd.f32 0.0, %v2494
      %v2496 = vpop.f32.mrf.mxu0
      %2497 = vmatprep.mubr.f32.mxu0 0.0
      %2498 = vmatmul.mubr.f32.gmra.mxu0 %v2416
      %v2499 = vpop.f32.mrf.mxu0
      %v2500 = vadd.f32 0.0, %v2499
      %v2501 = vpop.f32.mrf.mxu0
      %2502 = vdwg.mxu0
      %2507 = vrot.lane.b32.xlu0 %v2396, 127
      %v2508 = vpop.permute.xlu0 %2507
      %2509 = vrot.lane.b32.xlu0 %v2397, 127
      %v2510 = vpop.permute.xlu0 %2509
      %2511 = vrot.lane.b32.xlu0 %v2398, 127
      %v2512 = vpop.permute.xlu0 %2511
      %2513 = vrot.lane.b32.xlu0 %v2399, 127
      %v2514 = vpop.permute.xlu0 %2513
      %v2520 = vsel %vm2405, %v2392, 0
      %v2523 = vsel %vm2405, %v2393, 0
      %v2526 = vsel %vm2405, %v2394, 0
      %v2529 = vsel %vm2405, %v2395, 0
      %2531 = vmatprep.subr.mxu0 0.0
      %2532 = vmatpush1.msra.mxu0 0.0
      %2533 = vmatprep.subr.mxu0 0.0
      %2534 = vmatpush1.msra.mxu0 0.0
      %2535 = vmatprep.subr.mxu0 0.0
      %2536 = vmatpush1.msra.mxu0 0.0
      %2537 = vmatprep.subr.mxu0 0.0
      %2538 = vmatpush1.msra.mxu0 0.0
      %2539 = vmatprep.subr.mxu0 0.0
      %2540 = vmatpush1.msra.mxu0 0.0
      %2541 = vmatprep.subr.mxu0 0.0
      %2542 = vmatpush1.msra.mxu0 0.0
      %2543 = vmatprep.subr.mxu0 0.0
      %2544 = vmatpush1.msra.mxu0 0.0
      %2545 = vmatprep.subr.mxu0 0.0
      %2546 = vmatpush1.msra.mxu0 0.0
      %2547 = vmatprep.subr.mxu0 0.0
      %2548 = vmatpush1.msra.mxu0 0.0
      %2549 = vmatprep.subr.mxu0 0.0
      %2550 = vmatpush1.msra.mxu0 0.0
      %2551 = vmatprep.subr.mxu0 0.0
      %2552 = vmatpush1.msra.mxu0 0.0
      %2553 = vmatprep.subr.mxu0 0.0
      %2554 = vmatpush1.msra.mxu0 0.0
      %2555 = vmatprep.subr.mxu0 0.0
      %2556 = vmatpush1.msra.mxu0 %v2514
      %2557 = vmatprep.subr.mxu0 0.0
      %2558 = vmatpush1.msra.mxu0 %v2512
      %2559 = vmatprep.subr.mxu0 0.0
      %2560 = vmatpush1.msra.mxu0 %v2510
      %2561 = vmatprep.subr.mxu0 0.0
      %2562 = vmatpush1.msra.mxu0 %v2508
      %2563 = vmatprep.subr.mxu0 0.0
      %2564 = vmatpush2.msra.mxu0 0.0
      %2565 = vmatprep.subr.mxu0 0.0
      %2566 = vmatpush2.msra.mxu0 0.0
      %2567 = vmatprep.subr.mxu0 0.0
      %2568 = vmatpush2.msra.mxu0 0.0
      %2569 = vmatprep.subr.mxu0 0.0
      %2570 = vmatpush2.msra.mxu0 0.0
      %2571 = vmatprep.subr.mxu0 0.0
      %2572 = vmatpush2.msra.mxu0 0.0
      %2573 = vmatprep.subr.mxu0 0.0
      %2574 = vmatpush2.msra.mxu0 0.0
      %2575 = vmatprep.subr.mxu0 0.0
      %2576 = vmatpush2.msra.mxu0 0.0
      %2577 = vmatprep.subr.mxu0 0.0
      %2578 = vmatpush2.msra.mxu0 0.0
      %2579 = vmatprep.subr.mxu0 0.0
      %2580 = vmatpush2.msra.mxu0 0.0
      %2581 = vmatprep.subr.mxu0 0.0
      %2582 = vmatpush2.msra.mxu0 0.0
      %2583 = vmatprep.subr.mxu0 0.0
      %2584 = vmatpush2.msra.mxu0 0.0
      %2585 = vmatprep.subr.mxu0 0.0
      %2586 = vmatpush2.msra.mxu0 0.0
      %2587 = vmatprep.subr.mxu0 0.0
      %2588 = vmatpush2.msra.mxu0 0.0
      %2589 = vmatprep.subr.mxu0 0.0
      %2590 = vmatpush2.msra.mxu0 0.0
      %2591 = vmatprep.subr.mxu0 0.0
      %2592 = vmatpush2.msra.mxu0 0.0
      %2593 = vmatprep.subr.mxu0 0.0
      %2594 = vmatpush2.msra.mxu0 0.0
      %2595 = vmatprep.mubr.f32.mxu0 0.0
      %2596 = vmatmul.mubr.f32.gmra.mxu0 %v2520
      %v2597 = vpop.f32.mrf.mxu0
      %v2598 = vadd.f32 %v2485, %v2597
      %v2599 = vpop.f32.mrf.mxu0
      %2600 = vmatprep.mubr.f32.mxu0 0.0
      %2601 = vmatmul.mubr.f32.gmra.mxu0 %v2523
      %v2602 = vpop.f32.mrf.mxu0
      %v2603 = vadd.f32 %v2490, %v2602
      %v2604 = vpop.f32.mrf.mxu0
      %2605 = vmatprep.mubr.f32.mxu0 0.0
      %2606 = vmatmul.mubr.f32.gmra.mxu0 %v2526
      %v2607 = vpop.f32.mrf.mxu0
      %v2608 = vadd.f32 %v2495, %v2607
      %v2609 = vpop.f32.mrf.mxu0
      %2610 = vmatprep.mubr.f32.mxu0 0.0
      %2611 = vmatmul.mubr.f32.gmra.mxu0 %v2529
      %v2612 = vpop.f32.mrf.mxu0
      %v2613 = vadd.f32 %v2500, %v2612
      %v2614 = vpop.f32.mrf.mxu0
      %2615 = vdwg.mxu0
      %v2616 = vld [vmem:[%s12] sm:$0xff]
      %v2617 = vld [vmem:[%s12 + $0x8] sm:$0xff]
      %v2618 = vld [vmem:[%s12 + $0x10] sm:$0xff]
      %v2619 = vld [vmem:[%s12 + $0x18] sm:$0xff]
      %2621 = vset.pattern.permute.xlu0 0
      %2622 = vperm.xlu0 %2621, %v2616
      %v2623 = vpop.permute.xlu0 %2622
      %2626 = vset.pattern.permute.xlu0 0
      %2627 = vperm.xlu0 %2626, %v2617
      %v2628 = vpop.permute.xlu0 %2627
      %2631 = vset.pattern.permute.xlu0 0
      %2632 = vperm.xlu0 %2631, %v2618
      %v2633 = vpop.permute.xlu0 %2632
      %2636 = vset.pattern.permute.xlu0 0
      %2637 = vperm.xlu0 %2636, %v2619
      %v2638 = vpop.permute.xlu0 %2637
      %v2640 = vadd.f32 %v2598, %v2623
      %v2641 = vadd.f32 %v2603, %v2628
      %v2642 = vadd.f32 %v2608, %v2633
      %v2643 = vadd.f32 %v2613, %v2638
      %v2644 = vmax.f32 %v2640, 0.0
      %v2645 = vmax.f32 %v2641, 0.0
      %v2646 = vmax.f32 %v2642, 0.0
      %v2647 = vmax.f32 %v2643, 0.0
      %vm2648 = vcmask 121856
      %2649 = vst.msk [vmem:[%s460] sm:$0xff] %vm2648, %v2644
      %2650 = vst.msk [vmem:[%s460 + $0x8] sm:$0xff] %vm2648, %v2645
      %2651 = vst.msk [vmem:[%s460 + $0x10] sm:$0xff] %vm2648, %v2646
      %2652 = vst.msk [vmem:[%s460 + $0x18] sm:$0xff] %vm2648, %v2647
      %s2653 = scalar_lea.vmem %s11, 32
      %v2654 = vld [vmem:[%s2653] sm:$0xff]
      %v2655 = vld [vmem:[%s2653 + $0x8] sm:$0xff]
      %v2656 = vld [vmem:[%s2653 + $0x10] sm:$0xff]
      %v2657 = vld [vmem:[%s2653 + $0x18] sm:$0xff]
      %v2658 = vld [vmem:[#allocation3] sm:$0xff]
      %v2659 = vld [vmem:[#allocation3 + $0x8] sm:$0xff]
      %v2660 = vld [vmem:[#allocation3 + $0x10] sm:$0xff]
      %v2661 = vld [vmem:[#allocation3 + $0x18] sm:$0xff]
      %s2662 = scalar_lea.vmem %s11, 96
      %v2663 = vld [vmem:[%s2662] sm:$0xff]
      %v2664 = vld [vmem:[%s2662 + $0x8] sm:$0xff]
      %v2665 = vld [vmem:[%s2662 + $0x10] sm:$0xff]
      %v2666 = vld [vmem:[%s2662 + $0x18] sm:$0xff]
      %v2668 = vsel %vm2405, %v2663, 0
      %v2671 = vsel %vm2405, %v2664, 0
      %v2674 = vsel %vm2405, %v2665, 0
      %v2677 = vsel %vm2405, %v2666, 0
      %2679 = vmatprep.subr.mxu0 0.0
      %2680 = vmatpush1.msra.mxu0 0.0
      %2681 = vmatprep.subr.mxu0 0.0
      %2682 = vmatpush1.msra.mxu0 0.0
      %2683 = vmatprep.subr.mxu0 0.0
      %2684 = vmatpush1.msra.mxu0 0.0
      %2685 = vmatprep.subr.mxu0 0.0
      %2686 = vmatpush1.msra.mxu0 0.0
      %2687 = vmatprep.subr.mxu0 0.0
      %2688 = vmatpush1.msra.mxu0 0.0
      %2689 = vmatprep.subr.mxu0 0.0
      %2690 = vmatpush1.msra.mxu0 0.0
      %2691 = vmatprep.subr.mxu0 0.0
      %2692 = vmatpush1.msra.mxu0 0.0
      %2693 = vmatprep.subr.mxu0 0.0
      %2694 = vmatpush1.msra.mxu0 0.0
      %2695 = vmatprep.subr.mxu0 0.0
      %2696 = vmatpush1.msra.mxu0 0.0
      %2697 = vmatprep.subr.mxu0 0.0
      %2698 = vmatpush1.msra.mxu0 0.0
      %2699 = vmatprep.subr.mxu0 0.0
      %2700 = vmatpush1.msra.mxu0 0.0
      %2701 = vmatprep.subr.mxu0 0.0
      %2702 = vmatpush1.msra.mxu0 0.0
      %2703 = vmatprep.subr.mxu0 0.0
      %2704 = vmatpush1.msra.mxu0 %v2661
      %2705 = vmatprep.subr.mxu0 0.0
      %2706 = vmatpush1.msra.mxu0 %v2660
      %2707 = vmatprep.subr.mxu0 0.0
      %2708 = vmatpush1.msra.mxu0 %v2659
      %2709 = vmatprep.subr.mxu0 0.0
      %2710 = vmatpush1.msra.mxu0 %v2658
      %2711 = vmatprep.subr.mxu0 0.0
      %2712 = vmatpush2.msra.mxu0 0.0
      %2713 = vmatprep.subr.mxu0 0.0
      %2714 = vmatpush2.msra.mxu0 0.0
      %2715 = vmatprep.subr.mxu0 0.0
      %2716 = vmatpush2.msra.mxu0 0.0
      %2717 = vmatprep.subr.mxu0 0.0
      %2718 = vmatpush2.msra.mxu0 0.0
      %2719 = vmatprep.subr.mxu0 0.0
      %2720 = vmatpush2.msra.mxu0 0.0
      %2721 = vmatprep.subr.mxu0 0.0
      %2722 = vmatpush2.msra.mxu0 0.0
      %2723 = vmatprep.subr.mxu0 0.0
      %2724 = vmatpush2.msra.mxu0 0.0
      %2725 = vmatprep.subr.mxu0 0.0
      %2726 = vmatpush2.msra.mxu0 0.0
      %2727 = vmatprep.subr.mxu0 0.0
      %2728 = vmatpush2.msra.mxu0 0.0
      %2729 = vmatprep.subr.mxu0 0.0
      %2730 = vmatpush2.msra.mxu0 0.0
      %2731 = vmatprep.subr.mxu0 0.0
      %2732 = vmatpush2.msra.mxu0 0.0
      %2733 = vmatprep.subr.mxu0 0.0
      %2734 = vmatpush2.msra.mxu0 0.0
      %2735 = vmatprep.subr.mxu0 0.0
      %2736 = vmatpush2.msra.mxu0 0.0
      %2737 = vmatprep.subr.mxu0 0.0
      %2738 = vmatpush2.msra.mxu0 0.0
      %2739 = vmatprep.subr.mxu0 0.0
      %2740 = vmatpush2.msra.mxu0 0.0
      %2741 = vmatprep.subr.mxu0 0.0
      %2742 = vmatpush2.msra.mxu0 0.0
      %2743 = vmatprep.mubr.f32.mxu0 0.0
      %2744 = vmatmul.mubr.f32.gmra.mxu0 %v2668
      %v2745 = vpop.f32.mrf.mxu0
      %v2746 = vadd.f32 0.0, %v2745
      %v2747 = vpop.f32.mrf.mxu0
      %2748 = vmatprep.mubr.f32.mxu0 0.0
      %2749 = vmatmul.mubr.f32.gmra.mxu0 %v2671
      %v2750 = vpop.f32.mrf.mxu0
      %v2751 = vadd.f32 0.0, %v2750
      %v2752 = vpop.f32.mrf.mxu0
      %2753 = vmatprep.mubr.f32.mxu0 0.0
      %2754 = vmatmul.mubr.f32.gmra.mxu0 %v2674
      %v2755 = vpop.f32.mrf.mxu0
      %v2756 = vadd.f32 0.0, %v2755
      %v2757 = vpop.f32.mrf.mxu0
      %2758 = vmatprep.mubr.f32.mxu0 0.0
      %2759 = vmatmul.mubr.f32.gmra.mxu0 %v2677
      %v2760 = vpop.f32.mrf.mxu0
      %v2761 = vadd.f32 0.0, %v2760
      %v2762 = vpop.f32.mrf.mxu0
      %2763 = vdwg.mxu0
      %2768 = vrot.lane.b32.xlu0 %v2658, 127
      %v2769 = vpop.permute.xlu0 %2768
      %2770 = vrot.lane.b32.xlu0 %v2659, 127
      %v2771 = vpop.permute.xlu0 %2770
      %2772 = vrot.lane.b32.xlu0 %v2660, 127
      %v2773 = vpop.permute.xlu0 %2772
      %2774 = vrot.lane.b32.xlu0 %v2661, 127
      %v2775 = vpop.permute.xlu0 %2774
      %v2781 = vsel %vm2405, %v2654, 0
      %v2784 = vsel %vm2405, %v2655, 0
      %v2787 = vsel %vm2405, %v2656, 0
      %v2790 = vsel %vm2405, %v2657, 0
      %2792 = vmatprep.subr.mxu0 0.0
      %2793 = vmatpush1.msra.mxu0 0.0
      %2794 = vmatprep.subr.mxu0 0.0
      %2795 = vmatpush1.msra.mxu0 0.0
      %2796 = vmatprep.subr.mxu0 0.0
      %2797 = vmatpush1.msra.mxu0 0.0
      %2798 = vmatprep.subr.mxu0 0.0
      %2799 = vmatpush1.msra.mxu0 0.0
      %2800 = vmatprep.subr.mxu0 0.0
      %2801 = vmatpush1.msra.mxu0 0.0
      %2802 = vmatprep.subr.mxu0 0.0
      %2803 = vmatpush1.msra.mxu0 0.0
      %2804 = vmatprep.subr.mxu0 0.0
      %2805 = vmatpush1.msra.mxu0 0.0
      %2806 = vmatprep.subr.mxu0 0.0
      %2807 = vmatpush1.msra.mxu0 0.0
      %2808 = vmatprep.subr.mxu0 0.0
      %2809 = vmatpush1.msra.mxu0 0.0
      %2810 = vmatprep.subr.mxu0 0.0
      %2811 = vmatpush1.msra.mxu0 0.0
      %2812 = vmatprep.subr.mxu0 0.0
      %2813 = vmatpush1.msra.mxu0 0.0
      %2814 = vmatprep.subr.mxu0 0.0
      %2815 = vmatpush1.msra.mxu0 0.0
      %2816 = vmatprep.subr.mxu0 0.0
      %2817 = vmatpush1.msra.mxu0 %v2775
      %2818 = vmatprep.subr.mxu0 0.0
      %2819 = vmatpush1.msra.mxu0 %v2773
      %2820 = vmatprep.subr.mxu0 0.0
      %2821 = vmatpush1.msra.mxu0 %v2771
      %2822 = vmatprep.subr.mxu0 0.0
      %2823 = vmatpush1.msra.mxu0 %v2769
      %2824 = vmatprep.subr.mxu0 0.0
      %2825 = vmatpush2.msra.mxu0 0.0
      %2826 = vmatprep.subr.mxu0 0.0
      %2827 = vmatpush2.msra.mxu0 0.0
      %2828 = vmatprep.subr.mxu0 0.0
      %2829 = vmatpush2.msra.mxu0 0.0
      %2830 = vmatprep.subr.mxu0 0.0
      %2831 = vmatpush2.msra.mxu0 0.0
      %2832 = vmatprep.subr.mxu0 0.0
      %2833 = vmatpush2.msra.mxu0 0.0
      %2834 = vmatprep.subr.mxu0 0.0
      %2835 = vmatpush2.msra.mxu0 0.0
      %2836 = vmatprep.subr.mxu0 0.0
      %2837 = vmatpush2.msra.mxu0 0.0
      %2838 = vmatprep.subr.mxu0 0.0
      %2839 = vmatpush2.msra.mxu0 0.0
      %2840 = vmatprep.subr.mxu0 0.0
      %2841 = vmatpush2.msra.mxu0 0.0
      %2842 = vmatprep.subr.mxu0 0.0
      %2843 = vmatpush2.msra.mxu0 0.0
      %2844 = vmatprep.subr.mxu0 0.0
      %2845 = vmatpush2.msra.mxu0 0.0
      %2846 = vmatprep.subr.mxu0 0.0
      %2847 = vmatpush2.msra.mxu0 0.0
      %2848 = vmatprep.subr.mxu0 0.0
      %2849 = vmatpush2.msra.mxu0 0.0
      %2850 = vmatprep.subr.mxu0 0.0
      %2851 = vmatpush2.msra.mxu0 0.0
      %2852 = vmatprep.subr.mxu0 0.0
      %2853 = vmatpush2.msra.mxu0 0.0
      %2854 = vmatprep.subr.mxu0 0.0
      %2855 = vmatpush2.msra.mxu0 0.0
      %2856 = vmatprep.mubr.f32.mxu0 0.0
      %2857 = vmatmul.mubr.f32.gmra.mxu0 %v2781
      %v2858 = vpop.f32.mrf.mxu0
      %v2859 = vadd.f32 %v2746, %v2858
      %v2860 = vpop.f32.mrf.mxu0
      %2861 = vmatprep.mubr.f32.mxu0 0.0
      %2862 = vmatmul.mubr.f32.gmra.mxu0 %v2784
      %v2863 = vpop.f32.mrf.mxu0
      %v2864 = vadd.f32 %v2751, %v2863
      %v2865 = vpop.f32.mrf.mxu0
      %2866 = vmatprep.mubr.f32.mxu0 0.0
      %2867 = vmatmul.mubr.f32.gmra.mxu0 %v2787
      %v2868 = vpop.f32.mrf.mxu0
      %v2869 = vadd.f32 %v2756, %v2868
      %v2870 = vpop.f32.mrf.mxu0
      %2871 = vmatprep.mubr.f32.mxu0 0.0
      %2872 = vmatmul.mubr.f32.gmra.mxu0 %v2790
      %v2873 = vpop.f32.mrf.mxu0
      %v2874 = vadd.f32 %v2761, %v2873
      %v2875 = vpop.f32.mrf.mxu0
      %2876 = vdwg.mxu0
      %v2877 = vld [vmem:[%s12] sm:$0xff]
      %v2878 = vld [vmem:[%s12 + $0x8] sm:$0xff]
      %v2879 = vld [vmem:[%s12 + $0x10] sm:$0xff]
      %v2880 = vld [vmem:[%s12 + $0x18] sm:$0xff]
      %2882 = vset.pattern.permute.xlu0 0
      %2883 = vperm.xlu0 %2882, %v2877
      %v2884 = vpop.permute.xlu0 %2883
      %2887 = vset.pattern.permute.xlu0 0
      %2888 = vperm.xlu0 %2887, %v2878
      %v2889 = vpop.permute.xlu0 %2888
      %2892 = vset.pattern.permute.xlu0 0
      %2893 = vperm.xlu0 %2892, %v2879
      %v2894 = vpop.permute.xlu0 %2893
      %2897 = vset.pattern.permute.xlu0 0
      %2898 = vperm.xlu0 %2897, %v2880
      %v2899 = vpop.permute.xlu0 %2898
      %v2901 = vadd.f32 %v2859, %v2884
      %v2902 = vadd.f32 %v2864, %v2889
      %v2903 = vadd.f32 %v2869, %v2894
      %v2904 = vadd.f32 %v2874, %v2899
      %v2905 = vmax.f32 %v2901, 0.0
      %v2906 = vmax.f32 %v2902, 0.0
      %v2907 = vmax.f32 %v2903, 0.0
      %v2908 = vmax.f32 %v2904, 0.0
      %s2909 = scalar_lea.vmem %s460, 32
      %2910 = vst.msk [vmem:[%s2909] sm:$0xff] %vm2648, %v2905
      %2911 = vst.msk [vmem:[%s2909 + $0x8] sm:$0xff] %vm2648, %v2906
      %2912 = vst.msk [vmem:[%s2909 + $0x10] sm:$0xff] %vm2648, %v2907
      %2913 = vst.msk [vmem:[%s2909 + $0x18] sm:$0xff] %vm2648, %v2908
      %p2914 = scmp.lt.s32.totalorder %s24, 1
      %s2915 = scalar_select %p2914, %s24, 1
      %s2916 = smul.addr %s2915, 8
      %s2917 = smul.addr %s2916, 8
      %s2918 = scalar_lea.vmem %s13, %s2917
      // Predicated region
      $region73: #{manner_block_forward.9} parent=71 // pred_check
        %p2919 = pneg %p325
      $region74: #{manner_block_forward.9} parent=71 // pred_check_branch
        %2921 = sbr.rel (%p2919) target = $region76
      $region75: #{manner_block_forward.9} parent=71 // pred_region
        _
      $region76: #{manner_block_forward.9} parent=71 // pred_fallthru
        _
    $region72: #{manner_block_forward.9} parent=5 // pred_fallthru
      _
    %p2922 = scmp.le.s32.totalorder 2, %s19
    // Predicated region
    $region77: #{manner_block_forward.9} parent=5 // pred_check
      %p2923 = pneg %p2922
    $region78: #{manner_block_forward.9} parent=5 // pred_check_branch
      %2925 = sbr.rel (%p2923) target = $region80
    $region79: #{manner_block_forward.9} parent=5 // pred_region
      %s2926 = ssub.s32 %s19, 2
      // Predicated region
      $region81: #{manner_block_forward.9} parent=79 // pred_check
        %p2927 = pneg %p331
      $region82: #{manner_block_forward.9} parent=79 // pred_check_branch
        %2929 = sbr.rel (%p2927) target = $region84
      $region83: #{manner_block_forward.9} parent=79 // pred_region
        %p2930 = scmp.lt.s32.totalorder %s25, 1
        %s2931 = scalar_select %p2930, %s25, 1
        %s2932 = smul.addr %s2931, 8
        %s2933 = smul.addr %s2932, 8
        %s2934 = scalar_lea.vmem %s13, %s2933
      $region84: #{manner_block_forward.9} parent=79 // pred_fallthru
        _
    $region80: #{manner_block_forward.9} parent=5 // pred_fallthru
      _
  $region6: #{manner_block_forward.9} parent=0 // loop_footer
    %s23 = sadd.s32 1, %s19
  $region7: #{manner_block_forward.9} parent=0 // loop_footer_branch
    %18 = sbr.rel target = $region3
  $region8: #{manner_block_forward.9} parent=0 // loop_exit
    _

</llo_original>
